<compile_context>
chip_gen: v7x
topology: tpu7x:2x2x1
jax: 0.10.0
libtpu: 0.0.40
codegen_flags: <defaults>
</compile_context>

<pallas_src>
import functools

import numpy as np
import jax
import jax.numpy as jnp
from jax.experimental import pallas as pl
from jax.experimental.pallas import tpu as pltpu


_VMEM_LIMIT_BYTES = 64 * 1024 * 1024


# -----------------------------------------------------------------------------
# Kernel 1: recurrent attention + LSTM step.  grid = (batch_tile b, timestep t)
# -----------------------------------------------------------------------------
def decoder_step_kernel(
    tile_len_ref,               # (NB,) i32 scalar-prefetch (SMEM): max decode len per tile
    enc_ref,                    # (TB, Pp, E) bf16  sorted encoder features (batch tile)
    emb_ref,                    # (TB, De)    bf16  embedding for timestep t
    dl_ref,                     # (TB, 1)     i32   decode lengths (sorted descending)
    w_ih0_ref, b_ih0_ref,       # init_h:  (E, H) bf16, (1, H) f32
    w_ic0_ref, b_ic0_ref,       # init_c:  (E, H) bf16, (1, H) f32
    w_ea_ref, b_ea_ref,         # encoder_att: (E, A) bf16, (1, A) f32
    w_da_ref, b_da_ref,         # decoder_att: (H, A) bf16, (1, A) f32
    w_fa_ref, b_fa_ref,         # full_att:    (1, A) f32,  (1, 1) f32
    w_fb_ref, b_fb_ref,         # f_beta:      (H, E) bf16, (1, E) f32
    w_lstm_ref, b_lstm_ref,     # fused LSTM:  (De+E+H, 4H) bf16, (1, 4H) f32
    h_out_ref,                  # out block (TB, H)  bf16   hidden state at step t
    alpha_ref,                  # out block (TB, Pp) f32    attention weights at step t
    h_s, c_s,                   # VMEM scratch (TB, H) f32, recurrent state
    att1_s,                     # VMEM scratch (TB, Pp, A) bf16, hoisted encoder_att(enc)
    *, num_pixels,
):
    b = pl.program_id(0)
    t = pl.program_id(1)

    dl = dl_ref[...]                              # (TB, 1) i32
    active = dl > t                               # (TB, 1) bool   per-row mask
    tile_active = tile_len_ref[b] > t             # scalar         whole-tile skip

    @pl.when(tile_active)
    def _recurrent_step():
        enc = enc_ref[...]                        # (TB, Pp, E) bf16
        TB, Pp, E = enc.shape
        A = w_ea_ref.shape[-1]
        H = h_s.shape[-1]

        # init_hidden_state + hoisted (time-invariant) encoder attention projection.
        @pl.when(t == 0)
        def _init():
            mean_enc = (jnp.sum(enc.astype(jnp.float32), axis=1)
                        * (1.0 / num_pixels)).astype(jnp.bfloat16)
            h_s[...] = (jnp.dot(mean_enc, w_ih0_ref[...],
                                preferred_element_type=jnp.float32) + b_ih0_ref[...])
            c_s[...] = (jnp.dot(mean_enc, w_ic0_ref[...],
                                preferred_element_type=jnp.float32) + b_ic0_ref[...])
            att1 = (jnp.dot(enc.reshape(TB * Pp, E), w_ea_ref[...],
                            preferred_element_type=jnp.float32) + b_ea_ref[...])
            att1_s[...] = att1.reshape(TB, Pp, A).astype(att1_s.dtype)

        h = h_s[...]                              # (TB, H) f32
        c = c_s[...]
        h_b = h.astype(jnp.bfloat16)

        # ---- soft attention (att1 read from scratch, not recomputed) -------------
        att2 = (jnp.dot(h_b, w_da_ref[...], preferred_element_type=jnp.float32)
                + b_da_ref[...])                                          # (TB, A)
        att = jnp.maximum(att1_s[...].astype(jnp.float32) + att2[:, None, :], 0.0)
        scores = jnp.sum(att * w_fa_ref[...], axis=-1) + b_fa_ref[...]    # (TB, Pp)
        if Pp != num_pixels:                       # mask padded pixel rows
            pix = jax.lax.broadcasted_iota(jnp.int32, (TB, Pp), 1)
            scores = jnp.where(pix < num_pixels, scores, -jnp.inf)
        scores = scores - jnp.max(scores, axis=-1, keepdims=True)
        e = jnp.exp(scores)
        alpha = e / jnp.sum(e, axis=-1, keepdims=True)                    # exact divide

        # attention-weighted encoding: VPU multiply + sublane reduce over pixels.
        awe = jnp.sum(enc.astype(jnp.float32) * alpha[:, :, None], axis=1)   # (TB, E)

        # ---- gate = sigmoid(f_beta(h)) -------------------------------------------
        gate = jax.nn.sigmoid(jnp.dot(h_b, w_fb_ref[...],
                                      preferred_element_type=jnp.float32)
                              + b_fb_ref[...])
        awe = gate * awe

        # ---- fused LSTMCell([emb, awe], (h, c)), PyTorch gate order i,f,g,o ------
        x = jnp.concatenate([emb_ref[...], awe.astype(jnp.bfloat16), h_b], axis=-1)
        gates = (jnp.dot(x, w_lstm_ref[...], preferred_element_type=jnp.float32)
                 + b_lstm_ref[...])                                       # (TB, 4H)
        i_g = jax.nn.sigmoid(gates[:, 0 * H:1 * H])
        f_g = jax.nn.sigmoid(gates[:, 1 * H:2 * H])
        g_g = jnp.tanh(gates[:, 2 * H:3 * H])
        o_g = jax.nn.sigmoid(gates[:, 3 * H:4 * H])
        c_new = f_g * c + i_g * g_g
        h_new = o_g * jnp.tanh(c_new)

        # rows whose caption finished keep old state (== PyTorch's [:batch_size_t]).
        h_s[...] = jnp.where(active, h_new, h)
        c_s[...] = jnp.where(active, c_new, c)
        h_out_ref[...] = jnp.where(active, h_new, 0.0).astype(h_out_ref.dtype)
        alpha_ref[...] = jnp.where(active, alpha, 0.0)

    @pl.when(jnp.logical_not(tile_active))
    def _dead_tile():
        h_out_ref[...] = jnp.zeros_like(h_out_ref)
        alpha_ref[...] = jnp.zeros_like(alpha_ref)


# -----------------------------------------------------------------------------
# Kernel 2: big fc matmul over (batch, time) rows.  grid = (batch_tile b, vocab_tile v)
# -----------------------------------------------------------------------------
def fc_kernel(h_ref, mask_ref, w_ref, b_ref, out_ref):
    # TODO(synk): nn.Dropout before fc is treated as identity (eval mode).
    tb, tp, hdim = h_ref.shape
    x = h_ref[...].reshape(tb * tp, hdim)                        # (TB*T_pad, H) bf16
    preds = (jnp.dot(x, w_ref[...], preferred_element_type=jnp.float32)
             + b_ref[...])                                       # (TB*T_pad, TV) f32
    preds = preds * mask_ref[...]                                # zero finished rows
    out_ref[...] = preds.reshape(tb, tp, -1)                     # batch-major block


# -----------------------------------------------------------------------------
# Parameters (deterministic, shapes follow the PyTorch module)
# -----------------------------------------------------------------------------
def init_params(key, attention_dim, embed_dim, decoder_dim, vocab_size, encoder_dim):
    keys = jax.random.split(key, 18)
    u = lambda k, shape, s=0.1: jax.random.uniform(k, shape, jnp.float32, -s, s)
    return dict(
        embedding=u(keys[0], (vocab_size, embed_dim)),
        w_enc_att=u(keys[1], (attention_dim, encoder_dim)),
        b_enc_att=u(keys[2], (attention_dim,)),
        w_dec_att=u(keys[3], (attention_dim, decoder_dim)),
        b_dec_att=u(keys[4], (attention_dim,)),
        w_full_att=u(keys[5], (1, attention_dim)),
        b_full_att=u(keys[6], (1,)),
        w_init_h=u(keys[7], (decoder_dim, encoder_dim)),
        b_init_h=u(keys[8], (decoder_dim,)),
        w_init_c=u(keys[9], (decoder_dim, encoder_dim)),
        b_init_c=u(keys[10], (decoder_dim,)),
        w_f_beta=u(keys[11], (encoder_dim, decoder_dim)),
        b_f_beta=u(keys[12], (encoder_dim,)),
        w_ih=u(keys[13], (4 * decoder_dim, embed_dim + encoder_dim)),
        b_ih=u(keys[14], (4 * decoder_dim,)),
        w_hh=u(keys[15], (4 * decoder_dim, decoder_dim)),
        b_hh=u(keys[16], (4 * decoder_dim,)),
        w_fc=u(keys[17], (vocab_size, decoder_dim)),
        b_fc=jnp.zeros((vocab_size,), jnp.float32),
    )


def _round_up(x, m):
    return ((x + m - 1) // m) * m


# -----------------------------------------------------------------------------
# Wrapper: host-side glue (sort, embedding gather, padding) + two pallas_calls
# -----------------------------------------------------------------------------
def decoder_forward(params, encoder_out, encoded_captions, caption_lengths,
                    batch_tile=64, vocab_tile=512):
    B = encoder_out.shape[0]
    E = encoder_out.shape[-1]
    enc = jnp.asarray(encoder_out).reshape(B, -1, E)          # (B, P, E)
    P = enc.shape[1]

    # sort by caption length, descending (host-side, like the PyTorch module)
    cl = np.asarray(caption_lengths).reshape(-1)
    sort_ind = np.argsort(-cl, kind="stable")
    cl_sorted = cl[sort_ind]
    decode_lengths = (cl_sorted - 1).tolist()
    T = int(max(decode_lengths))

    sort_idx = jnp.asarray(sort_ind)
    enc = enc[sort_idx]
    caps_sorted = jnp.asarray(encoded_captions)[sort_idx]
    dl_np = (cl_sorted - 1).astype(np.int32)

    De = params["embedding"].shape[1]
    H = params["w_hh"].shape[1]
    A = params["w_enc_att"].shape[0]
    V = params["w_fc"].shape[0]

    # ---- tiling / padding ------------------------------------------------------
    TB = max(8, _round_up(min(batch_tile, _round_up(B, 8)), 8))
    B_pad = _round_up(B, TB)
    NB = B_pad // TB
    TV = max(128, _round_up(min(vocab_tile, _round_up(V, 128)), 128))
    V_pad = _round_up(V, TV)
    NV = V_pad // TV
    P_pad = _round_up(P, 8)          # sublane-aligned pixel axis
    T_pad = _round_up(T, 8)          # sublane-aligned time axis for the fc matmul

    enc_p = jnp.zeros((B_pad, P_pad, E), jnp.bfloat16).at[:B, :P].set(
        enc.astype(jnp.bfloat16))
    dl_p = np.zeros((B_pad, 1), np.int32)
    dl_p[:B, 0] = dl_np                                            # padded rows inactive
    tile_len = dl_p.reshape(NB, TB).max(axis=1).astype(np.int32)   # (NB,) per-tile max

    # embeddings for timesteps 0..T-1, time-major, batch padded
    embeddings = params["embedding"][caps_sorted][:, :T, :]        # (B, T, De)
    emb_seq = jnp.zeros((T, B_pad, De), jnp.bfloat16).at[:, :B, :].set(
        jnp.transpose(embeddings, (1, 0, 2)).astype(jnp.bfloat16))

    # ---- weight prep: (in, out) orientation, fused LSTM weight, bf16 matmul operands
    bf = lambda w: w.astype(jnp.bfloat16)
    row = lambda x: x.reshape(1, -1).astype(jnp.float32)

    w_lstm = jnp.concatenate([params["w_ih"].T, params["w_hh"].T], axis=0)   # (De+E+H,4H)
    b_lstm = (params["b_ih"] + params["b_hh"]).reshape(1, -1).astype(jnp.float32)

    weights = (
        bf(params["w_init_h"].T), row(params["b_init_h"]),
        bf(params["w_init_c"].T), row(params["b_init_c"]),
        bf(params["w_enc_att"].T), row(params["b_enc_att"]),
        bf(params["w_dec_att"].T), row(params["b_dec_att"]),
        params["w_full_att"].astype(jnp.float32),
        params["b_full_att"].reshape(1, 1).astype(jnp.float32),
        bf(params["w_f_beta"].T), row(params["b_f_beta"]),
        bf(w_lstm), b_lstm,
    )
    call_args = (jnp.asarray(tile_len), enc_p, emb_seq, jnp.asarray(dl_p)) + weights

    kernel = functools.partial(decoder_step_kernel, num_pixels=P)

    def run_recurrent(single_buffer):
        kw = dict(pipeline_mode=pl.Buffered(1)) if single_buffer else {}

        def const_spec(shape):
            n = len(shape)
            return pl.BlockSpec(shape, lambda b, t, tl, n=n: (0,) * n, **kw)

        in_specs = [
            pl.BlockSpec((TB, P_pad, E), lambda b, t, tl: (b, 0, 0), **kw),  # enc tile
            pl.BlockSpec((None, TB, De), lambda b, t, tl: (t, b, 0)),        # emb @ t
            pl.BlockSpec((TB, 1), lambda b, t, tl: (b, 0)),                  # decode len
        ] + [const_spec(w.shape) for w in weights]

        out_shape = (
            jax.ShapeDtypeStruct((T, B_pad, H), jnp.bfloat16),      # hidden states
            jax.ShapeDtypeStruct((T, B_pad, P_pad), jnp.float32),   # alphas
        )
        out_specs = (
            pl.BlockSpec((None, TB, H), lambda b, t, tl: (t, b, 0)),
            pl.BlockSpec((None, TB, P_pad), lambda b, t, tl: (t, b, 0)),
        )
        return pl.pallas_call(
            kernel,
            out_shape=out_shape,
            grid_spec=pltpu.PrefetchScalarGridSpec(
                num_scalar_prefetch=1,                 # tile_len -> SMEM
                grid=(NB, T),
                in_specs=in_specs,
                out_specs=out_specs,
                scratch_shapes=[
                    pltpu.VMEM((TB, H), jnp.float32),           # h state
                    pltpu.VMEM((TB, H), jnp.float32),           # c state
                    pltpu.VMEM((TB, P_pad, A), jnp.bfloat16),   # hoisted encoder_att(enc)
                ],
            ),
            compiler_params=pltpu.CompilerParams(
                dimension_semantics=("parallel", "arbitrary"),
                vmem_limit_bytes=_VMEM_LIMIT_BYTES,
            ),
        )(*call_args)

    try:
        h_tm, alphas_tm = run_recurrent(True)     # single-buffer invariant blocks
    except Exception:
        h_tm, alphas_tm = run_recurrent(False)    # fallback: default double-buffering

    # ---- second kernel: one big fc matmul, batch-major output -----------------
    h_bm = jnp.zeros((B_pad, T_pad, H), jnp.bfloat16).at[:, :T, :].set(
        jnp.transpose(h_tm, (1, 0, 2)))                           # small tensor
    dl_j = jnp.asarray(dl_p)                                      # (B_pad, 1)
    mask = (jnp.arange(T_pad, dtype=jnp.int32)[None, :] < dl_j).astype(jnp.float32)
    mask_flat = mask.reshape(B_pad * T_pad, 1)

    w_fc_p = jnp.zeros((H, V_pad), jnp.bfloat16).at[:, :V].set(bf(params["w_fc"].T))
    b_fc_p = jnp.zeros((1, V_pad), jnp.float32).at[:, :V].set(row(params["b_fc"]))

    preds_bm = pl.pallas_call(
        fc_kernel,
        out_shape=jax.ShapeDtypeStruct((B_pad, T_pad, V_pad), jnp.float32),
        grid=(NB, NV),
        in_specs=[
            pl.BlockSpec((TB, T_pad, H), lambda b, v: (b, 0, 0)),     # h stays resident
            pl.BlockSpec((TB * T_pad, 1), lambda b, v: (b, 0)),       # row mask
            pl.BlockSpec((H, TV), lambda b, v: (0, v)),               # fc weight tile
            pl.BlockSpec((1, TV), lambda b, v: (0, v)),               # fc bias tile
        ],
        out_specs=pl.BlockSpec((TB, T_pad, TV), lambda b, v: (b, 0, v)),
        compiler_params=pltpu.CompilerParams(
            dimension_semantics=("parallel", "parallel"),
            vmem_limit_bytes=_VMEM_LIMIT_BYTES,
        ),
    )(h_bm, mask_flat, w_fc_p, b_fc_p)

    predictions = preds_bm[:B, :T, :V]                          # already (B, T, V)
    alphas = jnp.transpose(alphas_tm[:, :B, :P], (1, 0, 2))     # small tensor transpose
    return predictions, caps_sorted, decode_lengths, alphas, sort_ind


# -----------------------------------------------------------------------------
# Pure numpy reference mirroring the PyTorch forward (eval-mode dropout)
# -----------------------------------------------------------------------------
def reference_forward(params, encoder_out, encoded_captions, caption_lengths):
    p = {k: np.asarray(v) for k, v in params.items()}
    B = encoder_out.shape[0]
    E = encoder_out.shape[-1]
    enc = np.asarray(encoder_out).reshape(B, -1, E)
    P = enc.shape[1]
    cl = np.asarray(caption_lengths).reshape(-1)
    sort_ind = np.argsort(-cl, kind="stable")
    cl = cl[sort_ind]
    enc = enc[sort_ind]
    caps = np.asarray(encoded_captions)[sort_ind]
    decode_lengths = (cl - 1).tolist()
    T = int(max(decode_lengths))
    V = p["w_fc"].shape[0]
    H = p["w_hh"].shape[1]

    preds_out = np.zeros((B, T, V), np.float32)
    alphas_out = np.zeros((B, T, P), np.float32)
    emb = p["embedding"][caps]

    def sig(x):
        return 1.0 / (1.0 + np.exp(-x))

    mean_enc = enc.mean(axis=1)
    h = mean_enc @ p["w_init_h"].T + p["b_init_h"]
    c = mean_enc @ p["w_init_c"].T + p["b_init_c"]

    for t in range(T):
        bt = sum(l > t for l in decode_lengths)
        hdash, cdash = (h[:bt], c[:bt])
        enc_t = enc[:bt]
        att1 = enc_t @ p["w_enc_att"].T + p["b_enc_att"]
        att2 = hdash @ p["w_dec_att"].T + p["b_dec_att"]
        att = np.maximum(att1 + att2[:, None, :], 0.0)
        scores = (att @ p["w_full_att"].T)[..., 0] + p["b_full_att"][0]
        scores = scores - scores.max(-1, keepdims=True)
        e = np.exp(scores)
        alpha = e / e.sum(-1, keepdims=True)
        awe = (enc_t * alpha[:, :, None]).sum(axis=1)
        gate = sig(hdash @ p["w_f_beta"].T + p["b_f_beta"])
        awe = gate * awe
        x = np.concatenate([emb[:bt, t, :], awe], axis=1)
        gates = x @ p["w_ih"].T + p["b_ih"] + hdash @ p["w_hh"].T + p["b_hh"]
        i_g, f_g = sig(gates[:, :H]), sig(gates[:, H:2 * H])
        g_g, o_g = np.tanh(gates[:, 2 * H:3 * H]), sig(gates[:, 3 * H:])
        c = f_g * cdash + i_g * g_g
        h = o_g * np.tanh(c)
        preds_out[:bt, t, :] = h @ p["w_fc"].T + p["b_fc"]
        alphas_out[:bt, t, :] = alpha
    return preds_out, alphas_out, sort_ind, decode_lengths


# -----------------------------------------------------------------------------
if __name__ == "__main__":
    # small shapes consistent with the module
    batch = 10
    feat_map = 4                 # 4x4 feature map -> 16 "pixels"
    encoder_dim = 32
    decoder_dim = 32
    attention_dim = 32
    embed_dim = 32
    vocab_size = 256             # exercises the vocab-tile padding / tiling path
    max_cap_len = 8

    key = jax.random.PRNGKey(0)
    k_p, k_enc, k_cap = jax.random.split(key, 3)

    params = init_params(k_p, attention_dim, embed_dim, decoder_dim, vocab_size, encoder_dim)

    encoder_out = jax.random.normal(
        k_enc, (batch, feat_map, feat_map, encoder_dim), jnp.float32)
    encoded_captions = jax.random.randint(
        k_cap, (batch, max_cap_len), 0, vocab_size, dtype=jnp.int32)
    caption_lengths = np.array(
        [[8], [5], [7], [4], [6], [8], [3], [5], [7], [6]], dtype=np.int32)   # (B, 1)

    preds, caps_sorted, dec_lens, alphas, sort_ind = decoder_forward(
        params, encoder_out, encoded_captions, caption_lengths)
    preds = jax.block_until_ready(preds)
    alphas = jax.block_until_ready(alphas)

    ref_preds, ref_alphas, ref_sort, ref_lens = reference_forward(
        params, encoder_out, encoded_captions, caption_lengths)

    assert list(ref_sort) == list(sort_ind)
    assert [int(x) for x in ref_lens] == [int(x) for x in dec_lens]
    # bf16 matmul operands / bf16 att1 scratch -> compare loosely against f32 reference
    err_p = float(np.max(np.abs(np.asarray(preds) - ref_preds)))
    err_a = float(np.max(np.abs(np.asarray(alphas) - ref_alphas)))
    assert err_p < 5e-2, f"pred max abs err {err_p}"
    assert err_a < 5e-2, f"alpha max abs err {err_a}"

    print("KERNEL_OK")
</pallas_src>

<mosaic_0001>
module attributes {stable_mosaic.version = 11 : i64} {
  func.func @decoder_step_kernel(%arg0: i32, %arg1: i32, %arg2: memref<1xi32, #tpu.memory_space<smem>>, %arg3: memref<16x16x32xbf16, #tpu.memory_space<vmem>>, %arg4: memref<1x16x32xbf16, #tpu.memory_space<vmem>>, %arg5: memref<16x1xi32, #tpu.memory_space<vmem>>, %arg6: memref<32x32xbf16, #tpu.memory_space<vmem>>, %arg7: memref<1x32xf32, #tpu.memory_space<vmem>>, %arg8: memref<32x32xbf16, #tpu.memory_space<vmem>>, %arg9: memref<1x32xf32, #tpu.memory_space<vmem>>, %arg10: memref<32x32xbf16, #tpu.memory_space<vmem>>, %arg11: memref<1x32xf32, #tpu.memory_space<vmem>>, %arg12: memref<32x32xbf16, #tpu.memory_space<vmem>>, %arg13: memref<1x32xf32, #tpu.memory_space<vmem>>, %arg14: memref<1x32xf32, #tpu.memory_space<vmem>>, %arg15: memref<1x1xf32, #tpu.memory_space<vmem>>, %arg16: memref<32x32xbf16, #tpu.memory_space<vmem>>, %arg17: memref<1x32xf32, #tpu.memory_space<vmem>>, %arg18: memref<96x128xbf16, #tpu.memory_space<vmem>>, %arg19: memref<1x128xf32, #tpu.memory_space<vmem>>, %arg20: memref<1x16x32xbf16, #tpu.memory_space<vmem>>, %arg21: memref<1x16x16xf32, #tpu.memory_space<vmem>>, %arg22: memref<16x32xf32, #tpu.memory_space<vmem>>, %arg23: memref<16x32xf32, #tpu.memory_space<vmem>>, %arg24: memref<16x16x32xbf16, #tpu.memory_space<vmem>>) attributes {dimension_semantics = [#tpu.dimension_semantics<parallel>, #tpu.dimension_semantics<arbitrary>], iteration_bounds = array<i64: 1, 7>, scalar_prefetch = 1 : i64, scratch_operands = 3 : i64, tpu.core_type = #tpu.core_type<tc>, window_params = [{pipeline_mode = #tpu.pipeline_mode<synchronous>, transform_indices = @transform_0, window_bounds = array<i64: 16, 16, 32>}, {transform_indices = @transform_1, window_bounds = array<i64: 1, 16, 32>}, {transform_indices = @transform_2, window_bounds = array<i64: 16, 1>}, {pipeline_mode = #tpu.pipeline_mode<synchronous>, transform_indices = @transform_3, window_bounds = array<i64: 32, 32>}, {pipeline_mode = #tpu.pipeline_mode<synchronous>, transform_indices = @transform_4, window_bounds = array<i64: 1, 32>}, {pipeline_mode = #tpu.pipeline_mode<synchronous>, transform_indices = @transform_5, window_bounds = array<i64: 32, 32>}, {pipeline_mode = #tpu.pipeline_mode<synchronous>, transform_indices = @transform_6, window_bounds = array<i64: 1, 32>}, {pipeline_mode = #tpu.pipeline_mode<synchronous>, transform_indices = @transform_7, window_bounds = array<i64: 32, 32>}, {pipeline_mode = #tpu.pipeline_mode<synchronous>, transform_indices = @transform_8, window_bounds = array<i64: 1, 32>}, {pipeline_mode = #tpu.pipeline_mode<synchronous>, transform_indices = @transform_9, window_bounds = array<i64: 32, 32>}, {pipeline_mode = #tpu.pipeline_mode<synchronous>, transform_indices = @transform_10, window_bounds = array<i64: 1, 32>}, {pipeline_mode = #tpu.pipeline_mode<synchronous>, transform_indices = @transform_11, window_bounds = array<i64: 1, 32>}, {pipeline_mode = #tpu.pipeline_mode<synchronous>, transform_indices = @transform_12, window_bounds = array<i64: 1, 1>}, {pipeline_mode = #tpu.pipeline_mode<synchronous>, transform_indices = @transform_13, window_bounds = array<i64: 32, 32>}, {pipeline_mode = #tpu.pipeline_mode<synchronous>, transform_indices = @transform_14, window_bounds = array<i64: 1, 32>}, {pipeline_mode = #tpu.pipeline_mode<synchronous>, transform_indices = @transform_15, window_bounds = array<i64: 96, 128>}, {pipeline_mode = #tpu.pipeline_mode<synchronous>, transform_indices = @transform_16, window_bounds = array<i64: 1, 128>}, {transform_indices = @transform_17, window_bounds = array<i64: 1, 16, 32>}, {transform_indices = @transform_18, window_bounds = array<i64: 1, 16, 16>}]} {
    %c0 = arith.constant 0 : index
    %c0_0 = arith.constant 0 : index
    %0 = vector.load %arg5[%c0, %c0_0] : memref<16x1xi32, #tpu.memory_space<vmem>>, vector<16x1xi32>
    %1 = vector.broadcast %arg1 : i32 to vector<16x1xi32>
    %2 = arith.cmpi sgt, %0, %1 : vector<16x1xi32>
    %3 = arith.index_cast %arg0 : i32 to index
    %4 = memref.load %arg2[%3] : memref<1xi32, #tpu.memory_space<smem>>
    %5 = arith.cmpi sgt, %4, %arg1 : i32
    %6 = arith.extui %5 : i1 to i32
    %c0_i32 = arith.constant 0 : i32
    %7 = arith.cmpi ne, %6, %c0_i32 : i32
    scf.if %7 {
      %c0_2 = arith.constant 0 : index
      %c0_3 = arith.constant 0 : index
      %c0_4 = arith.constant 0 : index
      %11 = vector.load %arg3[%c0_2, %c0_3, %c0_4] : memref<16x16x32xbf16, #tpu.memory_space<vmem>>, vector<16x16x32xbf16>
      %c0_i32_5 = arith.constant 0 : i32
      %12 = arith.cmpi eq, %arg1, %c0_i32_5 : i32
      %13 = arith.extui %12 : i1 to i32
      %c0_i32_6 = arith.constant 0 : i32
      %14 = arith.cmpi ne, %13, %c0_i32_6 : i32
      scf.if %14 {
        %120 = arith.extf %11 : vector<16x16x32xbf16> to vector<16x16x32xf32>
        %cst_56 = arith.constant dense<0.000000e+00> : vector<16x32xf32>
        %121 = vector.multi_reduction <add>, %120, %cst_56 [1] : vector<16x16x32xf32> to vector<16x32xf32>
        %cst_57 = arith.constant 6.250000e-02 : f32
        %122 = vector.broadcast %cst_57 : f32 to vector<16x32xf32>
        %123 = arith.mulf %121, %122 : vector<16x32xf32>
        %124 = arith.truncf %123 : vector<16x32xf32> to vector<16x32xbf16>
        %c0_58 = arith.constant 0 : index
        %c0_59 = arith.constant 0 : index
        %125 = vector.load %arg6[%c0_58, %c0_59] : memref<32x32xbf16, #tpu.memory_space<vmem>>, vector<32x32xbf16>
        %cst_60 = arith.constant dense<0.000000e+00> : vector<16x32xf32>
        %126 = tpu.matmul %124, %125, %cst_60 {dimension_numbers = #tpu.dot_dimension_numbers<[1], [0], [0], [1], [0, 0, 1, 1], [], []>} : vector<16x32xbf16>, vector<32x32xbf16>, vector<16x32xf32> -> vector<16x32xf32>
        %c0_61 = arith.constant 0 : index
        %c0_62 = arith.constant 0 : index
        %127 = vector.load %arg7[%c0_61, %c0_62] : memref<1x32xf32, #tpu.memory_space<vmem>>, vector<1x32xf32>
        %128 = vector.broadcast %127 : vector<1x32xf32> to vector<16x32xf32>
        %129 = arith.addf %126, %128 : vector<16x32xf32>
        %c0_63 = arith.constant 0 : index
        %c0_64 = arith.constant 0 : index
        %130 = vector.load %arg22[%c0_63, %c0_64] : memref<16x32xf32, #tpu.memory_space<vmem>>, vector<16x32xf32>
        tpu.vector_store %arg22[%c0_63, %c0_64], %129 {strides = array<i32>} : memref<16x32xf32, #tpu.memory_space<vmem>>, vector<16x32xf32>,
        %c0_65 = arith.constant 0 : index
        %c0_66 = arith.constant 0 : index
        %131 = vector.load %arg8[%c0_65, %c0_66] : memref<32x32xbf16, #tpu.memory_space<vmem>>, vector<32x32xbf16>
        %cst_67 = arith.constant dense<0.000000e+00> : vector<16x32xf32>
        %132 = tpu.matmul %124, %131, %cst_67 {dimension_numbers = #tpu.dot_dimension_numbers<[1], [0], [0], [1], [0, 0, 1, 1], [], []>} : vector<16x32xbf16>, vector<32x32xbf16>, vector<16x32xf32> -> vector<16x32xf32>
        %c0_68 = arith.constant 0 : index
        %c0_69 = arith.constant 0 : index
        %133 = vector.load %arg9[%c0_68, %c0_69] : memref<1x32xf32, #tpu.memory_space<vmem>>, vector<1x32xf32>
        %134 = vector.broadcast %133 : vector<1x32xf32> to vector<16x32xf32>
        %135 = arith.addf %132, %134 : vector<16x32xf32>
        %c0_70 = arith.constant 0 : index
        %c0_71 = arith.constant 0 : index
        %136 = vector.load %arg23[%c0_70, %c0_71] : memref<16x32xf32, #tpu.memory_space<vmem>>, vector<16x32xf32>
        tpu.vector_store %arg23[%c0_70, %c0_71], %135 {strides = array<i32>} : memref<16x32xf32, #tpu.memory_space<vmem>>, vector<16x32xf32>,
        %137 = vector.shape_cast %11 : vector<16x16x32xbf16> to vector<256x32xbf16>
        %c0_72 = arith.constant 0 : index
        %c0_73 = arith.constant 0 : index
        %138 = vector.load %arg10[%c0_72, %c0_73] : memref<32x32xbf16, #tpu.memory_space<vmem>>, vector<32x32xbf16>
        %cst_74 = arith.constant dense<0.000000e+00> : vector<256x32xf32>
        %139 = tpu.matmul %137, %138, %cst_74 {dimension_numbers = #tpu.dot_dimension_numbers<[1], [0], [0], [1], [0, 0, 1, 1], [], []>} : vector<256x32xbf16>, vector<32x32xbf16>, vector<256x32xf32> -> vector<256x32xf32>
        %c0_75 = arith.constant 0 : index
        %c0_76 = arith.constant 0 : index
        %140 = vector.load %arg11[%c0_75, %c0_76] : memref<1x32xf32, #tpu.memory_space<vmem>>, vector<1x32xf32>
        %141 = vector.broadcast %140 : vector<1x32xf32> to vector<256x32xf32>
        %142 = arith.addf %139, %141 : vector<256x32xf32>
        %143 = vector.shape_cast %142 : vector<256x32xf32> to vector<16x16x32xf32>
        %144 = arith.truncf %143 : vector<16x16x32xf32> to vector<16x16x32xbf16>
        %c0_77 = arith.constant 0 : index
        %c0_78 = arith.constant 0 : index
        %c0_79 = arith.constant 0 : index
        %145 = vector.load %arg24[%c0_77, %c0_78, %c0_79] : memref<16x16x32xbf16, #tpu.memory_space<vmem>>, vector<16x16x32xbf16>
        tpu.vector_store %arg24[%c0_77, %c0_78, %c0_79], %144 {strides = array<i32>} : memref<16x16x32xbf16, #tpu.memory_space<vmem>>, vector<16x16x32xbf16>,
      } else {
      }
      %c0_7 = arith.constant 0 : index
      %c0_8 = arith.constant 0 : index
      %15 = vector.load %arg22[%c0_7, %c0_8] : memref<16x32xf32, #tpu.memory_space<vmem>>, vector<16x32xf32>
      %c0_9 = arith.constant 0 : index
      %c0_10 = arith.constant 0 : index
      %16 = vector.load %arg23[%c0_9, %c0_10] : memref<16x32xf32, #tpu.memory_space<vmem>>, vector<16x32xf32>
      %17 = arith.truncf %15 : vector<16x32xf32> to vector<16x32xbf16>
      %c0_11 = arith.constant 0 : index
      %c0_12 = arith.constant 0 : index
      %18 = vector.load %arg12[%c0_11, %c0_12] : memref<32x32xbf16, #tpu.memory_space<vmem>>, vector<32x32xbf16>
      %cst = arith.constant dense<0.000000e+00> : vector<16x32xf32>
      %19 = tpu.matmul %17, %18, %cst {dimension_numbers = #tpu.dot_dimension_numbers<[1], [0], [0], [1], [0, 0, 1, 1], [], []>} : vector<16x32xbf16>, vector<32x32xbf16>, vector<16x32xf32> -> vector<16x32xf32>
      %c0_13 = arith.constant 0 : index
      %c0_14 = arith.constant 0 : index
      %20 = vector.load %arg13[%c0_13, %c0_14] : memref<1x32xf32, #tpu.memory_space<vmem>>, vector<1x32xf32>
      %21 = vector.broadcast %20 : vector<1x32xf32> to vector<16x32xf32>
      %22 = arith.addf %19, %21 : vector<16x32xf32>
      %c0_15 = arith.constant 0 : index
      %c0_16 = arith.constant 0 : index
      %c0_17 = arith.constant 0 : index
      %23 = vector.load %arg24[%c0_15, %c0_16, %c0_17] : memref<16x16x32xbf16, #tpu.memory_space<vmem>>, vector<16x16x32xbf16>
      %24 = arith.extf %23 : vector<16x16x32xbf16> to vector<16x16x32xf32>
      %25 = vector.shape_cast %22 : vector<16x32xf32> to vector<16x1x32xf32>
      %26 = vector.broadcast %25 : vector<16x1x32xf32> to vector<16x16x32xf32>
      %27 = arith.addf %24, %26 : vector<16x16x32xf32>
      %cst_18 = arith.constant 0.000000e+00 : f32
      %28 = vector.broadcast %cst_18 : f32 to vector<16x16x32xf32>
      %29 = arith.maximumf %27, %28 : vector<16x16x32xf32>
      %c0_19 = arith.constant 0 : index
      %c0_20 = arith.constant 0 : index
      %30 = vector.load %arg14[%c0_19, %c0_20] : memref<1x32xf32, #tpu.memory_space<vmem>>, vector<1x32xf32>
      %31 = vector.shape_cast %30 : vector<1x32xf32> to vector<1x1x32xf32>
      %32 = vector.broadcast %31 : vector<1x1x32xf32> to vector<16x16x32xf32>
      %33 = arith.mulf %29, %32 : vector<16x16x32xf32>
      %cst_21 = arith.constant dense<0.000000e+00> : vector<16x16xf32>
      %34 = vector.multi_reduction <add>, %33, %cst_21 [2] : vector<16x16x32xf32> to vector<16x16xf32>
      %c0_22 = arith.constant 0 : index
      %c0_23 = arith.constant 0 : index
      %35 = vector.load %arg15[%c0_22, %c0_23] : memref<1x1xf32, #tpu.memory_space<vmem>>, vector<1x1xf32>
      %36 = vector.broadcast %35 : vector<1x1xf32> to vector<16x16xf32>
      %37 = arith.addf %34, %36 : vector<16x16xf32>
      %cst_24 = arith.constant dense<0xFF800000> : vector<16xf32>
      %38 = vector.multi_reduction <maximumf>, %37, %cst_24 [1] : vector<16x16xf32> to vector<16xf32>
      %39 = vector.shape_cast %38 : vector<16xf32> to vector<16x1xf32>
      %40 = vector.broadcast %39 : vector<16x1xf32> to vector<16x16xf32>
      %41 = arith.subf %37, %40 : vector<16x16xf32>
      %42 = math.exp %41 : vector<16x16xf32>
      %cst_25 = arith.constant dense<0.000000e+00> : vector<16xf32>
      %43 = vector.multi_reduction <add>, %42, %cst_25 [1] : vector<16x16xf32> to vector<16xf32>
      %44 = vector.shape_cast %43 : vector<16xf32> to vector<16x1xf32>
      %45 = vector.broadcast %44 : vector<16x1xf32> to vector<16x16xf32>
      %46 = arith.divf %42, %45 : vector<16x16xf32>
      %47 = arith.extf %11 : vector<16x16x32xbf16> to vector<16x16x32xf32>
      %48 = vector.shape_cast %46 : vector<16x16xf32> to vector<16x16x1xf32>
      %49 = vector.broadcast %48 : vector<16x16x1xf32> to vector<16x16x32xf32>
      %50 = arith.mulf %47, %49 : vector<16x16x32xf32>
      %cst_26 = arith.constant dense<0.000000e+00> : vector<16x32xf32>
      %51 = vector.multi_reduction <add>, %50, %cst_26 [1] : vector<16x16x32xf32> to vector<16x32xf32>
      %c0_27 = arith.constant 0 : index
      %c0_28 = arith.constant 0 : index
      %52 = vector.load %arg16[%c0_27, %c0_28] : memref<32x32xbf16, #tpu.memory_space<vmem>>, vector<32x32xbf16>
      %cst_29 = arith.constant dense<0.000000e+00> : vector<16x32xf32>
      %53 = tpu.matmul %17, %52, %cst_29 {dimension_numbers = #tpu.dot_dimension_numbers<[1], [0], [0], [1], [0, 0, 1, 1], [], []>} : vector<16x32xbf16>, vector<32x32xbf16>, vector<16x32xf32> -> vector<16x32xf32>
      %c0_30 = arith.constant 0 : index
      %c0_31 = arith.constant 0 : index
      %54 = vector.load %arg17[%c0_30, %c0_31] : memref<1x32xf32, #tpu.memory_space<vmem>>, vector<1x32xf32>
      %55 = vector.broadcast %54 : vector<1x32xf32> to vector<16x32xf32>
      %56 = arith.addf %53, %55 : vector<16x32xf32>
      %57 = arith.negf %56 : vector<16x32xf32>
      %58 = math.exp %57 : vector<16x32xf32>
      %cst_32 = arith.constant 1.000000e+00 : f32
      %59 = vector.broadcast %cst_32 : f32 to vector<16x32xf32>
      %60 = arith.addf %59, %58 : vector<16x32xf32>
      %61 = arith.divf %59, %60 : vector<16x32xf32>
      %62 = arith.mulf %61, %51 : vector<16x32xf32>
      %c0_33 = arith.constant 0 : index
      %c0_34 = arith.constant 0 : index
      %c0_35 = arith.constant 0 : index
      %63 = vector.load %arg4[%c0_33, %c0_34, %c0_35] : memref<1x16x32xbf16, #tpu.memory_space<vmem>>, vector<1x16x32xbf16>
      %64 = vector.shape_cast %63 : vector<1x16x32xbf16> to vector<16x32xbf16>
      %65 = arith.truncf %62 : vector<16x32xf32> to vector<16x32xbf16>
      %66 = tpu.concatenate %64, %65, %17 in 1 : vector<16x32xbf16>, vector<16x32xbf16>, vector<16x32xbf16> -> vector<16x96xbf16>
      %c0_36 = arith.constant 0 : index
      %c0_37 = arith.constant 0 : index
      %67 = vector.load %arg18[%c0_36, %c0_37] : memref<96x128xbf16, #tpu.memory_space<vmem>>, vector<96x128xbf16>
      %cst_38 = arith.constant dense<0.000000e+00> : vector<16x128xf32>
      %68 = tpu.matmul %66, %67, %cst_38 {dimension_numbers = #tpu.dot_dimension_numbers<[1], [0], [0], [1], [0, 0, 1, 1], [], []>} : vector<16x96xbf16>, vector<96x128xbf16>, vector<16x128xf32> -> vector<16x128xf32>
      %c0_39 = arith.constant 0 : index
      %c0_40 = arith.constant 0 : index
      %69 = vector.load %arg19[%c0_39, %c0_40] : memref<1x128xf32, #tpu.memory_space<vmem>>, vector<1x128xf32>
      %70 = vector.broadcast %69 : vector<1x128xf32> to vector<16x128xf32>
      %71 = arith.addf %68, %70 : vector<16x128xf32>
      %72 = vector.extract_strided_slice %71 {offsets = [0, 0], sizes = [16, 32], strides = [1, 1]} : vector<16x128xf32> to vector<16x32xf32>
      %73 = arith.negf %72 : vector<16x32xf32>
      %74 = math.exp %73 : vector<16x32xf32>
      %cst_41 = arith.constant 1.000000e+00 : f32
      %75 = vector.broadcast %cst_41 : f32 to vector<16x32xf32>
      %76 = arith.addf %75, %74 : vector<16x32xf32>
      %77 = arith.divf %75, %76 : vector<16x32xf32>
      %78 = vector.extract_strided_slice %71 {offsets = [0, 32], sizes = [16, 32], strides = [1, 1]} : vector<16x128xf32> to vector<16x32xf32>
      %79 = arith.negf %78 : vector<16x32xf32>
      %80 = math.exp %79 : vector<16x32xf32>
      %cst_42 = arith.constant 1.000000e+00 : f32
      %81 = vector.broadcast %cst_42 : f32 to vector<16x32xf32>
      %82 = arith.addf %81, %80 : vector<16x32xf32>
      %83 = arith.divf %81, %82 : vector<16x32xf32>
      %84 = vector.extract_strided_slice %71 {offsets = [0, 64], sizes = [16, 32], strides = [1, 1]} : vector<16x128xf32> to vector<16x32xf32>
      %85 = math.tanh %84 : vector<16x32xf32>
      %86 = vector.extract_strided_slice %71 {offsets = [0, 96], sizes = [16, 32], strides = [1, 1]} : vector<16x128xf32> to vector<16x32xf32>
      %87 = arith.negf %86 : vector<16x32xf32>
      %88 = math.exp %87 : vector<16x32xf32>
      %cst_43 = arith.constant 1.000000e+00 : f32
      %89 = vector.broadcast %cst_43 : f32 to vector<16x32xf32>
      %90 = arith.addf %89, %88 : vector<16x32xf32>
      %91 = arith.divf %89, %90 : vector<16x32xf32>
      %92 = arith.mulf %83, %16 : vector<16x32xf32>
      %93 = arith.mulf %77, %85 : vector<16x32xf32>
      %94 = arith.addf %92, %93 : vector<16x32xf32>
      %95 = math.tanh %94 : vector<16x32xf32>
      %96 = arith.mulf %91, %95 : vector<16x32xf32>
      %97 = vector.shape_cast %2 : vector<16x1xi1> to vector<16x1xi1>
      %98 = vector.broadcast %97 : vector<16x1xi1> to vector<16x32xi1>
      %99 = arith.select %98, %96, %15 : vector<16x32xi1>, vector<16x32xf32>
      %c0_44 = arith.constant 0 : index
      %c0_45 = arith.constant 0 : index
      %100 = vector.load %arg22[%c0_44, %c0_45] : memref<16x32xf32, #tpu.memory_space<vmem>>, vector<16x32xf32>
      tpu.vector_store %arg22[%c0_44, %c0_45], %99 {strides = array<i32>} : memref<16x32xf32, #tpu.memory_space<vmem>>, vector<16x32xf32>,
      %101 = vector.shape_cast %2 : vector<16x1xi1> to vector<16x1xi1>
      %102 = vector.broadcast %101 : vector<16x1xi1> to vector<16x32xi1>
      %103 = arith.select %102, %94, %16 : vector<16x32xi1>, vector<16x32xf32>
      %c0_46 = arith.constant 0 : index
      %c0_47 = arith.constant 0 : index
      %104 = vector.load %arg23[%c0_46, %c0_47] : memref<16x32xf32, #tpu.memory_space<vmem>>, vector<16x32xf32>
      tpu.vector_store %arg23[%c0_46, %c0_47], %103 {strides = array<i32>} : memref<16x32xf32, #tpu.memory_space<vmem>>, vector<16x32xf32>,
      %cst_48 = arith.constant 0.000000e+00 : f32
      %105 = vector.shape_cast %2 : vector<16x1xi1> to vector<16x1xi1>
      %106 = vector.broadcast %105 : vector<16x1xi1> to vector<16x32xi1>
      %107 = vector.broadcast %cst_48 : f32 to vector<16x32xf32>
      %108 = arith.select %106, %96, %107 : vector<16x32xi1>, vector<16x32xf32>
      %109 = arith.truncf %108 : vector<16x32xf32> to vector<16x32xbf16>
      %c0_49 = arith.constant 0 : index
      %c0_50 = arith.constant 0 : index
      %c0_51 = arith.constant 0 : index
      %110 = vector.load %arg20[%c0_49, %c0_50, %c0_51] : memref<1x16x32xbf16, #tpu.memory_space<vmem>>, vector<1x16x32xbf16>
      %111 = vector.shape_cast %110 : vector<1x16x32xbf16> to vector<16x32xbf16>
      %112 = vector.shape_cast %109 : vector<16x32xbf16> to vector<1x16x32xbf16>
      tpu.vector_store %arg20[%c0_49, %c0_50, %c0_51], %112 {strides = array<i32>} : memref<1x16x32xbf16, #tpu.memory_space<vmem>>, vector<1x16x32xbf16>,
      %cst_52 = arith.constant 0.000000e+00 : f32
      %113 = vector.shape_cast %2 : vector<16x1xi1> to vector<16x1xi1>
      %114 = vector.broadcast %113 : vector<16x1xi1> to vector<16x16xi1>
      %115 = vector.broadcast %cst_52 : f32 to vector<16x16xf32>
      %116 = arith.select %114, %46, %115 : vector<16x16xi1>, vector<16x16xf32>
      %c0_53 = arith.constant 0 : index
      %c0_54 = arith.constant 0 : index
      %c0_55 = arith.constant 0 : index
      %117 = vector.load %arg21[%c0_53, %c0_54, %c0_55] : memref<1x16x16xf32, #tpu.memory_space<vmem>>, vector<1x16x16xf32>
      %118 = vector.shape_cast %117 : vector<1x16x16xf32> to vector<16x16xf32>
      %119 = vector.shape_cast %116 : vector<16x16xf32> to vector<1x16x16xf32>
      tpu.vector_store %arg21[%c0_53, %c0_54, %c0_55], %119 {strides = array<i32>} : memref<1x16x16xf32, #tpu.memory_space<vmem>>, vector<1x16x16xf32>,
    } else {
    }
    %true = arith.constant true
    %8 = arith.xori %5, %true : i1
    %9 = arith.extui %8 : i1 to i32
    %c0_i32_1 = arith.constant 0 : i32
    %10 = arith.cmpi ne, %9, %c0_i32_1 : i32
    scf.if %10 {
      %cst = arith.constant 0.000000e+00 : bf16
      %11 = vector.broadcast %cst : bf16 to vector<16x32xbf16>
      %c0_2 = arith.constant 0 : index
      %c0_3 = arith.constant 0 : index
      %c0_4 = arith.constant 0 : index
      %12 = vector.load %arg20[%c0_2, %c0_3, %c0_4] : memref<1x16x32xbf16, #tpu.memory_space<vmem>>, vector<1x16x32xbf16>
      %13 = vector.shape_cast %12 : vector<1x16x32xbf16> to vector<16x32xbf16>
      %14 = vector.shape_cast %11 : vector<16x32xbf16> to vector<1x16x32xbf16>
      tpu.vector_store %arg20[%c0_2, %c0_3, %c0_4], %14 {strides = array<i32>} : memref<1x16x32xbf16, #tpu.memory_space<vmem>>, vector<1x16x32xbf16>,
      %cst_5 = arith.constant 0.000000e+00 : f32
      %15 = vector.broadcast %cst_5 : f32 to vector<16x16xf32>
      %c0_6 = arith.constant 0 : index
      %c0_7 = arith.constant 0 : index
      %c0_8 = arith.constant 0 : index
      %16 = vector.load %arg21[%c0_6, %c0_7, %c0_8] : memref<1x16x16xf32, #tpu.memory_space<vmem>>, vector<1x16x16xf32>
      %17 = vector.shape_cast %16 : vector<1x16x16xf32> to vector<16x16xf32>
      %18 = vector.shape_cast %15 : vector<16x16xf32> to vector<1x16x16xf32>
      tpu.vector_store %arg21[%c0_6, %c0_7, %c0_8], %18 {strides = array<i32>} : memref<1x16x16xf32, #tpu.memory_space<vmem>>, vector<1x16x16xf32>,
    } else {
    }
    return
  }
  func.func @transform_0(%arg0: i32, %arg1: i32, %arg2: memref<1xi32, #tpu.memory_space<smem>>) -> (i32, i32, i32) {
    %c0_i32 = arith.constant 0 : i32
    %c0_i32_0 = arith.constant 0 : i32
    %c0_i32_1 = arith.constant 0 : i32
    return %arg0, %c0_i32, %c0_i32_0 : i32, i32, i32
  }
  func.func @transform_1(%arg0: i32, %arg1: i32, %arg2: memref<1xi32, #tpu.memory_space<smem>>) -> (i32, i32, i32) {
    %c0_i32 = arith.constant 0 : i32
    %c0_i32_0 = arith.constant 0 : i32
    return %arg1, %arg0, %c0_i32 : i32, i32, i32
  }
  func.func @transform_2(%arg0: i32, %arg1: i32, %arg2: memref<1xi32, #tpu.memory_space<smem>>) -> (i32, i32) {
    %c0_i32 = arith.constant 0 : i32
    %c0_i32_0 = arith.constant 0 : i32
    return %arg0, %c0_i32 : i32, i32
  }
  func.func @transform_3(%arg0: i32, %arg1: i32, %arg2: memref<1xi32, #tpu.memory_space<smem>>) -> (i32, i32) {
    %c0_i32 = arith.constant 0 : i32
    %c0_i32_0 = arith.constant 0 : i32
    %c0_i32_1 = arith.constant 0 : i32
    return %c0_i32, %c0_i32_0 : i32, i32
  }
  func.func @transform_4(%arg0: i32, %arg1: i32, %arg2: memref<1xi32, #tpu.memory_space<smem>>) -> (i32, i32) {
    %c0_i32 = arith.constant 0 : i32
    %c0_i32_0 = arith.constant 0 : i32
    %c0_i32_1 = arith.constant 0 : i32
    return %c0_i32, %c0_i32_0 : i32, i32
  }
  func.func @transform_5(%arg0: i32, %arg1: i32, %arg2: memref<1xi32, #tpu.memory_space<smem>>) -> (i32, i32) {
    %c0_i32 = arith.constant 0 : i32
    %c0_i32_0 = arith.constant 0 : i32
    %c0_i32_1 = arith.constant 0 : i32
    return %c0_i32, %c0_i32_0 : i32, i32
  }
  func.func @transform_6(%arg0: i32, %arg1: i32, %arg2: memref<1xi32, #tpu.memory_space<smem>>) -> (i32, i32) {
    %c0_i32 = arith.constant 0 : i32
    %c0_i32_0 = arith.constant 0 : i32
    %c0_i32_1 = arith.constant 0 : i32
    return %c0_i32, %c0_i32_0 : i32, i32
  }
  func.func @transform_7(%arg0: i32, %arg1: i32, %arg2: memref<1xi32, #tpu.memory_space<smem>>) -> (i32, i32) {
    %c0_i32 = arith.constant 0 : i32
    %c0_i32_0 = arith.constant 0 : i32
    %c0_i32_1 = arith.constant 0 : i32
    return %c0_i32, %c0_i32_0 : i32, i32
  }
  func.func @transform_8(%arg0: i32, %arg1: i32, %arg2: memref<1xi32, #tpu.memory_space<smem>>) -> (i32, i32) {
    %c0_i32 = arith.constant 0 : i32
    %c0_i32_0 = arith.constant 0 : i32
    %c0_i32_1 = arith.constant 0 : i32
    return %c0_i32, %c0_i32_0 : i32, i32
  }
  func.func @transform_9(%arg0: i32, %arg1: i32, %arg2: memref<1xi32, #tpu.memory_space<smem>>) -> (i32, i32) {
    %c0_i32 = arith.constant 0 : i32
    %c0_i32_0 = arith.constant 0 : i32
    %c0_i32_1 = arith.constant 0 : i32
    return %c0_i32, %c0_i32_0 : i32, i32
  }
  func.func @transform_10(%arg0: i32, %arg1: i32, %arg2: memref<1xi32, #tpu.memory_space<smem>>) -> (i32, i32) {
    %c0_i32 = arith.constant 0 : i32
    %c0_i32_0 = arith.constant 0 : i32
    %c0_i32_1 = arith.constant 0 : i32
    return %c0_i32, %c0_i32_0 : i32, i32
  }
  func.func @transform_11(%arg0: i32, %arg1: i32, %arg2: memref<1xi32, #tpu.memory_space<smem>>) -> (i32, i32) {
    %c0_i32 = arith.constant 0 : i32
    %c0_i32_0 = arith.constant 0 : i32
    %c0_i32_1 = arith.constant 0 : i32
    return %c0_i32, %c0_i32_0 : i32, i32
  }
  func.func @transform_12(%arg0: i32, %arg1: i32, %arg2: memref<1xi32, #tpu.memory_space<smem>>) -> (i32, i32) {
    %c0_i32 = arith.constant 0 : i32
    %c0_i32_0 = arith.constant 0 : i32
    %c0_i32_1 = arith.constant 0 : i32
    return %c0_i32, %c0_i32_0 : i32, i32
  }
  func.func @transform_13(%arg0: i32, %arg1: i32, %arg2: memref<1xi32, #tpu.memory_space<smem>>) -> (i32, i32) {
    %c0_i32 = arith.constant 0 : i32
    %c0_i32_0 = arith.constant 0 : i32
    %c0_i32_1 = arith.constant 0 : i32
    return %c0_i32, %c0_i32_0 : i32, i32
  }
  func.func @transform_14(%arg0: i32, %arg1: i32, %arg2: memref<1xi32, #tpu.memory_space<smem>>) -> (i32, i32) {
    %c0_i32 = arith.constant 0 : i32
    %c0_i32_0 = arith.constant 0 : i32
    %c0_i32_1 = arith.constant 0 : i32
    return %c0_i32, %c0_i32_0 : i32, i32
  }
  func.func @transform_15(%arg0: i32, %arg1: i32, %arg2: memref<1xi32, #tpu.memory_space<smem>>) -> (i32, i32) {
    %c0_i32 = arith.constant 0 : i32
    %c0_i32_0 = arith.constant 0 : i32
    %c0_i32_1 = arith.constant 0 : i32
    return %c0_i32, %c0_i32_0 : i32, i32
  }
  func.func @transform_16(%arg0: i32, %arg1: i32, %arg2: memref<1xi32, #tpu.memory_space<smem>>) -> (i32, i32) {
    %c0_i32 = arith.constant 0 : i32
    %c0_i32_0 = arith.constant 0 : i32
    %c0_i32_1 = arith.constant 0 : i32
    return %c0_i32, %c0_i32_0 : i32, i32
  }
  func.func @transform_17(%arg0: i32, %arg1: i32, %arg2: memref<1xi32, #tpu.memory_space<smem>>) -> (i32, i32, i32) {
    %c0_i32 = arith.constant 0 : i32
    %c0_i32_0 = arith.constant 0 : i32
    return %arg1, %arg0, %c0_i32 : i32, i32, i32
  }
  func.func @transform_18(%arg0: i32, %arg1: i32, %arg2: memref<1xi32, #tpu.memory_space<smem>>) -> (i32, i32, i32) {
    %c0_i32 = arith.constant 0 : i32
    %c0_i32_0 = arith.constant 0 : i32
    return %arg1, %arg0, %c0_i32 : i32, i32, i32
  }
}

module attributes {stable_mosaic.version = 11 : i64} {
  func.func @decoder_step_kernel(%arg0: i32, %arg1: i32, %arg2: memref<1xi32, #tpu.memory_space<smem>>, %arg3: memref<16x16x32xbf16, #tpu.memory_space<vmem>>, %arg4: memref<1x16x32xbf16, #tpu.memory_space<vmem>>, %arg5: memref<16x1xi32, #tpu.memory_space<vmem>>, %arg6: memref<32x32xbf16, #tpu.memory_space<vmem>>, %arg7: memref<1x32xf32, #tpu.memory_space<vmem>>, %arg8: memref<32x32xbf16, #tpu.memory_space<vmem>>, %arg9: memref<1x32xf32, #tpu.memory_space<vmem>>, %arg10: memref<32x32xbf16, #tpu.memory_space<vmem>>, %arg11: memref<1x32xf32, #tpu.memory_space<vmem>>, %arg12: memref<32x32xbf16, #tpu.memory_space<vmem>>, %arg13: memref<1x32xf32, #tpu.memory_space<vmem>>, %arg14: memref<1x32xf32, #tpu.memory_space<vmem>>, %arg15: memref<1x1xf32, #tpu.memory_space<vmem>>, %arg16: memref<32x32xbf16, #tpu.memory_space<vmem>>, %arg17: memref<1x32xf32, #tpu.memory_space<vmem>>, %arg18: memref<96x128xbf16, #tpu.memory_space<vmem>>, %arg19: memref<1x128xf32, #tpu.memory_space<vmem>>, %arg20: memref<1x16x32xbf16, #tpu.memory_space<vmem>>, %arg21: memref<1x16x16xf32, #tpu.memory_space<vmem>>, %arg22: memref<16x32xf32, #tpu.memory_space<vmem>>, %arg23: memref<16x32xf32, #tpu.memory_space<vmem>>, %arg24: memref<16x16x32xbf16, #tpu.memory_space<vmem>>) attributes {dimension_semantics = [#tpu.dimension_semantics<parallel>, #tpu.dimension_semantics<arbitrary>], iteration_bounds = array<i64: 1, 7>, scalar_prefetch = 1 : i64, scratch_operands = 3 : i64, tpu.core_type = #tpu.core_type<tc>, window_params = [{transform_indices = @transform_0, window_bounds = array<i64: 16, 16, 32>}, {transform_indices = @transform_1, window_bounds = array<i64: 1, 16, 32>}, {transform_indices = @transform_2, window_bounds = array<i64: 16, 1>}, {pipeline_mode = #tpu.pipeline_mode<synchronous>, transform_indices = @transform_3, window_bounds = array<i64: 32, 32>}, {pipeline_mode = #tpu.pipeline_mode<synchronous>, transform_indices = @transform_4, window_bounds = array<i64: 1, 32>}, {pipeline_mode = #tpu.pipeline_mode<synchronous>, transform_indices = @transform_5, window_bounds = array<i64: 32, 32>}, {pipeline_mode = #tpu.pipeline_mode<synchronous>, transform_indices = @transform_6, window_bounds = array<i64: 1, 32>}, {pipeline_mode = #tpu.pipeline_mode<synchronous>, transform_indices = @transform_7, window_bounds = array<i64: 32, 32>}, {pipeline_mode = #tpu.pipeline_mode<synchronous>, transform_indices = @transform_8, window_bounds = array<i64: 1, 32>}, {pipeline_mode = #tpu.pipeline_mode<synchronous>, transform_indices = @transform_9, window_bounds = array<i64: 32, 32>}, {pipeline_mode = #tpu.pipeline_mode<synchronous>, transform_indices = @transform_10, window_bounds = array<i64: 1, 32>}, {pipeline_mode = #tpu.pipeline_mode<synchronous>, transform_indices = @transform_11, window_bounds = array<i64: 1, 32>}, {pipeline_mode = #tpu.pipeline_mode<synchronous>, transform_indices = @transform_12, window_bounds = array<i64: 1, 1>}, {pipeline_mode = #tpu.pipeline_mode<synchronous>, transform_indices = @transform_13, window_bounds = array<i64: 32, 32>}, {pipeline_mode = #tpu.pipeline_mode<synchronous>, transform_indices = @transform_14, window_bounds = array<i64: 1, 32>}, {pipeline_mode = #tpu.pipeline_mode<synchronous>, transform_indices = @transform_15, window_bounds = array<i64: 96, 128>}, {pipeline_mode = #tpu.pipeline_mode<synchronous>, transform_indices = @transform_16, window_bounds = array<i64: 1, 128>}, {transform_indices = @transform_17, window_bounds = array<i64: 1, 16, 32>}, {transform_indices = @transform_18, window_bounds = array<i64: 1, 16, 16>}]} {
    %c0 = arith.constant 0 : index
    %c0_0 = arith.constant 0 : index
    %0 = vector.load %arg5[%c0, %c0_0] : memref<16x1xi32, #tpu.memory_space<vmem>>, vector<16x1xi32>
    %1 = vector.broadcast %arg1 : i32 to vector<16x1xi32>
    %2 = arith.cmpi sgt, %0, %1 : vector<16x1xi32>
    %3 = arith.index_cast %arg0 : i32 to index
    %4 = memref.load %arg2[%3] : memref<1xi32, #tpu.memory_space<smem>>
    %5 = arith.cmpi sgt, %4, %arg1 : i32
    %6 = arith.extui %5 : i1 to i32
    %c0_i32 = arith.constant 0 : i32
    %7 = arith.cmpi ne, %6, %c0_i32 : i32
    scf.if %7 {
      %c0_2 = arith.constant 0 : index
      %c0_3 = arith.constant 0 : index
      %c0_4 = arith.constant 0 : index
      %11 = vector.load %arg3[%c0_2, %c0_3, %c0_4] : memref<16x16x32xbf16, #tpu.memory_space<vmem>>, vector<16x16x32xbf16>
      %c0_i32_5 = arith.constant 0 : i32
      %12 = arith.cmpi eq, %arg1, %c0_i32_5 : i32
      %13 = arith.extui %12 : i1 to i32
      %c0_i32_6 = arith.constant 0 : i32
      %14 = arith.cmpi ne, %13, %c0_i32_6 : i32
      scf.if %14 {
        %120 = arith.extf %11 : vector<16x16x32xbf16> to vector<16x16x32xf32>
        %cst_56 = arith.constant dense<0.000000e+00> : vector<16x32xf32>
        %121 = vector.multi_reduction <add>, %120, %cst_56 [1] : vector<16x16x32xf32> to vector<16x32xf32>
        %cst_57 = arith.constant 6.250000e-02 : f32
        %122 = vector.broadcast %cst_57 : f32 to vector<16x32xf32>
        %123 = arith.mulf %121, %122 : vector<16x32xf32>
        %124 = arith.truncf %123 : vector<16x32xf32> to vector<16x32xbf16>
        %c0_58 = arith.constant 0 : index
        %c0_59 = arith.constant 0 : index
        %125 = vector.load %arg6[%c0_58, %c0_59] : memref<32x32xbf16, #tpu.memory_space<vmem>>, vector<32x32xbf16>
        %cst_60 = arith.constant dense<0.000000e+00> : vector<16x32xf32>
        %126 = tpu.matmul %124, %125, %cst_60 {dimension_numbers = #tpu.dot_dimension_numbers<[1], [0], [0], [1], [0, 0, 1, 1], [], []>} : vector<16x32xbf16>, vector<32x32xbf16>, vector<16x32xf32> -> vector<16x32xf32>
        %c0_61 = arith.constant 0 : index
        %c0_62 = arith.constant 0 : index
        %127 = vector.load %arg7[%c0_61, %c0_62] : memref<1x32xf32, #tpu.memory_space<vmem>>, vector<1x32xf32>
        %128 = vector.broadcast %127 : vector<1x32xf32> to vector<16x32xf32>
        %129 = arith.addf %126, %128 : vector<16x32xf32>
        %c0_63 = arith.constant 0 : index
        %c0_64 = arith.constant 0 : index
        %130 = vector.load %arg22[%c0_63, %c0_64] : memref<16x32xf32, #tpu.memory_space<vmem>>, vector<16x32xf32>
        tpu.vector_store %arg22[%c0_63, %c0_64], %129 {strides = array<i32>} : memref<16x32xf32, #tpu.memory_space<vmem>>, vector<16x32xf32>,
        %c0_65 = arith.constant 0 : index
        %c0_66 = arith.constant 0 : index
        %131 = vector.load %arg8[%c0_65, %c0_66] : memref<32x32xbf16, #tpu.memory_space<vmem>>, vector<32x32xbf16>
        %cst_67 = arith.constant dense<0.000000e+00> : vector<16x32xf32>
        %132 = tpu.matmul %124, %131, %cst_67 {dimension_numbers = #tpu.dot_dimension_numbers<[1], [0], [0], [1], [0, 0, 1, 1], [], []>} : vector<16x32xbf16>, vector<32x32xbf16>, vector<16x32xf32> -> vector<16x32xf32>
        %c0_68 = arith.constant 0 : index
        %c0_69 = arith.constant 0 : index
        %133 = vector.load %arg9[%c0_68, %c0_69] : memref<1x32xf32, #tpu.memory_space<vmem>>, vector<1x32xf32>
        %134 = vector.broadcast %133 : vector<1x32xf32> to vector<16x32xf32>
        %135 = arith.addf %132, %134 : vector<16x32xf32>
        %c0_70 = arith.constant 0 : index
        %c0_71 = arith.constant 0 : index
        %136 = vector.load %arg23[%c0_70, %c0_71] : memref<16x32xf32, #tpu.memory_space<vmem>>, vector<16x32xf32>
        tpu.vector_store %arg23[%c0_70, %c0_71], %135 {strides = array<i32>} : memref<16x32xf32, #tpu.memory_space<vmem>>, vector<16x32xf32>,
        %137 = vector.shape_cast %11 : vector<16x16x32xbf16> to vector<256x32xbf16>
        %c0_72 = arith.constant 0 : index
        %c0_73 = arith.constant 0 : index
        %138 = vector.load %arg10[%c0_72, %c0_73] : memref<32x32xbf16, #tpu.memory_space<vmem>>, vector<32x32xbf16>
        %cst_74 = arith.constant dense<0.000000e+00> : vector<256x32xf32>
        %139 = tpu.matmul %137, %138, %cst_74 {dimension_numbers = #tpu.dot_dimension_numbers<[1], [0], [0], [1], [0, 0, 1, 1], [], []>} : vector<256x32xbf16>, vector<32x32xbf16>, vector<256x32xf32> -> vector<256x32xf32>
        %c0_75 = arith.constant 0 : index
        %c0_76 = arith.constant 0 : index
        %140 = vector.load %arg11[%c0_75, %c0_76] : memref<1x32xf32, #tpu.memory_space<vmem>>, vector<1x32xf32>
        %141 = vector.broadcast %140 : vector<1x32xf32> to vector<256x32xf32>
        %142 = arith.addf %139, %141 : vector<256x32xf32>
        %143 = vector.shape_cast %142 : vector<256x32xf32> to vector<16x16x32xf32>
        %144 = arith.truncf %143 : vector<16x16x32xf32> to vector<16x16x32xbf16>
        %c0_77 = arith.constant 0 : index
        %c0_78 = arith.constant 0 : index
        %c0_79 = arith.constant 0 : index
        %145 = vector.load %arg24[%c0_77, %c0_78, %c0_79] : memref<16x16x32xbf16, #tpu.memory_space<vmem>>, vector<16x16x32xbf16>
        tpu.vector_store %arg24[%c0_77, %c0_78, %c0_79], %144 {strides = array<i32>} : memref<16x16x32xbf16, #tpu.memory_space<vmem>>, vector<16x16x32xbf16>,
      } else {
      }
      %c0_7 = arith.constant 0 : index
      %c0_8 = arith.constant 0 : index
      %15 = vector.load %arg22[%c0_7, %c0_8] : memref<16x32xf32, #tpu.memory_space<vmem>>, vector<16x32xf32>
      %c0_9 = arith.constant 0 : index
      %c0_10 = arith.constant 0 : index
      %16 = vector.load %arg23[%c0_9, %c0_10] : memref<16x32xf32, #tpu.memory_space<vmem>>, vector<16x32xf32>
      %17 = arith.truncf %15 : vector<16x32xf32> to vector<16x32xbf16>
      %c0_11 = arith.constant 0 : index
      %c0_12 = arith.constant 0 : index
      %18 = vector.load %arg12[%c0_11, %c0_12] : memref<32x32xbf16, #tpu.memory_space<vmem>>, vector<32x32xbf16>
      %cst = arith.constant dense<0.000000e+00> : vector<16x32xf32>
      %19 = tpu.matmul %17, %18, %cst {dimension_numbers = #tpu.dot_dimension_numbers<[1], [0], [0], [1], [0, 0, 1, 1], [], []>} : vector<16x32xbf16>, vector<32x32xbf16>, vector<16x32xf32> -> vector<16x32xf32>
      %c0_13 = arith.constant 0 : index
      %c0_14 = arith.constant 0 : index
      %20 = vector.load %arg13[%c0_13, %c0_14] : memref<1x32xf32, #tpu.memory_space<vmem>>, vector<1x32xf32>
      %21 = vector.broadcast %20 : vector<1x32xf32> to vector<16x32xf32>
      %22 = arith.addf %19, %21 : vector<16x32xf32>
      %c0_15 = arith.constant 0 : index
      %c0_16 = arith.constant 0 : index
      %c0_17 = arith.constant 0 : index
      %23 = vector.load %arg24[%c0_15, %c0_16, %c0_17] : memref<16x16x32xbf16, #tpu.memory_space<vmem>>, vector<16x16x32xbf16>
      %24 = arith.extf %23 : vector<16x16x32xbf16> to vector<16x16x32xf32>
      %25 = vector.shape_cast %22 : vector<16x32xf32> to vector<16x1x32xf32>
      %26 = vector.broadcast %25 : vector<16x1x32xf32> to vector<16x16x32xf32>
      %27 = arith.addf %24, %26 : vector<16x16x32xf32>
      %cst_18 = arith.constant 0.000000e+00 : f32
      %28 = vector.broadcast %cst_18 : f32 to vector<16x16x32xf32>
      %29 = arith.maximumf %27, %28 : vector<16x16x32xf32>
      %c0_19 = arith.constant 0 : index
      %c0_20 = arith.constant 0 : index
      %30 = vector.load %arg14[%c0_19, %c0_20] : memref<1x32xf32, #tpu.memory_space<vmem>>, vector<1x32xf32>
      %31 = vector.shape_cast %30 : vector<1x32xf32> to vector<1x1x32xf32>
      %32 = vector.broadcast %31 : vector<1x1x32xf32> to vector<16x16x32xf32>
      %33 = arith.mulf %29, %32 : vector<16x16x32xf32>
      %cst_21 = arith.constant dense<0.000000e+00> : vector<16x16xf32>
      %34 = vector.multi_reduction <add>, %33, %cst_21 [2] : vector<16x16x32xf32> to vector<16x16xf32>
      %c0_22 = arith.constant 0 : index
      %c0_23 = arith.constant 0 : index
      %35 = vector.load %arg15[%c0_22, %c0_23] : memref<1x1xf32, #tpu.memory_space<vmem>>, vector<1x1xf32>
      %36 = vector.broadcast %35 : vector<1x1xf32> to vector<16x16xf32>
      %37 = arith.addf %34, %36 : vector<16x16xf32>
      %cst_24 = arith.constant dense<0xFF800000> : vector<16xf32>
      %38 = vector.multi_reduction <maximumf>, %37, %cst_24 [1] : vector<16x16xf32> to vector<16xf32>
      %39 = vector.shape_cast %38 : vector<16xf32> to vector<16x1xf32>
      %40 = vector.broadcast %39 : vector<16x1xf32> to vector<16x16xf32>
      %41 = arith.subf %37, %40 : vector<16x16xf32>
      %42 = math.exp %41 : vector<16x16xf32>
      %cst_25 = arith.constant dense<0.000000e+00> : vector<16xf32>
      %43 = vector.multi_reduction <add>, %42, %cst_25 [1] : vector<16x16xf32> to vector<16xf32>
      %44 = vector.shape_cast %43 : vector<16xf32> to vector<16x1xf32>
      %45 = vector.broadcast %44 : vector<16x1xf32> to vector<16x16xf32>
      %46 = arith.divf %42, %45 : vector<16x16xf32>
      %47 = arith.extf %11 : vector<16x16x32xbf16> to vector<16x16x32xf32>
      %48 = vector.shape_cast %46 : vector<16x16xf32> to vector<16x16x1xf32>
      %49 = vector.broadcast %48 : vector<16x16x1xf32> to vector<16x16x32xf32>
      %50 = arith.mulf %47, %49 : vector<16x16x32xf32>
      %cst_26 = arith.constant dense<0.000000e+00> : vector<16x32xf32>
      %51 = vector.multi_reduction <add>, %50, %cst_26 [1] : vector<16x16x32xf32> to vector<16x32xf32>
      %c0_27 = arith.constant 0 : index
      %c0_28 = arith.constant 0 : index
      %52 = vector.load %arg16[%c0_27, %c0_28] : memref<32x32xbf16, #tpu.memory_space<vmem>>, vector<32x32xbf16>
      %cst_29 = arith.constant dense<0.000000e+00> : vector<16x32xf32>
      %53 = tpu.matmul %17, %52, %cst_29 {dimension_numbers = #tpu.dot_dimension_numbers<[1], [0], [0], [1], [0, 0, 1, 1], [], []>} : vector<16x32xbf16>, vector<32x32xbf16>, vector<16x32xf32> -> vector<16x32xf32>
      %c0_30 = arith.constant 0 : index
      %c0_31 = arith.constant 0 : index
      %54 = vector.load %arg17[%c0_30, %c0_31] : memref<1x32xf32, #tpu.memory_space<vmem>>, vector<1x32xf32>
      %55 = vector.broadcast %54 : vector<1x32xf32> to vector<16x32xf32>
      %56 = arith.addf %53, %55 : vector<16x32xf32>
      %57 = arith.negf %56 : vector<16x32xf32>
      %58 = math.exp %57 : vector<16x32xf32>
      %cst_32 = arith.constant 1.000000e+00 : f32
      %59 = vector.broadcast %cst_32 : f32 to vector<16x32xf32>
      %60 = arith.addf %59, %58 : vector<16x32xf32>
      %61 = arith.divf %59, %60 : vector<16x32xf32>
      %62 = arith.mulf %61, %51 : vector<16x32xf32>
      %c0_33 = arith.constant 0 : index
      %c0_34 = arith.constant 0 : index
      %c0_35 = arith.constant 0 : index
      %63 = vector.load %arg4[%c0_33, %c0_34, %c0_35] : memref<1x16x32xbf16, #tpu.memory_space<vmem>>, vector<1x16x32xbf16>
      %64 = vector.shape_cast %63 : vector<1x16x32xbf16> to vector<16x32xbf16>
      %65 = arith.truncf %62 : vector<16x32xf32> to vector<16x32xbf16>
      %66 = tpu.concatenate %64, %65, %17 in 1 : vector<16x32xbf16>, vector<16x32xbf16>, vector<16x32xbf16> -> vector<16x96xbf16>
      %c0_36 = arith.constant 0 : index
      %c0_37 = arith.constant 0 : index
      %67 = vector.load %arg18[%c0_36, %c0_37] : memref<96x128xbf16, #tpu.memory_space<vmem>>, vector<96x128xbf16>
      %cst_38 = arith.constant dense<0.000000e+00> : vector<16x128xf32>
      %68 = tpu.matmul %66, %67, %cst_38 {dimension_numbers = #tpu.dot_dimension_numbers<[1], [0], [0], [1], [0, 0, 1, 1], [], []>} : vector<16x96xbf16>, vector<96x128xbf16>, vector<16x128xf32> -> vector<16x128xf32>
      %c0_39 = arith.constant 0 : index
      %c0_40 = arith.constant 0 : index
      %69 = vector.load %arg19[%c0_39, %c0_40] : memref<1x128xf32, #tpu.memory_space<vmem>>, vector<1x128xf32>
      %70 = vector.broadcast %69 : vector<1x128xf32> to vector<16x128xf32>
      %71 = arith.addf %68, %70 : vector<16x128xf32>
      %72 = vector.extract_strided_slice %71 {offsets = [0, 0], sizes = [16, 32], strides = [1, 1]} : vector<16x128xf32> to vector<16x32xf32>
      %73 = arith.negf %72 : vector<16x32xf32>
      %74 = math.exp %73 : vector<16x32xf32>
      %cst_41 = arith.constant 1.000000e+00 : f32
      %75 = vector.broadcast %cst_41 : f32 to vector<16x32xf32>
      %76 = arith.addf %75, %74 : vector<16x32xf32>
      %77 = arith.divf %75, %76 : vector<16x32xf32>
      %78 = vector.extract_strided_slice %71 {offsets = [0, 32], sizes = [16, 32], strides = [1, 1]} : vector<16x128xf32> to vector<16x32xf32>
      %79 = arith.negf %78 : vector<16x32xf32>
      %80 = math.exp %79 : vector<16x32xf32>
      %cst_42 = arith.constant 1.000000e+00 : f32
      %81 = vector.broadcast %cst_42 : f32 to vector<16x32xf32>
      %82 = arith.addf %81, %80 : vector<16x32xf32>
      %83 = arith.divf %81, %82 : vector<16x32xf32>
      %84 = vector.extract_strided_slice %71 {offsets = [0, 64], sizes = [16, 32], strides = [1, 1]} : vector<16x128xf32> to vector<16x32xf32>
      %85 = math.tanh %84 : vector<16x32xf32>
      %86 = vector.extract_strided_slice %71 {offsets = [0, 96], sizes = [16, 32], strides = [1, 1]} : vector<16x128xf32> to vector<16x32xf32>
      %87 = arith.negf %86 : vector<16x32xf32>
      %88 = math.exp %87 : vector<16x32xf32>
      %cst_43 = arith.constant 1.000000e+00 : f32
      %89 = vector.broadcast %cst_43 : f32 to vector<16x32xf32>
      %90 = arith.addf %89, %88 : vector<16x32xf32>
      %91 = arith.divf %89, %90 : vector<16x32xf32>
      %92 = arith.mulf %83, %16 : vector<16x32xf32>
      %93 = arith.mulf %77, %85 : vector<16x32xf32>
      %94 = arith.addf %92, %93 : vector<16x32xf32>
      %95 = math.tanh %94 : vector<16x32xf32>
      %96 = arith.mulf %91, %95 : vector<16x32xf32>
      %97 = vector.shape_cast %2 : vector<16x1xi1> to vector<16x1xi1>
      %98 = vector.broadcast %97 : vector<16x1xi1> to vector<16x32xi1>
      %99 = arith.select %98, %96, %15 : vector<16x32xi1>, vector<16x32xf32>
      %c0_44 = arith.constant 0 : index
      %c0_45 = arith.constant 0 : index
      %100 = vector.load %arg22[%c0_44, %c0_45] : memref<16x32xf32, #tpu.memory_space<vmem>>, vector<16x32xf32>
      tpu.vector_store %arg22[%c0_44, %c0_45], %99 {strides = array<i32>} : memref<16x32xf32, #tpu.memory_space<vmem>>, vector<16x32xf32>,
      %101 = vector.shape_cast %2 : vector<16x1xi1> to vector<16x1xi1>
      %102 = vector.broadcast %101 : vector<16x1xi1> to vector<16x32xi1>
      %103 = arith.select %102, %94, %16 : vector<16x32xi1>, vector<16x32xf32>
      %c0_46 = arith.constant 0 : index
      %c0_47 = arith.constant 0 : index
      %104 = vector.load %arg23[%c0_46, %c0_47] : memref<16x32xf32, #tpu.memory_space<vmem>>, vector<16x32xf32>
      tpu.vector_store %arg23[%c0_46, %c0_47], %103 {strides = array<i32>} : memref<16x32xf32, #tpu.memory_space<vmem>>, vector<16x32xf32>,
      %cst_48 = arith.constant 0.000000e+00 : f32
      %105 = vector.shape_cast %2 : vector<16x1xi1> to vector<16x1xi1>
      %106 = vector.broadcast %105 : vector<16x1xi1> to vector<16x32xi1>
      %107 = vector.broadcast %cst_48 : f32 to vector<16x32xf32>
      %108 = arith.select %106, %96, %107 : vector<16x32xi1>, vector<16x32xf32>
      %109 = arith.truncf %108 : vector<16x32xf32> to vector<16x32xbf16>
      %c0_49 = arith.constant 0 : index
      %c0_50 = arith.constant 0 : index
      %c0_51 = arith.constant 0 : index
      %110 = vector.load %arg20[%c0_49, %c0_50, %c0_51] : memref<1x16x32xbf16, #tpu.memory_space<vmem>>, vector<1x16x32xbf16>
      %111 = vector.shape_cast %110 : vector<1x16x32xbf16> to vector<16x32xbf16>
      %112 = vector.shape_cast %109 : vector<16x32xbf16> to vector<1x16x32xbf16>
      tpu.vector_store %arg20[%c0_49, %c0_50, %c0_51], %112 {strides = array<i32>} : memref<1x16x32xbf16, #tpu.memory_space<vmem>>, vector<1x16x32xbf16>,
      %cst_52 = arith.constant 0.000000e+00 : f32
      %113 = vector.shape_cast %2 : vector<16x1xi1> to vector<16x1xi1>
      %114 = vector.broadcast %113 : vector<16x1xi1> to vector<16x16xi1>
      %115 = vector.broadcast %cst_52 : f32 to vector<16x16xf32>
      %116 = arith.select %114, %46, %115 : vector<16x16xi1>, vector<16x16xf32>
      %c0_53 = arith.constant 0 : index
      %c0_54 = arith.constant 0 : index
      %c0_55 = arith.constant 0 : index
      %117 = vector.load %arg21[%c0_53, %c0_54, %c0_55] : memref<1x16x16xf32, #tpu.memory_space<vmem>>, vector<1x16x16xf32>
      %118 = vector.shape_cast %117 : vector<1x16x16xf32> to vector<16x16xf32>
      %119 = vector.shape_cast %116 : vector<16x16xf32> to vector<1x16x16xf32>
      tpu.vector_store %arg21[%c0_53, %c0_54, %c0_55], %119 {strides = array<i32>} : memref<1x16x16xf32, #tpu.memory_space<vmem>>, vector<1x16x16xf32>,
    } else {
    }
    %true = arith.constant true
    %8 = arith.xori %5, %true : i1
    %9 = arith.extui %8 : i1 to i32
    %c0_i32_1 = arith.constant 0 : i32
    %10 = arith.cmpi ne, %9, %c0_i32_1 : i32
    scf.if %10 {
      %cst = arith.constant 0.000000e+00 : bf16
      %11 = vector.broadcast %cst : bf16 to vector<16x32xbf16>
      %c0_2 = arith.constant 0 : index
      %c0_3 = arith.constant 0 : index
      %c0_4 = arith.constant 0 : index
      %12 = vector.load %arg20[%c0_2, %c0_3, %c0_4] : memref<1x16x32xbf16, #tpu.memory_space<vmem>>, vector<1x16x32xbf16>
      %13 = vector.shape_cast %12 : vector<1x16x32xbf16> to vector<16x32xbf16>
      %14 = vector.shape_cast %11 : vector<16x32xbf16> to vector<1x16x32xbf16>
      tpu.vector_store %arg20[%c0_2, %c0_3, %c0_4], %14 {strides = array<i32>} : memref<1x16x32xbf16, #tpu.memory_space<vmem>>, vector<1x16x32xbf16>,
      %cst_5 = arith.constant 0.000000e+00 : f32
      %15 = vector.broadcast %cst_5 : f32 to vector<16x16xf32>
      %c0_6 = arith.constant 0 : index
      %c0_7 = arith.constant 0 : index
      %c0_8 = arith.constant 0 : index
      %16 = vector.load %arg21[%c0_6, %c0_7, %c0_8] : memref<1x16x16xf32, #tpu.memory_space<vmem>>, vector<1x16x16xf32>
      %17 = vector.shape_cast %16 : vector<1x16x16xf32> to vector<16x16xf32>
      %18 = vector.shape_cast %15 : vector<16x16xf32> to vector<1x16x16xf32>
      tpu.vector_store %arg21[%c0_6, %c0_7, %c0_8], %18 {strides = array<i32>} : memref<1x16x16xf32, #tpu.memory_space<vmem>>, vector<1x16x16xf32>,
    } else {
    }
    return
  }
  func.func @transform_0(%arg0: i32, %arg1: i32, %arg2: memref<1xi32, #tpu.memory_space<smem>>) -> (i32, i32, i32) {
    %c0_i32 = arith.constant 0 : i32
    %c0_i32_0 = arith.constant 0 : i32
    %c0_i32_1 = arith.constant 0 : i32
    return %arg0, %c0_i32, %c0_i32_0 : i32, i32, i32
  }
  func.func @transform_1(%arg0: i32, %arg1: i32, %arg2: memref<1xi32, #tpu.memory_space<smem>>) -> (i32, i32, i32) {
    %c0_i32 = arith.constant 0 : i32
    %c0_i32_0 = arith.constant 0 : i32
    return %arg1, %arg0, %c0_i32 : i32, i32, i32
  }
  func.func @transform_2(%arg0: i32, %arg1: i32, %arg2: memref<1xi32, #tpu.memory_space<smem>>) -> (i32, i32) {
    %c0_i32 = arith.constant 0 : i32
    %c0_i32_0 = arith.constant 0 : i32
    return %arg0, %c0_i32 : i32, i32
  }
  func.func @transform_3(%arg0: i32, %arg1: i32, %arg2: memref<1xi32, #tpu.memory_space<smem>>) -> (i32, i32) {
    %c0_i32 = arith.constant 0 : i32
    %c0_i32_0 = arith.constant 0 : i32
    %c0_i32_1 = arith.constant 0 : i32
    return %c0_i32, %c0_i32_0 : i32, i32
  }
  func.func @transform_4(%arg0: i32, %arg1: i32, %arg2: memref<1xi32, #tpu.memory_space<smem>>) -> (i32, i32) {
    %c0_i32 = arith.constant 0 : i32
    %c0_i32_0 = arith.constant 0 : i32
    %c0_i32_1 = arith.constant 0 : i32
    return %c0_i32, %c0_i32_0 : i32, i32
  }
  func.func @transform_5(%arg0: i32, %arg1: i32, %arg2: memref<1xi32, #tpu.memory_space<smem>>) -> (i32, i32) {
    %c0_i32 = arith.constant 0 : i32
    %c0_i32_0 = arith.constant 0 : i32
    %c0_i32_1 = arith.constant 0 : i32
    return %c0_i32, %c0_i32_0 : i32, i32
  }
  func.func @transform_6(%arg0: i32, %arg1: i32, %arg2: memref<1xi32, #tpu.memory_space<smem>>) -> (i32, i32) {
    %c0_i32 = arith.constant 0 : i32
    %c0_i32_0 = arith.constant 0 : i32
    %c0_i32_1 = arith.constant 0 : i32
    return %c0_i32, %c0_i32_0 : i32, i32
  }
  func.func @transform_7(%arg0: i32, %arg1: i32, %arg2: memref<1xi32, #tpu.memory_space<smem>>) -> (i32, i32) {
    %c0_i32 = arith.constant 0 : i32
    %c0_i32_0 = arith.constant 0 : i32
    %c0_i32_1 = arith.constant 0 : i32
    return %c0_i32, %c0_i32_0 : i32, i32
  }
  func.func @transform_8(%arg0: i32, %arg1: i32, %arg2: memref<1xi32, #tpu.memory_space<smem>>) -> (i32, i32) {
    %c0_i32 = arith.constant 0 : i32
    %c0_i32_0 = arith.constant 0 : i32
    %c0_i32_1 = arith.constant 0 : i32
    return %c0_i32, %c0_i32_0 : i32, i32
  }
  func.func @transform_9(%arg0: i32, %arg1: i32, %arg2: memref<1xi32, #tpu.memory_space<smem>>) -> (i32, i32) {
    %c0_i32 = arith.constant 0 : i32
    %c0_i32_0 = arith.constant 0 : i32
    %c0_i32_1 = arith.constant 0 : i32
    return %c0_i32, %c0_i32_0 : i32, i32
  }
  func.func @transform_10(%arg0: i32, %arg1: i32, %arg2: memref<1xi32, #tpu.memory_space<smem>>) -> (i32, i32) {
    %c0_i32 = arith.constant 0 : i32
    %c0_i32_0 = arith.constant 0 : i32
    %c0_i32_1 = arith.constant 0 : i32
    return %c0_i32, %c0_i32_0 : i32, i32
  }
  func.func @transform_11(%arg0: i32, %arg1: i32, %arg2: memref<1xi32, #tpu.memory_space<smem>>) -> (i32, i32) {
    %c0_i32 = arith.constant 0 : i32
    %c0_i32_0 = arith.constant 0 : i32
    %c0_i32_1 = arith.constant 0 : i32
    return %c0_i32, %c0_i32_0 : i32, i32
  }
  func.func @transform_12(%arg0: i32, %arg1: i32, %arg2: memref<1xi32, #tpu.memory_space<smem>>) -> (i32, i32) {
    %c0_i32 = arith.constant 0 : i32
    %c0_i32_0 = arith.constant 0 : i32
    %c0_i32_1 = arith.constant 0 : i32
    return %c0_i32, %c0_i32_0 : i32, i32
  }
  func.func @transform_13(%arg0: i32, %arg1: i32, %arg2: memref<1xi32, #tpu.memory_space<smem>>) -> (i32, i32) {
    %c0_i32 = arith.constant 0 : i32
    %c0_i32_0 = arith.constant 0 : i32
    %c0_i32_1 = arith.constant 0 : i32
    return %c0_i32, %c0_i32_0 : i32, i32
  }
  func.func @transform_14(%arg0: i32, %arg1: i32, %arg2: memref<1xi32, #tpu.memory_space<smem>>) -> (i32, i32) {
    %c0_i32 = arith.constant 0 : i32
    %c0_i32_0 = arith.constant 0 : i32
    %c0_i32_1 = arith.constant 0 : i32
    return %c0_i32, %c0_i32_0 : i32, i32
  }
  func.func @transform_15(%arg0: i32, %arg1: i32, %arg2: memref<1xi32, #tpu.memory_space<smem>>) -> (i32, i32) {
    %c0_i32 = arith.constant 0 : i32
    %c0_i32_0 = arith.constant 0 : i32
    %c0_i32_1 = arith.constant 0 : i32
    return %c0_i32, %c0_i32_0 : i32, i32
  }
  func.func @transform_16(%arg0: i32, %arg1: i32, %arg2: memref<1xi32, #tpu.memory_space<smem>>) -> (i32, i32) {
    %c0_i32 = arith.constant 0 : i32
    %c0_i32_0 = arith.constant 0 : i32
    %c0_i32_1 = arith.constant 0 : i32
    return %c0_i32, %c0_i32_0 : i32, i32
  }
  func.func @transform_17(%arg0: i32, %arg1: i32, %arg2: memref<1xi32, #tpu.memory_space<smem>>) -> (i32, i32, i32) {
    %c0_i32 = arith.constant 0 : i32
    %c0_i32_0 = arith.constant 0 : i32
    return %arg1, %arg0, %c0_i32 : i32, i32, i32
  }
  func.func @transform_18(%arg0: i32, %arg1: i32, %arg2: memref<1xi32, #tpu.memory_space<smem>>) -> (i32, i32, i32) {
    %c0_i32 = arith.constant 0 : i32
    %c0_i32_0 = arith.constant 0 : i32
    return %arg1, %arg0, %c0_i32 : i32, i32, i32
  }
}

</mosaic_0001>

<llo_original>
// kernel: tpu_custom_call.1
$region0: #{tpu_custom_call.1}
  #allocation0 [shape = 'u32[]', space=smem, size = 0x4, offset = 0x4, fixed_abs, tag = 'smem constant byte address 0x4 - core index']
  #allocation1 [shape = 'u32[144,128]{1,0:T(1,128)}', space=vmem, size = 0x12000, scoped, tag = 'internal scratch']
  #allocation2 [shape = 'f32[16,32]{1,0:T(8,128)}', space=vmem, size = 0x2000, scoped, tag = 'scratch operand']
  #allocation3 [shape = 'f32[16,32]{1,0:T(8,128)}', space=vmem, size = 0x2000, scoped, tag = 'scratch operand']
  #allocation4 [shape = 'bf16[16,16,32]{2,1,0:T(16,128)(2,1)}', space=vmem, size = 0x10000, scoped, tag = 'scratch operand']
  #allocation5 [shape = 's32[1]{0}', space=sflag, size = 0x4, scoped, tag = 'scoped memory for tpu_custom_call.1']
  #allocation6 [shape = 's32[1]{0:T(128)S(6)}', space=smem, size = 0x200, scoped, tag = 'prefetched SMEM operand 0']
  #allocation7 [shape = 'f32[1,1]{1,0:T(1,128)S(1)}', space=vmem, size = 0x200, scoped, tag = 'scoped memory for tpu_custom_call.1']
  %s0 = inlined_call_operand.<no memory space> [shape: s32[1], index: 0, kind: input, shape index: {}]
  %s1 = inlined_call_operand.hbm [shape: bf16[16,16,32], index: 1, kind: input, shape index: {}]
  %s2 = inlined_call_operand.hbm [shape: bf16[7,16,32], index: 2, kind: input, shape index: {}]
  %s3 = inlined_call_operand.hbm [shape: s32[16,1], index: 3, kind: input, shape index: {}]
  %s4 = inlined_call_operand.hbm [shape: bf16[32,32], index: 4, kind: input, shape index: {}]
  %s5 = inlined_call_operand.hbm [shape: f32[1,32], index: 5, kind: input, shape index: {}]
  %s6 = inlined_call_operand.hbm [shape: bf16[32,32], index: 6, kind: input, shape index: {}]
  %s7 = inlined_call_operand.hbm [shape: f32[1,32], index: 7, kind: input, shape index: {}]
  %s8 = inlined_call_operand.hbm [shape: bf16[32,32], index: 8, kind: input, shape index: {}]
  %s9 = inlined_call_operand.hbm [shape: f32[1,32], index: 9, kind: input, shape index: {}]
  %s10 = inlined_call_operand.hbm [shape: bf16[32,32], index: 10, kind: input, shape index: {}]
  %s11 = inlined_call_operand.hbm [shape: f32[1,32], index: 11, kind: input, shape index: {}]
  %s12 = inlined_call_operand.hbm [shape: f32[1,32], index: 12, kind: input, shape index: {}]
  %s13 = inlined_call_operand.<no memory space> [shape: f32[1,1], index: 13, kind: input, shape index: {}]
  %s14 = inlined_call_operand.hbm [shape: bf16[32,32], index: 14, kind: input, shape index: {}]
  %s15 = inlined_call_operand.hbm [shape: f32[1,32], index: 15, kind: input, shape index: {}]
  %s16 = inlined_call_operand.hbm [shape: bf16[96,128], index: 16, kind: input, shape index: {}]
  %s17 = inlined_call_operand.hbm [shape: f32[1,128], index: 17, kind: input, shape index: {}]
  %s18 = inlined_call_operand.hbm [shape: bf16[7,16,32], index: 18, kind: output, shape index: {0}]
  %s19 = inlined_call_operand.hbm [shape: f32[7,16,16], index: 19, kind: output, shape index: {1}]
  %20 = xla_tuple %s18, %s19
  %s21 = sld [smem:[#allocation0]]
  $region185: #{tpu_custom_call.1} parent=0
    _
  %s23 = ssub.s32 1, %s21
  %s24 = scalar_select 0, %s23, %s21
  %25 = sst [smem:[#allocation6]] %s0
  %v26 = vstv %s13
  %27 = vst [vmem:[#allocation7] sm:$0x1] %v26
  $region1: #{tpu_custom_call.1} parent=0
    #allocation8 [shape = 'u8[65536]{0}', space=vmem, size = 0x10000, scoped, tag = 'input window, operand 1, single buffered']
    #allocation9 [shape = 's32[2]{0}', space=sflag, size = 0x8, scoped, tag = 'scoped memory for tpu_custom_call.1']
    #allocation10 [shape = 's32[2]{0}', space=sflag, size = 0x8, scoped, tag = 'scoped memory for tpu_custom_call.1']
    #allocation11 [shape = 'u8[8192]{0}', space=vmem, size = 0x2000, scoped, tag = 'input window, operand 2']
    #allocation12 [shape = 's32[2]{0}', space=sflag, size = 0x8, scoped, tag = 'scoped memory for tpu_custom_call.1']
    #allocation13 [shape = 'u8[8192]{0}', space=vmem, size = 0x2000, scoped, tag = 'input window, operand 3, single buffered']
    #allocation14 [shape = 'u8[8192]{0}', space=vmem, size = 0x2000, scoped, tag = 'input window, operand 4, single buffered']
    #allocation15 [shape = 's32[1]{0}', space=sflag, size = 0x4, scoped, tag = 'scoped memory for tpu_custom_call.1']
    #allocation16 [shape = 'u8[512]{0}', space=vmem, size = 0x400, scoped, tag = 'input window, operand 5, single buffered']
    #allocation17 [shape = 'u8[8192]{0}', space=vmem, size = 0x2000, scoped, tag = 'input window, operand 6, single buffered']
    #allocation18 [shape = 's32[1]{0}', space=sflag, size = 0x4, scoped, tag = 'scoped memory for tpu_custom_call.1']
    #allocation19 [shape = 'u8[512]{0}', space=vmem, size = 0x400, scoped, tag = 'input window, operand 7, single buffered']
    #allocation20 [shape = 'u8[8192]{0}', space=vmem, size = 0x2000, scoped, tag = 'input window, operand 8, single buffered']
    #allocation21 [shape = 's32[1]{0}', space=sflag, size = 0x4, scoped, tag = 'scoped memory for tpu_custom_call.1']
    #allocation22 [shape = 'u8[512]{0}', space=vmem, size = 0x400, scoped, tag = 'input window, operand 9, single buffered']
    #allocation23 [shape = 'u8[8192]{0}', space=vmem, size = 0x2000, scoped, tag = 'input window, operand 10, single buffered']
    #allocation24 [shape = 's32[1]{0}', space=sflag, size = 0x4, scoped, tag = 'scoped memory for tpu_custom_call.1']
    #allocation25 [shape = 'u8[512]{0}', space=vmem, size = 0x400, scoped, tag = 'input window, operand 11, single buffered']
    #allocation26 [shape = 'u8[512]{0}', space=vmem, size = 0x400, scoped, tag = 'input window, operand 12, single buffered']
    #allocation27 [shape = 's32[1]{0}', space=sflag, size = 0x4, scoped, tag = 'scoped memory for tpu_custom_call.1']
    #allocation28 [shape = 'u8[8192]{0}', space=vmem, size = 0x2000, scoped, tag = 'input window, operand 14, single buffered']
    #allocation29 [shape = 'u8[512]{0}', space=vmem, size = 0x400, scoped, tag = 'input window, operand 15, single buffered']
    #allocation30 [shape = 's32[1]{0}', space=sflag, size = 0x4, scoped, tag = 'scoped memory for tpu_custom_call.1']
    #allocation31 [shape = 'u8[24576]{0}', space=vmem, size = 0x6000, scoped, tag = 'input window, operand 16, single buffered']
    #allocation32 [shape = 'u8[512]{0}', space=vmem, size = 0x400, scoped, tag = 'input window, operand 17, single buffered']
    #allocation33 [shape = 's32[1]{0}', space=sflag, size = 0x4, scoped, tag = 'scoped memory for tpu_custom_call.1']
    #allocation34 [shape = 'u8[8192]{0}', space=vmem, size = 0x2000, scoped, tag = 'output window, operand 0']
    #allocation35 [shape = 'u8[16384]{0}', space=vmem, size = 0x4000, scoped, tag = 'output window, operand 1']
    #allocation36 [shape = 's32[2]{0}', space=sflag, size = 0x8, scoped, tag = 'scoped memory for tpu_custom_call.1']
    %28 = vsyncpa [#allocation9], 0
    %29 = vsyncpa [#allocation12], 0
    %s30 = scalar_lea.sflag [#allocation12], 1
    %31 = vsyncpa %s30, 0
    %32 = vsyncpa [#allocation15], 0
    %33 = vsyncpa [#allocation18], 0
    %34 = vsyncpa [#allocation21], 0
    %35 = vsyncpa [#allocation24], 0
    %36 = vsyncpa [#allocation27], 0
    %37 = vsyncpa [#allocation30], 0
    %38 = vsyncpa [#allocation33], 0
    %39 = vsyncpa [#allocation10], 0
    %s40 = scalar_lea.sflag [#allocation10], 1
    %41 = vsyncpa %s40, 0
    %42 = vsyncpa [#allocation36], 0
    %s43 = scalar_lea.sflag [#allocation36], 1
    %44 = vsyncpa %s43, 0
    loop: start=0, step=1, limit=9
    $region2: #{tpu_custom_call.1} parent=1 // loop_pre_header
      _
    $region3: #{tpu_custom_call.1} parent=1 // loop_header
      %s46 = sphi 0, %s50
      %p47 = scmp.ge.s32.totalorder %s46, 9
      %s53 = sphi 0, %s65
      %s54 = sphi 0, %s61
      %s55 = sphi 0, %s53
      %s56 = sphi 0, %s54
      %s57 = sphi 0, %s55
      %s58 = sphi 0, %s56
      %s68 = sphi 0, %s70
      %s71 = sphi 0, %s68
      %s72 = sphi 0, %s71
      %s88 = sphi 0, %s72
      %s96 = sphi 0, %s98
      %s99 = sphi 0, %s96
      %s100 = sphi 0, %s99
      %s116 = sphi 0, %s100
      %s122 = sphi 0, %s124
      %s125 = sphi 0, %s122
      %s126 = sphi 0, %s125
      %s142 = sphi 0, %s126
      %s146 = sphi 0, %s146
      %s148 = sphi 0, %s146
      %s149 = sphi 0, %s148
      %s163 = sphi 0, %s149
      %s167 = sphi 0, %s167
      %s169 = sphi 0, %s167
      %s170 = sphi 0, %s169
      %s184 = sphi 0, %s170
      %s188 = sphi 0, %s188
      %s190 = sphi 0, %s188
      %s191 = sphi 0, %s190
      %s205 = sphi 0, %s191
      %s209 = sphi 0, %s209
      %s211 = sphi 0, %s209
      %s212 = sphi 0, %s211
      %s226 = sphi 0, %s212
      %s230 = sphi 0, %s230
      %s232 = sphi 0, %s230
      %s233 = sphi 0, %s232
      %s247 = sphi 0, %s233
      %s251 = sphi 0, %s251
      %s253 = sphi 0, %s251
      %s254 = sphi 0, %s253
      %s268 = sphi 0, %s254
      %s272 = sphi 0, %s272
      %s274 = sphi 0, %s272
      %s275 = sphi 0, %s274
      %s289 = sphi 0, %s275
      %s293 = sphi 0, %s293
      %s295 = sphi 0, %s293
      %s296 = sphi 0, %s295
      %s310 = sphi 0, %s296
      %s314 = sphi 0, %s314
      %s316 = sphi 0, %s314
      %s317 = sphi 0, %s316
      %s331 = sphi 0, %s317
      %s335 = sphi 0, %s335
      %s337 = sphi 0, %s335
      %s338 = sphi 0, %s337
      %s352 = sphi 0, %s338
      %s356 = sphi 0, %s356
      %s358 = sphi 0, %s356
      %s359 = sphi 0, %s358
      %s373 = sphi 0, %s359
      %s377 = sphi 0, %s377
      %s379 = sphi 0, %s377
      %s380 = sphi 0, %s379
      %s394 = sphi 0, %s380
      %s398 = sphi 0, %s398
      %s400 = sphi 0, %s398
      %s401 = sphi 0, %s400
      %s415 = sphi 0, %s401
      %s419 = sphi 0, %s419
      %s421 = sphi 0, %s419
      %s422 = sphi 0, %s421
      %s436 = sphi 0, %s422
      %s444 = sphi 0, %s446
      %s447 = sphi 0, %s444
      %s448 = sphi 0, %s447
      %s464 = sphi 0, %s448
      %s472 = sphi 0, %s474
      %s475 = sphi 0, %s472
      %s476 = sphi 0, %s475
      %s492 = sphi 0, %s476
    $region4: #{tpu_custom_call.1} parent=1 // loop_header_branch
      %49 = sbr.rel (%p47) target = $region8
    $region5: #{tpu_custom_call.1} parent=1 // loop_body
      %s51 = ssub.s32 %s46, 1
      %s52 = ssub.s32 %s46, 2
      %s59 = sadd.s32 1, %s54
      %p60 = scmp.ge.s32.totalorder %s59, 7
      %s61 = scalar_select %p60, 0, %s59
      %s62 = sadd.s32 1, %s53
      %s63 = scalar_select %p60, %s62, %s53
      %p64 = scmp.ge.s32.totalorder %s63, 1
      %s65 = scalar_select %p64, 0, %s63
      %s66 = ssub.s32 %s53, %s65
      %p67 = scmp.eq.s32.totalorder %s66, 0
      %s69 = sadd.s32 %s68, 1
      %s70 = scalar_select %p67, %s68, %s69
      %p73 = pneg %p67
      %p74 = scmp.eq.s32.totalorder %s46, 6
      %p75 = por %p73, %p74
      %p76 = scmp.ne.s32.totalorder %s68, %s71
      %p77 = scmp.eq.s32.totalorder %s46, 0
      %p78 = por %p76, %p77
      %p79 = scmp.ne.s32.totalorder %s68, %s71
      %p80 = scmp.eq.s32.totalorder %s51, 6
      %p81 = por %p79, %p80
      %p82 = scmp.ne.s32.totalorder %s71, %s72
      %p83 = scmp.eq.s32.totalorder %s51, 0
      %p84 = por %p82, %p83
      %p85 = scmp.ne.s32.totalorder %s71, %s72
      %p86 = scmp.eq.s32.totalorder %s52, 6
      %p87 = por %p85, %p86
      %p89 = scmp.ne.s32.totalorder %s72, %s88
      %p90 = scmp.eq.s32.totalorder %s52, 0
      %p91 = por %p89, %p90
      %s92 = ssub.s32 %s54, %s61
      %s93 = ssub.s32 %s53, %s65
      %s94 = sor.u32 %s92, %s93
      %p95 = scmp.eq.s32.totalorder %s94, 0
      %s97 = sadd.s32 %s96, 1
      %s98 = scalar_select %p95, %s96, %s97
      %p101 = pneg %p95
      %p102 = scmp.eq.s32.totalorder %s46, 6
      %p103 = por %p101, %p102
      %p104 = scmp.ne.s32.totalorder %s96, %s99
      %p105 = scmp.eq.s32.totalorder %s46, 0
      %p106 = por %p104, %p105
      %p107 = scmp.ne.s32.totalorder %s96, %s99
      %p108 = scmp.eq.s32.totalorder %s51, 6
      %p109 = por %p107, %p108
      %p110 = scmp.ne.s32.totalorder %s99, %s100
      %p111 = scmp.eq.s32.totalorder %s51, 0
      %p112 = por %p110, %p111
      %p113 = scmp.ne.s32.totalorder %s99, %s100
      %p114 = scmp.eq.s32.totalorder %s52, 6
      %p115 = por %p113, %p114
      %p117 = scmp.ne.s32.totalorder %s100, %s116
      %p118 = scmp.eq.s32.totalorder %s52, 0
      %p119 = por %p117, %p118
      %s120 = ssub.s32 %s53, %s65
      %p121 = scmp.eq.s32.totalorder %s120, 0
      %s123 = sadd.s32 %s122, 1
      %s124 = scalar_select %p121, %s122, %s123
      %p127 = pneg %p121
      %p128 = scmp.eq.s32.totalorder %s46, 6
      %p129 = por %p127, %p128
      %p130 = scmp.ne.s32.totalorder %s122, %s125
      %p131 = scmp.eq.s32.totalorder %s46, 0
      %p132 = por %p130, %p131
      %p133 = scmp.ne.s32.totalorder %s122, %s125
      %p134 = scmp.eq.s32.totalorder %s51, 6
      %p135 = por %p133, %p134
      %p136 = scmp.ne.s32.totalorder %s125, %s126
      %p137 = scmp.eq.s32.totalorder %s51, 0
      %p138 = por %p136, %p137
      %p139 = scmp.ne.s32.totalorder %s125, %s126
      %p140 = scmp.eq.s32.totalorder %s52, 6
      %p141 = por %p139, %p140
      %p143 = scmp.ne.s32.totalorder %s126, %s142
      %p144 = scmp.eq.s32.totalorder %s52, 0
      %p145 = por %p143, %p144
      %s147 = sadd.s32 %s146, 1
      %p150 = scmp.eq.s32.totalorder %s46, 6
      %p151 = scmp.ne.s32.totalorder %s146, %s148
      %p152 = scmp.eq.s32.totalorder %s46, 0
      %p153 = por %p151, %p152
      %p154 = scmp.ne.s32.totalorder %s146, %s148
      %p155 = scmp.eq.s32.totalorder %s51, 6
      %p156 = por %p154, %p155
      %p157 = scmp.ne.s32.totalorder %s148, %s149
      %p158 = scmp.eq.s32.totalorder %s51, 0
      %p159 = por %p157, %p158
      %p160 = scmp.ne.s32.totalorder %s148, %s149
      %p161 = scmp.eq.s32.totalorder %s52, 6
      %p162 = por %p160, %p161
      %p164 = scmp.ne.s32.totalorder %s149, %s163
      %p165 = scmp.eq.s32.totalorder %s52, 0
      %p166 = por %p164, %p165
      %s168 = sadd.s32 %s167, 1
      %p171 = scmp.eq.s32.totalorder %s46, 6
      %p172 = scmp.ne.s32.totalorder %s167, %s169
      %p173 = scmp.eq.s32.totalorder %s46, 0
      %p174 = por %p172, %p173
      %p175 = scmp.ne.s32.totalorder %s167, %s169
      %p176 = scmp.eq.s32.totalorder %s51, 6
      %p177 = por %p175, %p176
      %p178 = scmp.ne.s32.totalorder %s169, %s170
      %p179 = scmp.eq.s32.totalorder %s51, 0
      %p180 = por %p178, %p179
      %p181 = scmp.ne.s32.totalorder %s169, %s170
      %p182 = scmp.eq.s32.totalorder %s52, 6
      %p183 = por %p181, %p182
      %p185 = scmp.ne.s32.totalorder %s170, %s184
      %p186 = scmp.eq.s32.totalorder %s52, 0
      %p187 = por %p185, %p186
      %s189 = sadd.s32 %s188, 1
      %p192 = scmp.eq.s32.totalorder %s46, 6
      %p193 = scmp.ne.s32.totalorder %s188, %s190
      %p194 = scmp.eq.s32.totalorder %s46, 0
      %p195 = por %p193, %p194
      %p196 = scmp.ne.s32.totalorder %s188, %s190
      %p197 = scmp.eq.s32.totalorder %s51, 6
      %p198 = por %p196, %p197
      %p199 = scmp.ne.s32.totalorder %s190, %s191
      %p200 = scmp.eq.s32.totalorder %s51, 0
      %p201 = por %p199, %p200
      %p202 = scmp.ne.s32.totalorder %s190, %s191
      %p203 = scmp.eq.s32.totalorder %s52, 6
      %p204 = por %p202, %p203
      %p206 = scmp.ne.s32.totalorder %s191, %s205
      %p207 = scmp.eq.s32.totalorder %s52, 0
      %p208 = por %p206, %p207
      %s210 = sadd.s32 %s209, 1
      %p213 = scmp.eq.s32.totalorder %s46, 6
      %p214 = scmp.ne.s32.totalorder %s209, %s211
      %p215 = scmp.eq.s32.totalorder %s46, 0
      %p216 = por %p214, %p215
      %p217 = scmp.ne.s32.totalorder %s209, %s211
      %p218 = scmp.eq.s32.totalorder %s51, 6
      %p219 = por %p217, %p218
      %p220 = scmp.ne.s32.totalorder %s211, %s212
      %p221 = scmp.eq.s32.totalorder %s51, 0
      %p222 = por %p220, %p221
      %p223 = scmp.ne.s32.totalorder %s211, %s212
      %p224 = scmp.eq.s32.totalorder %s52, 6
      %p225 = por %p223, %p224
      %p227 = scmp.ne.s32.totalorder %s212, %s226
      %p228 = scmp.eq.s32.totalorder %s52, 0
      %p229 = por %p227, %p228
      %s231 = sadd.s32 %s230, 1
      %p234 = scmp.eq.s32.totalorder %s46, 6
      %p235 = scmp.ne.s32.totalorder %s230, %s232
      %p236 = scmp.eq.s32.totalorder %s46, 0
      %p237 = por %p235, %p236
      %p238 = scmp.ne.s32.totalorder %s230, %s232
      %p239 = scmp.eq.s32.totalorder %s51, 6
      %p240 = por %p238, %p239
      %p241 = scmp.ne.s32.totalorder %s232, %s233
      %p242 = scmp.eq.s32.totalorder %s51, 0
      %p243 = por %p241, %p242
      %p244 = scmp.ne.s32.totalorder %s232, %s233
      %p245 = scmp.eq.s32.totalorder %s52, 6
      %p246 = por %p244, %p245
      %p248 = scmp.ne.s32.totalorder %s233, %s247
      %p249 = scmp.eq.s32.totalorder %s52, 0
      %p250 = por %p248, %p249
      %s252 = sadd.s32 %s251, 1
      %p255 = scmp.eq.s32.totalorder %s46, 6
      %p256 = scmp.ne.s32.totalorder %s251, %s253
      %p257 = scmp.eq.s32.totalorder %s46, 0
      %p258 = por %p256, %p257
      %p259 = scmp.ne.s32.totalorder %s251, %s253
      %p260 = scmp.eq.s32.totalorder %s51, 6
      %p261 = por %p259, %p260
      %p262 = scmp.ne.s32.totalorder %s253, %s254
      %p263 = scmp.eq.s32.totalorder %s51, 0
      %p264 = por %p262, %p263
      %p265 = scmp.ne.s32.totalorder %s253, %s254
      %p266 = scmp.eq.s32.totalorder %s52, 6
      %p267 = por %p265, %p266
      %p269 = scmp.ne.s32.totalorder %s254, %s268
      %p270 = scmp.eq.s32.totalorder %s52, 0
      %p271 = por %p269, %p270
      %s273 = sadd.s32 %s272, 1
      %p276 = scmp.eq.s32.totalorder %s46, 6
      %p277 = scmp.ne.s32.totalorder %s272, %s274
      %p278 = scmp.eq.s32.totalorder %s46, 0
      %p279 = por %p277, %p278
      %p280 = scmp.ne.s32.totalorder %s272, %s274
      %p281 = scmp.eq.s32.totalorder %s51, 6
      %p282 = por %p280, %p281
      %p283 = scmp.ne.s32.totalorder %s274, %s275
      %p284 = scmp.eq.s32.totalorder %s51, 0
      %p285 = por %p283, %p284
      %p286 = scmp.ne.s32.totalorder %s274, %s275
      %p287 = scmp.eq.s32.totalorder %s52, 6
      %p288 = por %p286, %p287
      %p290 = scmp.ne.s32.totalorder %s275, %s289
      %p291 = scmp.eq.s32.totalorder %s52, 0
      %p292 = por %p290, %p291
      %s294 = sadd.s32 %s293, 1
      %p297 = scmp.eq.s32.totalorder %s46, 6
      %p298 = scmp.ne.s32.totalorder %s293, %s295
      %p299 = scmp.eq.s32.totalorder %s46, 0
      %p300 = por %p298, %p299
      %p301 = scmp.ne.s32.totalorder %s293, %s295
      %p302 = scmp.eq.s32.totalorder %s51, 6
      %p303 = por %p301, %p302
      %p304 = scmp.ne.s32.totalorder %s295, %s296
      %p305 = scmp.eq.s32.totalorder %s51, 0
      %p306 = por %p304, %p305
      %p307 = scmp.ne.s32.totalorder %s295, %s296
      %p308 = scmp.eq.s32.totalorder %s52, 6
      %p309 = por %p307, %p308
      %p311 = scmp.ne.s32.totalorder %s296, %s310
      %p312 = scmp.eq.s32.totalorder %s52, 0
      %p313 = por %p311, %p312
      %s315 = sadd.s32 %s314, 1
      %p318 = scmp.eq.s32.totalorder %s46, 6
      %p319 = scmp.ne.s32.totalorder %s314, %s316
      %p320 = scmp.eq.s32.totalorder %s46, 0
      %p321 = por %p319, %p320
      %p322 = scmp.ne.s32.totalorder %s314, %s316
      %p323 = scmp.eq.s32.totalorder %s51, 6
      %p324 = por %p322, %p323
      %p325 = scmp.ne.s32.totalorder %s316, %s317
      %p326 = scmp.eq.s32.totalorder %s51, 0
      %p327 = por %p325, %p326
      %p328 = scmp.ne.s32.totalorder %s316, %s317
      %p329 = scmp.eq.s32.totalorder %s52, 6
      %p330 = por %p328, %p329
      %p332 = scmp.ne.s32.totalorder %s317, %s331
      %p333 = scmp.eq.s32.totalorder %s52, 0
      %p334 = por %p332, %p333
      %s336 = sadd.s32 %s335, 1
      %p339 = scmp.eq.s32.totalorder %s46, 6
      %p340 = scmp.ne.s32.totalorder %s335, %s337
      %p341 = scmp.eq.s32.totalorder %s46, 0
      %p342 = por %p340, %p341
      %p343 = scmp.ne.s32.totalorder %s335, %s337
      %p344 = scmp.eq.s32.totalorder %s51, 6
      %p345 = por %p343, %p344
      %p346 = scmp.ne.s32.totalorder %s337, %s338
      %p347 = scmp.eq.s32.totalorder %s51, 0
      %p348 = por %p346, %p347
      %p349 = scmp.ne.s32.totalorder %s337, %s338
      %p350 = scmp.eq.s32.totalorder %s52, 6
      %p351 = por %p349, %p350
      %p353 = scmp.ne.s32.totalorder %s338, %s352
      %p354 = scmp.eq.s32.totalorder %s52, 0
      %p355 = por %p353, %p354
      %s357 = sadd.s32 %s356, 1
      %p360 = scmp.eq.s32.totalorder %s46, 6
      %p361 = scmp.ne.s32.totalorder %s356, %s358
      %p362 = scmp.eq.s32.totalorder %s46, 0
      %p363 = por %p361, %p362
      %p364 = scmp.ne.s32.totalorder %s356, %s358
      %p365 = scmp.eq.s32.totalorder %s51, 6
      %p366 = por %p364, %p365
      %p367 = scmp.ne.s32.totalorder %s358, %s359
      %p368 = scmp.eq.s32.totalorder %s51, 0
      %p369 = por %p367, %p368
      %p370 = scmp.ne.s32.totalorder %s358, %s359
      %p371 = scmp.eq.s32.totalorder %s52, 6
      %p372 = por %p370, %p371
      %p374 = scmp.ne.s32.totalorder %s359, %s373
      %p375 = scmp.eq.s32.totalorder %s52, 0
      %p376 = por %p374, %p375
      %s378 = sadd.s32 %s377, 1
      %p381 = scmp.eq.s32.totalorder %s46, 6
      %p382 = scmp.ne.s32.totalorder %s377, %s379
      %p383 = scmp.eq.s32.totalorder %s46, 0
      %p384 = por %p382, %p383
      %p385 = scmp.ne.s32.totalorder %s377, %s379
      %p386 = scmp.eq.s32.totalorder %s51, 6
      %p387 = por %p385, %p386
      %p388 = scmp.ne.s32.totalorder %s379, %s380
      %p389 = scmp.eq.s32.totalorder %s51, 0
      %p390 = por %p388, %p389
      %p391 = scmp.ne.s32.totalorder %s379, %s380
      %p392 = scmp.eq.s32.totalorder %s52, 6
      %p393 = por %p391, %p392
      %p395 = scmp.ne.s32.totalorder %s380, %s394
      %p396 = scmp.eq.s32.totalorder %s52, 0
      %p397 = por %p395, %p396
      %s399 = sadd.s32 %s398, 1
      %p402 = scmp.eq.s32.totalorder %s46, 6
      %p403 = scmp.ne.s32.totalorder %s398, %s400
      %p404 = scmp.eq.s32.totalorder %s46, 0
      %p405 = por %p403, %p404
      %p406 = scmp.ne.s32.totalorder %s398, %s400
      %p407 = scmp.eq.s32.totalorder %s51, 6
      %p408 = por %p406, %p407
      %p409 = scmp.ne.s32.totalorder %s400, %s401
      %p410 = scmp.eq.s32.totalorder %s51, 0
      %p411 = por %p409, %p410
      %p412 = scmp.ne.s32.totalorder %s400, %s401
      %p413 = scmp.eq.s32.totalorder %s52, 6
      %p414 = por %p412, %p413
      %p416 = scmp.ne.s32.totalorder %s401, %s415
      %p417 = scmp.eq.s32.totalorder %s52, 0
      %p418 = por %p416, %p417
      %s420 = sadd.s32 %s419, 1
      %p423 = scmp.eq.s32.totalorder %s46, 6
      %p424 = scmp.ne.s32.totalorder %s419, %s421
      %p425 = scmp.eq.s32.totalorder %s46, 0
      %p426 = por %p424, %p425
      %p427 = scmp.ne.s32.totalorder %s419, %s421
      %p428 = scmp.eq.s32.totalorder %s51, 6
      %p429 = por %p427, %p428
      %p430 = scmp.ne.s32.totalorder %s421, %s422
      %p431 = scmp.eq.s32.totalorder %s51, 0
      %p432 = por %p430, %p431
      %p433 = scmp.ne.s32.totalorder %s421, %s422
      %p434 = scmp.eq.s32.totalorder %s52, 6
      %p435 = por %p433, %p434
      %p437 = scmp.ne.s32.totalorder %s422, %s436
      %p438 = scmp.eq.s32.totalorder %s52, 0
      %p439 = por %p437, %p438
      %s440 = ssub.s32 %s54, %s61
      %s441 = ssub.s32 %s53, %s65
      %s442 = sor.u32 %s440, %s441
      %p443 = scmp.eq.s32.totalorder %s442, 0
      %s445 = sadd.s32 %s444, 1
      %s446 = scalar_select %p443, %s444, %s445
      %p449 = pneg %p443
      %p450 = scmp.eq.s32.totalorder %s46, 6
      %p451 = por %p449, %p450
      %p452 = scmp.ne.s32.totalorder %s444, %s447
      %p453 = scmp.eq.s32.totalorder %s46, 0
      %p454 = por %p452, %p453
      %p455 = scmp.ne.s32.totalorder %s444, %s447
      %p456 = scmp.eq.s32.totalorder %s51, 6
      %p457 = por %p455, %p456
      %p458 = scmp.ne.s32.totalorder %s447, %s448
      %p459 = scmp.eq.s32.totalorder %s51, 0
      %p460 = por %p458, %p459
      %p461 = scmp.ne.s32.totalorder %s447, %s448
      %p462 = scmp.eq.s32.totalorder %s52, 6
      %p463 = por %p461, %p462
      %p465 = scmp.ne.s32.totalorder %s448, %s464
      %p466 = scmp.eq.s32.totalorder %s52, 0
      %p467 = por %p465, %p466
      %s468 = ssub.s32 %s54, %s61
      %s469 = ssub.s32 %s53, %s65
      %s470 = sor.u32 %s468, %s469
      %p471 = scmp.eq.s32.totalorder %s470, 0
      %s473 = sadd.s32 %s472, 1
      %s474 = scalar_select %p471, %s472, %s473
      %p477 = pneg %p471
      %p478 = scmp.eq.s32.totalorder %s46, 6
      %p479 = por %p477, %p478
      %p480 = scmp.ne.s32.totalorder %s472, %s475
      %p481 = scmp.eq.s32.totalorder %s46, 0
      %p482 = por %p480, %p481
      %p483 = scmp.ne.s32.totalorder %s472, %s475
      %p484 = scmp.eq.s32.totalorder %s51, 6
      %p485 = por %p483, %p484
      %p486 = scmp.ne.s32.totalorder %s475, %s476
      %p487 = scmp.eq.s32.totalorder %s51, 0
      %p488 = por %p486, %p487
      %p489 = scmp.ne.s32.totalorder %s475, %s476
      %p490 = scmp.eq.s32.totalorder %s52, 6
      %p491 = por %p489, %p490
      %p493 = scmp.ne.s32.totalorder %s476, %s492
      %p494 = scmp.eq.s32.totalorder %s52, 0
      %p495 = por %p493, %p494
      %p496 = scmp.le.s32.totalorder 1, %s46
      %p497 = scmp.lt.s32.totalorder %s46, 8
      %p498 = pnand %p496, %p497
      %p499 = pneg %p498
      // Predicated region
      $region9: #{tpu_custom_call.1} parent=5 // pred_check
        _
      $region10: #{tpu_custom_call.1} parent=5 // pred_check_branch
        %501 = sbr.rel (%p498) target = $region12
      $region11: #{tpu_custom_call.1} parent=5 // pred_region
        %s502 = ssub.s32 %s46, 1
        // Predicated region
        $region13: #{tpu_custom_call.1} parent=11 // pred_check
          %p503 = pneg %p84
        $region14: #{tpu_custom_call.1} parent=11 // pred_check_branch
          %505 = sbr.rel (%p503) target = $region16
        $region15: #{tpu_custom_call.1} parent=11 // pred_region
          %s506 = smul.u32 16, %s55
          %s508 = ssub.s32 2048, 2048
          %509 = vsyncadd [#allocation9], %s508
          %s510 = smul.addr %s506, 2
          %s511 = smul.addr %s510, 64
          %s512 = scalar_lea.hbm %s1, %s511
          %s513 = sshll.u32 [#allocation8], 4
          %s514 = int_to_ptr.vmem [resolvable:$true] %s513
          %519 = dma.hbm_to_vmem [thread:$0]  %s512, 2048, %s514, [#allocation9], 64, 64, 4
        $region16: #{tpu_custom_call.1} parent=11 // pred_fallthru
          _
        // Predicated region
        $region17: #{tpu_custom_call.1} parent=11 // pred_check
          %p520 = pneg %p138
        $region18: #{tpu_custom_call.1} parent=11 // pred_check_branch
          %522 = sbr.rel (%p520) target = $region20
        $region19: #{tpu_custom_call.1} parent=11 // pred_region
          %s523 = smul.u32 2, %s55
          %s525 = ssub.s32 256, 256
          %526 = vsyncadd [#allocation12], %s525
          %s527 = smul.addr %s523, 128
          %s528 = scalar_lea.hbm %s3, %s527
          %s529 = sshll.u32 [#allocation13], 4
          %s530 = int_to_ptr.vmem [resolvable:$true] %s529
          %535 = dma.hbm_to_vmem [thread:$0]  %s528, 256, %s530, [#allocation12], 128, 128, 8
        $region20: #{tpu_custom_call.1} parent=11 // pred_fallthru
          _
        // Predicated region
        $region21: #{tpu_custom_call.1} parent=11 // pred_check
          %p536 = pneg %p159
        $region22: #{tpu_custom_call.1} parent=11 // pred_check_branch
          %538 = sbr.rel (%p536) target = $region24
        $region23: #{tpu_custom_call.1} parent=11 // pred_region
          %s540 = ssub.s32 256, 256
          %541 = vsyncadd [#allocation15], %s540
          %s542 = sshll.u32 [#allocation14], 4
          %s543 = int_to_ptr.vmem [resolvable:$true] %s542
          %548 = dma.hbm_to_vmem [thread:$0]  %s4, 256, %s543, [#allocation15], 64, 64, 4
        $region24: #{tpu_custom_call.1} parent=11 // pred_fallthru
          _
        // Predicated region
        $region25: #{tpu_custom_call.1} parent=11 // pred_check
          %p549 = pneg %p180
        $region26: #{tpu_custom_call.1} parent=11 // pred_check_branch
          %551 = sbr.rel (%p549) target = $region28
        $region27: #{tpu_custom_call.1} parent=11 // pred_region
          %s553 = ssub.s32 16, 16
          %554 = vsyncadd [#allocation15], %s553
          %s556 = sshll.u32 [#allocation16], 4
          %s557 = int_to_ptr.vmem [resolvable:$true] %s556
          %559 = dma.hbm_to_vmem [thread:$0]  %s5, 16, %s557, [#allocation15]
        $region28: #{tpu_custom_call.1} parent=11 // pred_fallthru
          _
        // Predicated region
        $region29: #{tpu_custom_call.1} parent=11 // pred_check
          %p560 = pneg %p201
        $region30: #{tpu_custom_call.1} parent=11 // pred_check_branch
          %562 = sbr.rel (%p560) target = $region32
        $region31: #{tpu_custom_call.1} parent=11 // pred_region
          %s564 = ssub.s32 256, 256
          %565 = vsyncadd [#allocation18], %s564
          %s566 = sshll.u32 [#allocation17], 4
          %s567 = int_to_ptr.vmem [resolvable:$true] %s566
          %572 = dma.hbm_to_vmem [thread:$0]  %s6, 256, %s567, [#allocation18], 64, 64, 4
        $region32: #{tpu_custom_call.1} parent=11 // pred_fallthru
          _
        // Predicated region
        $region33: #{tpu_custom_call.1} parent=11 // pred_check
          %p573 = pneg %p222
        $region34: #{tpu_custom_call.1} parent=11 // pred_check_branch
          %575 = sbr.rel (%p573) target = $region36
        $region35: #{tpu_custom_call.1} parent=11 // pred_region
          %s577 = ssub.s32 16, 16
          %578 = vsyncadd [#allocation18], %s577
          %s580 = sshll.u32 [#allocation19], 4
          %s581 = int_to_ptr.vmem [resolvable:$true] %s580
          %583 = dma.hbm_to_vmem [thread:$0]  %s7, 16, %s581, [#allocation18]
        $region36: #{tpu_custom_call.1} parent=11 // pred_fallthru
          _
        // Predicated region
        $region37: #{tpu_custom_call.1} parent=11 // pred_check
          %p584 = pneg %p243
        $region38: #{tpu_custom_call.1} parent=11 // pred_check_branch
          %586 = sbr.rel (%p584) target = $region40
        $region39: #{tpu_custom_call.1} parent=11 // pred_region
          %s588 = ssub.s32 256, 256
          %589 = vsyncadd [#allocation21], %s588
          %s590 = sshll.u32 [#allocation20], 4
          %s591 = int_to_ptr.vmem [resolvable:$true] %s590
          %596 = dma.hbm_to_vmem [thread:$0]  %s8, 256, %s591, [#allocation21], 64, 64, 4
        $region40: #{tpu_custom_call.1} parent=11 // pred_fallthru
          _
        // Predicated region
        $region41: #{tpu_custom_call.1} parent=11 // pred_check
          %p597 = pneg %p264
        $region42: #{tpu_custom_call.1} parent=11 // pred_check_branch
          %599 = sbr.rel (%p597) target = $region44
        $region43: #{tpu_custom_call.1} parent=11 // pred_region
          %s601 = ssub.s32 16, 16
          %602 = vsyncadd [#allocation21], %s601
          %s604 = sshll.u32 [#allocation22], 4
          %s605 = int_to_ptr.vmem [resolvable:$true] %s604
          %607 = dma.hbm_to_vmem [thread:$0]  %s9, 16, %s605, [#allocation21]
        $region44: #{tpu_custom_call.1} parent=11 // pred_fallthru
          _
        // Predicated region
        $region45: #{tpu_custom_call.1} parent=11 // pred_check
          %p608 = pneg %p285
        $region46: #{tpu_custom_call.1} parent=11 // pred_check_branch
          %610 = sbr.rel (%p608) target = $region48
        $region47: #{tpu_custom_call.1} parent=11 // pred_region
          %s612 = ssub.s32 256, 256
          %613 = vsyncadd [#allocation24], %s612
          %s614 = sshll.u32 [#allocation23], 4
          %s615 = int_to_ptr.vmem [resolvable:$true] %s614
          %620 = dma.hbm_to_vmem [thread:$0]  %s10, 256, %s615, [#allocation24], 64, 64, 4
        $region48: #{tpu_custom_call.1} parent=11 // pred_fallthru
          _
        // Predicated region
        $region49: #{tpu_custom_call.1} parent=11 // pred_check
          %p621 = pneg %p306
        $region50: #{tpu_custom_call.1} parent=11 // pred_check_branch
          %623 = sbr.rel (%p621) target = $region52
        $region51: #{tpu_custom_call.1} parent=11 // pred_region
          %s625 = ssub.s32 16, 16
          %626 = vsyncadd [#allocation24], %s625
          %s628 = sshll.u32 [#allocation25], 4
          %s629 = int_to_ptr.vmem [resolvable:$true] %s628
          %631 = dma.hbm_to_vmem [thread:$0]  %s11, 16, %s629, [#allocation24]
        $region52: #{tpu_custom_call.1} parent=11 // pred_fallthru
          _
        // Predicated region
        $region53: #{tpu_custom_call.1} parent=11 // pred_check
          %p632 = pneg %p327
        $region54: #{tpu_custom_call.1} parent=11 // pred_check_branch
          %634 = sbr.rel (%p632) target = $region56
        $region55: #{tpu_custom_call.1} parent=11 // pred_region
          %s636 = ssub.s32 16, 16
          %637 = vsyncadd [#allocation27], %s636
          %s639 = sshll.u32 [#allocation26], 4
          %s640 = int_to_ptr.vmem [resolvable:$true] %s639
          %642 = dma.hbm_to_vmem [thread:$0]  %s12, 16, %s640, [#allocation27]
        $region56: #{tpu_custom_call.1} parent=11 // pred_fallthru
          _
        // Predicated region
        $region57: #{tpu_custom_call.1} parent=11 // pred_check
          %p643 = pneg %p348
        $region58: #{tpu_custom_call.1} parent=11 // pred_check_branch
          %645 = sbr.rel (%p643) target = $region60
        $region59: #{tpu_custom_call.1} parent=11 // pred_region
          _
        $region60: #{tpu_custom_call.1} parent=11 // pred_fallthru
          _
        // Predicated region
        $region61: #{tpu_custom_call.1} parent=11 // pred_check
          %p646 = pneg %p369
        $region62: #{tpu_custom_call.1} parent=11 // pred_check_branch
          %648 = sbr.rel (%p646) target = $region64
        $region63: #{tpu_custom_call.1} parent=11 // pred_region
          %s650 = ssub.s32 256, 256
          %651 = vsyncadd [#allocation27], %s650
          %s652 = sshll.u32 [#allocation28], 4
          %s653 = int_to_ptr.vmem [resolvable:$true] %s652
          %658 = dma.hbm_to_vmem [thread:$0]  %s14, 256, %s653, [#allocation27], 64, 64, 4
        $region64: #{tpu_custom_call.1} parent=11 // pred_fallthru
          _
        // Predicated region
        $region65: #{tpu_custom_call.1} parent=11 // pred_check
          %p659 = pneg %p390
        $region66: #{tpu_custom_call.1} parent=11 // pred_check_branch
          %661 = sbr.rel (%p659) target = $region68
        $region67: #{tpu_custom_call.1} parent=11 // pred_region
          %s663 = ssub.s32 16, 16
          %664 = vsyncadd [#allocation30], %s663
          %s666 = sshll.u32 [#allocation29], 4
          %s667 = int_to_ptr.vmem [resolvable:$true] %s666
          %669 = dma.hbm_to_vmem [thread:$0]  %s15, 16, %s667, [#allocation30]
        $region68: #{tpu_custom_call.1} parent=11 // pred_fallthru
          _
        // Predicated region
        $region69: #{tpu_custom_call.1} parent=11 // pred_check
          %p670 = pneg %p411
        $region70: #{tpu_custom_call.1} parent=11 // pred_check_branch
          %672 = sbr.rel (%p670) target = $region72
        $region71: #{tpu_custom_call.1} parent=11 // pred_region
          %s674 = ssub.s32 768, 768
          %675 = vsyncadd [#allocation30], %s674
          %s676 = sshll.u32 [#allocation31], 4
          %s677 = int_to_ptr.vmem [resolvable:$true] %s676
          %682 = dma.hbm_to_vmem [thread:$0]  %s16, 768, %s677, [#allocation30], 64, 64, 4
        $region72: #{tpu_custom_call.1} parent=11 // pred_fallthru
          _
        // Predicated region
        $region73: #{tpu_custom_call.1} parent=11 // pred_check
          %p683 = pneg %p432
        $region74: #{tpu_custom_call.1} parent=11 // pred_check_branch
          %685 = sbr.rel (%p683) target = $region76
        $region75: #{tpu_custom_call.1} parent=11 // pred_region
          %s687 = ssub.s32 16, 16
          %688 = vsyncadd [#allocation33], %s687
          %s690 = sshll.u32 [#allocation32], 4
          %s691 = int_to_ptr.vmem [resolvable:$true] %s690
          %693 = dma.hbm_to_vmem [thread:$0]  %s17, 16, %s691, [#allocation33]
        $region76: #{tpu_custom_call.1} parent=11 // pred_fallthru
          _
      $region12: #{tpu_custom_call.1} parent=5 // pred_fallthru
        _
      %p694 = scmp.lt.s32.totalorder %s46, 7
      // Predicated region
      $region77: #{tpu_custom_call.1} parent=5 // pred_check
        %p695 = pneg %p694
      $region78: #{tpu_custom_call.1} parent=5 // pred_check_branch
        %697 = sbr.rel (%p695) target = $region80
      $region79: #{tpu_custom_call.1} parent=5 // pred_region
        // Predicated region
        $region81: #{tpu_custom_call.1} parent=79 // pred_check
          %p698 = pneg %p106
        $region82: #{tpu_custom_call.1} parent=79 // pred_check_branch
          %700 = sbr.rel (%p698) target = $region84
        $region83: #{tpu_custom_call.1} parent=79 // pred_region
          %s701 = sand.u32 %s46, 1
          %s702 = scalar_lea.sflag [#allocation12], %s701
          %s703 = sand.u32 %s96, 1
          %s704 = smul.addr %s703, 8
          %s705 = scalar_lea.vmem [#allocation11], %s704
          %s706 = smul.u32 2, %s53
          %s708 = ssub.s32 128, 128
          %709 = vsyncadd %s702, %s708
          %s710 = smul.addr %s54, 2
          %s711 = sadd.s32 %s706, %s710
          %s712 = smul.addr %s711, 64
          %s713 = scalar_lea.hbm %s2, %s712
          %s714 = sshll.u32 %s705, 4
          %s715 = int_to_ptr.vmem [resolvable:$true] %s714
          %720 = dma.hbm_to_vmem [thread:$0]  %s713, 128, %s715, %s702, 64, 64, 4
        $region84: #{tpu_custom_call.1} parent=79 // pred_fallthru
          _
      $region80: #{tpu_custom_call.1} parent=5 // pred_fallthru
        _
      %p721 = scmp.le.s32.totalorder 1, %s46
      %p722 = scmp.lt.s32.totalorder %s46, 8
      %p723 = pnand %p721, %p722
      %p724 = pneg %p723
      // Predicated region
      $region85: #{tpu_custom_call.1} parent=5 // pred_check
        _
      $region86: #{tpu_custom_call.1} parent=5 // pred_check_branch
        %726 = sbr.rel (%p723) target = $region88
      $region87: #{tpu_custom_call.1} parent=5 // pred_region
        %s727 = ssub.s32 %s46, 1
        // Predicated region
        $region89: #{tpu_custom_call.1} parent=87 // pred_check
          %p728 = pneg %p84
        $region90: #{tpu_custom_call.1} parent=87 // pred_check_branch
          %730 = sbr.rel (%p728) target = $region92
        $region91: #{tpu_custom_call.1} parent=87 // pred_region
          %731 = dma.done [#allocation9], 2048
        $region92: #{tpu_custom_call.1} parent=87 // pred_fallthru
          _
        %s732 = sand.u32 %s51, 1
        %s733 = scalar_lea.sflag [#allocation12], %s732
        %s734 = sand.u32 %s99, 1
        %s735 = smul.addr %s734, 8
        %s736 = scalar_lea.vmem [#allocation11], %s735
        // Predicated region
        $region93: #{tpu_custom_call.1} parent=87 // pred_check
          %p737 = pneg %p112
        $region94: #{tpu_custom_call.1} parent=87 // pred_check_branch
          %739 = sbr.rel (%p737) target = $region96
        $region95: #{tpu_custom_call.1} parent=87 // pred_region
          %740 = dma.done %s733, 128
        $region96: #{tpu_custom_call.1} parent=87 // pred_fallthru
          _
        // Predicated region
        $region97: #{tpu_custom_call.1} parent=87 // pred_check
          %p741 = pneg %p138
        $region98: #{tpu_custom_call.1} parent=87 // pred_check_branch
          %743 = sbr.rel (%p741) target = $region100
        $region99: #{tpu_custom_call.1} parent=87 // pred_region
          %744 = dma.done [#allocation12], 256
        $region100: #{tpu_custom_call.1} parent=87 // pred_fallthru
          _
        // Predicated region
        $region101: #{tpu_custom_call.1} parent=87 // pred_check
          %p745 = pneg %p159
        $region102: #{tpu_custom_call.1} parent=87 // pred_check_branch
          %747 = sbr.rel (%p745) target = $region104
        $region103: #{tpu_custom_call.1} parent=87 // pred_region
          %748 = dma.done [#allocation15], 256
        $region104: #{tpu_custom_call.1} parent=87 // pred_fallthru
          _
        // Predicated region
        $region105: #{tpu_custom_call.1} parent=87 // pred_check
          %p749 = pneg %p180
        $region106: #{tpu_custom_call.1} parent=87 // pred_check_branch
          %751 = sbr.rel (%p749) target = $region108
        $region107: #{tpu_custom_call.1} parent=87 // pred_region
          %752 = dma.done [#allocation15], 16
        $region108: #{tpu_custom_call.1} parent=87 // pred_fallthru
          _
        // Predicated region
        $region109: #{tpu_custom_call.1} parent=87 // pred_check
          %p753 = pneg %p201
        $region110: #{tpu_custom_call.1} parent=87 // pred_check_branch
          %755 = sbr.rel (%p753) target = $region112
        $region111: #{tpu_custom_call.1} parent=87 // pred_region
          %756 = dma.done [#allocation18], 256
        $region112: #{tpu_custom_call.1} parent=87 // pred_fallthru
          _
        // Predicated region
        $region113: #{tpu_custom_call.1} parent=87 // pred_check
          %p757 = pneg %p222
        $region114: #{tpu_custom_call.1} parent=87 // pred_check_branch
          %759 = sbr.rel (%p757) target = $region116
        $region115: #{tpu_custom_call.1} parent=87 // pred_region
          %760 = dma.done [#allocation18], 16
        $region116: #{tpu_custom_call.1} parent=87 // pred_fallthru
          _
        // Predicated region
        $region117: #{tpu_custom_call.1} parent=87 // pred_check
          %p761 = pneg %p243
        $region118: #{tpu_custom_call.1} parent=87 // pred_check_branch
          %763 = sbr.rel (%p761) target = $region120
        $region119: #{tpu_custom_call.1} parent=87 // pred_region
          %764 = dma.done [#allocation21], 256
        $region120: #{tpu_custom_call.1} parent=87 // pred_fallthru
          _
        // Predicated region
        $region121: #{tpu_custom_call.1} parent=87 // pred_check
          %p765 = pneg %p264
        $region122: #{tpu_custom_call.1} parent=87 // pred_check_branch
          %767 = sbr.rel (%p765) target = $region124
        $region123: #{tpu_custom_call.1} parent=87 // pred_region
          %768 = dma.done [#allocation21], 16
        $region124: #{tpu_custom_call.1} parent=87 // pred_fallthru
          _
        // Predicated region
        $region125: #{tpu_custom_call.1} parent=87 // pred_check
          %p769 = pneg %p285
        $region126: #{tpu_custom_call.1} parent=87 // pred_check_branch
          %771 = sbr.rel (%p769) target = $region128
        $region127: #{tpu_custom_call.1} parent=87 // pred_region
          %772 = dma.done [#allocation24], 256
        $region128: #{tpu_custom_call.1} parent=87 // pred_fallthru
          _
        // Predicated region
        $region129: #{tpu_custom_call.1} parent=87 // pred_check
          %p773 = pneg %p306
        $region130: #{tpu_custom_call.1} parent=87 // pred_check_branch
          %775 = sbr.rel (%p773) target = $region132
        $region131: #{tpu_custom_call.1} parent=87 // pred_region
          %776 = dma.done [#allocation24], 16
        $region132: #{tpu_custom_call.1} parent=87 // pred_fallthru
          _
        // Predicated region
        $region133: #{tpu_custom_call.1} parent=87 // pred_check
          %p777 = pneg %p327
        $region134: #{tpu_custom_call.1} parent=87 // pred_check_branch
          %779 = sbr.rel (%p777) target = $region136
        $region135: #{tpu_custom_call.1} parent=87 // pred_region
          %780 = dma.done [#allocation27], 16
        $region136: #{tpu_custom_call.1} parent=87 // pred_fallthru
          _
        // Predicated region
        $region137: #{tpu_custom_call.1} parent=87 // pred_check
          %p781 = pneg %p369
        $region138: #{tpu_custom_call.1} parent=87 // pred_check_branch
          %783 = sbr.rel (%p781) target = $region140
        $region139: #{tpu_custom_call.1} parent=87 // pred_region
          %784 = dma.done [#allocation27], 256
        $region140: #{tpu_custom_call.1} parent=87 // pred_fallthru
          _
        // Predicated region
        $region141: #{tpu_custom_call.1} parent=87 // pred_check
          %p785 = pneg %p390
        $region142: #{tpu_custom_call.1} parent=87 // pred_check_branch
          %787 = sbr.rel (%p785) target = $region144
        $region143: #{tpu_custom_call.1} parent=87 // pred_region
          %788 = dma.done [#allocation30], 16
        $region144: #{tpu_custom_call.1} parent=87 // pred_fallthru
          _
        // Predicated region
        $region145: #{tpu_custom_call.1} parent=87 // pred_check
          %p789 = pneg %p411
        $region146: #{tpu_custom_call.1} parent=87 // pred_check_branch
          %791 = sbr.rel (%p789) target = $region148
        $region147: #{tpu_custom_call.1} parent=87 // pred_region
          %792 = dma.done [#allocation30], 768
        $region148: #{tpu_custom_call.1} parent=87 // pred_fallthru
          _
        // Predicated region
        $region149: #{tpu_custom_call.1} parent=87 // pred_check
          %p793 = pneg %p432
        $region150: #{tpu_custom_call.1} parent=87 // pred_check_branch
          %795 = sbr.rel (%p793) target = $region152
        $region151: #{tpu_custom_call.1} parent=87 // pred_region
          %796 = dma.done [#allocation33], 16
        $region152: #{tpu_custom_call.1} parent=87 // pred_fallthru
          _
        %p797 = pneg %p84
        %p798 = pneg %p81
        %s799 = sand.u32 %s51, 1
        %s800 = scalar_lea.sflag [#allocation12], %s799
        %s801 = sand.u32 %s99, 1
        %s802 = smul.addr %s801, 8
        %s803 = scalar_lea.vmem [#allocation11], %s802
        %p804 = pneg %p112
        %p805 = pneg %p109
        %p806 = pneg %p138
        %p807 = pneg %p135
        %p808 = pneg %p159
        %p809 = pneg %p156
        %p810 = pneg %p180
        %p811 = pneg %p177
        %p812 = pneg %p201
        %p813 = pneg %p198
        %p814 = pneg %p222
        %p815 = pneg %p219
        %p816 = pneg %p243
        %p817 = pneg %p240
        %p818 = pneg %p264
        %p819 = pneg %p261
        %p820 = pneg %p285
        %p821 = pneg %p282
        %p822 = pneg %p306
        %p823 = pneg %p303
        %p824 = pneg %p327
        %p825 = pneg %p324
        %p826 = pneg %p348
        %p827 = pneg %p345
        %p828 = pneg %p369
        %p829 = pneg %p366
        %p830 = pneg %p390
        %p831 = pneg %p387
        %p832 = pneg %p411
        %p833 = pneg %p408
        %p834 = pneg %p432
        %p835 = pneg %p429
        %p836 = pneg %p460
        %p837 = pneg %p457
        %s838 = sand.u32 %s447, 1
        %s839 = scalar_lea.sflag [#allocation10], %s838
        %s840 = sand.u32 %s447, 1
        %s841 = smul.addr %s840, 8
        %s842 = scalar_lea.vmem [#allocation34], %s841
        %p843 = pneg %p488
        %p844 = pneg %p485
        %s845 = sand.u32 %s475, 1
        %s846 = scalar_lea.sflag [#allocation36], %s845
        %s847 = sand.u32 %s475, 1
        %s848 = smul.addr %s847, 16
        %s849 = scalar_lea.vmem [#allocation35], %s848
        %s850 = smul.u32 16, %s55
        %s851 = smul.u32 2, %s55
        %s852 = smul.u32 2, %s55
        %s853 = smul.u32 2, %s55
        %s854 = smul.u32 2, %s55
        %v856 = vld [vmem:[#allocation13] sm:$0xff]
        %v857 = vld [vmem:[#allocation13 + $0x8] sm:$0xff]
        %v858 = vstv %s56
        %vm859 = vcmp.gt.s32.totalorder %v856, %v858
        %vm860 = vcmp.gt.s32.totalorder %v857, %v858
        %s861 = sld [smem:[#allocation6 + %s55]]
        %p862 = scmp.gt.s32.totalorder %s861, %s56
        // Predicated region
        $region153: #{tpu_custom_call.1} parent=87 // pred_check
          %p863 = pneg %p862
        $region154: #{tpu_custom_call.1} parent=87 // pred_check_branch
          %865 = sbr.rel (%p863) target = $region156
        $region155: #{tpu_custom_call.1} parent=87 // pred_region
          %v866 = vld [vmem:[#allocation8] sm:$0xf]
          %v867 = vld [vmem:[#allocation8 + $0x4] sm:$0xf]
          %v868 = vld [vmem:[#allocation8 + $0x8] sm:$0xf]
          %v869 = vld [vmem:[#allocation8 + $0xc] sm:$0xf]
          %v870 = vld [vmem:[#allocation8 + $0x10] sm:$0xf]
          %v871 = vld [vmem:[#allocation8 + $0x14] sm:$0xf]
          %v872 = vld [vmem:[#allocation8 + $0x18] sm:$0xf]
          %v873 = vld [vmem:[#allocation8 + $0x1c] sm:$0xf]
          %v874 = vld [vmem:[#allocation8 + $0x20] sm:$0xf]
          %v875 = vld [vmem:[#allocation8 + $0x24] sm:$0xf]
          %v876 = vld [vmem:[#allocation8 + $0x28] sm:$0xf]
          %v877 = vld [vmem:[#allocation8 + $0x2c] sm:$0xf]
          %v878 = vld [vmem:[#allocation8 + $0x30] sm:$0xf]
          %v879 = vld [vmem:[#allocation8 + $0x34] sm:$0xf]
          %v880 = vld [vmem:[#allocation8 + $0x38] sm:$0xf]
          %v881 = vld [vmem:[#allocation8 + $0x3c] sm:$0xf]
          %v882 = vld [vmem:[#allocation8 + $0x40] sm:$0xf]
          %v883 = vld [vmem:[#allocation8 + $0x44] sm:$0xf]
          %v884 = vld [vmem:[#allocation8 + $0x48] sm:$0xf]
          %v885 = vld [vmem:[#allocation8 + $0x4c] sm:$0xf]
          %v886 = vld [vmem:[#allocation8 + $0x50] sm:$0xf]
          %v887 = vld [vmem:[#allocation8 + $0x54] sm:$0xf]
          %v888 = vld [vmem:[#allocation8 + $0x58] sm:$0xf]
          %v889 = vld [vmem:[#allocation8 + $0x5c] sm:$0xf]
          %v890 = vld [vmem:[#allocation8 + $0x60] sm:$0xf]
          %v891 = vld [vmem:[#allocation8 + $0x64] sm:$0xf]
          %v892 = vld [vmem:[#allocation8 + $0x68] sm:$0xf]
          %v893 = vld [vmem:[#allocation8 + $0x6c] sm:$0xf]
          %v894 = vld [vmem:[#allocation8 + $0x70] sm:$0xf]
          %v895 = vld [vmem:[#allocation8 + $0x74] sm:$0xf]
          %v896 = vld [vmem:[#allocation8 + $0x78] sm:$0xf]
          %v897 = vld [vmem:[#allocation8 + $0x7c] sm:$0xf]
          %p898 = scmp.eq.s32.totalorder %s56, 0
          // Predicated region
          $region157: #{tpu_custom_call.1} parent=155 // pred_check
            %p899 = pneg %p898
          $region158: #{tpu_custom_call.1} parent=155 // pred_check_branch
            %901 = sbr.rel (%p899) target = $region160
          $region159: #{tpu_custom_call.1} parent=155 // pred_region
            %v902 = vunpack.c.l.bf16 %v866
            %v903 = vunpack.c.l.bf16 %v867
            %v904 = vunpack.c.l.bf16 %v868
            %v905 = vunpack.c.l.bf16 %v869
            %v906 = vunpack.c.l.bf16 %v870
            %v907 = vunpack.c.l.bf16 %v871
            %v908 = vunpack.c.l.bf16 %v872
            %v909 = vunpack.c.l.bf16 %v873
            %v910 = vunpack.c.l.bf16 %v874
            %v911 = vunpack.c.l.bf16 %v875
            %v912 = vunpack.c.l.bf16 %v876
            %v913 = vunpack.c.l.bf16 %v877
            %v914 = vunpack.c.l.bf16 %v878
            %v915 = vunpack.c.l.bf16 %v879
            %v916 = vunpack.c.l.bf16 %v880
            %v917 = vunpack.c.l.bf16 %v881
            %v918 = vunpack.c.l.bf16 %v882
            %v919 = vunpack.c.l.bf16 %v883
            %v920 = vunpack.c.l.bf16 %v884
            %v921 = vunpack.c.l.bf16 %v885
            %v922 = vunpack.c.l.bf16 %v886
            %v923 = vunpack.c.l.bf16 %v887
            %v924 = vunpack.c.l.bf16 %v888
            %v925 = vunpack.c.l.bf16 %v889
            %v926 = vunpack.c.l.bf16 %v890
            %v927 = vunpack.c.l.bf16 %v891
            %v928 = vunpack.c.l.bf16 %v892
            %v929 = vunpack.c.l.bf16 %v893
            %v930 = vunpack.c.l.bf16 %v894
            %v931 = vunpack.c.l.bf16 %v895
            %v932 = vunpack.c.l.bf16 %v896
            %v933 = vunpack.c.l.bf16 %v897
            %vm934 = vcmask 261120
            %v935 = vsel %vm934, %v902, 0.0
            %v936 = vsel %vm934, %v903, 0.0
            %v937 = vadd.f32 %v935, %v936
            %v938 = vrot.slane %v937, 4
            %v939 = vadd.f32 %v937, %v938
            %v940 = vrot.slane %v939, 2
            %v941 = vadd.f32 %v939, %v940
            %v942 = vrot.slane %v941, 1
            %v943 = vadd.f32 %v941, %v942
            %v944 = vsel %vm934, %v904, 0.0
            %v945 = vsel %vm934, %v905, 0.0
            %v946 = vadd.f32 %v944, %v945
            %v947 = vrot.slane %v946, 4
            %v948 = vadd.f32 %v946, %v947
            %v949 = vrot.slane %v948, 2
            %v950 = vadd.f32 %v948, %v949
            %v951 = vrot.slane %v950, 1
            %v952 = vadd.f32 %v950, %v951
            %v953 = vsel %vm934, %v906, 0.0
            %v954 = vsel %vm934, %v907, 0.0
            %v955 = vadd.f32 %v953, %v954
            %v956 = vrot.slane %v955, 4
            %v957 = vadd.f32 %v955, %v956
            %v958 = vrot.slane %v957, 2
            %v959 = vadd.f32 %v957, %v958
            %v960 = vrot.slane %v959, 1
            %v961 = vadd.f32 %v959, %v960
            %v962 = vsel %vm934, %v908, 0.0
            %v963 = vsel %vm934, %v909, 0.0
            %v964 = vadd.f32 %v962, %v963
            %v965 = vrot.slane %v964, 4
            %v966 = vadd.f32 %v964, %v965
            %v967 = vrot.slane %v966, 2
            %v968 = vadd.f32 %v966, %v967
            %v969 = vrot.slane %v968, 1
            %v970 = vadd.f32 %v968, %v969
            %v971 = vsel %vm934, %v910, 0.0
            %v972 = vsel %vm934, %v911, 0.0
            %v973 = vadd.f32 %v971, %v972
            %v974 = vrot.slane %v973, 4
            %v975 = vadd.f32 %v973, %v974
            %v976 = vrot.slane %v975, 2
            %v977 = vadd.f32 %v975, %v976
            %v978 = vrot.slane %v977, 1
            %v979 = vadd.f32 %v977, %v978
            %v980 = vsel %vm934, %v912, 0.0
            %v981 = vsel %vm934, %v913, 0.0
            %v982 = vadd.f32 %v980, %v981
            %v983 = vrot.slane %v982, 4
            %v984 = vadd.f32 %v982, %v983
            %v985 = vrot.slane %v984, 2
            %v986 = vadd.f32 %v984, %v985
            %v987 = vrot.slane %v986, 1
            %v988 = vadd.f32 %v986, %v987
            %v989 = vsel %vm934, %v914, 0.0
            %v990 = vsel %vm934, %v915, 0.0
            %v991 = vadd.f32 %v989, %v990
            %v992 = vrot.slane %v991, 4
            %v993 = vadd.f32 %v991, %v992
            %v994 = vrot.slane %v993, 2
            %v995 = vadd.f32 %v993, %v994
            %v996 = vrot.slane %v995, 1
            %v997 = vadd.f32 %v995, %v996
            %v998 = vsel %vm934, %v916, 0.0
            %v999 = vsel %vm934, %v917, 0.0
            %v1000 = vadd.f32 %v998, %v999
            %v1001 = vrot.slane %v1000, 4
            %v1002 = vadd.f32 %v1000, %v1001
            %v1003 = vrot.slane %v1002, 2
            %v1004 = vadd.f32 %v1002, %v1003
            %v1005 = vrot.slane %v1004, 1
            %v1006 = vadd.f32 %v1004, %v1005
            %v1007 = vsel %vm934, %v918, 0.0
            %v1008 = vsel %vm934, %v919, 0.0
            %v1009 = vadd.f32 %v1007, %v1008
            %v1010 = vrot.slane %v1009, 4
            %v1011 = vadd.f32 %v1009, %v1010
            %v1012 = vrot.slane %v1011, 2
            %v1013 = vadd.f32 %v1011, %v1012
            %v1014 = vrot.slane %v1013, 1
            %v1015 = vadd.f32 %v1013, %v1014
            %v1016 = vsel %vm934, %v920, 0.0
            %v1017 = vsel %vm934, %v921, 0.0
            %v1018 = vadd.f32 %v1016, %v1017
            %v1019 = vrot.slane %v1018, 4
            %v1020 = vadd.f32 %v1018, %v1019
            %v1021 = vrot.slane %v1020, 2
            %v1022 = vadd.f32 %v1020, %v1021
            %v1023 = vrot.slane %v1022, 1
            %v1024 = vadd.f32 %v1022, %v1023
            %v1025 = vsel %vm934, %v922, 0.0
            %v1026 = vsel %vm934, %v923, 0.0
            %v1027 = vadd.f32 %v1025, %v1026
            %v1028 = vrot.slane %v1027, 4
            %v1029 = vadd.f32 %v1027, %v1028
            %v1030 = vrot.slane %v1029, 2
            %v1031 = vadd.f32 %v1029, %v1030
            %v1032 = vrot.slane %v1031, 1
            %v1033 = vadd.f32 %v1031, %v1032
            %v1034 = vsel %vm934, %v924, 0.0
            %v1035 = vsel %vm934, %v925, 0.0
            %v1036 = vadd.f32 %v1034, %v1035
            %v1037 = vrot.slane %v1036, 4
            %v1038 = vadd.f32 %v1036, %v1037
            %v1039 = vrot.slane %v1038, 2
            %v1040 = vadd.f32 %v1038, %v1039
            %v1041 = vrot.slane %v1040, 1
            %v1042 = vadd.f32 %v1040, %v1041
            %v1043 = vsel %vm934, %v926, 0.0
            %v1044 = vsel %vm934, %v927, 0.0
            %v1045 = vadd.f32 %v1043, %v1044
            %v1046 = vrot.slane %v1045, 4
            %v1047 = vadd.f32 %v1045, %v1046
            %v1048 = vrot.slane %v1047, 2
            %v1049 = vadd.f32 %v1047, %v1048
            %v1050 = vrot.slane %v1049, 1
            %v1051 = vadd.f32 %v1049, %v1050
            %v1052 = vsel %vm934, %v928, 0.0
            %v1053 = vsel %vm934, %v929, 0.0
            %v1054 = vadd.f32 %v1052, %v1053
            %v1055 = vrot.slane %v1054, 4
            %v1056 = vadd.f32 %v1054, %v1055
            %v1057 = vrot.slane %v1056, 2
            %v1058 = vadd.f32 %v1056, %v1057
            %v1059 = vrot.slane %v1058, 1
            %v1060 = vadd.f32 %v1058, %v1059
            %v1061 = vsel %vm934, %v930, 0.0
            %v1062 = vsel %vm934, %v931, 0.0
            %v1063 = vadd.f32 %v1061, %v1062
            %v1064 = vrot.slane %v1063, 4
            %v1065 = vadd.f32 %v1063, %v1064
            %v1066 = vrot.slane %v1065, 2
            %v1067 = vadd.f32 %v1065, %v1066
            %v1068 = vrot.slane %v1067, 1
            %v1069 = vadd.f32 %v1067, %v1068
            %v1070 = vsel %vm934, %v932, 0.0
            %v1071 = vsel %vm934, %v933, 0.0
            %v1072 = vadd.f32 %v1070, %v1071
            %v1073 = vrot.slane %v1072, 4
            %v1074 = vadd.f32 %v1072, %v1073
            %v1075 = vrot.slane %v1074, 2
            %v1076 = vadd.f32 %v1074, %v1075
            %v1077 = vrot.slane %v1076, 1
            %v1078 = vadd.f32 %v1076, %v1077
            %v1079 = vmul.f32 %v943, 0.0625
            %v1080 = vmul.f32 %v952, 0.0625
            %v1081 = vmul.f32 %v961, 0.0625
            %v1082 = vmul.f32 %v970, 0.0625
            %v1083 = vmul.f32 %v979, 0.0625
            %v1084 = vmul.f32 %v988, 0.0625
            %v1085 = vmul.f32 %v997, 0.0625
            %v1086 = vmul.f32 %v1006, 0.0625
            %v1087 = vmul.f32 %v1015, 0.0625
            %v1088 = vmul.f32 %v1024, 0.0625
            %v1089 = vmul.f32 %v1033, 0.0625
            %v1090 = vmul.f32 %v1042, 0.0625
            %v1091 = vmul.f32 %v1051, 0.0625
            %v1092 = vmul.f32 %v1060, 0.0625
            %v1093 = vmul.f32 %v1069, 0.0625
            %v1094 = vmul.f32 %v1078, 0.0625
            %v1095 = vpack.c.bf16 %v1079, %v1079
            %v1096 = vpack.c.bf16 %v1080, %v1080
            %v1097 = vpack.c.bf16 %v1081, %v1081
            %v1098 = vpack.c.bf16 %v1082, %v1082
            %v1099 = vpack.c.bf16 %v1083, %v1083
            %v1100 = vpack.c.bf16 %v1084, %v1084
            %v1101 = vpack.c.bf16 %v1085, %v1085
            %v1102 = vpack.c.bf16 %v1086, %v1086
            %v1103 = vpack.c.bf16 %v1087, %v1087
            %v1104 = vpack.c.bf16 %v1088, %v1088
            %v1105 = vpack.c.bf16 %v1089, %v1089
            %v1106 = vpack.c.bf16 %v1090, %v1090
            %v1107 = vpack.c.bf16 %v1091, %v1091
            %v1108 = vpack.c.bf16 %v1092, %v1092
            %v1109 = vpack.c.bf16 %v1093, %v1093
            %v1110 = vpack.c.bf16 %v1094, %v1094
            %v1111 = vld [vmem:[#allocation14] sm:$0xf]
            %v1112 = vld [vmem:[#allocation14 + $0x4] sm:$0xf]
            %v1113 = vld [vmem:[#allocation14 + $0x8] sm:$0xf]
            %v1114 = vld [vmem:[#allocation14 + $0xc] sm:$0xf]
            %v1115 = vld [vmem:[#allocation16] sm:$0x1]
            %v1117 = vlaneseq
            %v1118 = vshrl.u32 %v1117, 7
            %v1119 = vsub.s32 0, %v1118
            %v1120 = vrot.slane %v1115, %v1119
            %v1138 = vunpack.c.l.b16 %v1095
            %v1139 = vunpack.c.l.b16 %v1096
            %v1140 = vunpack.c.l.b16 %v1097
            %v1141 = vunpack.c.l.b16 %v1098
            %v1142 = vunpack.c.l.b16 %v1099
            %v1143 = vunpack.c.l.b16 %v1100
            %v1144 = vunpack.c.l.b16 %v1101
            %v1145 = vunpack.c.l.b16 %v1102
            %v1146 = vunpack.c.l.b16 %v1103
            %v1147 = vunpack.c.l.b16 %v1104
            %v1148 = vunpack.c.l.b16 %v1105
            %v1149 = vunpack.c.l.b16 %v1106
            %v1150 = vunpack.c.l.b16 %v1107
            %v1151 = vunpack.c.l.b16 %v1108
            %v1152 = vunpack.c.l.b16 %v1109
            %v1153 = vunpack.c.l.b16 %v1110
            %vm1154 = vcmask 1041409
            %v1155 = vsel %vm1154, %v1139, %v1138
            %vm1156 = vcmask 1042434
            %v1157 = vsel %vm1156, %v1140, %v1155
            %vm1158 = vcmask 1043459
            %v1159 = vsel %vm1158, %v1141, %v1157
            %vm1160 = vcmask 1044484
            %v1161 = vsel %vm1160, %v1142, %v1159
            %vm1162 = vcmask 1045509
            %v1163 = vsel %vm1162, %v1143, %v1161
            %vm1164 = vcmask 1046534
            %v1165 = vsel %vm1164, %v1144, %v1163
            %vm1166 = vcmask 1047559
            %v1167 = vsel %vm1166, %v1145, %v1165
            %v1168 = vsel %vm1154, %v1147, %v1146
            %v1169 = vsel %vm1156, %v1148, %v1168
            %v1170 = vsel %vm1158, %v1149, %v1169
            %v1171 = vsel %vm1160, %v1150, %v1170
            %v1172 = vsel %vm1162, %v1151, %v1171
            %v1173 = vsel %vm1164, %v1152, %v1172
            %v1174 = vsel %vm1166, %v1153, %v1173
            %v1175 = vpack.c.b16 %v1174, %v1167
            %v1180 = vunpack.c.l.b16 %v1111
            %v1181 = vunpack.c.l.b16 %v1112
            %v1182 = vunpack.c.l.b16 %v1113
            %v1183 = vunpack.c.l.b16 %v1114
            %v1184 = vpack.c.b16 %v1181, %v1180
            %v1185 = vpack.c.b16 %v1183, %v1182
            %v1189 = vsel %vm934, %v1175, 0
            %1191 = vmatprep.subr.bf16.mxu0 0
            %1192 = vmatpush1.bf16.msra.mxu0 %v1184
            %1193 = vmatprep.subr.bf16.mxu0 0
            %1194 = vmatpush1.bf16.msra.mxu0 %v1185
            %1195 = vmatprep.subr.bf16.mxu0 0
            %1196 = vmatpush1.bf16.msra.mxu0 0
            %1197 = vmatprep.subr.bf16.mxu0 0
            %1198 = vmatpush1.bf16.msra.mxu0 0
            %1199 = vmatprep.subr.bf16.mxu0 0
            %1200 = vmatpush1.bf16.msra.mxu0 0
            %1201 = vmatprep.subr.bf16.mxu0 0
            %1202 = vmatpush1.bf16.msra.mxu0 0
            %1203 = vmatprep.subr.bf16.mxu0 0
            %1204 = vmatpush1.bf16.msra.mxu0 0
            %1205 = vmatprep.subr.bf16.mxu0 0
            %1206 = vmatpush1.bf16.msra.mxu0 0
            %1207 = vmatprep.subr.bf16.mxu0 0
            %1208 = vmatpush1.bf16.msra.mxu0 0
            %1209 = vmatprep.subr.bf16.mxu0 0
            %1210 = vmatpush1.bf16.msra.mxu0 0
            %1211 = vmatprep.subr.bf16.mxu0 0
            %1212 = vmatpush1.bf16.msra.mxu0 0
            %1213 = vmatprep.subr.bf16.mxu0 0
            %1214 = vmatpush1.bf16.msra.mxu0 0
            %1215 = vmatprep.subr.bf16.mxu0 0
            %1216 = vmatpush1.bf16.msra.mxu0 0
            %1217 = vmatprep.subr.bf16.mxu0 0
            %1218 = vmatpush1.bf16.msra.mxu0 0
            %1219 = vmatprep.subr.bf16.mxu0 0
            %1220 = vmatpush1.bf16.msra.mxu0 0
            %1221 = vmatprep.subr.bf16.mxu0 0
            %1222 = vmatpush1.bf16.msra.mxu0 0
            %1223 = vmatprep.mubr.bf16.mxu0 0
            %1224 = vmatmul.mubr.bf16.gmra.mrb[0].mxu0 %v1189
            %v1225 = vpop.f32.mrb[0].mxu0
            %v1226 = vadd.f32 %v1120, %v1225
            %v1227 = vpop.f32.mrb[0].mxu0
            %v1228 = vpop.f32.mrb[0].mxu0
            %v1229 = vadd.f32 %v1120, %v1228
            %v1230 = vpop.f32.mrb[0].mxu0
            %1231 = vdwg.mxu0
            %1232 = vst.msk [vmem:[#allocation2] sm:$0xff] %vm934, %v1226
            %1233 = vst.msk [vmem:[#allocation2 + $0x8] sm:$0xff] %vm934, %v1229
            %v1234 = vld [vmem:[#allocation17] sm:$0xf]
            %v1235 = vld [vmem:[#allocation17 + $0x4] sm:$0xf]
            %v1236 = vld [vmem:[#allocation17 + $0x8] sm:$0xf]
            %v1237 = vld [vmem:[#allocation17 + $0xc] sm:$0xf]
            %v1238 = vld [vmem:[#allocation19] sm:$0x1]
            %v1240 = vlaneseq
            %v1241 = vshrl.u32 %v1240, 7
            %v1242 = vsub.s32 0, %v1241
            %v1243 = vrot.slane %v1238, %v1242
            %v1249 = vunpack.c.l.b16 %v1234
            %v1250 = vunpack.c.l.b16 %v1235
            %v1251 = vunpack.c.l.b16 %v1236
            %v1252 = vunpack.c.l.b16 %v1237
            %v1253 = vpack.c.b16 %v1250, %v1249
            %v1254 = vpack.c.b16 %v1252, %v1251
            %1257 = vmatprep.subr.bf16.mxu0 0
            %1258 = vmatpush1.bf16.msra.mxu0 %v1253
            %1259 = vmatprep.subr.bf16.mxu0 0
            %1260 = vmatpush1.bf16.msra.mxu0 %v1254
            %1261 = vmatprep.subr.bf16.mxu0 0
            %1262 = vmatpush1.bf16.msra.mxu0 0
            %1263 = vmatprep.subr.bf16.mxu0 0
            %1264 = vmatpush1.bf16.msra.mxu0 0
            %1265 = vmatprep.subr.bf16.mxu0 0
            %1266 = vmatpush1.bf16.msra.mxu0 0
            %1267 = vmatprep.subr.bf16.mxu0 0
            %1268 = vmatpush1.bf16.msra.mxu0 0
            %1269 = vmatprep.subr.bf16.mxu0 0
            %1270 = vmatpush1.bf16.msra.mxu0 0
            %1271 = vmatprep.subr.bf16.mxu0 0
            %1272 = vmatpush1.bf16.msra.mxu0 0
            %1273 = vmatprep.subr.bf16.mxu0 0
            %1274 = vmatpush1.bf16.msra.mxu0 0
            %1275 = vmatprep.subr.bf16.mxu0 0
            %1276 = vmatpush1.bf16.msra.mxu0 0
            %1277 = vmatprep.subr.bf16.mxu0 0
            %1278 = vmatpush1.bf16.msra.mxu0 0
            %1279 = vmatprep.subr.bf16.mxu0 0
            %1280 = vmatpush1.bf16.msra.mxu0 0
            %1281 = vmatprep.subr.bf16.mxu0 0
            %1282 = vmatpush1.bf16.msra.mxu0 0
            %1283 = vmatprep.subr.bf16.mxu0 0
            %1284 = vmatpush1.bf16.msra.mxu0 0
            %1285 = vmatprep.subr.bf16.mxu0 0
            %1286 = vmatpush1.bf16.msra.mxu0 0
            %1287 = vmatprep.subr.bf16.mxu0 0
            %1288 = vmatpush1.bf16.msra.mxu0 0
            %1289 = vmatprep.mubr.bf16.mxu0 0
            %1290 = vmatmul.mubr.bf16.gmra.mrb[0].mxu0 %v1189
            %v1291 = vpop.f32.mrb[0].mxu0
            %v1292 = vadd.f32 %v1243, %v1291
            %v1293 = vpop.f32.mrb[0].mxu0
            %v1294 = vpop.f32.mrb[0].mxu0
            %v1295 = vadd.f32 %v1243, %v1294
            %v1296 = vpop.f32.mrb[0].mxu0
            %1297 = vdwg.mxu0
            %1298 = vst.msk [vmem:[#allocation3] sm:$0xff] %vm934, %v1292
            %1299 = vst.msk [vmem:[#allocation3 + $0x8] sm:$0xff] %vm934, %v1295
            %v1300 = vld [vmem:[#allocation20] sm:$0xf]
            %v1301 = vld [vmem:[#allocation20 + $0x4] sm:$0xf]
            %v1302 = vld [vmem:[#allocation20 + $0x8] sm:$0xf]
            %v1303 = vld [vmem:[#allocation20 + $0xc] sm:$0xf]
            %v1304 = vld [vmem:[#allocation22] sm:$0x1]
            %v1306 = vlaneseq
            %v1307 = vshrl.u32 %v1306, 7
            %v1308 = vsub.s32 0, %v1307
            %v1309 = vrot.slane %v1304, %v1308
            %v1343 = vunpack.c.l.b16 %v866
            %v1344 = vunpack.c.l.b16 %v867
            %v1345 = vunpack.c.l.b16 %v868
            %v1346 = vunpack.c.l.b16 %v869
            %v1347 = vunpack.c.l.b16 %v870
            %v1348 = vunpack.c.l.b16 %v871
            %v1349 = vunpack.c.l.b16 %v872
            %v1350 = vunpack.c.l.b16 %v873
            %v1351 = vunpack.c.l.b16 %v874
            %v1352 = vunpack.c.l.b16 %v875
            %v1353 = vunpack.c.l.b16 %v876
            %v1354 = vunpack.c.l.b16 %v877
            %v1355 = vunpack.c.l.b16 %v878
            %v1356 = vunpack.c.l.b16 %v879
            %v1357 = vunpack.c.l.b16 %v880
            %v1358 = vunpack.c.l.b16 %v881
            %v1359 = vunpack.c.l.b16 %v882
            %v1360 = vunpack.c.l.b16 %v883
            %v1361 = vunpack.c.l.b16 %v884
            %v1362 = vunpack.c.l.b16 %v885
            %v1363 = vunpack.c.l.b16 %v886
            %v1364 = vunpack.c.l.b16 %v887
            %v1365 = vunpack.c.l.b16 %v888
            %v1366 = vunpack.c.l.b16 %v889
            %v1367 = vunpack.c.l.b16 %v890
            %v1368 = vunpack.c.l.b16 %v891
            %v1369 = vunpack.c.l.b16 %v892
            %v1370 = vunpack.c.l.b16 %v893
            %v1371 = vunpack.c.l.b16 %v894
            %v1372 = vunpack.c.l.b16 %v895
            %v1373 = vunpack.c.l.b16 %v896
            %v1374 = vunpack.c.l.b16 %v897
            %v1375 = vpack.c.b16 %v1344, %v1343
            %v1376 = vpack.c.b16 %v1346, %v1345
            %v1377 = vpack.c.b16 %v1348, %v1347
            %v1378 = vpack.c.b16 %v1350, %v1349
            %v1379 = vpack.c.b16 %v1352, %v1351
            %v1380 = vpack.c.b16 %v1354, %v1353
            %v1381 = vpack.c.b16 %v1356, %v1355
            %v1382 = vpack.c.b16 %v1358, %v1357
            %v1383 = vpack.c.b16 %v1360, %v1359
            %v1384 = vpack.c.b16 %v1362, %v1361
            %v1385 = vpack.c.b16 %v1364, %v1363
            %v1386 = vpack.c.b16 %v1366, %v1365
            %v1387 = vpack.c.b16 %v1368, %v1367
            %v1388 = vpack.c.b16 %v1370, %v1369
            %v1389 = vpack.c.b16 %v1372, %v1371
            %v1390 = vpack.c.b16 %v1374, %v1373
            %v1395 = vunpack.c.l.b16 %v1300
            %v1396 = vunpack.c.l.b16 %v1301
            %v1397 = vunpack.c.l.b16 %v1302
            %v1398 = vunpack.c.l.b16 %v1303
            %v1399 = vpack.c.b16 %v1396, %v1395
            %v1400 = vpack.c.b16 %v1398, %v1397
            %v1404 = vsel %vm934, %v1375, 0
            %v1407 = vsel %vm934, %v1376, 0
            %v1410 = vsel %vm934, %v1377, 0
            %v1413 = vsel %vm934, %v1378, 0
            %v1416 = vsel %vm934, %v1379, 0
            %v1419 = vsel %vm934, %v1380, 0
            %v1422 = vsel %vm934, %v1381, 0
            %v1425 = vsel %vm934, %v1382, 0
            %v1428 = vsel %vm934, %v1383, 0
            %v1431 = vsel %vm934, %v1384, 0
            %v1434 = vsel %vm934, %v1385, 0
            %v1437 = vsel %vm934, %v1386, 0
            %v1440 = vsel %vm934, %v1387, 0
            %v1443 = vsel %vm934, %v1388, 0
            %v1446 = vsel %vm934, %v1389, 0
            %v1449 = vsel %vm934, %v1390, 0
            %1451 = vmatprep.subr.bf16.mxu0 0
            %1452 = vmatpush1.bf16.msra.mxu0 %v1399
            %1453 = vmatprep.subr.bf16.mxu0 0
            %1454 = vmatpush1.bf16.msra.mxu0 %v1400
            %1455 = vmatprep.subr.bf16.mxu0 0
            %1456 = vmatpush1.bf16.msra.mxu0 0
            %1457 = vmatprep.subr.bf16.mxu0 0
            %1458 = vmatpush1.bf16.msra.mxu0 0
            %1459 = vmatprep.subr.bf16.mxu0 0
            %1460 = vmatpush1.bf16.msra.mxu0 0
            %1461 = vmatprep.subr.bf16.mxu0 0
            %1462 = vmatpush1.bf16.msra.mxu0 0
            %1463 = vmatprep.subr.bf16.mxu0 0
            %1464 = vmatpush1.bf16.msra.mxu0 0
            %1465 = vmatprep.subr.bf16.mxu0 0
            %1466 = vmatpush1.bf16.msra.mxu0 0
            %1467 = vmatprep.subr.bf16.mxu0 0
            %1468 = vmatpush1.bf16.msra.mxu0 0
            %1469 = vmatprep.subr.bf16.mxu0 0
            %1470 = vmatpush1.bf16.msra.mxu0 0
            %1471 = vmatprep.subr.bf16.mxu0 0
            %1472 = vmatpush1.bf16.msra.mxu0 0
            %1473 = vmatprep.subr.bf16.mxu0 0
            %1474 = vmatpush1.bf16.msra.mxu0 0
            %1475 = vmatprep.subr.bf16.mxu0 0
            %1476 = vmatpush1.bf16.msra.mxu0 0
            %1477 = vmatprep.subr.bf16.mxu0 0
            %1478 = vmatpush1.bf16.msra.mxu0 0
            %1479 = vmatprep.subr.bf16.mxu0 0
            %1480 = vmatpush1.bf16.msra.mxu0 0
            %1481 = vmatprep.subr.bf16.mxu0 0
            %1482 = vmatpush1.bf16.msra.mxu0 0
            %1483 = vmatprep.mubr.bf16.mxu0 0
            %1484 = vmatmul.mubr.bf16.gmra.mrb[0].mxu0 %v1404
            %v1485 = vpop.f32.mrb[0].mxu0
            %v1486 = vadd.f32 %v1309, %v1485
            %v1487 = vpop.f32.mrb[0].mxu0
            %v1488 = vpop.f32.mrb[0].mxu0
            %v1489 = vadd.f32 %v1309, %v1488
            %v1490 = vpop.f32.mrb[0].mxu0
            %1491 = vmatprep.mubr.bf16.mxu0 0
            %1492 = vmatmul.mubr.bf16.gmra.mrb[0].mxu0 %v1407
            %v1493 = vpop.f32.mrb[0].mxu0
            %v1494 = vadd.f32 %v1309, %v1493
            %v1495 = vpop.f32.mrb[0].mxu0
            %v1496 = vpop.f32.mrb[0].mxu0
            %v1497 = vadd.f32 %v1309, %v1496
            %v1498 = vpop.f32.mrb[0].mxu0
            %1499 = vmatprep.mubr.bf16.mxu0 0
            %1500 = vmatmul.mubr.bf16.gmra.mrb[0].mxu0 %v1410
            %v1501 = vpop.f32.mrb[0].mxu0
            %v1502 = vadd.f32 %v1309, %v1501
            %v1503 = vpop.f32.mrb[0].mxu0
            %v1504 = vpop.f32.mrb[0].mxu0
            %v1505 = vadd.f32 %v1309, %v1504
            %v1506 = vpop.f32.mrb[0].mxu0
            %1507 = vmatprep.mubr.bf16.mxu0 0
            %1508 = vmatmul.mubr.bf16.gmra.mrb[0].mxu0 %v1413
            %v1509 = vpop.f32.mrb[0].mxu0
            %v1510 = vadd.f32 %v1309, %v1509
            %v1511 = vpop.f32.mrb[0].mxu0
            %v1512 = vpop.f32.mrb[0].mxu0
            %v1513 = vadd.f32 %v1309, %v1512
            %v1514 = vpop.f32.mrb[0].mxu0
            %1515 = vmatprep.mubr.bf16.mxu0 0
            %1516 = vmatmul.mubr.bf16.gmra.mrb[0].mxu0 %v1416
            %v1517 = vpop.f32.mrb[0].mxu0
            %v1518 = vadd.f32 %v1309, %v1517
            %v1519 = vpop.f32.mrb[0].mxu0
            %v1520 = vpop.f32.mrb[0].mxu0
            %v1521 = vadd.f32 %v1309, %v1520
            %v1522 = vpop.f32.mrb[0].mxu0
            %1523 = vmatprep.mubr.bf16.mxu0 0
            %1524 = vmatmul.mubr.bf16.gmra.mrb[0].mxu0 %v1419
            %v1525 = vpop.f32.mrb[0].mxu0
            %v1526 = vadd.f32 %v1309, %v1525
            %v1527 = vpop.f32.mrb[0].mxu0
            %v1528 = vpop.f32.mrb[0].mxu0
            %v1529 = vadd.f32 %v1309, %v1528
            %v1530 = vpop.f32.mrb[0].mxu0
            %1531 = vmatprep.mubr.bf16.mxu0 0
            %1532 = vmatmul.mubr.bf16.gmra.mrb[0].mxu0 %v1422
            %v1533 = vpop.f32.mrb[0].mxu0
            %v1534 = vadd.f32 %v1309, %v1533
            %v1535 = vpop.f32.mrb[0].mxu0
            %v1536 = vpop.f32.mrb[0].mxu0
            %v1537 = vadd.f32 %v1309, %v1536
            %v1538 = vpop.f32.mrb[0].mxu0
            %1539 = vmatprep.mubr.bf16.mxu0 0
            %1540 = vmatmul.mubr.bf16.gmra.mrb[0].mxu0 %v1425
            %v1541 = vpop.f32.mrb[0].mxu0
            %v1542 = vadd.f32 %v1309, %v1541
            %v1543 = vpop.f32.mrb[0].mxu0
            %v1544 = vpop.f32.mrb[0].mxu0
            %v1545 = vadd.f32 %v1309, %v1544
            %v1546 = vpop.f32.mrb[0].mxu0
            %1547 = vmatprep.mubr.bf16.mxu0 0
            %1548 = vmatmul.mubr.bf16.gmra.mrb[0].mxu0 %v1428
            %v1549 = vpop.f32.mrb[0].mxu0
            %v1550 = vadd.f32 %v1309, %v1549
            %v1551 = vpop.f32.mrb[0].mxu0
            %v1552 = vpop.f32.mrb[0].mxu0
            %v1553 = vadd.f32 %v1309, %v1552
            %v1554 = vpop.f32.mrb[0].mxu0
            %1555 = vmatprep.mubr.bf16.mxu0 0
            %1556 = vmatmul.mubr.bf16.gmra.mrb[0].mxu0 %v1431
            %v1557 = vpop.f32.mrb[0].mxu0
            %v1558 = vadd.f32 %v1309, %v1557
            %v1559 = vpop.f32.mrb[0].mxu0
            %v1560 = vpop.f32.mrb[0].mxu0
            %v1561 = vadd.f32 %v1309, %v1560
            %v1562 = vpop.f32.mrb[0].mxu0
            %1563 = vmatprep.mubr.bf16.mxu0 0
            %1564 = vmatmul.mubr.bf16.gmra.mrb[0].mxu0 %v1434
            %v1565 = vpop.f32.mrb[0].mxu0
            %v1566 = vadd.f32 %v1309, %v1565
            %v1567 = vpop.f32.mrb[0].mxu0
            %v1568 = vpop.f32.mrb[0].mxu0
            %v1569 = vadd.f32 %v1309, %v1568
            %v1570 = vpop.f32.mrb[0].mxu0
            %1571 = vmatprep.mubr.bf16.mxu0 0
            %1572 = vmatmul.mubr.bf16.gmra.mrb[0].mxu0 %v1437
            %v1573 = vpop.f32.mrb[0].mxu0
            %v1574 = vadd.f32 %v1309, %v1573
            %v1575 = vpop.f32.mrb[0].mxu0
            %v1576 = vpop.f32.mrb[0].mxu0
            %v1577 = vadd.f32 %v1309, %v1576
            %v1578 = vpop.f32.mrb[0].mxu0
            %1579 = vmatprep.mubr.bf16.mxu0 0
            %1580 = vmatmul.mubr.bf16.gmra.mrb[0].mxu0 %v1440
            %v1581 = vpop.f32.mrb[0].mxu0
            %v1582 = vadd.f32 %v1309, %v1581
            %v1583 = vpop.f32.mrb[0].mxu0
            %v1584 = vpop.f32.mrb[0].mxu0
            %v1585 = vadd.f32 %v1309, %v1584
            %v1586 = vpop.f32.mrb[0].mxu0
            %1587 = vmatprep.mubr.bf16.mxu0 0
            %1588 = vmatmul.mubr.bf16.gmra.mrb[0].mxu0 %v1443
            %v1589 = vpop.f32.mrb[0].mxu0
            %v1590 = vadd.f32 %v1309, %v1589
            %v1591 = vpop.f32.mrb[0].mxu0
            %v1592 = vpop.f32.mrb[0].mxu0
            %v1593 = vadd.f32 %v1309, %v1592
            %v1594 = vpop.f32.mrb[0].mxu0
            %1595 = vmatprep.mubr.bf16.mxu0 0
            %1596 = vmatmul.mubr.bf16.gmra.mrb[0].mxu0 %v1446
            %v1597 = vpop.f32.mrb[0].mxu0
            %v1598 = vadd.f32 %v1309, %v1597
            %v1599 = vpop.f32.mrb[0].mxu0
            %v1600 = vpop.f32.mrb[0].mxu0
            %v1601 = vadd.f32 %v1309, %v1600
            %v1602 = vpop.f32.mrb[0].mxu0
            %1603 = vmatprep.mubr.bf16.mxu0 0
            %1604 = vmatmul.mubr.bf16.gmra.mrb[0].mxu0 %v1449
            %v1605 = vpop.f32.mrb[0].mxu0
            %v1606 = vadd.f32 %v1309, %v1605
            %v1607 = vpop.f32.mrb[0].mxu0
            %v1608 = vpop.f32.mrb[0].mxu0
            %v1609 = vadd.f32 %v1309, %v1608
            %v1610 = vpop.f32.mrb[0].mxu0
            %1611 = vdwg.mxu0
            %v1612 = vpack.c.bf16 %v1489, %v1486
            %v1613 = vpack.c.bf16 %v1497, %v1494
            %v1614 = vpack.c.bf16 %v1505, %v1502
            %v1615 = vpack.c.bf16 %v1513, %v1510
            %v1616 = vpack.c.bf16 %v1521, %v1518
            %v1617 = vpack.c.bf16 %v1529, %v1526
            %v1618 = vpack.c.bf16 %v1537, %v1534
            %v1619 = vpack.c.bf16 %v1545, %v1542
            %v1620 = vpack.c.bf16 %v1553, %v1550
            %v1621 = vpack.c.bf16 %v1561, %v1558
            %v1622 = vpack.c.bf16 %v1569, %v1566
            %v1623 = vpack.c.bf16 %v1577, %v1574
            %v1624 = vpack.c.bf16 %v1585, %v1582
            %v1625 = vpack.c.bf16 %v1593, %v1590
            %v1626 = vpack.c.bf16 %v1601, %v1598
            %v1627 = vpack.c.bf16 %v1609, %v1606
            %1628 = vst.msk [vmem:[#allocation4] sm:$0xff] %vm934, %v1612
            %1629 = vst.msk [vmem:[#allocation4 + $0x8] sm:$0xff] %vm934, %v1613
            %1630 = vst.msk [vmem:[#allocation4 + $0x10] sm:$0xff] %vm934, %v1614
            %1631 = vst.msk [vmem:[#allocation4 + $0x18] sm:$0xff] %vm934, %v1615
            %1632 = vst.msk [vmem:[#allocation4 + $0x20] sm:$0xff] %vm934, %v1616
            %1633 = vst.msk [vmem:[#allocation4 + $0x28] sm:$0xff] %vm934, %v1617
            %1634 = vst.msk [vmem:[#allocation4 + $0x30] sm:$0xff] %vm934, %v1618
            %1635 = vst.msk [vmem:[#allocation4 + $0x38] sm:$0xff] %vm934, %v1619
            %1636 = vst.msk [vmem:[#allocation4 + $0x40] sm:$0xff] %vm934, %v1620
            %1637 = vst.msk [vmem:[#allocation4 + $0x48] sm:$0xff] %vm934, %v1621
            %1638 = vst.msk [vmem:[#allocation4 + $0x50] sm:$0xff] %vm934, %v1622
            %1639 = vst.msk [vmem:[#allocation4 + $0x58] sm:$0xff] %vm934, %v1623
            %1640 = vst.msk [vmem:[#allocation4 + $0x60] sm:$0xff] %vm934, %v1624
            %1641 = vst.msk [vmem:[#allocation4 + $0x68] sm:$0xff] %vm934, %v1625
            %1642 = vst.msk [vmem:[#allocation4 + $0x70] sm:$0xff] %vm934, %v1626
            %1643 = vst.msk [vmem:[#allocation4 + $0x78] sm:$0xff] %vm934, %v1627
          $region160: #{tpu_custom_call.1} parent=155 // pred_fallthru
            _
          %v1644 = vld [vmem:[#allocation2] sm:$0xff]
          %v1645 = vld [vmem:[#allocation2 + $0x8] sm:$0xff]
          %v1646 = vld [vmem:[#allocation3] sm:$0xff]
          %v1647 = vld [vmem:[#allocation3 + $0x8] sm:$0xff]
          %v1648 = vpack.c.bf16 %v1645, %v1644
          %v1649 = vld [vmem:[#allocation23] sm:$0xf]
          %v1650 = vld [vmem:[#allocation23 + $0x4] sm:$0xf]
          %v1651 = vld [vmem:[#allocation23 + $0x8] sm:$0xf]
          %v1652 = vld [vmem:[#allocation23 + $0xc] sm:$0xf]
          %v1653 = vld [vmem:[#allocation25] sm:$0x1]
          %v1655 = vlaneseq
          %v1656 = vshrl.u32 %v1655, 7
          %v1657 = vsub.s32 0, %v1656
          %v1658 = vrot.slane %v1653, %v1657
          %v1664 = vunpack.c.l.b16 %v1649
          %v1665 = vunpack.c.l.b16 %v1650
          %v1666 = vunpack.c.l.b16 %v1651
          %v1667 = vunpack.c.l.b16 %v1652
          %v1668 = vpack.c.b16 %v1665, %v1664
          %v1669 = vpack.c.b16 %v1667, %v1666
          %vm1672 = vcmask 261120
          %v1674 = vsel %vm1672, %v1648, 0
          %1676 = vmatprep.subr.bf16.mxu0 0
          %1677 = vmatpush1.bf16.msra.mxu0 %v1668
          %1678 = vmatprep.subr.bf16.mxu0 0
          %1679 = vmatpush1.bf16.msra.mxu0 %v1669
          %1680 = vmatprep.subr.bf16.mxu0 0
          %1681 = vmatpush1.bf16.msra.mxu0 0
          %1682 = vmatprep.subr.bf16.mxu0 0
          %1683 = vmatpush1.bf16.msra.mxu0 0
          %1684 = vmatprep.subr.bf16.mxu0 0
          %1685 = vmatpush1.bf16.msra.mxu0 0
          %1686 = vmatprep.subr.bf16.mxu0 0
          %1687 = vmatpush1.bf16.msra.mxu0 0
          %1688 = vmatprep.subr.bf16.mxu0 0
          %1689 = vmatpush1.bf16.msra.mxu0 0
          %1690 = vmatprep.subr.bf16.mxu0 0
          %1691 = vmatpush1.bf16.msra.mxu0 0
          %1692 = vmatprep.subr.bf16.mxu0 0
          %1693 = vmatpush1.bf16.msra.mxu0 0
          %1694 = vmatprep.subr.bf16.mxu0 0
          %1695 = vmatpush1.bf16.msra.mxu0 0
          %1696 = vmatprep.subr.bf16.mxu0 0
          %1697 = vmatpush1.bf16.msra.mxu0 0
          %1698 = vmatprep.subr.bf16.mxu0 0
          %1699 = vmatpush1.bf16.msra.mxu0 0
          %1700 = vmatprep.subr.bf16.mxu0 0
          %1701 = vmatpush1.bf16.msra.mxu0 0
          %1702 = vmatprep.subr.bf16.mxu0 0
          %1703 = vmatpush1.bf16.msra.mxu0 0
          %1704 = vmatprep.subr.bf16.mxu0 0
          %1705 = vmatpush1.bf16.msra.mxu0 0
          %1706 = vmatprep.subr.bf16.mxu0 0
          %1707 = vmatpush1.bf16.msra.mxu0 0
          %1708 = vmatprep.mubr.bf16.mxu0 0
          %1709 = vmatmul.mubr.bf16.gmra.mrb[0].mxu0 %v1674
          %v1710 = vpop.f32.mrb[0].mxu0
          %v1711 = vadd.f32 %v1658, %v1710
          %v1712 = vpop.f32.mrb[0].mxu0
          %v1713 = vpop.f32.mrb[0].mxu0
          %v1714 = vadd.f32 %v1658, %v1713
          %v1715 = vpop.f32.mrb[0].mxu0
          %1716 = vdwg.mxu0
          %v1717 = vld [vmem:[#allocation4] sm:$0xff]
          %v1718 = vld [vmem:[#allocation4 + $0x8] sm:$0xff]
          %v1719 = vld [vmem:[#allocation4 + $0x10] sm:$0xff]
          %v1720 = vld [vmem:[#allocation4 + $0x18] sm:$0xff]
          %v1721 = vld [vmem:[#allocation4 + $0x20] sm:$0xff]
          %v1722 = vld [vmem:[#allocation4 + $0x28] sm:$0xff]
          %v1723 = vld [vmem:[#allocation4 + $0x30] sm:$0xff]
          %v1724 = vld [vmem:[#allocation4 + $0x38] sm:$0xff]
          %v1725 = vld [vmem:[#allocation4 + $0x40] sm:$0xff]
          %v1726 = vld [vmem:[#allocation4 + $0x48] sm:$0xff]
          %v1727 = vld [vmem:[#allocation4 + $0x50] sm:$0xff]
          %v1728 = vld [vmem:[#allocation4 + $0x58] sm:$0xff]
          %v1729 = vld [vmem:[#allocation4 + $0x60] sm:$0xff]
          %v1730 = vld [vmem:[#allocation4 + $0x68] sm:$0xff]
          %v1731 = vld [vmem:[#allocation4 + $0x70] sm:$0xff]
          %v1732 = vld [vmem:[#allocation4 + $0x78] sm:$0xff]
          %v1733 = vunpack.c.l.bf16 %v1717
          %v1734 = vunpack.c.h.bf16 %v1717
          %v1735 = vunpack.c.l.bf16 %v1718
          %v1736 = vunpack.c.h.bf16 %v1718
          %v1737 = vunpack.c.l.bf16 %v1719
          %v1738 = vunpack.c.h.bf16 %v1719
          %v1739 = vunpack.c.l.bf16 %v1720
          %v1740 = vunpack.c.h.bf16 %v1720
          %v1741 = vunpack.c.l.bf16 %v1721
          %v1742 = vunpack.c.h.bf16 %v1721
          %v1743 = vunpack.c.l.bf16 %v1722
          %v1744 = vunpack.c.h.bf16 %v1722
          %v1745 = vunpack.c.l.bf16 %v1723
          %v1746 = vunpack.c.h.bf16 %v1723
          %v1747 = vunpack.c.l.bf16 %v1724
          %v1748 = vunpack.c.h.bf16 %v1724
          %v1749 = vunpack.c.l.bf16 %v1725
          %v1750 = vunpack.c.h.bf16 %v1725
          %v1751 = vunpack.c.l.bf16 %v1726
          %v1752 = vunpack.c.h.bf16 %v1726
          %v1753 = vunpack.c.l.bf16 %v1727
          %v1754 = vunpack.c.h.bf16 %v1727
          %v1755 = vunpack.c.l.bf16 %v1728
          %v1756 = vunpack.c.h.bf16 %v1728
          %v1757 = vunpack.c.l.bf16 %v1729
          %v1758 = vunpack.c.h.bf16 %v1729
          %v1759 = vunpack.c.l.bf16 %v1730
          %v1760 = vunpack.c.h.bf16 %v1730
          %v1761 = vunpack.c.l.bf16 %v1731
          %v1762 = vunpack.c.h.bf16 %v1731
          %v1763 = vunpack.c.l.bf16 %v1732
          %v1764 = vunpack.c.h.bf16 %v1732
          %v1767 = vcombine.high %v1711, %v1711
          %v1769 = vunpack.c.l.s4 1966171168
          %v1770 = vunpack.c.0.s8 %v1769
          %v1771 = vlaneseq
          %v1772 = vshrl.u32 %v1771, 7
          %v1773 = vsub.s32 %v1770, %v1772
          %v1774 = vrot.slane %v1711, %v1773
          %v1776 = vunpack.c.l.s4 1966171168
          %v1777 = vunpack.c.0.s8 %v1776
          %v1778 = vlaneseq
          %v1779 = vshrl.u32 %v1778, 7
          %v1780 = vsub.s32 %v1777, %v1779
          %v1781 = vrot.slane %v1767, %v1780
          %v1782 = vcombine.high %v1774, %v1774
          %v1783 = vcombine.high %v1781, %v1781
          %v1785 = vunpack.c.l.s4 1966171168
          %v1786 = vunpack.c.0.s8 %v1785
          %v1787 = vlaneseq
          %v1788 = vshrl.u32 %v1787, 7
          %v1789 = vsub.s32 %v1786, %v1788
          %v1790 = vrot.slane %v1774, %v1789
          %v1792 = vunpack.c.l.s4 1966171168
          %v1793 = vunpack.c.0.s8 %v1792
          %v1794 = vlaneseq
          %v1795 = vshrl.u32 %v1794, 7
          %v1796 = vsub.s32 %v1793, %v1795
          %v1797 = vrot.slane %v1781, %v1796
          %v1799 = vunpack.c.l.s4 1966171168
          %v1800 = vunpack.c.0.s8 %v1799
          %v1801 = vlaneseq
          %v1802 = vshrl.u32 %v1801, 7
          %v1803 = vsub.s32 %v1800, %v1802
          %v1804 = vrot.slane %v1782, %v1803
          %v1806 = vunpack.c.l.s4 1966171168
          %v1807 = vunpack.c.0.s8 %v1806
          %v1808 = vlaneseq
          %v1809 = vshrl.u32 %v1808, 7
          %v1810 = vsub.s32 %v1807, %v1809
          %v1811 = vrot.slane %v1783, %v1810
          %v1812 = vcombine.high %v1790, %v1790
          %v1813 = vcombine.high %v1797, %v1797
          %v1814 = vcombine.high %v1804, %v1804
          %v1815 = vcombine.high %v1811, %v1811
          %v1816 = vcombine.high %v1714, %v1714
          %v1818 = vunpack.c.l.s4 1966171168
          %v1819 = vunpack.c.0.s8 %v1818
          %v1820 = vlaneseq
          %v1821 = vshrl.u32 %v1820, 7
          %v1822 = vsub.s32 %v1819, %v1821
          %v1823 = vrot.slane %v1714, %v1822
          %v1825 = vunpack.c.l.s4 1966171168
          %v1826 = vunpack.c.0.s8 %v1825
          %v1827 = vlaneseq
          %v1828 = vshrl.u32 %v1827, 7
          %v1829 = vsub.s32 %v1826, %v1828
          %v1830 = vrot.slane %v1816, %v1829
          %v1831 = vcombine.high %v1823, %v1823
          %v1832 = vcombine.high %v1830, %v1830
          %v1834 = vunpack.c.l.s4 1966171168
          %v1835 = vunpack.c.0.s8 %v1834
          %v1836 = vlaneseq
          %v1837 = vshrl.u32 %v1836, 7
          %v1838 = vsub.s32 %v1835, %v1837
          %v1839 = vrot.slane %v1823, %v1838
          %v1841 = vunpack.c.l.s4 1966171168
          %v1842 = vunpack.c.0.s8 %v1841
          %v1843 = vlaneseq
          %v1844 = vshrl.u32 %v1843, 7
          %v1845 = vsub.s32 %v1842, %v1844
          %v1846 = vrot.slane %v1830, %v1845
          %v1848 = vunpack.c.l.s4 1966171168
          %v1849 = vunpack.c.0.s8 %v1848
          %v1850 = vlaneseq
          %v1851 = vshrl.u32 %v1850, 7
          %v1852 = vsub.s32 %v1849, %v1851
          %v1853 = vrot.slane %v1831, %v1852
          %v1855 = vunpack.c.l.s4 1966171168
          %v1856 = vunpack.c.0.s8 %v1855
          %v1857 = vlaneseq
          %v1858 = vshrl.u32 %v1857, 7
          %v1859 = vsub.s32 %v1856, %v1858
          %v1860 = vrot.slane %v1832, %v1859
          %v1861 = vcombine.high %v1839, %v1839
          %v1862 = vcombine.high %v1846, %v1846
          %v1863 = vcombine.high %v1853, %v1853
          %v1864 = vcombine.high %v1860, %v1860
          %v1865 = vlaneseq
          %v1866 = vshrl.u32 %v1865, 7
          %v1867 = vsub.s32 0, %v1866
          %v1868 = vrot.slane %v1790, %v1867
          %v1869 = vlaneseq
          %v1870 = vshrl.u32 %v1869, 7
          %v1871 = vsub.s32 0, %v1870
          %v1872 = vrot.slane %v1804, %v1871
          %v1873 = vlaneseq
          %v1874 = vshrl.u32 %v1873, 7
          %v1875 = vsub.s32 0, %v1874
          %v1876 = vrot.slane %v1812, %v1875
          %v1877 = vlaneseq
          %v1878 = vshrl.u32 %v1877, 7
          %v1879 = vsub.s32 0, %v1878
          %v1880 = vrot.slane %v1814, %v1879
          %v1881 = vlaneseq
          %v1882 = vshrl.u32 %v1881, 7
          %v1883 = vsub.s32 0, %v1882
          %v1884 = vrot.slane %v1797, %v1883
          %v1885 = vlaneseq
          %v1886 = vshrl.u32 %v1885, 7
          %v1887 = vsub.s32 0, %v1886
          %v1888 = vrot.slane %v1811, %v1887
          %v1889 = vlaneseq
          %v1890 = vshrl.u32 %v1889, 7
          %v1891 = vsub.s32 0, %v1890
          %v1892 = vrot.slane %v1813, %v1891
          %v1893 = vlaneseq
          %v1894 = vshrl.u32 %v1893, 7
          %v1895 = vsub.s32 0, %v1894
          %v1896 = vrot.slane %v1815, %v1895
          %v1897 = vlaneseq
          %v1898 = vshrl.u32 %v1897, 7
          %v1899 = vsub.s32 0, %v1898
          %v1900 = vrot.slane %v1839, %v1899
          %v1901 = vlaneseq
          %v1902 = vshrl.u32 %v1901, 7
          %v1903 = vsub.s32 0, %v1902
          %v1904 = vrot.slane %v1853, %v1903
          %v1905 = vlaneseq
          %v1906 = vshrl.u32 %v1905, 7
          %v1907 = vsub.s32 0, %v1906
          %v1908 = vrot.slane %v1861, %v1907
          %v1909 = vlaneseq
          %v1910 = vshrl.u32 %v1909, 7
          %v1911 = vsub.s32 0, %v1910
          %v1912 = vrot.slane %v1863, %v1911
          %v1913 = vlaneseq
          %v1914 = vshrl.u32 %v1913, 7
          %v1915 = vsub.s32 0, %v1914
          %v1916 = vrot.slane %v1846, %v1915
          %v1917 = vlaneseq
          %v1918 = vshrl.u32 %v1917, 7
          %v1919 = vsub.s32 0, %v1918
          %v1920 = vrot.slane %v1860, %v1919
          %v1921 = vlaneseq
          %v1922 = vshrl.u32 %v1921, 7
          %v1923 = vsub.s32 0, %v1922
          %v1924 = vrot.slane %v1862, %v1923
          %v1925 = vlaneseq
          %v1926 = vshrl.u32 %v1925, 7
          %v1927 = vsub.s32 0, %v1926
          %v1928 = vrot.slane %v1864, %v1927
          %v1945 = vadd.f32 %v1733, %v1868
          %v1946 = vadd.f32 %v1734, %v1868
          %v1947 = vadd.f32 %v1735, %v1872
          %v1948 = vadd.f32 %v1736, %v1872
          %v1949 = vadd.f32 %v1737, %v1876
          %v1950 = vadd.f32 %v1738, %v1876
          %v1951 = vadd.f32 %v1739, %v1880
          %v1952 = vadd.f32 %v1740, %v1880
          %v1953 = vadd.f32 %v1741, %v1884
          %v1954 = vadd.f32 %v1742, %v1884
          %v1955 = vadd.f32 %v1743, %v1888
          %v1956 = vadd.f32 %v1744, %v1888
          %v1957 = vadd.f32 %v1745, %v1892
          %v1958 = vadd.f32 %v1746, %v1892
          %v1959 = vadd.f32 %v1747, %v1896
          %v1960 = vadd.f32 %v1748, %v1896
          %v1961 = vadd.f32 %v1749, %v1900
          %v1962 = vadd.f32 %v1750, %v1900
          %v1963 = vadd.f32 %v1751, %v1904
          %v1964 = vadd.f32 %v1752, %v1904
          %v1965 = vadd.f32 %v1753, %v1908
          %v1966 = vadd.f32 %v1754, %v1908
          %v1967 = vadd.f32 %v1755, %v1912
          %v1968 = vadd.f32 %v1756, %v1912
          %v1969 = vadd.f32 %v1757, %v1916
          %v1970 = vadd.f32 %v1758, %v1916
          %v1971 = vadd.f32 %v1759, %v1920
          %v1972 = vadd.f32 %v1760, %v1920
          %v1973 = vadd.f32 %v1761, %v1924
          %v1974 = vadd.f32 %v1762, %v1924
          %v1975 = vadd.f32 %v1763, %v1928
          %v1976 = vadd.f32 %v1764, %v1928
          %v1977 = vmax.f32 %v1945, 0.0
          %v1978 = vmax.f32 %v1946, 0.0
          %v1979 = vmax.f32 %v1947, 0.0
          %v1980 = vmax.f32 %v1948, 0.0
          %v1981 = vmax.f32 %v1949, 0.0
          %v1982 = vmax.f32 %v1950, 0.0
          %v1983 = vmax.f32 %v1951, 0.0
          %v1984 = vmax.f32 %v1952, 0.0
          %v1985 = vmax.f32 %v1953, 0.0
          %v1986 = vmax.f32 %v1954, 0.0
          %v1987 = vmax.f32 %v1955, 0.0
          %v1988 = vmax.f32 %v1956, 0.0
          %v1989 = vmax.f32 %v1957, 0.0
          %v1990 = vmax.f32 %v1958, 0.0
          %v1991 = vmax.f32 %v1959, 0.0
          %v1992 = vmax.f32 %v1960, 0.0
          %v1993 = vmax.f32 %v1961, 0.0
          %v1994 = vmax.f32 %v1962, 0.0
          %v1995 = vmax.f32 %v1963, 0.0
          %v1996 = vmax.f32 %v1964, 0.0
          %v1997 = vmax.f32 %v1965, 0.0
          %v1998 = vmax.f32 %v1966, 0.0
          %v1999 = vmax.f32 %v1967, 0.0
          %v2000 = vmax.f32 %v1968, 0.0
          %v2001 = vmax.f32 %v1969, 0.0
          %v2002 = vmax.f32 %v1970, 0.0
          %v2003 = vmax.f32 %v1971, 0.0
          %v2004 = vmax.f32 %v1972, 0.0
          %v2005 = vmax.f32 %v1973, 0.0
          %v2006 = vmax.f32 %v1974, 0.0
          %v2007 = vmax.f32 %v1975, 0.0
          %v2008 = vmax.f32 %v1976, 0.0
          %v2009 = vld [vmem:[#allocation26] sm:$0x1]
          %v2011 = vlaneseq
          %v2012 = vshrl.u32 %v2011, 7
          %v2013 = vsub.s32 0, %v2012
          %v2014 = vrot.slane %v2009, %v2013
          %v2016 = vmul.f32 %v1977, %v2014
          %v2017 = vmul.f32 %v1978, %v2014
          %v2018 = vmul.f32 %v1979, %v2014
          %v2019 = vmul.f32 %v1980, %v2014
          %v2020 = vmul.f32 %v1981, %v2014
          %v2021 = vmul.f32 %v1982, %v2014
          %v2022 = vmul.f32 %v1983, %v2014
          %v2023 = vmul.f32 %v1984, %v2014
          %v2024 = vmul.f32 %v1985, %v2014
          %v2025 = vmul.f32 %v1986, %v2014
          %v2026 = vmul.f32 %v1987, %v2014
          %v2027 = vmul.f32 %v1988, %v2014
          %v2028 = vmul.f32 %v1989, %v2014
          %v2029 = vmul.f32 %v1990, %v2014
          %v2030 = vmul.f32 %v1991, %v2014
          %v2031 = vmul.f32 %v1992, %v2014
          %v2032 = vmul.f32 %v1993, %v2014
          %v2033 = vmul.f32 %v1994, %v2014
          %v2034 = vmul.f32 %v1995, %v2014
          %v2035 = vmul.f32 %v1996, %v2014
          %v2036 = vmul.f32 %v1997, %v2014
          %v2037 = vmul.f32 %v1998, %v2014
          %v2038 = vmul.f32 %v1999, %v2014
          %v2039 = vmul.f32 %v2000, %v2014
          %v2040 = vmul.f32 %v2001, %v2014
          %v2041 = vmul.f32 %v2002, %v2014
          %v2042 = vmul.f32 %v2003, %v2014
          %v2043 = vmul.f32 %v2004, %v2014
          %v2044 = vmul.f32 %v2005, %v2014
          %v2045 = vmul.f32 %v2006, %v2014
          %v2046 = vmul.f32 %v2007, %v2014
          %v2047 = vmul.f32 %v2008, %v2014
          %v2048 = vsel %vm1672, %v2016, 0.0
          %2049 = vadd.xlane.f32.xlu0 %v2048
          %v2050 = vpop.xlane.xlu0 %2049
          %v2051 = vsel %vm1672, %v2017, 0.0
          %2052 = vadd.xlane.f32.xlu0 %v2051
          %v2053 = vpop.xlane.xlu0 %2052
          %v2054 = vsel %vm1672, %v2018, 0.0
          %2055 = vadd.xlane.f32.xlu0 %v2054
          %v2056 = vpop.xlane.xlu0 %2055
          %v2057 = vsel %vm1672, %v2019, 0.0
          %2058 = vadd.xlane.f32.xlu0 %v2057
          %v2059 = vpop.xlane.xlu0 %2058
          %v2060 = vsel %vm1672, %v2020, 0.0
          %2061 = vadd.xlane.f32.xlu0 %v2060
          %v2062 = vpop.xlane.xlu0 %2061
          %v2063 = vsel %vm1672, %v2021, 0.0
          %2064 = vadd.xlane.f32.xlu0 %v2063
          %v2065 = vpop.xlane.xlu0 %2064
          %v2066 = vsel %vm1672, %v2022, 0.0
          %2067 = vadd.xlane.f32.xlu0 %v2066
          %v2068 = vpop.xlane.xlu0 %2067
          %v2069 = vsel %vm1672, %v2023, 0.0
          %2070 = vadd.xlane.f32.xlu0 %v2069
          %v2071 = vpop.xlane.xlu0 %2070
          %v2072 = vsel %vm1672, %v2024, 0.0
          %2073 = vadd.xlane.f32.xlu0 %v2072
          %v2074 = vpop.xlane.xlu0 %2073
          %v2075 = vsel %vm1672, %v2025, 0.0
          %2076 = vadd.xlane.f32.xlu0 %v2075
          %v2077 = vpop.xlane.xlu0 %2076
          %v2078 = vsel %vm1672, %v2026, 0.0
          %2079 = vadd.xlane.f32.xlu0 %v2078
          %v2080 = vpop.xlane.xlu0 %2079
          %v2081 = vsel %vm1672, %v2027, 0.0
          %2082 = vadd.xlane.f32.xlu0 %v2081
          %v2083 = vpop.xlane.xlu0 %2082
          %v2084 = vsel %vm1672, %v2028, 0.0
          %2085 = vadd.xlane.f32.xlu0 %v2084
          %v2086 = vpop.xlane.xlu0 %2085
          %v2087 = vsel %vm1672, %v2029, 0.0
          %2088 = vadd.xlane.f32.xlu0 %v2087
          %v2089 = vpop.xlane.xlu0 %2088
          %v2090 = vsel %vm1672, %v2030, 0.0
          %2091 = vadd.xlane.f32.xlu0 %v2090
          %v2092 = vpop.xlane.xlu0 %2091
          %v2093 = vsel %vm1672, %v2031, 0.0
          %2094 = vadd.xlane.f32.xlu0 %v2093
          %v2095 = vpop.xlane.xlu0 %2094
          %v2096 = vsel %vm1672, %v2032, 0.0
          %2097 = vadd.xlane.f32.xlu0 %v2096
          %v2098 = vpop.xlane.xlu0 %2097
          %v2099 = vsel %vm1672, %v2033, 0.0
          %2100 = vadd.xlane.f32.xlu0 %v2099
          %v2101 = vpop.xlane.xlu0 %2100
          %v2102 = vsel %vm1672, %v2034, 0.0
          %2103 = vadd.xlane.f32.xlu0 %v2102
          %v2104 = vpop.xlane.xlu0 %2103
          %v2105 = vsel %vm1672, %v2035, 0.0
          %2106 = vadd.xlane.f32.xlu0 %v2105
          %v2107 = vpop.xlane.xlu0 %2106
          %v2108 = vsel %vm1672, %v2036, 0.0
          %2109 = vadd.xlane.f32.xlu0 %v2108
          %v2110 = vpop.xlane.xlu0 %2109
          %v2111 = vsel %vm1672, %v2037, 0.0
          %2112 = vadd.xlane.f32.xlu0 %v2111
          %v2113 = vpop.xlane.xlu0 %2112
          %v2114 = vsel %vm1672, %v2038, 0.0
          %2115 = vadd.xlane.f32.xlu0 %v2114
          %v2116 = vpop.xlane.xlu0 %2115
          %v2117 = vsel %vm1672, %v2039, 0.0
          %2118 = vadd.xlane.f32.xlu0 %v2117
          %v2119 = vpop.xlane.xlu0 %2118
          %v2120 = vsel %vm1672, %v2040, 0.0
          %2121 = vadd.xlane.f32.xlu0 %v2120
          %v2122 = vpop.xlane.xlu0 %2121
          %v2123 = vsel %vm1672, %v2041, 0.0
          %2124 = vadd.xlane.f32.xlu0 %v2123
          %v2125 = vpop.xlane.xlu0 %2124
          %v2126 = vsel %vm1672, %v2042, 0.0
          %2127 = vadd.xlane.f32.xlu0 %v2126
          %v2128 = vpop.xlane.xlu0 %2127
          %v2129 = vsel %vm1672, %v2043, 0.0
          %2130 = vadd.xlane.f32.xlu0 %v2129
          %v2131 = vpop.xlane.xlu0 %2130
          %v2132 = vsel %vm1672, %v2044, 0.0
          %2133 = vadd.xlane.f32.xlu0 %v2132
          %v2134 = vpop.xlane.xlu0 %2133
          %v2135 = vsel %vm1672, %v2045, 0.0
          %2136 = vadd.xlane.f32.xlu0 %v2135
          %v2137 = vpop.xlane.xlu0 %2136
          %v2138 = vsel %vm1672, %v2046, 0.0
          %2139 = vadd.xlane.f32.xlu0 %v2138
          %v2140 = vpop.xlane.xlu0 %2139
          %v2141 = vsel %vm1672, %v2047, 0.0
          %2142 = vadd.xlane.f32.xlu0 %v2141
          %v2143 = vpop.xlane.xlu0 %2142
          %v2144 = vld [vmem:[#allocation7] sm:$0x1]
          %v2146 = vlaneseq
          %v2147 = vshrl.u32 %v2146, 7
          %v2148 = vsub.s32 0, %v2147
          %v2149 = vrot.slane %v2144, %v2148
          %2150 = vset.pattern.permute.xlu0 0
          %2151 = vperm.xlu0 %2150, %v2149
          %v2152 = vpop.permute.xlu0 %2151
          %v2154 = vadd.f32 %v2050, %v2152
          %v2155 = vadd.f32 %v2053, %v2152
          %v2156 = vadd.f32 %v2056, %v2152
          %v2157 = vadd.f32 %v2059, %v2152
          %v2158 = vadd.f32 %v2062, %v2152
          %v2159 = vadd.f32 %v2065, %v2152
          %v2160 = vadd.f32 %v2068, %v2152
          %v2161 = vadd.f32 %v2071, %v2152
          %v2162 = vadd.f32 %v2074, %v2152
          %v2163 = vadd.f32 %v2077, %v2152
          %v2164 = vadd.f32 %v2080, %v2152
          %v2165 = vadd.f32 %v2083, %v2152
          %v2166 = vadd.f32 %v2086, %v2152
          %v2167 = vadd.f32 %v2089, %v2152
          %v2168 = vadd.f32 %v2092, %v2152
          %v2169 = vadd.f32 %v2095, %v2152
          %v2170 = vadd.f32 %v2098, %v2152
          %v2171 = vadd.f32 %v2101, %v2152
          %v2172 = vadd.f32 %v2104, %v2152
          %v2173 = vadd.f32 %v2107, %v2152
          %v2174 = vadd.f32 %v2110, %v2152
          %v2175 = vadd.f32 %v2113, %v2152
          %v2176 = vadd.f32 %v2116, %v2152
          %v2177 = vadd.f32 %v2119, %v2152
          %v2178 = vadd.f32 %v2122, %v2152
          %v2179 = vadd.f32 %v2125, %v2152
          %v2180 = vadd.f32 %v2128, %v2152
          %v2181 = vadd.f32 %v2131, %v2152
          %v2182 = vadd.f32 %v2134, %v2152
          %v2183 = vadd.f32 %v2137, %v2152
          %v2184 = vadd.f32 %v2140, %v2152
          %v2185 = vadd.f32 %v2143, %v2152
          %v2218 = vlaneseq
          %v2219 = vand.u32 %v2218, 127
          %v2220 = vlaneseq
          %v2221 = vshrl.u32 %v2220, 7
          %v2222 = vsub.s32 %v2219, %v2221
          %v2223 = vrot.slane %v2154, %v2222
          %v2224 = vadd.s32 %v2219, 4294967288
          %v2225 = vlaneseq
          %v2226 = vshrl.u32 %v2225, 7
          %v2227 = vsub.s32 %v2224, %v2226
          %v2228 = vrot.slane %v2155, %v2227
          %vm2229 = vcmask 130112
          %v2230 = vsel %vm2229, %v2228, %v2223
          %v2231 = vlaneseq
          %v2232 = vshrl.u32 %v2231, 7
          %v2233 = vsub.s32 %v2219, %v2232
          %v2234 = vrot.slane %v2156, %v2233
          %v2235 = vlaneseq
          %v2236 = vshrl.u32 %v2235, 7
          %v2237 = vsub.s32 %v2224, %v2236
          %v2238 = vrot.slane %v2157, %v2237
          %v2239 = vsel %vm2229, %v2238, %v2234
          %v2240 = vlaneseq
          %v2241 = vshrl.u32 %v2240, 7
          %v2242 = vsub.s32 %v2219, %v2241
          %v2243 = vrot.slane %v2158, %v2242
          %v2244 = vlaneseq
          %v2245 = vshrl.u32 %v2244, 7
          %v2246 = vsub.s32 %v2224, %v2245
          %v2247 = vrot.slane %v2159, %v2246
          %v2248 = vsel %vm2229, %v2247, %v2243
          %v2249 = vlaneseq
          %v2250 = vshrl.u32 %v2249, 7
          %v2251 = vsub.s32 %v2219, %v2250
          %v2252 = vrot.slane %v2160, %v2251
          %v2253 = vlaneseq
          %v2254 = vshrl.u32 %v2253, 7
          %v2255 = vsub.s32 %v2224, %v2254
          %v2256 = vrot.slane %v2161, %v2255
          %v2257 = vsel %vm2229, %v2256, %v2252
          %v2258 = vlaneseq
          %v2259 = vshrl.u32 %v2258, 7
          %v2260 = vsub.s32 %v2219, %v2259
          %v2261 = vrot.slane %v2162, %v2260
          %v2262 = vlaneseq
          %v2263 = vshrl.u32 %v2262, 7
          %v2264 = vsub.s32 %v2224, %v2263
          %v2265 = vrot.slane %v2163, %v2264
          %v2266 = vsel %vm2229, %v2265, %v2261
          %v2267 = vlaneseq
          %v2268 = vshrl.u32 %v2267, 7
          %v2269 = vsub.s32 %v2219, %v2268
          %v2270 = vrot.slane %v2164, %v2269
          %v2271 = vlaneseq
          %v2272 = vshrl.u32 %v2271, 7
          %v2273 = vsub.s32 %v2224, %v2272
          %v2274 = vrot.slane %v2165, %v2273
          %v2275 = vsel %vm2229, %v2274, %v2270
          %v2276 = vlaneseq
          %v2277 = vshrl.u32 %v2276, 7
          %v2278 = vsub.s32 %v2219, %v2277
          %v2279 = vrot.slane %v2166, %v2278
          %v2280 = vlaneseq
          %v2281 = vshrl.u32 %v2280, 7
          %v2282 = vsub.s32 %v2224, %v2281
          %v2283 = vrot.slane %v2167, %v2282
          %v2284 = vsel %vm2229, %v2283, %v2279
          %v2285 = vlaneseq
          %v2286 = vshrl.u32 %v2285, 7
          %v2287 = vsub.s32 %v2219, %v2286
          %v2288 = vrot.slane %v2168, %v2287
          %v2289 = vlaneseq
          %v2290 = vshrl.u32 %v2289, 7
          %v2291 = vsub.s32 %v2224, %v2290
          %v2292 = vrot.slane %v2169, %v2291
          %v2293 = vsel %vm2229, %v2292, %v2288
          %v2294 = vlaneseq
          %v2295 = vshrl.u32 %v2294, 7
          %v2296 = vsub.s32 %v2219, %v2295
          %v2297 = vrot.slane %v2170, %v2296
          %v2298 = vlaneseq
          %v2299 = vshrl.u32 %v2298, 7
          %v2300 = vsub.s32 %v2224, %v2299
          %v2301 = vrot.slane %v2171, %v2300
          %v2302 = vsel %vm2229, %v2301, %v2297
          %v2303 = vlaneseq
          %v2304 = vshrl.u32 %v2303, 7
          %v2305 = vsub.s32 %v2219, %v2304
          %v2306 = vrot.slane %v2172, %v2305
          %v2307 = vlaneseq
          %v2308 = vshrl.u32 %v2307, 7
          %v2309 = vsub.s32 %v2224, %v2308
          %v2310 = vrot.slane %v2173, %v2309
          %v2311 = vsel %vm2229, %v2310, %v2306
          %v2312 = vlaneseq
          %v2313 = vshrl.u32 %v2312, 7
          %v2314 = vsub.s32 %v2219, %v2313
          %v2315 = vrot.slane %v2174, %v2314
          %v2316 = vlaneseq
          %v2317 = vshrl.u32 %v2316, 7
          %v2318 = vsub.s32 %v2224, %v2317
          %v2319 = vrot.slane %v2175, %v2318
          %v2320 = vsel %vm2229, %v2319, %v2315
          %v2321 = vlaneseq
          %v2322 = vshrl.u32 %v2321, 7
          %v2323 = vsub.s32 %v2219, %v2322
          %v2324 = vrot.slane %v2176, %v2323
          %v2325 = vlaneseq
          %v2326 = vshrl.u32 %v2325, 7
          %v2327 = vsub.s32 %v2224, %v2326
          %v2328 = vrot.slane %v2177, %v2327
          %v2329 = vsel %vm2229, %v2328, %v2324
          %v2330 = vlaneseq
          %v2331 = vshrl.u32 %v2330, 7
          %v2332 = vsub.s32 %v2219, %v2331
          %v2333 = vrot.slane %v2178, %v2332
          %v2334 = vlaneseq
          %v2335 = vshrl.u32 %v2334, 7
          %v2336 = vsub.s32 %v2224, %v2335
          %v2337 = vrot.slane %v2179, %v2336
          %v2338 = vsel %vm2229, %v2337, %v2333
          %v2339 = vlaneseq
          %v2340 = vshrl.u32 %v2339, 7
          %v2341 = vsub.s32 %v2219, %v2340
          %v2342 = vrot.slane %v2180, %v2341
          %v2343 = vlaneseq
          %v2344 = vshrl.u32 %v2343, 7
          %v2345 = vsub.s32 %v2224, %v2344
          %v2346 = vrot.slane %v2181, %v2345
          %v2347 = vsel %vm2229, %v2346, %v2342
          %v2348 = vlaneseq
          %v2349 = vshrl.u32 %v2348, 7
          %v2350 = vsub.s32 %v2219, %v2349
          %v2351 = vrot.slane %v2182, %v2350
          %v2352 = vlaneseq
          %v2353 = vshrl.u32 %v2352, 7
          %v2354 = vsub.s32 %v2224, %v2353
          %v2355 = vrot.slane %v2183, %v2354
          %v2356 = vsel %vm2229, %v2355, %v2351
          %v2357 = vlaneseq
          %v2358 = vshrl.u32 %v2357, 7
          %v2359 = vsub.s32 %v2219, %v2358
          %v2360 = vrot.slane %v2184, %v2359
          %v2361 = vlaneseq
          %v2362 = vshrl.u32 %v2361, 7
          %v2363 = vsub.s32 %v2224, %v2362
          %v2364 = vrot.slane %v2185, %v2363
          %v2365 = vsel %vm2229, %v2364, %v2360
          %vm2366 = vcmask 1041409
          %v2367 = vsel %vm2366, %v2239, %v2230
          %vm2368 = vcmask 1042434
          %v2369 = vsel %vm2368, %v2248, %v2367
          %vm2370 = vcmask 1043459
          %v2371 = vsel %vm2370, %v2257, %v2369
          %vm2372 = vcmask 1044484
          %v2373 = vsel %vm2372, %v2266, %v2371
          %vm2374 = vcmask 1045509
          %v2375 = vsel %vm2374, %v2275, %v2373
          %vm2376 = vcmask 1046534
          %v2377 = vsel %vm2376, %v2284, %v2375
          %vm2378 = vcmask 1047559
          %v2379 = vsel %vm2378, %v2293, %v2377
          %v2380 = vsel %vm2366, %v2311, %v2302
          %v2381 = vsel %vm2368, %v2320, %v2380
          %v2382 = vsel %vm2370, %v2329, %v2381
          %v2383 = vsel %vm2372, %v2338, %v2382
          %v2384 = vsel %vm2374, %v2347, %v2383
          %v2385 = vsel %vm2376, %v2356, %v2384
          %v2386 = vsel %vm2378, %v2365, %v2385
          %vm2389 = vcmask 130048
          %v2390 = vsel %vm2389, %v2379, -inf
          %2391 = vmax.xlane.f32.xlu0 %v2390
          %v2392 = vpop.xlane.xlu0 %2391
          %v2393 = vsel %vm2389, %v2386, -inf
          %2394 = vmax.xlane.f32.xlu0 %v2393
          %v2395 = vpop.xlane.xlu0 %2394
          %v2398 = vlaneseq
          %v2399 = vshrl.u32 %v2398, 7
          %v2400 = vsub.s32 0, %v2399
          %v2401 = vrot.slane %v2392, %v2400
          %v2402 = vlaneseq
          %v2403 = vshrl.u32 %v2402, 7
          %v2404 = vsub.s32 1, %v2403
          %v2405 = vrot.slane %v2392, %v2404
          %v2406 = vlaneseq
          %v2407 = vshrl.u32 %v2406, 7
          %v2408 = vsub.s32 2, %v2407
          %v2409 = vrot.slane %v2392, %v2408
          %v2410 = vlaneseq
          %v2411 = vshrl.u32 %v2410, 7
          %v2412 = vsub.s32 3, %v2411
          %v2413 = vrot.slane %v2392, %v2412
          %v2414 = vlaneseq
          %v2415 = vshrl.u32 %v2414, 7
          %v2416 = vsub.s32 4, %v2415
          %v2417 = vrot.slane %v2392, %v2416
          %v2418 = vlaneseq
          %v2419 = vshrl.u32 %v2418, 7
          %v2420 = vsub.s32 5, %v2419
          %v2421 = vrot.slane %v2392, %v2420
          %v2422 = vlaneseq
          %v2423 = vshrl.u32 %v2422, 7
          %v2424 = vsub.s32 6, %v2423
          %v2425 = vrot.slane %v2392, %v2424
          %v2426 = vlaneseq
          %v2427 = vshrl.u32 %v2426, 7
          %v2428 = vsub.s32 7, %v2427
          %v2429 = vrot.slane %v2392, %v2428
          %v2430 = vlaneseq
          %v2431 = vshrl.u32 %v2430, 7
          %v2432 = vsub.s32 0, %v2431
          %v2433 = vrot.slane %v2395, %v2432
          %v2434 = vlaneseq
          %v2435 = vshrl.u32 %v2434, 7
          %v2436 = vsub.s32 1, %v2435
          %v2437 = vrot.slane %v2395, %v2436
          %v2438 = vlaneseq
          %v2439 = vshrl.u32 %v2438, 7
          %v2440 = vsub.s32 2, %v2439
          %v2441 = vrot.slane %v2395, %v2440
          %v2442 = vlaneseq
          %v2443 = vshrl.u32 %v2442, 7
          %v2444 = vsub.s32 3, %v2443
          %v2445 = vrot.slane %v2395, %v2444
          %v2446 = vlaneseq
          %v2447 = vshrl.u32 %v2446, 7
          %v2448 = vsub.s32 4, %v2447
          %v2449 = vrot.slane %v2395, %v2448
          %v2450 = vlaneseq
          %v2451 = vshrl.u32 %v2450, 7
          %v2452 = vsub.s32 5, %v2451
          %v2453 = vrot.slane %v2395, %v2452
          %v2454 = vlaneseq
          %v2455 = vshrl.u32 %v2454, 7
          %v2456 = vsub.s32 6, %v2455
          %v2457 = vrot.slane %v2395, %v2456
          %v2458 = vlaneseq
          %v2459 = vshrl.u32 %v2458, 7
          %v2460 = vsub.s32 7, %v2459
          %v2461 = vrot.slane %v2395, %v2460
          %v2478 = vsub.f32 %v2154, %v2401
          %v2479 = vsub.f32 %v2155, %v2401
          %v2480 = vsub.f32 %v2156, %v2405
          %v2481 = vsub.f32 %v2157, %v2405
          %v2482 = vsub.f32 %v2158, %v2409
          %v2483 = vsub.f32 %v2159, %v2409
          %v2484 = vsub.f32 %v2160, %v2413
          %v2485 = vsub.f32 %v2161, %v2413
          %v2486 = vsub.f32 %v2162, %v2417
          %v2487 = vsub.f32 %v2163, %v2417
          %v2488 = vsub.f32 %v2164, %v2421
          %v2489 = vsub.f32 %v2165, %v2421
          %v2490 = vsub.f32 %v2166, %v2425
          %v2491 = vsub.f32 %v2167, %v2425
          %v2492 = vsub.f32 %v2168, %v2429
          %v2493 = vsub.f32 %v2169, %v2429
          %v2494 = vsub.f32 %v2170, %v2433
          %v2495 = vsub.f32 %v2171, %v2433
          %v2496 = vsub.f32 %v2172, %v2437
          %v2497 = vsub.f32 %v2173, %v2437
          %v2498 = vsub.f32 %v2174, %v2441
          %v2499 = vsub.f32 %v2175, %v2441
          %v2500 = vsub.f32 %v2176, %v2445
          %v2501 = vsub.f32 %v2177, %v2445
          %v2502 = vsub.f32 %v2178, %v2449
          %v2503 = vsub.f32 %v2179, %v2449
          %v2504 = vsub.f32 %v2180, %v2453
          %v2505 = vsub.f32 %v2181, %v2453
          %v2506 = vsub.f32 %v2182, %v2457
          %v2507 = vsub.f32 %v2183, %v2457
          %v2508 = vsub.f32 %v2184, %v2461
          %v2509 = vsub.f32 %v2185, %v2461
          %v2510 = vmul.f32 %v2478, 1.442695
          %v2511 = vpow.pop %v2510
          %v2512 = vmul.f32 %v2479, 1.442695
          %v2513 = vpow.pop %v2512
          %v2514 = vmul.f32 %v2480, 1.442695
          %v2515 = vpow.pop %v2514
          %v2516 = vmul.f32 %v2481, 1.442695
          %v2517 = vpow.pop %v2516
          %v2518 = vmul.f32 %v2482, 1.442695
          %v2519 = vpow.pop %v2518
          %v2520 = vmul.f32 %v2483, 1.442695
          %v2521 = vpow.pop %v2520
          %v2522 = vmul.f32 %v2484, 1.442695
          %v2523 = vpow.pop %v2522
          %v2524 = vmul.f32 %v2485, 1.442695
          %v2525 = vpow.pop %v2524
          %v2526 = vmul.f32 %v2486, 1.442695
          %v2527 = vpow.pop %v2526
          %v2528 = vmul.f32 %v2487, 1.442695
          %v2529 = vpow.pop %v2528
          %v2530 = vmul.f32 %v2488, 1.442695
          %v2531 = vpow.pop %v2530
          %v2532 = vmul.f32 %v2489, 1.442695
          %v2533 = vpow.pop %v2532
          %v2534 = vmul.f32 %v2490, 1.442695
          %v2535 = vpow.pop %v2534
          %v2536 = vmul.f32 %v2491, 1.442695
          %v2537 = vpow.pop %v2536
          %v2538 = vmul.f32 %v2492, 1.442695
          %v2539 = vpow.pop %v2538
          %v2540 = vmul.f32 %v2493, 1.442695
          %v2541 = vpow.pop %v2540
          %v2542 = vmul.f32 %v2494, 1.442695
          %v2543 = vpow.pop %v2542
          %v2544 = vmul.f32 %v2495, 1.442695
          %v2545 = vpow.pop %v2544
          %v2546 = vmul.f32 %v2496, 1.442695
          %v2547 = vpow.pop %v2546
          %v2548 = vmul.f32 %v2497, 1.442695
          %v2549 = vpow.pop %v2548
          %v2550 = vmul.f32 %v2498, 1.442695
          %v2551 = vpow.pop %v2550
          %v2552 = vmul.f32 %v2499, 1.442695
          %v2553 = vpow.pop %v2552
          %v2554 = vmul.f32 %v2500, 1.442695
          %v2555 = vpow.pop %v2554
          %v2556 = vmul.f32 %v2501, 1.442695
          %v2557 = vpow.pop %v2556
          %v2558 = vmul.f32 %v2502, 1.442695
          %v2559 = vpow.pop %v2558
          %v2560 = vmul.f32 %v2503, 1.442695
          %v2561 = vpow.pop %v2560
          %v2562 = vmul.f32 %v2504, 1.442695
          %v2563 = vpow.pop %v2562
          %v2564 = vmul.f32 %v2505, 1.442695
          %v2565 = vpow.pop %v2564
          %v2566 = vmul.f32 %v2506, 1.442695
          %v2567 = vpow.pop %v2566
          %v2568 = vmul.f32 %v2507, 1.442695
          %v2569 = vpow.pop %v2568
          %v2570 = vmul.f32 %v2508, 1.442695
          %v2571 = vpow.pop %v2570
          %v2572 = vmul.f32 %v2509, 1.442695
          %v2573 = vpow.pop %v2572
          %2606 = vset.pattern.permute.xlu0 0
          %2607 = vperm.xlu0 %2606, %v2511
          %v2608 = vpop.permute.xlu0 %2607
          %2609 = vset.pattern.permute.xlu0 0
          %2610 = vperm.xlu0 %2609, %v2513
          %v2611 = vpop.permute.xlu0 %2610
          %2612 = vset.pattern.permute.xlu0 0
          %2613 = vperm.xlu0 %2612, %v2515
          %v2614 = vpop.permute.xlu0 %2613
          %2615 = vset.pattern.permute.xlu0 0
          %2616 = vperm.xlu0 %2615, %v2517
          %v2617 = vpop.permute.xlu0 %2616
          %2618 = vset.pattern.permute.xlu0 0
          %2619 = vperm.xlu0 %2618, %v2519
          %v2620 = vpop.permute.xlu0 %2619
          %2621 = vset.pattern.permute.xlu0 0
          %2622 = vperm.xlu0 %2621, %v2521
          %v2623 = vpop.permute.xlu0 %2622
          %2624 = vset.pattern.permute.xlu0 0
          %2625 = vperm.xlu0 %2624, %v2523
          %v2626 = vpop.permute.xlu0 %2625
          %2627 = vset.pattern.permute.xlu0 0
          %2628 = vperm.xlu0 %2627, %v2525
          %v2629 = vpop.permute.xlu0 %2628
          %2630 = vset.pattern.permute.xlu0 0
          %2631 = vperm.xlu0 %2630, %v2527
          %v2632 = vpop.permute.xlu0 %2631
          %2633 = vset.pattern.permute.xlu0 0
          %2634 = vperm.xlu0 %2633, %v2529
          %v2635 = vpop.permute.xlu0 %2634
          %2636 = vset.pattern.permute.xlu0 0
          %2637 = vperm.xlu0 %2636, %v2531
          %v2638 = vpop.permute.xlu0 %2637
          %2639 = vset.pattern.permute.xlu0 0
          %2640 = vperm.xlu0 %2639, %v2533
          %v2641 = vpop.permute.xlu0 %2640
          %2642 = vset.pattern.permute.xlu0 0
          %2643 = vperm.xlu0 %2642, %v2535
          %v2644 = vpop.permute.xlu0 %2643
          %2645 = vset.pattern.permute.xlu0 0
          %2646 = vperm.xlu0 %2645, %v2537
          %v2647 = vpop.permute.xlu0 %2646
          %2648 = vset.pattern.permute.xlu0 0
          %2649 = vperm.xlu0 %2648, %v2539
          %v2650 = vpop.permute.xlu0 %2649
          %2651 = vset.pattern.permute.xlu0 0
          %2652 = vperm.xlu0 %2651, %v2541
          %v2653 = vpop.permute.xlu0 %2652
          %2654 = vset.pattern.permute.xlu0 0
          %2655 = vperm.xlu0 %2654, %v2543
          %v2656 = vpop.permute.xlu0 %2655
          %2657 = vset.pattern.permute.xlu0 0
          %2658 = vperm.xlu0 %2657, %v2545
          %v2659 = vpop.permute.xlu0 %2658
          %2660 = vset.pattern.permute.xlu0 0
          %2661 = vperm.xlu0 %2660, %v2547
          %v2662 = vpop.permute.xlu0 %2661
          %2663 = vset.pattern.permute.xlu0 0
          %2664 = vperm.xlu0 %2663, %v2549
          %v2665 = vpop.permute.xlu0 %2664
          %2666 = vset.pattern.permute.xlu0 0
          %2667 = vperm.xlu0 %2666, %v2551
          %v2668 = vpop.permute.xlu0 %2667
          %2669 = vset.pattern.permute.xlu0 0
          %2670 = vperm.xlu0 %2669, %v2553
          %v2671 = vpop.permute.xlu0 %2670
          %2672 = vset.pattern.permute.xlu0 0
          %2673 = vperm.xlu0 %2672, %v2555
          %v2674 = vpop.permute.xlu0 %2673
          %2675 = vset.pattern.permute.xlu0 0
          %2676 = vperm.xlu0 %2675, %v2557
          %v2677 = vpop.permute.xlu0 %2676
          %2678 = vset.pattern.permute.xlu0 0
          %2679 = vperm.xlu0 %2678, %v2559
          %v2680 = vpop.permute.xlu0 %2679
          %2681 = vset.pattern.permute.xlu0 0
          %2682 = vperm.xlu0 %2681, %v2561
          %v2683 = vpop.permute.xlu0 %2682
          %2684 = vset.pattern.permute.xlu0 0
          %2685 = vperm.xlu0 %2684, %v2563
          %v2686 = vpop.permute.xlu0 %2685
          %2687 = vset.pattern.permute.xlu0 0
          %2688 = vperm.xlu0 %2687, %v2565
          %v2689 = vpop.permute.xlu0 %2688
          %2690 = vset.pattern.permute.xlu0 0
          %2691 = vperm.xlu0 %2690, %v2567
          %v2692 = vpop.permute.xlu0 %2691
          %2693 = vset.pattern.permute.xlu0 0
          %2694 = vperm.xlu0 %2693, %v2569
          %v2695 = vpop.permute.xlu0 %2694
          %2696 = vset.pattern.permute.xlu0 0
          %2697 = vperm.xlu0 %2696, %v2571
          %v2698 = vpop.permute.xlu0 %2697
          %2699 = vset.pattern.permute.xlu0 0
          %2700 = vperm.xlu0 %2699, %v2573
          %v2701 = vpop.permute.xlu0 %2700
          %v2702 = vlaneseq
          %v2703 = vshrl.u32 %v2702, 7
          %v2704 = vsub.s32 %v2219, %v2703
          %v2705 = vrot.slane %v2608, %v2704
          %v2706 = vlaneseq
          %v2707 = vshrl.u32 %v2706, 7
          %v2708 = vsub.s32 %v2224, %v2707
          %v2709 = vrot.slane %v2611, %v2708
          %v2710 = vsel %vm2229, %v2709, %v2705
          %v2711 = vlaneseq
          %v2712 = vshrl.u32 %v2711, 7
          %v2713 = vsub.s32 %v2219, %v2712
          %v2714 = vrot.slane %v2614, %v2713
          %v2715 = vlaneseq
          %v2716 = vshrl.u32 %v2715, 7
          %v2717 = vsub.s32 %v2224, %v2716
          %v2718 = vrot.slane %v2617, %v2717
          %v2719 = vsel %vm2229, %v2718, %v2714
          %v2720 = vlaneseq
          %v2721 = vshrl.u32 %v2720, 7
          %v2722 = vsub.s32 %v2219, %v2721
          %v2723 = vrot.slane %v2620, %v2722
          %v2724 = vlaneseq
          %v2725 = vshrl.u32 %v2724, 7
          %v2726 = vsub.s32 %v2224, %v2725
          %v2727 = vrot.slane %v2623, %v2726
          %v2728 = vsel %vm2229, %v2727, %v2723
          %v2729 = vlaneseq
          %v2730 = vshrl.u32 %v2729, 7
          %v2731 = vsub.s32 %v2219, %v2730
          %v2732 = vrot.slane %v2626, %v2731
          %v2733 = vlaneseq
          %v2734 = vshrl.u32 %v2733, 7
          %v2735 = vsub.s32 %v2224, %v2734
          %v2736 = vrot.slane %v2629, %v2735
          %v2737 = vsel %vm2229, %v2736, %v2732
          %v2738 = vlaneseq
          %v2739 = vshrl.u32 %v2738, 7
          %v2740 = vsub.s32 %v2219, %v2739
          %v2741 = vrot.slane %v2632, %v2740
          %v2742 = vlaneseq
          %v2743 = vshrl.u32 %v2742, 7
          %v2744 = vsub.s32 %v2224, %v2743
          %v2745 = vrot.slane %v2635, %v2744
          %v2746 = vsel %vm2229, %v2745, %v2741
          %v2747 = vlaneseq
          %v2748 = vshrl.u32 %v2747, 7
          %v2749 = vsub.s32 %v2219, %v2748
          %v2750 = vrot.slane %v2638, %v2749
          %v2751 = vlaneseq
          %v2752 = vshrl.u32 %v2751, 7
          %v2753 = vsub.s32 %v2224, %v2752
          %v2754 = vrot.slane %v2641, %v2753
          %v2755 = vsel %vm2229, %v2754, %v2750
          %v2756 = vlaneseq
          %v2757 = vshrl.u32 %v2756, 7
          %v2758 = vsub.s32 %v2219, %v2757
          %v2759 = vrot.slane %v2644, %v2758
          %v2760 = vlaneseq
          %v2761 = vshrl.u32 %v2760, 7
          %v2762 = vsub.s32 %v2224, %v2761
          %v2763 = vrot.slane %v2647, %v2762
          %v2764 = vsel %vm2229, %v2763, %v2759
          %v2765 = vlaneseq
          %v2766 = vshrl.u32 %v2765, 7
          %v2767 = vsub.s32 %v2219, %v2766
          %v2768 = vrot.slane %v2650, %v2767
          %v2769 = vlaneseq
          %v2770 = vshrl.u32 %v2769, 7
          %v2771 = vsub.s32 %v2224, %v2770
          %v2772 = vrot.slane %v2653, %v2771
          %v2773 = vsel %vm2229, %v2772, %v2768
          %v2774 = vlaneseq
          %v2775 = vshrl.u32 %v2774, 7
          %v2776 = vsub.s32 %v2219, %v2775
          %v2777 = vrot.slane %v2656, %v2776
          %v2778 = vlaneseq
          %v2779 = vshrl.u32 %v2778, 7
          %v2780 = vsub.s32 %v2224, %v2779
          %v2781 = vrot.slane %v2659, %v2780
          %v2782 = vsel %vm2229, %v2781, %v2777
          %v2783 = vlaneseq
          %v2784 = vshrl.u32 %v2783, 7
          %v2785 = vsub.s32 %v2219, %v2784
          %v2786 = vrot.slane %v2662, %v2785
          %v2787 = vlaneseq
          %v2788 = vshrl.u32 %v2787, 7
          %v2789 = vsub.s32 %v2224, %v2788
          %v2790 = vrot.slane %v2665, %v2789
          %v2791 = vsel %vm2229, %v2790, %v2786
          %v2792 = vlaneseq
          %v2793 = vshrl.u32 %v2792, 7
          %v2794 = vsub.s32 %v2219, %v2793
          %v2795 = vrot.slane %v2668, %v2794
          %v2796 = vlaneseq
          %v2797 = vshrl.u32 %v2796, 7
          %v2798 = vsub.s32 %v2224, %v2797
          %v2799 = vrot.slane %v2671, %v2798
          %v2800 = vsel %vm2229, %v2799, %v2795
          %v2801 = vlaneseq
          %v2802 = vshrl.u32 %v2801, 7
          %v2803 = vsub.s32 %v2219, %v2802
          %v2804 = vrot.slane %v2674, %v2803
          %v2805 = vlaneseq
          %v2806 = vshrl.u32 %v2805, 7
          %v2807 = vsub.s32 %v2224, %v2806
          %v2808 = vrot.slane %v2677, %v2807
          %v2809 = vsel %vm2229, %v2808, %v2804
          %v2810 = vlaneseq
          %v2811 = vshrl.u32 %v2810, 7
          %v2812 = vsub.s32 %v2219, %v2811
          %v2813 = vrot.slane %v2680, %v2812
          %v2814 = vlaneseq
          %v2815 = vshrl.u32 %v2814, 7
          %v2816 = vsub.s32 %v2224, %v2815
          %v2817 = vrot.slane %v2683, %v2816
          %v2818 = vsel %vm2229, %v2817, %v2813
          %v2819 = vlaneseq
          %v2820 = vshrl.u32 %v2819, 7
          %v2821 = vsub.s32 %v2219, %v2820
          %v2822 = vrot.slane %v2686, %v2821
          %v2823 = vlaneseq
          %v2824 = vshrl.u32 %v2823, 7
          %v2825 = vsub.s32 %v2224, %v2824
          %v2826 = vrot.slane %v2689, %v2825
          %v2827 = vsel %vm2229, %v2826, %v2822
          %v2828 = vlaneseq
          %v2829 = vshrl.u32 %v2828, 7
          %v2830 = vsub.s32 %v2219, %v2829
          %v2831 = vrot.slane %v2692, %v2830
          %v2832 = vlaneseq
          %v2833 = vshrl.u32 %v2832, 7
          %v2834 = vsub.s32 %v2224, %v2833
          %v2835 = vrot.slane %v2695, %v2834
          %v2836 = vsel %vm2229, %v2835, %v2831
          %v2837 = vlaneseq
          %v2838 = vshrl.u32 %v2837, 7
          %v2839 = vsub.s32 %v2219, %v2838
          %v2840 = vrot.slane %v2698, %v2839
          %v2841 = vlaneseq
          %v2842 = vshrl.u32 %v2841, 7
          %v2843 = vsub.s32 %v2224, %v2842
          %v2844 = vrot.slane %v2701, %v2843
          %v2845 = vsel %vm2229, %v2844, %v2840
          %v2846 = vsel %vm2366, %v2719, %v2710
          %v2847 = vsel %vm2368, %v2728, %v2846
          %v2848 = vsel %vm2370, %v2737, %v2847
          %v2849 = vsel %vm2372, %v2746, %v2848
          %v2850 = vsel %vm2374, %v2755, %v2849
          %v2851 = vsel %vm2376, %v2764, %v2850
          %v2852 = vsel %vm2378, %v2773, %v2851
          %v2853 = vsel %vm2366, %v2791, %v2782
          %v2854 = vsel %vm2368, %v2800, %v2853
          %v2855 = vsel %vm2370, %v2809, %v2854
          %v2856 = vsel %vm2372, %v2818, %v2855
          %v2857 = vsel %vm2374, %v2827, %v2856
          %v2858 = vsel %vm2376, %v2836, %v2857
          %v2859 = vsel %vm2378, %v2845, %v2858
          %v2862 = vsel %vm2389, %v2852, 0.0
          %2863 = vadd.xlane.f32.xlu0 %v2862
          %v2864 = vpop.xlane.xlu0 %2863
          %v2865 = vsel %vm2389, %v2859, 0.0
          %2866 = vadd.xlane.f32.xlu0 %v2865
          %v2867 = vpop.xlane.xlu0 %2866
          %v2870 = vlaneseq
          %v2871 = vshrl.u32 %v2870, 7
          %v2872 = vsub.s32 0, %v2871
          %v2873 = vrot.slane %v2864, %v2872
          %v2874 = vlaneseq
          %v2875 = vshrl.u32 %v2874, 7
          %v2876 = vsub.s32 1, %v2875
          %v2877 = vrot.slane %v2864, %v2876
          %v2878 = vlaneseq
          %v2879 = vshrl.u32 %v2878, 7
          %v2880 = vsub.s32 2, %v2879
          %v2881 = vrot.slane %v2864, %v2880
          %v2882 = vlaneseq
          %v2883 = vshrl.u32 %v2882, 7
          %v2884 = vsub.s32 3, %v2883
          %v2885 = vrot.slane %v2864, %v2884
          %v2886 = vlaneseq
          %v2887 = vshrl.u32 %v2886, 7
          %v2888 = vsub.s32 4, %v2887
          %v2889 = vrot.slane %v2864, %v2888
          %v2890 = vlaneseq
          %v2891 = vshrl.u32 %v2890, 7
          %v2892 = vsub.s32 5, %v2891
          %v2893 = vrot.slane %v2864, %v2892
          %v2894 = vlaneseq
          %v2895 = vshrl.u32 %v2894, 7
          %v2896 = vsub.s32 6, %v2895
          %v2897 = vrot.slane %v2864, %v2896
          %v2898 = vlaneseq
          %v2899 = vshrl.u32 %v2898, 7
          %v2900 = vsub.s32 7, %v2899
          %v2901 = vrot.slane %v2864, %v2900
          %v2902 = vlaneseq
          %v2903 = vshrl.u32 %v2902, 7
          %v2904 = vsub.s32 0, %v2903
          %v2905 = vrot.slane %v2867, %v2904
          %v2906 = vlaneseq
          %v2907 = vshrl.u32 %v2906, 7
          %v2908 = vsub.s32 1, %v2907
          %v2909 = vrot.slane %v2867, %v2908
          %v2910 = vlaneseq
          %v2911 = vshrl.u32 %v2910, 7
          %v2912 = vsub.s32 2, %v2911
          %v2913 = vrot.slane %v2867, %v2912
          %v2914 = vlaneseq
          %v2915 = vshrl.u32 %v2914, 7
          %v2916 = vsub.s32 3, %v2915
          %v2917 = vrot.slane %v2867, %v2916
          %v2918 = vlaneseq
          %v2919 = vshrl.u32 %v2918, 7
          %v2920 = vsub.s32 4, %v2919
          %v2921 = vrot.slane %v2867, %v2920
          %v2922 = vlaneseq
          %v2923 = vshrl.u32 %v2922, 7
          %v2924 = vsub.s32 5, %v2923
          %v2925 = vrot.slane %v2867, %v2924
          %v2926 = vlaneseq
          %v2927 = vshrl.u32 %v2926, 7
          %v2928 = vsub.s32 6, %v2927
          %v2929 = vrot.slane %v2867, %v2928
          %v2930 = vlaneseq
          %v2931 = vshrl.u32 %v2930, 7
          %v2932 = vsub.s32 7, %v2931
          %v2933 = vrot.slane %v2867, %v2932
          %v2950 = vrcp.pop %v2873
          %v2951 = vmul.f32 %v2511, %v2950
          %v2952 = vmul.f32 %v2513, %v2950
          %v2953 = vrcp.pop %v2877
          %v2954 = vmul.f32 %v2515, %v2953
          %v2955 = vmul.f32 %v2517, %v2953
          %v2956 = vrcp.pop %v2881
          %v2957 = vmul.f32 %v2519, %v2956
          %v2958 = vmul.f32 %v2521, %v2956
          %v2959 = vrcp.pop %v2885
          %v2960 = vmul.f32 %v2523, %v2959
          %v2961 = vmul.f32 %v2525, %v2959
          %v2962 = vrcp.pop %v2889
          %v2963 = vmul.f32 %v2527, %v2962
          %v2964 = vmul.f32 %v2529, %v2962
          %v2965 = vrcp.pop %v2893
          %v2966 = vmul.f32 %v2531, %v2965
          %v2967 = vmul.f32 %v2533, %v2965
          %v2968 = vrcp.pop %v2897
          %v2969 = vmul.f32 %v2535, %v2968
          %v2970 = vmul.f32 %v2537, %v2968
          %v2971 = vrcp.pop %v2901
          %v2972 = vmul.f32 %v2539, %v2971
          %v2973 = vmul.f32 %v2541, %v2971
          %v2974 = vrcp.pop %v2905
          %v2975 = vmul.f32 %v2543, %v2974
          %v2976 = vmul.f32 %v2545, %v2974
          %v2977 = vrcp.pop %v2909
          %v2978 = vmul.f32 %v2547, %v2977
          %v2979 = vmul.f32 %v2549, %v2977
          %v2980 = vrcp.pop %v2913
          %v2981 = vmul.f32 %v2551, %v2980
          %v2982 = vmul.f32 %v2553, %v2980
          %v2983 = vrcp.pop %v2917
          %v2984 = vmul.f32 %v2555, %v2983
          %v2985 = vmul.f32 %v2557, %v2983
          %v2986 = vrcp.pop %v2921
          %v2987 = vmul.f32 %v2559, %v2986
          %v2988 = vmul.f32 %v2561, %v2986
          %v2989 = vrcp.pop %v2925
          %v2990 = vmul.f32 %v2563, %v2989
          %v2991 = vmul.f32 %v2565, %v2989
          %v2992 = vrcp.pop %v2929
          %v2993 = vmul.f32 %v2567, %v2992
          %v2994 = vmul.f32 %v2569, %v2992
          %v2995 = vrcp.pop %v2933
          %v2996 = vmul.f32 %v2571, %v2995
          %v2997 = vmul.f32 %v2573, %v2995
          %v2998 = vunpack.c.l.bf16 %v866
          %v2999 = vunpack.c.l.bf16 %v867
          %v3000 = vunpack.c.l.bf16 %v868
          %v3001 = vunpack.c.l.bf16 %v869
          %v3002 = vunpack.c.l.bf16 %v870
          %v3003 = vunpack.c.l.bf16 %v871
          %v3004 = vunpack.c.l.bf16 %v872
          %v3005 = vunpack.c.l.bf16 %v873
          %v3006 = vunpack.c.l.bf16 %v874
          %v3007 = vunpack.c.l.bf16 %v875
          %v3008 = vunpack.c.l.bf16 %v876
          %v3009 = vunpack.c.l.bf16 %v877
          %v3010 = vunpack.c.l.bf16 %v878
          %v3011 = vunpack.c.l.bf16 %v879
          %v3012 = vunpack.c.l.bf16 %v880
          %v3013 = vunpack.c.l.bf16 %v881
          %v3014 = vunpack.c.l.bf16 %v882
          %v3015 = vunpack.c.l.bf16 %v883
          %v3016 = vunpack.c.l.bf16 %v884
          %v3017 = vunpack.c.l.bf16 %v885
          %v3018 = vunpack.c.l.bf16 %v886
          %v3019 = vunpack.c.l.bf16 %v887
          %v3020 = vunpack.c.l.bf16 %v888
          %v3021 = vunpack.c.l.bf16 %v889
          %v3022 = vunpack.c.l.bf16 %v890
          %v3023 = vunpack.c.l.bf16 %v891
          %v3024 = vunpack.c.l.bf16 %v892
          %v3025 = vunpack.c.l.bf16 %v893
          %v3026 = vunpack.c.l.bf16 %v894
          %v3027 = vunpack.c.l.bf16 %v895
          %v3028 = vunpack.c.l.bf16 %v896
          %v3029 = vunpack.c.l.bf16 %v897
          %3031 = vset.pattern.permute.xlu0 0
          %3032 = vperm.xlu0 %3031, %v2951
          %v3033 = vpop.permute.xlu0 %3032
          %3036 = vset.pattern.permute.xlu0 0
          %3037 = vperm.xlu0 %3036, %v2952
          %v3038 = vpop.permute.xlu0 %3037
          %3041 = vset.pattern.permute.xlu0 0
          %3042 = vperm.xlu0 %3041, %v2954
          %v3043 = vpop.permute.xlu0 %3042
          %3046 = vset.pattern.permute.xlu0 0
          %3047 = vperm.xlu0 %3046, %v2955
          %v3048 = vpop.permute.xlu0 %3047
          %3051 = vset.pattern.permute.xlu0 0
          %3052 = vperm.xlu0 %3051, %v2957
          %v3053 = vpop.permute.xlu0 %3052
          %3056 = vset.pattern.permute.xlu0 0
          %3057 = vperm.xlu0 %3056, %v2958
          %v3058 = vpop.permute.xlu0 %3057
          %3061 = vset.pattern.permute.xlu0 0
          %3062 = vperm.xlu0 %3061, %v2960
          %v3063 = vpop.permute.xlu0 %3062
          %3066 = vset.pattern.permute.xlu0 0
          %3067 = vperm.xlu0 %3066, %v2961
          %v3068 = vpop.permute.xlu0 %3067
          %3071 = vset.pattern.permute.xlu0 0
          %3072 = vperm.xlu0 %3071, %v2963
          %v3073 = vpop.permute.xlu0 %3072
          %3076 = vset.pattern.permute.xlu0 0
          %3077 = vperm.xlu0 %3076, %v2964
          %v3078 = vpop.permute.xlu0 %3077
          %3081 = vset.pattern.permute.xlu0 0
          %3082 = vperm.xlu0 %3081, %v2966
          %v3083 = vpop.permute.xlu0 %3082
          %3086 = vset.pattern.permute.xlu0 0
          %3087 = vperm.xlu0 %3086, %v2967
          %v3088 = vpop.permute.xlu0 %3087
          %3091 = vset.pattern.permute.xlu0 0
          %3092 = vperm.xlu0 %3091, %v2969
          %v3093 = vpop.permute.xlu0 %3092
          %3096 = vset.pattern.permute.xlu0 0
          %3097 = vperm.xlu0 %3096, %v2970
          %v3098 = vpop.permute.xlu0 %3097
          %3101 = vset.pattern.permute.xlu0 0
          %3102 = vperm.xlu0 %3101, %v2972
          %v3103 = vpop.permute.xlu0 %3102
          %3106 = vset.pattern.permute.xlu0 0
          %3107 = vperm.xlu0 %3106, %v2973
          %v3108 = vpop.permute.xlu0 %3107
          %3111 = vset.pattern.permute.xlu0 0
          %3112 = vperm.xlu0 %3111, %v2975
          %v3113 = vpop.permute.xlu0 %3112
          %3116 = vset.pattern.permute.xlu0 0
          %3117 = vperm.xlu0 %3116, %v2976
          %v3118 = vpop.permute.xlu0 %3117
          %3121 = vset.pattern.permute.xlu0 0
          %3122 = vperm.xlu0 %3121, %v2978
          %v3123 = vpop.permute.xlu0 %3122
          %3126 = vset.pattern.permute.xlu0 0
          %3127 = vperm.xlu0 %3126, %v2979
          %v3128 = vpop.permute.xlu0 %3127
          %3131 = vset.pattern.permute.xlu0 0
          %3132 = vperm.xlu0 %3131, %v2981
          %v3133 = vpop.permute.xlu0 %3132
          %3136 = vset.pattern.permute.xlu0 0
          %3137 = vperm.xlu0 %3136, %v2982
          %v3138 = vpop.permute.xlu0 %3137
          %3141 = vset.pattern.permute.xlu0 0
          %3142 = vperm.xlu0 %3141, %v2984
          %v3143 = vpop.permute.xlu0 %3142
          %3146 = vset.pattern.permute.xlu0 0
          %3147 = vperm.xlu0 %3146, %v2985
          %v3148 = vpop.permute.xlu0 %3147
          %3151 = vset.pattern.permute.xlu0 0
          %3152 = vperm.xlu0 %3151, %v2987
          %v3153 = vpop.permute.xlu0 %3152
          %3156 = vset.pattern.permute.xlu0 0
          %3157 = vperm.xlu0 %3156, %v2988
          %v3158 = vpop.permute.xlu0 %3157
          %3161 = vset.pattern.permute.xlu0 0
          %3162 = vperm.xlu0 %3161, %v2990
          %v3163 = vpop.permute.xlu0 %3162
          %3166 = vset.pattern.permute.xlu0 0
          %3167 = vperm.xlu0 %3166, %v2991
          %v3168 = vpop.permute.xlu0 %3167
          %3171 = vset.pattern.permute.xlu0 0
          %3172 = vperm.xlu0 %3171, %v2993
          %v3173 = vpop.permute.xlu0 %3172
          %3176 = vset.pattern.permute.xlu0 0
          %3177 = vperm.xlu0 %3176, %v2994
          %v3178 = vpop.permute.xlu0 %3177
          %3181 = vset.pattern.permute.xlu0 0
          %3182 = vperm.xlu0 %3181, %v2996
          %v3183 = vpop.permute.xlu0 %3182
          %3186 = vset.pattern.permute.xlu0 0
          %3187 = vperm.xlu0 %3186, %v2997
          %v3188 = vpop.permute.xlu0 %3187
          %v3190 = vmul.f32 %v2998, %v3033
          %v3191 = vmul.f32 %v2999, %v3038
          %v3192 = vmul.f32 %v3000, %v3043
          %v3193 = vmul.f32 %v3001, %v3048
          %v3194 = vmul.f32 %v3002, %v3053
          %v3195 = vmul.f32 %v3003, %v3058
          %v3196 = vmul.f32 %v3004, %v3063
          %v3197 = vmul.f32 %v3005, %v3068
          %v3198 = vmul.f32 %v3006, %v3073
          %v3199 = vmul.f32 %v3007, %v3078
          %v3200 = vmul.f32 %v3008, %v3083
          %v3201 = vmul.f32 %v3009, %v3088
          %v3202 = vmul.f32 %v3010, %v3093
          %v3203 = vmul.f32 %v3011, %v3098
          %v3204 = vmul.f32 %v3012, %v3103
          %v3205 = vmul.f32 %v3013, %v3108
          %v3206 = vmul.f32 %v3014, %v3113
          %v3207 = vmul.f32 %v3015, %v3118
          %v3208 = vmul.f32 %v3016, %v3123
          %v3209 = vmul.f32 %v3017, %v3128
          %v3210 = vmul.f32 %v3018, %v3133
          %v3211 = vmul.f32 %v3019, %v3138
          %v3212 = vmul.f32 %v3020, %v3143
          %v3213 = vmul.f32 %v3021, %v3148
          %v3214 = vmul.f32 %v3022, %v3153
          %v3215 = vmul.f32 %v3023, %v3158
          %v3216 = vmul.f32 %v3024, %v3163
          %v3217 = vmul.f32 %v3025, %v3168
          %v3218 = vmul.f32 %v3026, %v3173
          %v3219 = vmul.f32 %v3027, %v3178
          %v3220 = vmul.f32 %v3028, %v3183
          %v3221 = vmul.f32 %v3029, %v3188
          %v3222 = vsel %vm1672, %v3190, 0.0
          %v3223 = vsel %vm1672, %v3191, 0.0
          %v3224 = vadd.f32 %v3222, %v3223
          %v3225 = vrot.slane %v3224, 4
          %v3226 = vadd.f32 %v3224, %v3225
          %v3227 = vrot.slane %v3226, 2
          %v3228 = vadd.f32 %v3226, %v3227
          %v3229 = vrot.slane %v3228, 1
          %v3230 = vadd.f32 %v3228, %v3229
          %v3231 = vsel %vm1672, %v3192, 0.0
          %v3232 = vsel %vm1672, %v3193, 0.0
          %v3233 = vadd.f32 %v3231, %v3232
          %v3234 = vrot.slane %v3233, 4
          %v3235 = vadd.f32 %v3233, %v3234
          %v3236 = vrot.slane %v3235, 2
          %v3237 = vadd.f32 %v3235, %v3236
          %v3238 = vrot.slane %v3237, 1
          %v3239 = vadd.f32 %v3237, %v3238
          %v3240 = vsel %vm1672, %v3194, 0.0
          %v3241 = vsel %vm1672, %v3195, 0.0
          %v3242 = vadd.f32 %v3240, %v3241
          %v3243 = vrot.slane %v3242, 4
          %v3244 = vadd.f32 %v3242, %v3243
          %v3245 = vrot.slane %v3244, 2
          %v3246 = vadd.f32 %v3244, %v3245
          %v3247 = vrot.slane %v3246, 1
          %v3248 = vadd.f32 %v3246, %v3247
          %v3249 = vsel %vm1672, %v3196, 0.0
          %v3250 = vsel %vm1672, %v3197, 0.0
          %v3251 = vadd.f32 %v3249, %v3250
          %v3252 = vrot.slane %v3251, 4
          %v3253 = vadd.f32 %v3251, %v3252
          %v3254 = vrot.slane %v3253, 2
          %v3255 = vadd.f32 %v3253, %v3254
          %v3256 = vrot.slane %v3255, 1
          %v3257 = vadd.f32 %v3255, %v3256
          %v3258 = vsel %vm1672, %v3198, 0.0
          %v3259 = vsel %vm1672, %v3199, 0.0
          %v3260 = vadd.f32 %v3258, %v3259
          %v3261 = vrot.slane %v3260, 4
          %v3262 = vadd.f32 %v3260, %v3261
          %v3263 = vrot.slane %v3262, 2
          %v3264 = vadd.f32 %v3262, %v3263
          %v3265 = vrot.slane %v3264, 1
          %v3266 = vadd.f32 %v3264, %v3265
          %v3267 = vsel %vm1672, %v3200, 0.0
          %v3268 = vsel %vm1672, %v3201, 0.0
          %v3269 = vadd.f32 %v3267, %v3268
          %v3270 = vrot.slane %v3269, 4
          %v3271 = vadd.f32 %v3269, %v3270
          %v3272 = vrot.slane %v3271, 2
          %v3273 = vadd.f32 %v3271, %v3272
          %v3274 = vrot.slane %v3273, 1
          %v3275 = vadd.f32 %v3273, %v3274
          %v3276 = vsel %vm1672, %v3202, 0.0
          %v3277 = vsel %vm1672, %v3203, 0.0
          %v3278 = vadd.f32 %v3276, %v3277
          %v3279 = vrot.slane %v3278, 4
          %v3280 = vadd.f32 %v3278, %v3279
          %v3281 = vrot.slane %v3280, 2
          %v3282 = vadd.f32 %v3280, %v3281
          %v3283 = vrot.slane %v3282, 1
          %v3284 = vadd.f32 %v3282, %v3283
          %v3285 = vsel %vm1672, %v3204, 0.0
          %v3286 = vsel %vm1672, %v3205, 0.0
          %v3287 = vadd.f32 %v3285, %v3286
          %v3288 = vrot.slane %v3287, 4
          %v3289 = vadd.f32 %v3287, %v3288
          %v3290 = vrot.slane %v3289, 2
          %v3291 = vadd.f32 %v3289, %v3290
          %v3292 = vrot.slane %v3291, 1
          %v3293 = vadd.f32 %v3291, %v3292
          %v3294 = vsel %vm1672, %v3206, 0.0
          %v3295 = vsel %vm1672, %v3207, 0.0
          %v3296 = vadd.f32 %v3294, %v3295
          %v3297 = vrot.slane %v3296, 4
          %v3298 = vadd.f32 %v3296, %v3297
          %v3299 = vrot.slane %v3298, 2
          %v3300 = vadd.f32 %v3298, %v3299
          %v3301 = vrot.slane %v3300, 1
          %v3302 = vadd.f32 %v3300, %v3301
          %v3303 = vsel %vm1672, %v3208, 0.0
          %v3304 = vsel %vm1672, %v3209, 0.0
          %v3305 = vadd.f32 %v3303, %v3304
          %v3306 = vrot.slane %v3305, 4
          %v3307 = vadd.f32 %v3305, %v3306
          %v3308 = vrot.slane %v3307, 2
          %v3309 = vadd.f32 %v3307, %v3308
          %v3310 = vrot.slane %v3309, 1
          %v3311 = vadd.f32 %v3309, %v3310
          %v3312 = vsel %vm1672, %v3210, 0.0
          %v3313 = vsel %vm1672, %v3211, 0.0
          %v3314 = vadd.f32 %v3312, %v3313
          %v3315 = vrot.slane %v3314, 4
          %v3316 = vadd.f32 %v3314, %v3315
          %v3317 = vrot.slane %v3316, 2
          %v3318 = vadd.f32 %v3316, %v3317
          %v3319 = vrot.slane %v3318, 1
          %v3320 = vadd.f32 %v3318, %v3319
          %v3321 = vsel %vm1672, %v3212, 0.0
          %v3322 = vsel %vm1672, %v3213, 0.0
          %v3323 = vadd.f32 %v3321, %v3322
          %v3324 = vrot.slane %v3323, 4
          %v3325 = vadd.f32 %v3323, %v3324
          %v3326 = vrot.slane %v3325, 2
          %v3327 = vadd.f32 %v3325, %v3326
          %v3328 = vrot.slane %v3327, 1
          %v3329 = vadd.f32 %v3327, %v3328
          %v3330 = vsel %vm1672, %v3214, 0.0
          %v3331 = vsel %vm1672, %v3215, 0.0
          %v3332 = vadd.f32 %v3330, %v3331
          %v3333 = vrot.slane %v3332, 4
          %v3334 = vadd.f32 %v3332, %v3333
          %v3335 = vrot.slane %v3334, 2
          %v3336 = vadd.f32 %v3334, %v3335
          %v3337 = vrot.slane %v3336, 1
          %v3338 = vadd.f32 %v3336, %v3337
          %v3339 = vsel %vm1672, %v3216, 0.0
          %v3340 = vsel %vm1672, %v3217, 0.0
          %v3341 = vadd.f32 %v3339, %v3340
          %v3342 = vrot.slane %v3341, 4
          %v3343 = vadd.f32 %v3341, %v3342
          %v3344 = vrot.slane %v3343, 2
          %v3345 = vadd.f32 %v3343, %v3344
          %v3346 = vrot.slane %v3345, 1
          %v3347 = vadd.f32 %v3345, %v3346
          %v3348 = vsel %vm1672, %v3218, 0.0
          %v3349 = vsel %vm1672, %v3219, 0.0
          %v3350 = vadd.f32 %v3348, %v3349
          %v3351 = vrot.slane %v3350, 4
          %v3352 = vadd.f32 %v3350, %v3351
          %v3353 = vrot.slane %v3352, 2
          %v3354 = vadd.f32 %v3352, %v3353
          %v3355 = vrot.slane %v3354, 1
          %v3356 = vadd.f32 %v3354, %v3355
          %v3357 = vsel %vm1672, %v3220, 0.0
          %v3358 = vsel %vm1672, %v3221, 0.0
          %v3359 = vadd.f32 %v3357, %v3358
          %v3360 = vrot.slane %v3359, 4
          %v3361 = vadd.f32 %v3359, %v3360
          %v3362 = vrot.slane %v3361, 2
          %v3363 = vadd.f32 %v3361, %v3362
          %v3364 = vrot.slane %v3363, 1
          %v3365 = vadd.f32 %v3363, %v3364
          %v3366 = vld [vmem:[#allocation28] sm:$0xf]
          %v3367 = vld [vmem:[#allocation28 + $0x4] sm:$0xf]
          %v3368 = vld [vmem:[#allocation28 + $0x8] sm:$0xf]
          %v3369 = vld [vmem:[#allocation28 + $0xc] sm:$0xf]
          %v3370 = vld [vmem:[#allocation29] sm:$0x1]
          %v3372 = vlaneseq
          %v3373 = vshrl.u32 %v3372, 7
          %v3374 = vsub.s32 0, %v3373
          %v3375 = vrot.slane %v3370, %v3374
          %v3381 = vunpack.c.l.b16 %v3366
          %v3382 = vunpack.c.l.b16 %v3367
          %v3383 = vunpack.c.l.b16 %v3368
          %v3384 = vunpack.c.l.b16 %v3369
          %v3385 = vpack.c.b16 %v3382, %v3381
          %v3386 = vpack.c.b16 %v3384, %v3383
          %3389 = vmatprep.subr.bf16.mxu0 0
          %3390 = vmatpush1.bf16.msra.mxu0 %v3385
          %3391 = vmatprep.subr.bf16.mxu0 0
          %3392 = vmatpush1.bf16.msra.mxu0 %v3386
          %3393 = vmatprep.subr.bf16.mxu0 0
          %3394 = vmatpush1.bf16.msra.mxu0 0
          %3395 = vmatprep.subr.bf16.mxu0 0
          %3396 = vmatpush1.bf16.msra.mxu0 0
          %3397 = vmatprep.subr.bf16.mxu0 0
          %3398 = vmatpush1.bf16.msra.mxu0 0
          %3399 = vmatprep.subr.bf16.mxu0 0
          %3400 = vmatpush1.bf16.msra.mxu0 0
          %3401 = vmatprep.subr.bf16.mxu0 0
          %3402 = vmatpush1.bf16.msra.mxu0 0
          %3403 = vmatprep.subr.bf16.mxu0 0
          %3404 = vmatpush1.bf16.msra.mxu0 0
          %3405 = vmatprep.subr.bf16.mxu0 0
          %3406 = vmatpush1.bf16.msra.mxu0 0
          %3407 = vmatprep.subr.bf16.mxu0 0
          %3408 = vmatpush1.bf16.msra.mxu0 0
          %3409 = vmatprep.subr.bf16.mxu0 0
          %3410 = vmatpush1.bf16.msra.mxu0 0
          %3411 = vmatprep.subr.bf16.mxu0 0
          %3412 = vmatpush1.bf16.msra.mxu0 0
          %3413 = vmatprep.subr.bf16.mxu0 0
          %3414 = vmatpush1.bf16.msra.mxu0 0
          %3415 = vmatprep.subr.bf16.mxu0 0
          %3416 = vmatpush1.bf16.msra.mxu0 0
          %3417 = vmatprep.subr.bf16.mxu0 0
          %3418 = vmatpush1.bf16.msra.mxu0 0
          %3419 = vmatprep.subr.bf16.mxu0 0
          %3420 = vmatpush1.bf16.msra.mxu0 0
          %3421 = vmatprep.mubr.bf16.mxu0 0
          %3422 = vmatmul.mubr.bf16.gmra.mrb[0].mxu0 %v1674
          %v3423 = vpop.f32.mrb[0].mxu0
          %v3424 = vadd.f32 %v3375, %v3423
          %v3425 = vpop.f32.mrb[0].mxu0
          %v3426 = vpop.f32.mrb[0].mxu0
          %v3427 = vadd.f32 %v3375, %v3426
          %v3428 = vpop.f32.mrb[0].mxu0
          %3429 = vdwg.mxu0
          %v3430 = vxor.u32 %v3424, 2147483648
          %v3431 = vxor.u32 %v3427, 2147483648
          %v3432 = vmul.f32 %v3430, 1.442695
          %v3433 = vpow.pop %v3432
          %v3434 = vmul.f32 %v3431, 1.442695
          %v3435 = vpow.pop %v3434
          %v3436 = vadd.f32 %v3433, 1.0
          %v3437 = vadd.f32 %v3435, 1.0
          %v3438 = vrcp.pop %v3436
          %v3439 = vmul.f32 1.0, %v3438
          %v3440 = vrcp.pop %v3437
          %v3441 = vmul.f32 1.0, %v3440
          %v3458 = vsel %vm2366, %v3239, %v3230
          %v3459 = vsel %vm2368, %v3248, %v3458
          %v3460 = vsel %vm2370, %v3257, %v3459
          %v3461 = vsel %vm2372, %v3266, %v3460
          %v3462 = vsel %vm2374, %v3275, %v3461
          %v3463 = vsel %vm2376, %v3284, %v3462
          %v3464 = vsel %vm2378, %v3293, %v3463
          %v3465 = vsel %vm2366, %v3311, %v3302
          %v3466 = vsel %vm2368, %v3320, %v3465
          %v3467 = vsel %vm2370, %v3329, %v3466
          %v3468 = vsel %vm2372, %v3338, %v3467
          %v3469 = vsel %vm2374, %v3347, %v3468
          %v3470 = vsel %vm2376, %v3356, %v3469
          %v3471 = vsel %vm2378, %v3365, %v3470
          %v3474 = vmul.f32 %v3439, %v3464
          %v3475 = vmul.f32 %v3441, %v3471
          %v3476 = vld [vmem:[%s736] sm:$0xf]
          %v3477 = vld [vmem:[%s736 + $0x4] sm:$0xf]
          %v3478 = vpack.c.bf16 %v3475, %v3474
          %v3481 = vunpack.c.l.b16 %v3476
          %v3482 = vunpack.c.l.b16 %v3477
          %v3483 = vpack.c.b16 %v3482, %v3481
          %3485 = vrot.lane.b32.xlu0 %v3478, 32
          %v3486 = vpop.permute.xlu0 %3485
          %3488 = vrot.lane.b32.xlu0 %v1648, 64
          %v3489 = vpop.permute.xlu0 %3488
          %v3492 = vsel %vm1672, %v3483, %v3486
          %vm3493 = vcmask 523264
          %v3495 = vsel %vm3493, %v3492, %v3489
          %v3496 = vld [vmem:[#allocation31] sm:$0xf]
          %v3497 = vld [vmem:[#allocation31 + $0x4] sm:$0xf]
          %v3498 = vld [vmem:[#allocation31 + $0x8] sm:$0xf]
          %v3499 = vld [vmem:[#allocation31 + $0xc] sm:$0xf]
          %v3500 = vld [vmem:[#allocation31 + $0x10] sm:$0xf]
          %v3501 = vld [vmem:[#allocation31 + $0x14] sm:$0xf]
          %v3502 = vld [vmem:[#allocation31 + $0x18] sm:$0xf]
          %v3503 = vld [vmem:[#allocation31 + $0x1c] sm:$0xf]
          %v3504 = vld [vmem:[#allocation31 + $0x20] sm:$0xf]
          %v3505 = vld [vmem:[#allocation31 + $0x24] sm:$0xf]
          %v3506 = vld [vmem:[#allocation31 + $0x28] sm:$0xf]
          %v3507 = vld [vmem:[#allocation31 + $0x2c] sm:$0xf]
          %v3508 = vld [vmem:[#allocation32] sm:$0x1]
          %v3510 = vlaneseq
          %v3511 = vshrl.u32 %v3510, 7
          %v3512 = vsub.s32 0, %v3511
          %v3513 = vrot.slane %v3508, %v3512
          %v3527 = vunpack.c.l.b16 %v3496
          %v3528 = vunpack.c.l.b16 %v3497
          %v3529 = vunpack.c.l.b16 %v3498
          %v3530 = vunpack.c.l.b16 %v3499
          %v3531 = vunpack.c.l.b16 %v3500
          %v3532 = vunpack.c.l.b16 %v3501
          %v3533 = vunpack.c.l.b16 %v3502
          %v3534 = vunpack.c.l.b16 %v3503
          %v3535 = vunpack.c.l.b16 %v3504
          %v3536 = vunpack.c.l.b16 %v3505
          %v3537 = vunpack.c.l.b16 %v3506
          %v3538 = vunpack.c.l.b16 %v3507
          %v3539 = vpack.c.b16 %v3528, %v3527
          %v3540 = vpack.c.b16 %v3530, %v3529
          %v3541 = vpack.c.b16 %v3532, %v3531
          %v3542 = vpack.c.b16 %v3534, %v3533
          %v3543 = vpack.c.b16 %v3536, %v3535
          %v3544 = vpack.c.b16 %v3538, %v3537
          %vm3551 = vcmask 785408
          %v3552 = vsel %vm3551, %v3495, 0
          %3554 = vmatprep.subr.bf16.mxu0 0
          %3555 = vmatpush1.bf16.msra.mxu0 %v3539
          %3556 = vmatprep.subr.bf16.mxu0 0
          %3557 = vmatpush1.bf16.msra.mxu0 %v3540
          %3558 = vmatprep.subr.bf16.mxu0 0
          %3559 = vmatpush1.bf16.msra.mxu0 %v3541
          %3560 = vmatprep.subr.bf16.mxu0 0
          %3561 = vmatpush1.bf16.msra.mxu0 %v3542
          %3562 = vmatprep.subr.bf16.mxu0 0
          %3563 = vmatpush1.bf16.msra.mxu0 %v3543
          %3564 = vmatprep.subr.bf16.mxu0 0
          %3565 = vmatpush1.bf16.msra.mxu0 %v3544
          %3566 = vmatprep.subr.bf16.mxu0 0
          %3567 = vmatpush1.bf16.msra.mxu0 0
          %3568 = vmatprep.subr.bf16.mxu0 0
          %3569 = vmatpush1.bf16.msra.mxu0 0
          %3570 = vmatprep.subr.bf16.mxu0 0
          %3571 = vmatpush1.bf16.msra.mxu0 0
          %3572 = vmatprep.subr.bf16.mxu0 0
          %3573 = vmatpush1.bf16.msra.mxu0 0
          %3574 = vmatprep.subr.bf16.mxu0 0
          %3575 = vmatpush1.bf16.msra.mxu0 0
          %3576 = vmatprep.subr.bf16.mxu0 0
          %3577 = vmatpush1.bf16.msra.mxu0 0
          %3578 = vmatprep.subr.bf16.mxu0 0
          %3579 = vmatpush1.bf16.msra.mxu0 0
          %3580 = vmatprep.subr.bf16.mxu0 0
          %3581 = vmatpush1.bf16.msra.mxu0 0
          %3582 = vmatprep.subr.bf16.mxu0 0
          %3583 = vmatpush1.bf16.msra.mxu0 0
          %3584 = vmatprep.subr.bf16.mxu0 0
          %3585 = vmatpush1.bf16.msra.mxu0 0
          %3586 = vmatprep.mubr.bf16.mxu0 0
          %3587 = vmatmul.mubr.bf16.gmra.mrb[0].mxu0 %v3552
          %v3588 = vpop.f32.mrb[0].mxu0
          %v3589 = vadd.f32 %v3513, %v3588
          %v3590 = vpop.f32.mrb[0].mxu0
          %v3591 = vpop.f32.mrb[0].mxu0
          %v3592 = vadd.f32 %v3513, %v3591
          %v3593 = vpop.f32.mrb[0].mxu0
          %3594 = vdwg.mxu0
          %v3595 = vxor.u32 %v3589, 2147483648
          %v3596 = vxor.u32 %v3592, 2147483648
          %v3597 = vmul.f32 %v3595, 1.442695
          %v3598 = vpow.pop %v3597
          %v3599 = vmul.f32 %v3596, 1.442695
          %v3600 = vpow.pop %v3599
          %v3601 = vadd.f32 %v3598, 1.0
          %v3602 = vadd.f32 %v3600, 1.0
          %v3603 = vrcp.pop %v3601
          %v3604 = vmul.f32 1.0, %v3603
          %v3605 = vrcp.pop %v3602
          %v3606 = vmul.f32 1.0, %v3605
          %v3607 = vtanh.pop %v3589
          %v3608 = vtanh.pop %v3592
          %3611 = vrot.lane.b32.xlu0 %v1646, 32
          %v3612 = vpop.permute.xlu0 %3611
          %3613 = vrot.lane.b32.xlu0 %v1647, 32
          %v3614 = vpop.permute.xlu0 %3613
          %v3617 = vmul.f32 %v3604, %v3612
          %v3618 = vmul.f32 %v3606, %v3614
          %3621 = vrot.lane.b32.xlu0 %v3607, 64
          %v3622 = vpop.permute.xlu0 %3621
          %3623 = vrot.lane.b32.xlu0 %v3608, 64
          %v3624 = vpop.permute.xlu0 %3623
          %v3627 = vmul.f32 %v3604, %v3622
          %v3628 = vmul.f32 %v3606, %v3624
          %3631 = vrot.lane.b32.xlu0 %v3627, 32
          %v3632 = vpop.permute.xlu0 %3631
          %3633 = vrot.lane.b32.xlu0 %v3628, 32
          %v3634 = vpop.permute.xlu0 %3633
          %v3637 = vadd.f32 %v3617, %v3632
          %v3638 = vadd.f32 %v3618, %v3634
          %v3639 = vtanh.pop %v3637
          %v3640 = vtanh.pop %v3638
          %3643 = vrot.lane.b32.xlu0 %v3639, 64
          %v3644 = vpop.permute.xlu0 %3643
          %3645 = vrot.lane.b32.xlu0 %v3640, 64
          %v3646 = vpop.permute.xlu0 %3645
          %v3649 = vmul.f32 %v3604, %v3644
          %v3650 = vmul.f32 %v3606, %v3646
          %v3651 = vsel %vm859, 1, 0
          %v3652 = vsel %vm860, 1, 0
          %3653 = vset.pattern.permute.xlu0 0
          %3654 = vperm.xlu0 %3653, %v3651
          %v3655 = vpop.permute.xlu0 %3654
          %3656 = vset.pattern.permute.xlu0 0
          %3657 = vperm.xlu0 %3656, %v3652
          %v3658 = vpop.permute.xlu0 %3657
          %vm3659 = vcmp.eq.s32.totalorder %v3655, 1
          %vm3660 = vcmp.eq.s32.totalorder %v3658, 1
          %3663 = vrot.lane.b32.xlu0 %v1644, 96
          %v3664 = vpop.permute.xlu0 %3663
          %3665 = vrot.lane.b32.xlu0 %v1645, 96
          %v3666 = vpop.permute.xlu0 %3665
          %v3669 = vsel %vm3659, %v3649, %v3664
          %v3670 = vsel %vm3660, %v3650, %v3666
          %3673 = vrot.lane.b32.xlu0 %v3669, 32
          %v3674 = vpop.permute.xlu0 %3673
          %3675 = vrot.lane.b32.xlu0 %v3670, 32
          %v3676 = vpop.permute.xlu0 %3675
          %3679 = vst.msk [vmem:[#allocation2] sm:$0xff] %vm1672, %v3674
          %3680 = vst.msk [vmem:[#allocation2 + $0x8] sm:$0xff] %vm1672, %v3676
          %v3681 = vsel %vm3659, %v3637, %v3612
          %v3682 = vsel %vm3660, %v3638, %v3614
          %3685 = vrot.lane.b32.xlu0 %v3681, 96
          %v3686 = vpop.permute.xlu0 %3685
          %3687 = vrot.lane.b32.xlu0 %v3682, 96
          %v3688 = vpop.permute.xlu0 %3687
          %3691 = vst.msk [vmem:[#allocation3] sm:$0xff] %vm1672, %v3686
          %3692 = vst.msk [vmem:[#allocation3 + $0x8] sm:$0xff] %vm1672, %v3688
          %v3693 = vsel %vm3659, %v3649, 0.0
          %v3694 = vsel %vm3660, %v3650, 0.0
          %v3695 = vpack.c.bf16 %v3694, %v3693
          %v3697 = vunpack.c.l.b16 %v3695
          %v3698 = vunpack.c.h.b16 %v3695
          %v3699 = vpack.c.b16 %v3697, %v3697
          %v3700 = vpack.c.b16 %v3698, %v3698
          %3701 = vrot.lane.b32.xlu0 %v3699, 32
          %v3702 = vpop.permute.xlu0 %3701
          %3703 = vrot.lane.b32.xlu0 %v3700, 32
          %v3704 = vpop.permute.xlu0 %3703
          %vm3707 = vcmask 257024
          %3708 = vst.msk [vmem:[%s842] sm:$0xf] %vm3707, %v3702
          %3709 = vst.msk [vmem:[%s842 + $0x4] sm:$0xf] %vm3707, %v3704
          %v3710 = vlaneseq
          %v3711 = vshrl.u32 %v3710, 7
          %v3712 = vsub.s32 %v2219, %v3711
          %v3713 = vrot.slane %v3033, %v3712
          %v3714 = vlaneseq
          %v3715 = vshrl.u32 %v3714, 7
          %v3716 = vsub.s32 %v2224, %v3715
          %v3717 = vrot.slane %v3038, %v3716
          %v3718 = vsel %vm2229, %v3717, %v3713
          %v3719 = vlaneseq
          %v3720 = vshrl.u32 %v3719, 7
          %v3721 = vsub.s32 %v2219, %v3720
          %v3722 = vrot.slane %v3043, %v3721
          %v3723 = vlaneseq
          %v3724 = vshrl.u32 %v3723, 7
          %v3725 = vsub.s32 %v2224, %v3724
          %v3726 = vrot.slane %v3048, %v3725
          %v3727 = vsel %vm2229, %v3726, %v3722
          %v3728 = vlaneseq
          %v3729 = vshrl.u32 %v3728, 7
          %v3730 = vsub.s32 %v2219, %v3729
          %v3731 = vrot.slane %v3053, %v3730
          %v3732 = vlaneseq
          %v3733 = vshrl.u32 %v3732, 7
          %v3734 = vsub.s32 %v2224, %v3733
          %v3735 = vrot.slane %v3058, %v3734
          %v3736 = vsel %vm2229, %v3735, %v3731
          %v3737 = vlaneseq
          %v3738 = vshrl.u32 %v3737, 7
          %v3739 = vsub.s32 %v2219, %v3738
          %v3740 = vrot.slane %v3063, %v3739
          %v3741 = vlaneseq
          %v3742 = vshrl.u32 %v3741, 7
          %v3743 = vsub.s32 %v2224, %v3742
          %v3744 = vrot.slane %v3068, %v3743
          %v3745 = vsel %vm2229, %v3744, %v3740
          %v3746 = vlaneseq
          %v3747 = vshrl.u32 %v3746, 7
          %v3748 = vsub.s32 %v2219, %v3747
          %v3749 = vrot.slane %v3073, %v3748
          %v3750 = vlaneseq
          %v3751 = vshrl.u32 %v3750, 7
          %v3752 = vsub.s32 %v2224, %v3751
          %v3753 = vrot.slane %v3078, %v3752
          %v3754 = vsel %vm2229, %v3753, %v3749
          %v3755 = vlaneseq
          %v3756 = vshrl.u32 %v3755, 7
          %v3757 = vsub.s32 %v2219, %v3756
          %v3758 = vrot.slane %v3083, %v3757
          %v3759 = vlaneseq
          %v3760 = vshrl.u32 %v3759, 7
          %v3761 = vsub.s32 %v2224, %v3760
          %v3762 = vrot.slane %v3088, %v3761
          %v3763 = vsel %vm2229, %v3762, %v3758
          %v3764 = vlaneseq
          %v3765 = vshrl.u32 %v3764, 7
          %v3766 = vsub.s32 %v2219, %v3765
          %v3767 = vrot.slane %v3093, %v3766
          %v3768 = vlaneseq
          %v3769 = vshrl.u32 %v3768, 7
          %v3770 = vsub.s32 %v2224, %v3769
          %v3771 = vrot.slane %v3098, %v3770
          %v3772 = vsel %vm2229, %v3771, %v3767
          %v3773 = vlaneseq
          %v3774 = vshrl.u32 %v3773, 7
          %v3775 = vsub.s32 %v2219, %v3774
          %v3776 = vrot.slane %v3103, %v3775
          %v3777 = vlaneseq
          %v3778 = vshrl.u32 %v3777, 7
          %v3779 = vsub.s32 %v2224, %v3778
          %v3780 = vrot.slane %v3108, %v3779
          %v3781 = vsel %vm2229, %v3780, %v3776
          %v3782 = vlaneseq
          %v3783 = vshrl.u32 %v3782, 7
          %v3784 = vsub.s32 %v2219, %v3783
          %v3785 = vrot.slane %v3113, %v3784
          %v3786 = vlaneseq
          %v3787 = vshrl.u32 %v3786, 7
          %v3788 = vsub.s32 %v2224, %v3787
          %v3789 = vrot.slane %v3118, %v3788
          %v3790 = vsel %vm2229, %v3789, %v3785
          %v3791 = vlaneseq
          %v3792 = vshrl.u32 %v3791, 7
          %v3793 = vsub.s32 %v2219, %v3792
          %v3794 = vrot.slane %v3123, %v3793
          %v3795 = vlaneseq
          %v3796 = vshrl.u32 %v3795, 7
          %v3797 = vsub.s32 %v2224, %v3796
          %v3798 = vrot.slane %v3128, %v3797
          %v3799 = vsel %vm2229, %v3798, %v3794
          %v3800 = vlaneseq
          %v3801 = vshrl.u32 %v3800, 7
          %v3802 = vsub.s32 %v2219, %v3801
          %v3803 = vrot.slane %v3133, %v3802
          %v3804 = vlaneseq
          %v3805 = vshrl.u32 %v3804, 7
          %v3806 = vsub.s32 %v2224, %v3805
          %v3807 = vrot.slane %v3138, %v3806
          %v3808 = vsel %vm2229, %v3807, %v3803
          %v3809 = vlaneseq
          %v3810 = vshrl.u32 %v3809, 7
          %v3811 = vsub.s32 %v2219, %v3810
          %v3812 = vrot.slane %v3143, %v3811
          %v3813 = vlaneseq
          %v3814 = vshrl.u32 %v3813, 7
          %v3815 = vsub.s32 %v2224, %v3814
          %v3816 = vrot.slane %v3148, %v3815
          %v3817 = vsel %vm2229, %v3816, %v3812
          %v3818 = vlaneseq
          %v3819 = vshrl.u32 %v3818, 7
          %v3820 = vsub.s32 %v2219, %v3819
          %v3821 = vrot.slane %v3153, %v3820
          %v3822 = vlaneseq
          %v3823 = vshrl.u32 %v3822, 7
          %v3824 = vsub.s32 %v2224, %v3823
          %v3825 = vrot.slane %v3158, %v3824
          %v3826 = vsel %vm2229, %v3825, %v3821
          %v3827 = vlaneseq
          %v3828 = vshrl.u32 %v3827, 7
          %v3829 = vsub.s32 %v2219, %v3828
          %v3830 = vrot.slane %v3163, %v3829
          %v3831 = vlaneseq
          %v3832 = vshrl.u32 %v3831, 7
          %v3833 = vsub.s32 %v2224, %v3832
          %v3834 = vrot.slane %v3168, %v3833
          %v3835 = vsel %vm2229, %v3834, %v3830
          %v3836 = vlaneseq
          %v3837 = vshrl.u32 %v3836, 7
          %v3838 = vsub.s32 %v2219, %v3837
          %v3839 = vrot.slane %v3173, %v3838
          %v3840 = vlaneseq
          %v3841 = vshrl.u32 %v3840, 7
          %v3842 = vsub.s32 %v2224, %v3841
          %v3843 = vrot.slane %v3178, %v3842
          %v3844 = vsel %vm2229, %v3843, %v3839
          %v3845 = vlaneseq
          %v3846 = vshrl.u32 %v3845, 7
          %v3847 = vsub.s32 %v2219, %v3846
          %v3848 = vrot.slane %v3183, %v3847
          %v3849 = vlaneseq
          %v3850 = vshrl.u32 %v3849, 7
          %v3851 = vsub.s32 %v2224, %v3850
          %v3852 = vrot.slane %v3188, %v3851
          %v3853 = vsel %vm2229, %v3852, %v3848
          %v3854 = vsel %vm2366, %v3727, %v3718
          %v3855 = vsel %vm2368, %v3736, %v3854
          %v3856 = vsel %vm2370, %v3745, %v3855
          %v3857 = vsel %vm2372, %v3754, %v3856
          %v3858 = vsel %vm2374, %v3763, %v3857
          %v3859 = vsel %vm2376, %v3772, %v3858
          %v3860 = vsel %vm2378, %v3781, %v3859
          %v3861 = vsel %vm2366, %v3799, %v3790
          %v3862 = vsel %vm2368, %v3808, %v3861
          %v3863 = vsel %vm2370, %v3817, %v3862
          %v3864 = vsel %vm2372, %v3826, %v3863
          %v3865 = vsel %vm2374, %v3835, %v3864
          %v3866 = vsel %vm2376, %v3844, %v3865
          %v3867 = vsel %vm2378, %v3853, %v3866
          %v3870 = vsel %vm3659, %v3860, 0.0
          %v3871 = vsel %vm3660, %v3867, 0.0
          %3872 = vst.msk [vmem:[%s849] sm:$0xff] %vm2389, %v3870
          %3873 = vst.msk [vmem:[%s849 + $0x8] sm:$0xff] %vm2389, %v3871
        $region156: #{tpu_custom_call.1} parent=87 // pred_fallthru
          _
        %p3874 = scmp.le.s32.totalorder %s861, %s56
        // Predicated region
        $region161: #{tpu_custom_call.1} parent=87 // pred_check
          %p3875 = pneg %p3874
        $region162: #{tpu_custom_call.1} parent=87 // pred_check_branch
          %3877 = sbr.rel (%p3875) target = $region164
        $region163: #{tpu_custom_call.1} parent=87 // pred_region
          %vm3878 = vcmask 257024
          %3879 = vst.msk [vmem:[%s842] sm:$0xf] %vm3878, 0
          %3880 = vst.msk [vmem:[%s842 + $0x4] sm:$0xf] %vm3878, 0
          %vm3881 = vcmask 130048
          %3882 = vst.msk [vmem:[%s849] sm:$0xff] %vm3881, 0.0
          %3883 = vst.msk [vmem:[%s849 + $0x8] sm:$0xff] %vm3881, 0.0
        $region164: #{tpu_custom_call.1} parent=87 // pred_fallthru
          _
        %s3884 = sand.u32 %s447, 1
        %s3885 = scalar_lea.sflag [#allocation10], %s3884
        %s3886 = sand.u32 %s447, 1
        %s3887 = smul.addr %s3886, 8
        %s3888 = scalar_lea.vmem [#allocation34], %s3887
        %s3889 = sand.u32 %s475, 1
        %s3890 = scalar_lea.sflag [#allocation36], %s3889
        %s3891 = sand.u32 %s475, 1
        %s3892 = smul.addr %s3891, 16
        %s3893 = scalar_lea.vmem [#allocation35], %s3892
        // Predicated region
        $region165: #{tpu_custom_call.1} parent=87 // pred_check
          %p3894 = pneg %p457
        $region166: #{tpu_custom_call.1} parent=87 // pred_check_branch
          %3896 = sbr.rel (%p3894) target = $region168
        $region167: #{tpu_custom_call.1} parent=87 // pred_region
          %s3897 = smul.u32 2, %s55
          %s3899 = ssub.s32 128, 128
          %3900 = vsyncadd %s3885, %s3899
          %s3901 = smul.addr %s56, 2
          %s3902 = sadd.s32 %s3897, %s3901
          %s3903 = smul.addr %s3902, 64
          %s3904 = scalar_lea.hbm %s18, %s3903
          %s3905 = sshll.u32 %s3888, 4
          %s3906 = int_to_ptr.vmem [resolvable:$true] %s3905
          %3911 = dma.vmem_to_hbm [thread:$0]  %s3906, 128, %s3904, %s3885, 64, 64, 4
        $region168: #{tpu_custom_call.1} parent=87 // pred_fallthru
          _
        // Predicated region
        $region169: #{tpu_custom_call.1} parent=87 // pred_check
          %p3912 = pneg %p485
        $region170: #{tpu_custom_call.1} parent=87 // pred_check_branch
          %3914 = sbr.rel (%p3912) target = $region172
        $region171: #{tpu_custom_call.1} parent=87 // pred_region
          %s3915 = smul.u32 2, %s55
          %s3917 = ssub.s32 256, 256
          %3918 = vsyncadd %s3890, %s3917
          %s3919 = smul.addr %s56, 2
          %s3920 = sadd.s32 %s3915, %s3919
          %s3921 = smul.addr %s3920, 128
          %s3922 = scalar_lea.hbm %s19, %s3921
          %s3923 = sshll.u32 %s3893, 4
          %s3924 = int_to_ptr.vmem [resolvable:$true] %s3923
          %3929 = dma.vmem_to_hbm [thread:$0]  %s3924, 256, %s3922, %s3890, 128, 128, 8
        $region172: #{tpu_custom_call.1} parent=87 // pred_fallthru
          _
      $region88: #{tpu_custom_call.1} parent=5 // pred_fallthru
        _
      %p3930 = scmp.le.s32.totalorder 2, %s46
      // Predicated region
      $region173: #{tpu_custom_call.1} parent=5 // pred_check
        %p3931 = pneg %p3930
      $region174: #{tpu_custom_call.1} parent=5 // pred_check_branch
        %3933 = sbr.rel (%p3931) target = $region176
      $region175: #{tpu_custom_call.1} parent=5 // pred_region
        %s3934 = ssub.s32 %s46, 2
        // Predicated region
        $region177: #{tpu_custom_call.1} parent=175 // pred_check
          %p3935 = pneg %p463
        $region178: #{tpu_custom_call.1} parent=175 // pred_check_branch
          %3937 = sbr.rel (%p3935) target = $region180
        $region179: #{tpu_custom_call.1} parent=175 // pred_region
          %s3938 = sand.u32 %s448, 1
          %s3939 = scalar_lea.sflag [#allocation10], %s3938
          %s3940 = sand.u32 %s448, 1
          %s3941 = smul.addr %s3940, 8
          %s3942 = scalar_lea.vmem [#allocation34], %s3941
          %3943 = dma.done %s3939, 128
        $region180: #{tpu_custom_call.1} parent=175 // pred_fallthru
          _
        // Predicated region
        $region181: #{tpu_custom_call.1} parent=175 // pred_check
          %p3944 = pneg %p491
        $region182: #{tpu_custom_call.1} parent=175 // pred_check_branch
          %3946 = sbr.rel (%p3944) target = $region184
        $region183: #{tpu_custom_call.1} parent=175 // pred_region
          %s3947 = sand.u32 %s476, 1
          %s3948 = scalar_lea.sflag [#allocation36], %s3947
          %s3949 = sand.u32 %s476, 1
          %s3950 = smul.addr %s3949, 16
          %s3951 = scalar_lea.vmem [#allocation35], %s3950
          %3952 = dma.done %s3948, 256
        $region184: #{tpu_custom_call.1} parent=175 // pred_fallthru
          _
      $region176: #{tpu_custom_call.1} parent=5 // pred_fallthru
        _
    $region6: #{tpu_custom_call.1} parent=1 // loop_footer
      %s50 = sadd.s32 1, %s46
    $region7: #{tpu_custom_call.1} parent=1 // loop_footer_branch
      %45 = sbr.rel target = $region3
    $region8: #{tpu_custom_call.1} parent=1 // loop_exit
      _
    %3953 = vsyncpa [#allocation9], 1
    %s3954 = scalar_lea.sflag [#allocation9], 1
    %3955 = vsyncpa %s3954, 1
    %3956 = vsyncpa [#allocation12], 1
    %s3957 = scalar_lea.sflag [#allocation12], 1
    %3958 = vsyncpa %s3957, 1
    %3959 = vsyncpa [#allocation15], 1
    %3960 = vsyncpa [#allocation18], 1
    %3961 = vsyncpa [#allocation21], 1
    %3962 = vsyncpa [#allocation24], 1
    %3963 = vsyncpa [#allocation27], 1
    %3964 = vsyncpa [#allocation30], 1
    %3965 = vsyncpa [#allocation33], 1
    %3966 = vsyncpa [#allocation10], 1
    %s3967 = scalar_lea.sflag [#allocation10], 1
    %3968 = vsyncpa %s3967, 1
    %3969 = vsyncpa [#allocation36], 1
    %s3970 = scalar_lea.sflag [#allocation36], 1
    %3971 = vsyncpa %s3970, 1

// kernel: tpu_custom_call.1
$region0: #{tpu_custom_call.1}
  #allocation0 [shape = 'u32[]', space=smem, size = 0x4, offset = 0x4, fixed_abs, tag = 'smem constant byte address 0x4 - core index']
  #allocation1 [shape = 'u32[144,128]{1,0:T(1,128)}', space=vmem, size = 0x12000, scoped, tag = 'internal scratch']
  #allocation2 [shape = 'f32[16,32]{1,0:T(8,128)}', space=vmem, size = 0x2000, scoped, tag = 'scratch operand']
  #allocation3 [shape = 'f32[16,32]{1,0:T(8,128)}', space=vmem, size = 0x2000, scoped, tag = 'scratch operand']
  #allocation4 [shape = 'bf16[16,16,32]{2,1,0:T(16,128)(2,1)}', space=vmem, size = 0x10000, scoped, tag = 'scratch operand']
  #allocation5 [shape = 's32[1]{0}', space=sflag, size = 0x4, scoped, tag = 'scoped memory for tpu_custom_call.1']
  #allocation6 [shape = 's32[1]{0:T(128)S(6)}', space=smem, size = 0x200, scoped, tag = 'prefetched SMEM operand 0']
  #allocation7 [shape = 'f32[1,1]{1,0:T(1,128)S(1)}', space=vmem, size = 0x200, scoped, tag = 'scoped memory for tpu_custom_call.1']
  %s0 = inlined_call_operand.<no memory space> [shape: s32[1], index: 0, kind: input, shape index: {}]
  %s1 = inlined_call_operand.hbm [shape: bf16[16,16,32], index: 1, kind: input, shape index: {}]
  %s2 = inlined_call_operand.hbm [shape: bf16[7,16,32], index: 2, kind: input, shape index: {}]
  %s3 = inlined_call_operand.hbm [shape: s32[16,1], index: 3, kind: input, shape index: {}]
  %s4 = inlined_call_operand.hbm [shape: bf16[32,32], index: 4, kind: input, shape index: {}]
  %s5 = inlined_call_operand.hbm [shape: f32[1,32], index: 5, kind: input, shape index: {}]
  %s6 = inlined_call_operand.hbm [shape: bf16[32,32], index: 6, kind: input, shape index: {}]
  %s7 = inlined_call_operand.hbm [shape: f32[1,32], index: 7, kind: input, shape index: {}]
  %s8 = inlined_call_operand.hbm [shape: bf16[32,32], index: 8, kind: input, shape index: {}]
  %s9 = inlined_call_operand.hbm [shape: f32[1,32], index: 9, kind: input, shape index: {}]
  %s10 = inlined_call_operand.hbm [shape: bf16[32,32], index: 10, kind: input, shape index: {}]
  %s11 = inlined_call_operand.hbm [shape: f32[1,32], index: 11, kind: input, shape index: {}]
  %s12 = inlined_call_operand.hbm [shape: f32[1,32], index: 12, kind: input, shape index: {}]
  %s13 = inlined_call_operand.<no memory space> [shape: f32[1,1], index: 13, kind: input, shape index: {}]
  %s14 = inlined_call_operand.hbm [shape: bf16[32,32], index: 14, kind: input, shape index: {}]
  %s15 = inlined_call_operand.hbm [shape: f32[1,32], index: 15, kind: input, shape index: {}]
  %s16 = inlined_call_operand.hbm [shape: bf16[96,128], index: 16, kind: input, shape index: {}]
  %s17 = inlined_call_operand.hbm [shape: f32[1,128], index: 17, kind: input, shape index: {}]
  %s18 = inlined_call_operand.hbm [shape: bf16[7,16,32], index: 18, kind: output, shape index: {0}]
  %s19 = inlined_call_operand.hbm [shape: f32[7,16,16], index: 19, kind: output, shape index: {1}]
  %20 = xla_tuple %s18, %s19
  %s21 = sld [smem:[#allocation0]]
  $region185: #{tpu_custom_call.1} parent=0
    _
  %s23 = ssub.s32 1, %s21
  %s24 = scalar_select 0, %s23, %s21
  %25 = sst [smem:[#allocation6]] %s0
  %v26 = vstv %s13
  %27 = vst [vmem:[#allocation7] sm:$0x1] %v26
  $region1: #{tpu_custom_call.1} parent=0
    #allocation8 [shape = 'u8[65536]{0}', space=vmem, size = 0x10000, scoped, tag = 'input window, operand 1, single buffered']
    #allocation9 [shape = 's32[2]{0}', space=sflag, size = 0x8, scoped, tag = 'scoped memory for tpu_custom_call.1']
    #allocation10 [shape = 's32[2]{0}', space=sflag, size = 0x8, scoped, tag = 'scoped memory for tpu_custom_call.1']
    #allocation11 [shape = 'u8[8192]{0}', space=vmem, size = 0x2000, scoped, tag = 'input window, operand 2']
    #allocation12 [shape = 's32[2]{0}', space=sflag, size = 0x8, scoped, tag = 'scoped memory for tpu_custom_call.1']
    #allocation13 [shape = 'u8[8192]{0}', space=vmem, size = 0x2000, scoped, tag = 'input window, operand 3, single buffered']
    #allocation14 [shape = 'u8[8192]{0}', space=vmem, size = 0x2000, scoped, tag = 'input window, operand 4, single buffered']
    #allocation15 [shape = 's32[1]{0}', space=sflag, size = 0x4, scoped, tag = 'scoped memory for tpu_custom_call.1']
    #allocation16 [shape = 'u8[512]{0}', space=vmem, size = 0x400, scoped, tag = 'input window, operand 5, single buffered']
    #allocation17 [shape = 'u8[8192]{0}', space=vmem, size = 0x2000, scoped, tag = 'input window, operand 6, single buffered']
    #allocation18 [shape = 's32[1]{0}', space=sflag, size = 0x4, scoped, tag = 'scoped memory for tpu_custom_call.1']
    #allocation19 [shape = 'u8[512]{0}', space=vmem, size = 0x400, scoped, tag = 'input window, operand 7, single buffered']
    #allocation20 [shape = 'u8[8192]{0}', space=vmem, size = 0x2000, scoped, tag = 'input window, operand 8, single buffered']
    #allocation21 [shape = 's32[1]{0}', space=sflag, size = 0x4, scoped, tag = 'scoped memory for tpu_custom_call.1']
    #allocation22 [shape = 'u8[512]{0}', space=vmem, size = 0x400, scoped, tag = 'input window, operand 9, single buffered']
    #allocation23 [shape = 'u8[8192]{0}', space=vmem, size = 0x2000, scoped, tag = 'input window, operand 10, single buffered']
    #allocation24 [shape = 's32[1]{0}', space=sflag, size = 0x4, scoped, tag = 'scoped memory for tpu_custom_call.1']
    #allocation25 [shape = 'u8[512]{0}', space=vmem, size = 0x400, scoped, tag = 'input window, operand 11, single buffered']
    #allocation26 [shape = 'u8[512]{0}', space=vmem, size = 0x400, scoped, tag = 'input window, operand 12, single buffered']
    #allocation27 [shape = 's32[1]{0}', space=sflag, size = 0x4, scoped, tag = 'scoped memory for tpu_custom_call.1']
    #allocation28 [shape = 'u8[8192]{0}', space=vmem, size = 0x2000, scoped, tag = 'input window, operand 14, single buffered']
    #allocation29 [shape = 'u8[512]{0}', space=vmem, size = 0x400, scoped, tag = 'input window, operand 15, single buffered']
    #allocation30 [shape = 's32[1]{0}', space=sflag, size = 0x4, scoped, tag = 'scoped memory for tpu_custom_call.1']
    #allocation31 [shape = 'u8[24576]{0}', space=vmem, size = 0x6000, scoped, tag = 'input window, operand 16, single buffered']
    #allocation32 [shape = 'u8[512]{0}', space=vmem, size = 0x400, scoped, tag = 'input window, operand 17, single buffered']
    #allocation33 [shape = 's32[1]{0}', space=sflag, size = 0x4, scoped, tag = 'scoped memory for tpu_custom_call.1']
    #allocation34 [shape = 'u8[8192]{0}', space=vmem, size = 0x2000, scoped, tag = 'output window, operand 0']
    #allocation35 [shape = 'u8[16384]{0}', space=vmem, size = 0x4000, scoped, tag = 'output window, operand 1']
    #allocation36 [shape = 's32[2]{0}', space=sflag, size = 0x8, scoped, tag = 'scoped memory for tpu_custom_call.1']
    %28 = vsyncpa [#allocation9], 0
    %29 = vsyncpa [#allocation12], 0
    %s30 = scalar_lea.sflag [#allocation12], 1
    %31 = vsyncpa %s30, 0
    %32 = vsyncpa [#allocation15], 0
    %33 = vsyncpa [#allocation18], 0
    %34 = vsyncpa [#allocation21], 0
    %35 = vsyncpa [#allocation24], 0
    %36 = vsyncpa [#allocation27], 0
    %37 = vsyncpa [#allocation30], 0
    %38 = vsyncpa [#allocation33], 0
    %39 = vsyncpa [#allocation10], 0
    %s40 = scalar_lea.sflag [#allocation10], 1
    %41 = vsyncpa %s40, 0
    %42 = vsyncpa [#allocation36], 0
    %s43 = scalar_lea.sflag [#allocation36], 1
    %44 = vsyncpa %s43, 0
    loop: start=0, step=1, limit=9
    $region2: #{tpu_custom_call.1} parent=1 // loop_pre_header
      _
    $region3: #{tpu_custom_call.1} parent=1 // loop_header
      %s46 = sphi 0, %s50
      %p47 = scmp.ge.s32.totalorder %s46, 9
      %s53 = sphi 0, %s65
      %s54 = sphi 0, %s61
      %s55 = sphi 0, %s53
      %s56 = sphi 0, %s54
      %s57 = sphi 0, %s55
      %s58 = sphi 0, %s56
      %s68 = sphi 0, %s70
      %s71 = sphi 0, %s68
      %s72 = sphi 0, %s71
      %s88 = sphi 0, %s72
      %s96 = sphi 0, %s98
      %s99 = sphi 0, %s96
      %s100 = sphi 0, %s99
      %s116 = sphi 0, %s100
      %s122 = sphi 0, %s124
      %s125 = sphi 0, %s122
      %s126 = sphi 0, %s125
      %s142 = sphi 0, %s126
      %s146 = sphi 0, %s146
      %s148 = sphi 0, %s146
      %s149 = sphi 0, %s148
      %s163 = sphi 0, %s149
      %s167 = sphi 0, %s167
      %s169 = sphi 0, %s167
      %s170 = sphi 0, %s169
      %s184 = sphi 0, %s170
      %s188 = sphi 0, %s188
      %s190 = sphi 0, %s188
      %s191 = sphi 0, %s190
      %s205 = sphi 0, %s191
      %s209 = sphi 0, %s209
      %s211 = sphi 0, %s209
      %s212 = sphi 0, %s211
      %s226 = sphi 0, %s212
      %s230 = sphi 0, %s230
      %s232 = sphi 0, %s230
      %s233 = sphi 0, %s232
      %s247 = sphi 0, %s233
      %s251 = sphi 0, %s251
      %s253 = sphi 0, %s251
      %s254 = sphi 0, %s253
      %s268 = sphi 0, %s254
      %s272 = sphi 0, %s272
      %s274 = sphi 0, %s272
      %s275 = sphi 0, %s274
      %s289 = sphi 0, %s275
      %s293 = sphi 0, %s293
      %s295 = sphi 0, %s293
      %s296 = sphi 0, %s295
      %s310 = sphi 0, %s296
      %s314 = sphi 0, %s314
      %s316 = sphi 0, %s314
      %s317 = sphi 0, %s316
      %s331 = sphi 0, %s317
      %s335 = sphi 0, %s335
      %s337 = sphi 0, %s335
      %s338 = sphi 0, %s337
      %s352 = sphi 0, %s338
      %s356 = sphi 0, %s356
      %s358 = sphi 0, %s356
      %s359 = sphi 0, %s358
      %s373 = sphi 0, %s359
      %s377 = sphi 0, %s377
      %s379 = sphi 0, %s377
      %s380 = sphi 0, %s379
      %s394 = sphi 0, %s380
      %s398 = sphi 0, %s398
      %s400 = sphi 0, %s398
      %s401 = sphi 0, %s400
      %s415 = sphi 0, %s401
      %s419 = sphi 0, %s419
      %s421 = sphi 0, %s419
      %s422 = sphi 0, %s421
      %s436 = sphi 0, %s422
      %s444 = sphi 0, %s446
      %s447 = sphi 0, %s444
      %s448 = sphi 0, %s447
      %s464 = sphi 0, %s448
      %s472 = sphi 0, %s474
      %s475 = sphi 0, %s472
      %s476 = sphi 0, %s475
      %s492 = sphi 0, %s476
    $region4: #{tpu_custom_call.1} parent=1 // loop_header_branch
      %49 = sbr.rel (%p47) target = $region8
    $region5: #{tpu_custom_call.1} parent=1 // loop_body
      %s51 = ssub.s32 %s46, 1
      %s52 = ssub.s32 %s46, 2
      %s59 = sadd.s32 1, %s54
      %p60 = scmp.ge.s32.totalorder %s59, 7
      %s61 = scalar_select %p60, 0, %s59
      %s62 = sadd.s32 1, %s53
      %s63 = scalar_select %p60, %s62, %s53
      %p64 = scmp.ge.s32.totalorder %s63, 1
      %s65 = scalar_select %p64, 0, %s63
      %s66 = ssub.s32 %s53, %s65
      %p67 = scmp.eq.s32.totalorder %s66, 0
      %s69 = sadd.s32 %s68, 1
      %s70 = scalar_select %p67, %s68, %s69
      %p73 = pneg %p67
      %p74 = scmp.eq.s32.totalorder %s46, 6
      %p75 = por %p73, %p74
      %p76 = scmp.ne.s32.totalorder %s68, %s71
      %p77 = scmp.eq.s32.totalorder %s46, 0
      %p78 = por %p76, %p77
      %p79 = scmp.ne.s32.totalorder %s68, %s71
      %p80 = scmp.eq.s32.totalorder %s51, 6
      %p81 = por %p79, %p80
      %p82 = scmp.ne.s32.totalorder %s71, %s72
      %p83 = scmp.eq.s32.totalorder %s51, 0
      %p84 = por %p82, %p83
      %p85 = scmp.ne.s32.totalorder %s71, %s72
      %p86 = scmp.eq.s32.totalorder %s52, 6
      %p87 = por %p85, %p86
      %p89 = scmp.ne.s32.totalorder %s72, %s88
      %p90 = scmp.eq.s32.totalorder %s52, 0
      %p91 = por %p89, %p90
      %s92 = ssub.s32 %s54, %s61
      %s93 = ssub.s32 %s53, %s65
      %s94 = sor.u32 %s92, %s93
      %p95 = scmp.eq.s32.totalorder %s94, 0
      %s97 = sadd.s32 %s96, 1
      %s98 = scalar_select %p95, %s96, %s97
      %p101 = pneg %p95
      %p102 = scmp.eq.s32.totalorder %s46, 6
      %p103 = por %p101, %p102
      %p104 = scmp.ne.s32.totalorder %s96, %s99
      %p105 = scmp.eq.s32.totalorder %s46, 0
      %p106 = por %p104, %p105
      %p107 = scmp.ne.s32.totalorder %s96, %s99
      %p108 = scmp.eq.s32.totalorder %s51, 6
      %p109 = por %p107, %p108
      %p110 = scmp.ne.s32.totalorder %s99, %s100
      %p111 = scmp.eq.s32.totalorder %s51, 0
      %p112 = por %p110, %p111
      %p113 = scmp.ne.s32.totalorder %s99, %s100
      %p114 = scmp.eq.s32.totalorder %s52, 6
      %p115 = por %p113, %p114
      %p117 = scmp.ne.s32.totalorder %s100, %s116
      %p118 = scmp.eq.s32.totalorder %s52, 0
      %p119 = por %p117, %p118
      %s120 = ssub.s32 %s53, %s65
      %p121 = scmp.eq.s32.totalorder %s120, 0
      %s123 = sadd.s32 %s122, 1
      %s124 = scalar_select %p121, %s122, %s123
      %p127 = pneg %p121
      %p128 = scmp.eq.s32.totalorder %s46, 6
      %p129 = por %p127, %p128
      %p130 = scmp.ne.s32.totalorder %s122, %s125
      %p131 = scmp.eq.s32.totalorder %s46, 0
      %p132 = por %p130, %p131
      %p133 = scmp.ne.s32.totalorder %s122, %s125
      %p134 = scmp.eq.s32.totalorder %s51, 6
      %p135 = por %p133, %p134
      %p136 = scmp.ne.s32.totalorder %s125, %s126
      %p137 = scmp.eq.s32.totalorder %s51, 0
      %p138 = por %p136, %p137
      %p139 = scmp.ne.s32.totalorder %s125, %s126
      %p140 = scmp.eq.s32.totalorder %s52, 6
      %p141 = por %p139, %p140
      %p143 = scmp.ne.s32.totalorder %s126, %s142
      %p144 = scmp.eq.s32.totalorder %s52, 0
      %p145 = por %p143, %p144
      %s147 = sadd.s32 %s146, 1
      %p150 = scmp.eq.s32.totalorder %s46, 6
      %p151 = scmp.ne.s32.totalorder %s146, %s148
      %p152 = scmp.eq.s32.totalorder %s46, 0
      %p153 = por %p151, %p152
      %p154 = scmp.ne.s32.totalorder %s146, %s148
      %p155 = scmp.eq.s32.totalorder %s51, 6
      %p156 = por %p154, %p155
      %p157 = scmp.ne.s32.totalorder %s148, %s149
      %p158 = scmp.eq.s32.totalorder %s51, 0
      %p159 = por %p157, %p158
      %p160 = scmp.ne.s32.totalorder %s148, %s149
      %p161 = scmp.eq.s32.totalorder %s52, 6
      %p162 = por %p160, %p161
      %p164 = scmp.ne.s32.totalorder %s149, %s163
      %p165 = scmp.eq.s32.totalorder %s52, 0
      %p166 = por %p164, %p165
      %s168 = sadd.s32 %s167, 1
      %p171 = scmp.eq.s32.totalorder %s46, 6
      %p172 = scmp.ne.s32.totalorder %s167, %s169
      %p173 = scmp.eq.s32.totalorder %s46, 0
      %p174 = por %p172, %p173
      %p175 = scmp.ne.s32.totalorder %s167, %s169
      %p176 = scmp.eq.s32.totalorder %s51, 6
      %p177 = por %p175, %p176
      %p178 = scmp.ne.s32.totalorder %s169, %s170
      %p179 = scmp.eq.s32.totalorder %s51, 0
      %p180 = por %p178, %p179
      %p181 = scmp.ne.s32.totalorder %s169, %s170
      %p182 = scmp.eq.s32.totalorder %s52, 6
      %p183 = por %p181, %p182
      %p185 = scmp.ne.s32.totalorder %s170, %s184
      %p186 = scmp.eq.s32.totalorder %s52, 0
      %p187 = por %p185, %p186
      %s189 = sadd.s32 %s188, 1
      %p192 = scmp.eq.s32.totalorder %s46, 6
      %p193 = scmp.ne.s32.totalorder %s188, %s190
      %p194 = scmp.eq.s32.totalorder %s46, 0
      %p195 = por %p193, %p194
      %p196 = scmp.ne.s32.totalorder %s188, %s190
      %p197 = scmp.eq.s32.totalorder %s51, 6
      %p198 = por %p196, %p197
      %p199 = scmp.ne.s32.totalorder %s190, %s191
      %p200 = scmp.eq.s32.totalorder %s51, 0
      %p201 = por %p199, %p200
      %p202 = scmp.ne.s32.totalorder %s190, %s191
      %p203 = scmp.eq.s32.totalorder %s52, 6
      %p204 = por %p202, %p203
      %p206 = scmp.ne.s32.totalorder %s191, %s205
      %p207 = scmp.eq.s32.totalorder %s52, 0
      %p208 = por %p206, %p207
      %s210 = sadd.s32 %s209, 1
      %p213 = scmp.eq.s32.totalorder %s46, 6
      %p214 = scmp.ne.s32.totalorder %s209, %s211
      %p215 = scmp.eq.s32.totalorder %s46, 0
      %p216 = por %p214, %p215
      %p217 = scmp.ne.s32.totalorder %s209, %s211
      %p218 = scmp.eq.s32.totalorder %s51, 6
      %p219 = por %p217, %p218
      %p220 = scmp.ne.s32.totalorder %s211, %s212
      %p221 = scmp.eq.s32.totalorder %s51, 0
      %p222 = por %p220, %p221
      %p223 = scmp.ne.s32.totalorder %s211, %s212
      %p224 = scmp.eq.s32.totalorder %s52, 6
      %p225 = por %p223, %p224
      %p227 = scmp.ne.s32.totalorder %s212, %s226
      %p228 = scmp.eq.s32.totalorder %s52, 0
      %p229 = por %p227, %p228
      %s231 = sadd.s32 %s230, 1
      %p234 = scmp.eq.s32.totalorder %s46, 6
      %p235 = scmp.ne.s32.totalorder %s230, %s232
      %p236 = scmp.eq.s32.totalorder %s46, 0
      %p237 = por %p235, %p236
      %p238 = scmp.ne.s32.totalorder %s230, %s232
      %p239 = scmp.eq.s32.totalorder %s51, 6
      %p240 = por %p238, %p239
      %p241 = scmp.ne.s32.totalorder %s232, %s233
      %p242 = scmp.eq.s32.totalorder %s51, 0
      %p243 = por %p241, %p242
      %p244 = scmp.ne.s32.totalorder %s232, %s233
      %p245 = scmp.eq.s32.totalorder %s52, 6
      %p246 = por %p244, %p245
      %p248 = scmp.ne.s32.totalorder %s233, %s247
      %p249 = scmp.eq.s32.totalorder %s52, 0
      %p250 = por %p248, %p249
      %s252 = sadd.s32 %s251, 1
      %p255 = scmp.eq.s32.totalorder %s46, 6
      %p256 = scmp.ne.s32.totalorder %s251, %s253
      %p257 = scmp.eq.s32.totalorder %s46, 0
      %p258 = por %p256, %p257
      %p259 = scmp.ne.s32.totalorder %s251, %s253
      %p260 = scmp.eq.s32.totalorder %s51, 6
      %p261 = por %p259, %p260
      %p262 = scmp.ne.s32.totalorder %s253, %s254
      %p263 = scmp.eq.s32.totalorder %s51, 0
      %p264 = por %p262, %p263
      %p265 = scmp.ne.s32.totalorder %s253, %s254
      %p266 = scmp.eq.s32.totalorder %s52, 6
      %p267 = por %p265, %p266
      %p269 = scmp.ne.s32.totalorder %s254, %s268
      %p270 = scmp.eq.s32.totalorder %s52, 0
      %p271 = por %p269, %p270
      %s273 = sadd.s32 %s272, 1
      %p276 = scmp.eq.s32.totalorder %s46, 6
      %p277 = scmp.ne.s32.totalorder %s272, %s274
      %p278 = scmp.eq.s32.totalorder %s46, 0
      %p279 = por %p277, %p278
      %p280 = scmp.ne.s32.totalorder %s272, %s274
      %p281 = scmp.eq.s32.totalorder %s51, 6
      %p282 = por %p280, %p281
      %p283 = scmp.ne.s32.totalorder %s274, %s275
      %p284 = scmp.eq.s32.totalorder %s51, 0
      %p285 = por %p283, %p284
      %p286 = scmp.ne.s32.totalorder %s274, %s275
      %p287 = scmp.eq.s32.totalorder %s52, 6
      %p288 = por %p286, %p287
      %p290 = scmp.ne.s32.totalorder %s275, %s289
      %p291 = scmp.eq.s32.totalorder %s52, 0
      %p292 = por %p290, %p291
      %s294 = sadd.s32 %s293, 1
      %p297 = scmp.eq.s32.totalorder %s46, 6
      %p298 = scmp.ne.s32.totalorder %s293, %s295
      %p299 = scmp.eq.s32.totalorder %s46, 0
      %p300 = por %p298, %p299
      %p301 = scmp.ne.s32.totalorder %s293, %s295
      %p302 = scmp.eq.s32.totalorder %s51, 6
      %p303 = por %p301, %p302
      %p304 = scmp.ne.s32.totalorder %s295, %s296
      %p305 = scmp.eq.s32.totalorder %s51, 0
      %p306 = por %p304, %p305
      %p307 = scmp.ne.s32.totalorder %s295, %s296
      %p308 = scmp.eq.s32.totalorder %s52, 6
      %p309 = por %p307, %p308
      %p311 = scmp.ne.s32.totalorder %s296, %s310
      %p312 = scmp.eq.s32.totalorder %s52, 0
      %p313 = por %p311, %p312
      %s315 = sadd.s32 %s314, 1
      %p318 = scmp.eq.s32.totalorder %s46, 6
      %p319 = scmp.ne.s32.totalorder %s314, %s316
      %p320 = scmp.eq.s32.totalorder %s46, 0
      %p321 = por %p319, %p320
      %p322 = scmp.ne.s32.totalorder %s314, %s316
      %p323 = scmp.eq.s32.totalorder %s51, 6
      %p324 = por %p322, %p323
      %p325 = scmp.ne.s32.totalorder %s316, %s317
      %p326 = scmp.eq.s32.totalorder %s51, 0
      %p327 = por %p325, %p326
      %p328 = scmp.ne.s32.totalorder %s316, %s317
      %p329 = scmp.eq.s32.totalorder %s52, 6
      %p330 = por %p328, %p329
      %p332 = scmp.ne.s32.totalorder %s317, %s331
      %p333 = scmp.eq.s32.totalorder %s52, 0
      %p334 = por %p332, %p333
      %s336 = sadd.s32 %s335, 1
      %p339 = scmp.eq.s32.totalorder %s46, 6
      %p340 = scmp.ne.s32.totalorder %s335, %s337
      %p341 = scmp.eq.s32.totalorder %s46, 0
      %p342 = por %p340, %p341
      %p343 = scmp.ne.s32.totalorder %s335, %s337
      %p344 = scmp.eq.s32.totalorder %s51, 6
      %p345 = por %p343, %p344
      %p346 = scmp.ne.s32.totalorder %s337, %s338
      %p347 = scmp.eq.s32.totalorder %s51, 0
      %p348 = por %p346, %p347
      %p349 = scmp.ne.s32.totalorder %s337, %s338
      %p350 = scmp.eq.s32.totalorder %s52, 6
      %p351 = por %p349, %p350
      %p353 = scmp.ne.s32.totalorder %s338, %s352
      %p354 = scmp.eq.s32.totalorder %s52, 0
      %p355 = por %p353, %p354
      %s357 = sadd.s32 %s356, 1
      %p360 = scmp.eq.s32.totalorder %s46, 6
      %p361 = scmp.ne.s32.totalorder %s356, %s358
      %p362 = scmp.eq.s32.totalorder %s46, 0
      %p363 = por %p361, %p362
      %p364 = scmp.ne.s32.totalorder %s356, %s358
      %p365 = scmp.eq.s32.totalorder %s51, 6
      %p366 = por %p364, %p365
      %p367 = scmp.ne.s32.totalorder %s358, %s359
      %p368 = scmp.eq.s32.totalorder %s51, 0
      %p369 = por %p367, %p368
      %p370 = scmp.ne.s32.totalorder %s358, %s359
      %p371 = scmp.eq.s32.totalorder %s52, 6
      %p372 = por %p370, %p371
      %p374 = scmp.ne.s32.totalorder %s359, %s373
      %p375 = scmp.eq.s32.totalorder %s52, 0
      %p376 = por %p374, %p375
      %s378 = sadd.s32 %s377, 1
      %p381 = scmp.eq.s32.totalorder %s46, 6
      %p382 = scmp.ne.s32.totalorder %s377, %s379
      %p383 = scmp.eq.s32.totalorder %s46, 0
      %p384 = por %p382, %p383
      %p385 = scmp.ne.s32.totalorder %s377, %s379
      %p386 = scmp.eq.s32.totalorder %s51, 6
      %p387 = por %p385, %p386
      %p388 = scmp.ne.s32.totalorder %s379, %s380
      %p389 = scmp.eq.s32.totalorder %s51, 0
      %p390 = por %p388, %p389
      %p391 = scmp.ne.s32.totalorder %s379, %s380
      %p392 = scmp.eq.s32.totalorder %s52, 6
      %p393 = por %p391, %p392
      %p395 = scmp.ne.s32.totalorder %s380, %s394
      %p396 = scmp.eq.s32.totalorder %s52, 0
      %p397 = por %p395, %p396
      %s399 = sadd.s32 %s398, 1
      %p402 = scmp.eq.s32.totalorder %s46, 6
      %p403 = scmp.ne.s32.totalorder %s398, %s400
      %p404 = scmp.eq.s32.totalorder %s46, 0
      %p405 = por %p403, %p404
      %p406 = scmp.ne.s32.totalorder %s398, %s400
      %p407 = scmp.eq.s32.totalorder %s51, 6
      %p408 = por %p406, %p407
      %p409 = scmp.ne.s32.totalorder %s400, %s401
      %p410 = scmp.eq.s32.totalorder %s51, 0
      %p411 = por %p409, %p410
      %p412 = scmp.ne.s32.totalorder %s400, %s401
      %p413 = scmp.eq.s32.totalorder %s52, 6
      %p414 = por %p412, %p413
      %p416 = scmp.ne.s32.totalorder %s401, %s415
      %p417 = scmp.eq.s32.totalorder %s52, 0
      %p418 = por %p416, %p417
      %s420 = sadd.s32 %s419, 1
      %p423 = scmp.eq.s32.totalorder %s46, 6
      %p424 = scmp.ne.s32.totalorder %s419, %s421
      %p425 = scmp.eq.s32.totalorder %s46, 0
      %p426 = por %p424, %p425
      %p427 = scmp.ne.s32.totalorder %s419, %s421
      %p428 = scmp.eq.s32.totalorder %s51, 6
      %p429 = por %p427, %p428
      %p430 = scmp.ne.s32.totalorder %s421, %s422
      %p431 = scmp.eq.s32.totalorder %s51, 0
      %p432 = por %p430, %p431
      %p433 = scmp.ne.s32.totalorder %s421, %s422
      %p434 = scmp.eq.s32.totalorder %s52, 6
      %p435 = por %p433, %p434
      %p437 = scmp.ne.s32.totalorder %s422, %s436
      %p438 = scmp.eq.s32.totalorder %s52, 0
      %p439 = por %p437, %p438
      %s440 = ssub.s32 %s54, %s61
      %s441 = ssub.s32 %s53, %s65
      %s442 = sor.u32 %s440, %s441
      %p443 = scmp.eq.s32.totalorder %s442, 0
      %s445 = sadd.s32 %s444, 1
      %s446 = scalar_select %p443, %s444, %s445
      %p449 = pneg %p443
      %p450 = scmp.eq.s32.totalorder %s46, 6
      %p451 = por %p449, %p450
      %p452 = scmp.ne.s32.totalorder %s444, %s447
      %p453 = scmp.eq.s32.totalorder %s46, 0
      %p454 = por %p452, %p453
      %p455 = scmp.ne.s32.totalorder %s444, %s447
      %p456 = scmp.eq.s32.totalorder %s51, 6
      %p457 = por %p455, %p456
      %p458 = scmp.ne.s32.totalorder %s447, %s448
      %p459 = scmp.eq.s32.totalorder %s51, 0
      %p460 = por %p458, %p459
      %p461 = scmp.ne.s32.totalorder %s447, %s448
      %p462 = scmp.eq.s32.totalorder %s52, 6
      %p463 = por %p461, %p462
      %p465 = scmp.ne.s32.totalorder %s448, %s464
      %p466 = scmp.eq.s32.totalorder %s52, 0
      %p467 = por %p465, %p466
      %s468 = ssub.s32 %s54, %s61
      %s469 = ssub.s32 %s53, %s65
      %s470 = sor.u32 %s468, %s469
      %p471 = scmp.eq.s32.totalorder %s470, 0
      %s473 = sadd.s32 %s472, 1
      %s474 = scalar_select %p471, %s472, %s473
      %p477 = pneg %p471
      %p478 = scmp.eq.s32.totalorder %s46, 6
      %p479 = por %p477, %p478
      %p480 = scmp.ne.s32.totalorder %s472, %s475
      %p481 = scmp.eq.s32.totalorder %s46, 0
      %p482 = por %p480, %p481
      %p483 = scmp.ne.s32.totalorder %s472, %s475
      %p484 = scmp.eq.s32.totalorder %s51, 6
      %p485 = por %p483, %p484
      %p486 = scmp.ne.s32.totalorder %s475, %s476
      %p487 = scmp.eq.s32.totalorder %s51, 0
      %p488 = por %p486, %p487
      %p489 = scmp.ne.s32.totalorder %s475, %s476
      %p490 = scmp.eq.s32.totalorder %s52, 6
      %p491 = por %p489, %p490
      %p493 = scmp.ne.s32.totalorder %s476, %s492
      %p494 = scmp.eq.s32.totalorder %s52, 0
      %p495 = por %p493, %p494
      %p496 = scmp.le.s32.totalorder 1, %s46
      %p497 = scmp.lt.s32.totalorder %s46, 8
      %p498 = pnand %p496, %p497
      %p499 = pneg %p498
      // Predicated region
      $region9: #{tpu_custom_call.1} parent=5 // pred_check
        _
      $region10: #{tpu_custom_call.1} parent=5 // pred_check_branch
        %501 = sbr.rel (%p498) target = $region12
      $region11: #{tpu_custom_call.1} parent=5 // pred_region
        %s502 = ssub.s32 %s46, 1
        // Predicated region
        $region13: #{tpu_custom_call.1} parent=11 // pred_check
          %p503 = pneg %p84
        $region14: #{tpu_custom_call.1} parent=11 // pred_check_branch
          %505 = sbr.rel (%p503) target = $region16
        $region15: #{tpu_custom_call.1} parent=11 // pred_region
          %s506 = smul.u32 16, %s55
          %s508 = ssub.s32 2048, 2048
          %509 = vsyncadd [#allocation9], %s508
          %s510 = smul.addr %s506, 2
          %s511 = smul.addr %s510, 64
          %s512 = scalar_lea.hbm %s1, %s511
          %s513 = sshll.u32 [#allocation8], 4
          %s514 = int_to_ptr.vmem [resolvable:$true] %s513
          %519 = dma.hbm_to_vmem [thread:$0]  %s512, 2048, %s514, [#allocation9], 64, 64, 4
        $region16: #{tpu_custom_call.1} parent=11 // pred_fallthru
          _
        // Predicated region
        $region17: #{tpu_custom_call.1} parent=11 // pred_check
          %p520 = pneg %p138
        $region18: #{tpu_custom_call.1} parent=11 // pred_check_branch
          %522 = sbr.rel (%p520) target = $region20
        $region19: #{tpu_custom_call.1} parent=11 // pred_region
          %s523 = smul.u32 2, %s55
          %s525 = ssub.s32 256, 256
          %526 = vsyncadd [#allocation12], %s525
          %s527 = smul.addr %s523, 128
          %s528 = scalar_lea.hbm %s3, %s527
          %s529 = sshll.u32 [#allocation13], 4
          %s530 = int_to_ptr.vmem [resolvable:$true] %s529
          %535 = dma.hbm_to_vmem [thread:$0]  %s528, 256, %s530, [#allocation12], 128, 128, 8
        $region20: #{tpu_custom_call.1} parent=11 // pred_fallthru
          _
        // Predicated region
        $region21: #{tpu_custom_call.1} parent=11 // pred_check
          %p536 = pneg %p159
        $region22: #{tpu_custom_call.1} parent=11 // pred_check_branch
          %538 = sbr.rel (%p536) target = $region24
        $region23: #{tpu_custom_call.1} parent=11 // pred_region
          %s540 = ssub.s32 256, 256
          %541 = vsyncadd [#allocation15], %s540
          %s542 = sshll.u32 [#allocation14], 4
          %s543 = int_to_ptr.vmem [resolvable:$true] %s542
          %548 = dma.hbm_to_vmem [thread:$0]  %s4, 256, %s543, [#allocation15], 64, 64, 4
        $region24: #{tpu_custom_call.1} parent=11 // pred_fallthru
          _
        // Predicated region
        $region25: #{tpu_custom_call.1} parent=11 // pred_check
          %p549 = pneg %p180
        $region26: #{tpu_custom_call.1} parent=11 // pred_check_branch
          %551 = sbr.rel (%p549) target = $region28
        $region27: #{tpu_custom_call.1} parent=11 // pred_region
          %s553 = ssub.s32 16, 16
          %554 = vsyncadd [#allocation15], %s553
          %s556 = sshll.u32 [#allocation16], 4
          %s557 = int_to_ptr.vmem [resolvable:$true] %s556
          %559 = dma.hbm_to_vmem [thread:$0]  %s5, 16, %s557, [#allocation15]
        $region28: #{tpu_custom_call.1} parent=11 // pred_fallthru
          _
        // Predicated region
        $region29: #{tpu_custom_call.1} parent=11 // pred_check
          %p560 = pneg %p201
        $region30: #{tpu_custom_call.1} parent=11 // pred_check_branch
          %562 = sbr.rel (%p560) target = $region32
        $region31: #{tpu_custom_call.1} parent=11 // pred_region
          %s564 = ssub.s32 256, 256
          %565 = vsyncadd [#allocation18], %s564
          %s566 = sshll.u32 [#allocation17], 4
          %s567 = int_to_ptr.vmem [resolvable:$true] %s566
          %572 = dma.hbm_to_vmem [thread:$0]  %s6, 256, %s567, [#allocation18], 64, 64, 4
        $region32: #{tpu_custom_call.1} parent=11 // pred_fallthru
          _
        // Predicated region
        $region33: #{tpu_custom_call.1} parent=11 // pred_check
          %p573 = pneg %p222
        $region34: #{tpu_custom_call.1} parent=11 // pred_check_branch
          %575 = sbr.rel (%p573) target = $region36
        $region35: #{tpu_custom_call.1} parent=11 // pred_region
          %s577 = ssub.s32 16, 16
          %578 = vsyncadd [#allocation18], %s577
          %s580 = sshll.u32 [#allocation19], 4
          %s581 = int_to_ptr.vmem [resolvable:$true] %s580
          %583 = dma.hbm_to_vmem [thread:$0]  %s7, 16, %s581, [#allocation18]
        $region36: #{tpu_custom_call.1} parent=11 // pred_fallthru
          _
        // Predicated region
        $region37: #{tpu_custom_call.1} parent=11 // pred_check
          %p584 = pneg %p243
        $region38: #{tpu_custom_call.1} parent=11 // pred_check_branch
          %586 = sbr.rel (%p584) target = $region40
        $region39: #{tpu_custom_call.1} parent=11 // pred_region
          %s588 = ssub.s32 256, 256
          %589 = vsyncadd [#allocation21], %s588
          %s590 = sshll.u32 [#allocation20], 4
          %s591 = int_to_ptr.vmem [resolvable:$true] %s590
          %596 = dma.hbm_to_vmem [thread:$0]  %s8, 256, %s591, [#allocation21], 64, 64, 4
        $region40: #{tpu_custom_call.1} parent=11 // pred_fallthru
          _
        // Predicated region
        $region41: #{tpu_custom_call.1} parent=11 // pred_check
          %p597 = pneg %p264
        $region42: #{tpu_custom_call.1} parent=11 // pred_check_branch
          %599 = sbr.rel (%p597) target = $region44
        $region43: #{tpu_custom_call.1} parent=11 // pred_region
          %s601 = ssub.s32 16, 16
          %602 = vsyncadd [#allocation21], %s601
          %s604 = sshll.u32 [#allocation22], 4
          %s605 = int_to_ptr.vmem [resolvable:$true] %s604
          %607 = dma.hbm_to_vmem [thread:$0]  %s9, 16, %s605, [#allocation21]
        $region44: #{tpu_custom_call.1} parent=11 // pred_fallthru
          _
        // Predicated region
        $region45: #{tpu_custom_call.1} parent=11 // pred_check
          %p608 = pneg %p285
        $region46: #{tpu_custom_call.1} parent=11 // pred_check_branch
          %610 = sbr.rel (%p608) target = $region48
        $region47: #{tpu_custom_call.1} parent=11 // pred_region
          %s612 = ssub.s32 256, 256
          %613 = vsyncadd [#allocation24], %s612
          %s614 = sshll.u32 [#allocation23], 4
          %s615 = int_to_ptr.vmem [resolvable:$true] %s614
          %620 = dma.hbm_to_vmem [thread:$0]  %s10, 256, %s615, [#allocation24], 64, 64, 4
        $region48: #{tpu_custom_call.1} parent=11 // pred_fallthru
          _
        // Predicated region
        $region49: #{tpu_custom_call.1} parent=11 // pred_check
          %p621 = pneg %p306
        $region50: #{tpu_custom_call.1} parent=11 // pred_check_branch
          %623 = sbr.rel (%p621) target = $region52
        $region51: #{tpu_custom_call.1} parent=11 // pred_region
          %s625 = ssub.s32 16, 16
          %626 = vsyncadd [#allocation24], %s625
          %s628 = sshll.u32 [#allocation25], 4
          %s629 = int_to_ptr.vmem [resolvable:$true] %s628
          %631 = dma.hbm_to_vmem [thread:$0]  %s11, 16, %s629, [#allocation24]
        $region52: #{tpu_custom_call.1} parent=11 // pred_fallthru
          _
        // Predicated region
        $region53: #{tpu_custom_call.1} parent=11 // pred_check
          %p632 = pneg %p327
        $region54: #{tpu_custom_call.1} parent=11 // pred_check_branch
          %634 = sbr.rel (%p632) target = $region56
        $region55: #{tpu_custom_call.1} parent=11 // pred_region
          %s636 = ssub.s32 16, 16
          %637 = vsyncadd [#allocation27], %s636
          %s639 = sshll.u32 [#allocation26], 4
          %s640 = int_to_ptr.vmem [resolvable:$true] %s639
          %642 = dma.hbm_to_vmem [thread:$0]  %s12, 16, %s640, [#allocation27]
        $region56: #{tpu_custom_call.1} parent=11 // pred_fallthru
          _
        // Predicated region
        $region57: #{tpu_custom_call.1} parent=11 // pred_check
          %p643 = pneg %p348
        $region58: #{tpu_custom_call.1} parent=11 // pred_check_branch
          %645 = sbr.rel (%p643) target = $region60
        $region59: #{tpu_custom_call.1} parent=11 // pred_region
          _
        $region60: #{tpu_custom_call.1} parent=11 // pred_fallthru
          _
        // Predicated region
        $region61: #{tpu_custom_call.1} parent=11 // pred_check
          %p646 = pneg %p369
        $region62: #{tpu_custom_call.1} parent=11 // pred_check_branch
          %648 = sbr.rel (%p646) target = $region64
        $region63: #{tpu_custom_call.1} parent=11 // pred_region
          %s650 = ssub.s32 256, 256
          %651 = vsyncadd [#allocation27], %s650
          %s652 = sshll.u32 [#allocation28], 4
          %s653 = int_to_ptr.vmem [resolvable:$true] %s652
          %658 = dma.hbm_to_vmem [thread:$0]  %s14, 256, %s653, [#allocation27], 64, 64, 4
        $region64: #{tpu_custom_call.1} parent=11 // pred_fallthru
          _
        // Predicated region
        $region65: #{tpu_custom_call.1} parent=11 // pred_check
          %p659 = pneg %p390
        $region66: #{tpu_custom_call.1} parent=11 // pred_check_branch
          %661 = sbr.rel (%p659) target = $region68
        $region67: #{tpu_custom_call.1} parent=11 // pred_region
          %s663 = ssub.s32 16, 16
          %664 = vsyncadd [#allocation30], %s663
          %s666 = sshll.u32 [#allocation29], 4
          %s667 = int_to_ptr.vmem [resolvable:$true] %s666
          %669 = dma.hbm_to_vmem [thread:$0]  %s15, 16, %s667, [#allocation30]
        $region68: #{tpu_custom_call.1} parent=11 // pred_fallthru
          _
        // Predicated region
        $region69: #{tpu_custom_call.1} parent=11 // pred_check
          %p670 = pneg %p411
        $region70: #{tpu_custom_call.1} parent=11 // pred_check_branch
          %672 = sbr.rel (%p670) target = $region72
        $region71: #{tpu_custom_call.1} parent=11 // pred_region
          %s674 = ssub.s32 768, 768
          %675 = vsyncadd [#allocation30], %s674
          %s676 = sshll.u32 [#allocation31], 4
          %s677 = int_to_ptr.vmem [resolvable:$true] %s676
          %682 = dma.hbm_to_vmem [thread:$0]  %s16, 768, %s677, [#allocation30], 64, 64, 4
        $region72: #{tpu_custom_call.1} parent=11 // pred_fallthru
          _
        // Predicated region
        $region73: #{tpu_custom_call.1} parent=11 // pred_check
          %p683 = pneg %p432
        $region74: #{tpu_custom_call.1} parent=11 // pred_check_branch
          %685 = sbr.rel (%p683) target = $region76
        $region75: #{tpu_custom_call.1} parent=11 // pred_region
          %s687 = ssub.s32 16, 16
          %688 = vsyncadd [#allocation33], %s687
          %s690 = sshll.u32 [#allocation32], 4
          %s691 = int_to_ptr.vmem [resolvable:$true] %s690
          %693 = dma.hbm_to_vmem [thread:$0]  %s17, 16, %s691, [#allocation33]
        $region76: #{tpu_custom_call.1} parent=11 // pred_fallthru
          _
      $region12: #{tpu_custom_call.1} parent=5 // pred_fallthru
        _
      %p694 = scmp.lt.s32.totalorder %s46, 7
      // Predicated region
      $region77: #{tpu_custom_call.1} parent=5 // pred_check
        %p695 = pneg %p694
      $region78: #{tpu_custom_call.1} parent=5 // pred_check_branch
        %697 = sbr.rel (%p695) target = $region80
      $region79: #{tpu_custom_call.1} parent=5 // pred_region
        // Predicated region
        $region81: #{tpu_custom_call.1} parent=79 // pred_check
          %p698 = pneg %p106
        $region82: #{tpu_custom_call.1} parent=79 // pred_check_branch
          %700 = sbr.rel (%p698) target = $region84
        $region83: #{tpu_custom_call.1} parent=79 // pred_region
          %s701 = sand.u32 %s46, 1
          %s702 = scalar_lea.sflag [#allocation12], %s701
          %s703 = sand.u32 %s96, 1
          %s704 = smul.addr %s703, 8
          %s705 = scalar_lea.vmem [#allocation11], %s704
          %s706 = smul.u32 2, %s53
          %s708 = ssub.s32 128, 128
          %709 = vsyncadd %s702, %s708
          %s710 = smul.addr %s54, 2
          %s711 = sadd.s32 %s706, %s710
          %s712 = smul.addr %s711, 64
          %s713 = scalar_lea.hbm %s2, %s712
          %s714 = sshll.u32 %s705, 4
          %s715 = int_to_ptr.vmem [resolvable:$true] %s714
          %720 = dma.hbm_to_vmem [thread:$0]  %s713, 128, %s715, %s702, 64, 64, 4
        $region84: #{tpu_custom_call.1} parent=79 // pred_fallthru
          _
      $region80: #{tpu_custom_call.1} parent=5 // pred_fallthru
        _
      %p721 = scmp.le.s32.totalorder 1, %s46
      %p722 = scmp.lt.s32.totalorder %s46, 8
      %p723 = pnand %p721, %p722
      %p724 = pneg %p723
      // Predicated region
      $region85: #{tpu_custom_call.1} parent=5 // pred_check
        _
      $region86: #{tpu_custom_call.1} parent=5 // pred_check_branch
        %726 = sbr.rel (%p723) target = $region88
      $region87: #{tpu_custom_call.1} parent=5 // pred_region
        %s727 = ssub.s32 %s46, 1
        // Predicated region
        $region89: #{tpu_custom_call.1} parent=87 // pred_check
          %p728 = pneg %p84
        $region90: #{tpu_custom_call.1} parent=87 // pred_check_branch
          %730 = sbr.rel (%p728) target = $region92
        $region91: #{tpu_custom_call.1} parent=87 // pred_region
          %731 = dma.done [#allocation9], 2048
        $region92: #{tpu_custom_call.1} parent=87 // pred_fallthru
          _
        %s732 = sand.u32 %s51, 1
        %s733 = scalar_lea.sflag [#allocation12], %s732
        %s734 = sand.u32 %s99, 1
        %s735 = smul.addr %s734, 8
        %s736 = scalar_lea.vmem [#allocation11], %s735
        // Predicated region
        $region93: #{tpu_custom_call.1} parent=87 // pred_check
          %p737 = pneg %p112
        $region94: #{tpu_custom_call.1} parent=87 // pred_check_branch
          %739 = sbr.rel (%p737) target = $region96
        $region95: #{tpu_custom_call.1} parent=87 // pred_region
          %740 = dma.done %s733, 128
        $region96: #{tpu_custom_call.1} parent=87 // pred_fallthru
          _
        // Predicated region
        $region97: #{tpu_custom_call.1} parent=87 // pred_check
          %p741 = pneg %p138
        $region98: #{tpu_custom_call.1} parent=87 // pred_check_branch
          %743 = sbr.rel (%p741) target = $region100
        $region99: #{tpu_custom_call.1} parent=87 // pred_region
          %744 = dma.done [#allocation12], 256
        $region100: #{tpu_custom_call.1} parent=87 // pred_fallthru
          _
        // Predicated region
        $region101: #{tpu_custom_call.1} parent=87 // pred_check
          %p745 = pneg %p159
        $region102: #{tpu_custom_call.1} parent=87 // pred_check_branch
          %747 = sbr.rel (%p745) target = $region104
        $region103: #{tpu_custom_call.1} parent=87 // pred_region
          %748 = dma.done [#allocation15], 256
        $region104: #{tpu_custom_call.1} parent=87 // pred_fallthru
          _
        // Predicated region
        $region105: #{tpu_custom_call.1} parent=87 // pred_check
          %p749 = pneg %p180
        $region106: #{tpu_custom_call.1} parent=87 // pred_check_branch
          %751 = sbr.rel (%p749) target = $region108
        $region107: #{tpu_custom_call.1} parent=87 // pred_region
          %752 = dma.done [#allocation15], 16
        $region108: #{tpu_custom_call.1} parent=87 // pred_fallthru
          _
        // Predicated region
        $region109: #{tpu_custom_call.1} parent=87 // pred_check
          %p753 = pneg %p201
        $region110: #{tpu_custom_call.1} parent=87 // pred_check_branch
          %755 = sbr.rel (%p753) target = $region112
        $region111: #{tpu_custom_call.1} parent=87 // pred_region
          %756 = dma.done [#allocation18], 256
        $region112: #{tpu_custom_call.1} parent=87 // pred_fallthru
          _
        // Predicated region
        $region113: #{tpu_custom_call.1} parent=87 // pred_check
          %p757 = pneg %p222
        $region114: #{tpu_custom_call.1} parent=87 // pred_check_branch
          %759 = sbr.rel (%p757) target = $region116
        $region115: #{tpu_custom_call.1} parent=87 // pred_region
          %760 = dma.done [#allocation18], 16
        $region116: #{tpu_custom_call.1} parent=87 // pred_fallthru
          _
        // Predicated region
        $region117: #{tpu_custom_call.1} parent=87 // pred_check
          %p761 = pneg %p243
        $region118: #{tpu_custom_call.1} parent=87 // pred_check_branch
          %763 = sbr.rel (%p761) target = $region120
        $region119: #{tpu_custom_call.1} parent=87 // pred_region
          %764 = dma.done [#allocation21], 256
        $region120: #{tpu_custom_call.1} parent=87 // pred_fallthru
          _
        // Predicated region
        $region121: #{tpu_custom_call.1} parent=87 // pred_check
          %p765 = pneg %p264
        $region122: #{tpu_custom_call.1} parent=87 // pred_check_branch
          %767 = sbr.rel (%p765) target = $region124
        $region123: #{tpu_custom_call.1} parent=87 // pred_region
          %768 = dma.done [#allocation21], 16
        $region124: #{tpu_custom_call.1} parent=87 // pred_fallthru
          _
        // Predicated region
        $region125: #{tpu_custom_call.1} parent=87 // pred_check
          %p769 = pneg %p285
        $region126: #{tpu_custom_call.1} parent=87 // pred_check_branch
          %771 = sbr.rel (%p769) target = $region128
        $region127: #{tpu_custom_call.1} parent=87 // pred_region
          %772 = dma.done [#allocation24], 256
        $region128: #{tpu_custom_call.1} parent=87 // pred_fallthru
          _
        // Predicated region
        $region129: #{tpu_custom_call.1} parent=87 // pred_check
          %p773 = pneg %p306
        $region130: #{tpu_custom_call.1} parent=87 // pred_check_branch
          %775 = sbr.rel (%p773) target = $region132
        $region131: #{tpu_custom_call.1} parent=87 // pred_region
          %776 = dma.done [#allocation24], 16
        $region132: #{tpu_custom_call.1} parent=87 // pred_fallthru
          _
        // Predicated region
        $region133: #{tpu_custom_call.1} parent=87 // pred_check
          %p777 = pneg %p327
        $region134: #{tpu_custom_call.1} parent=87 // pred_check_branch
          %779 = sbr.rel (%p777) target = $region136
        $region135: #{tpu_custom_call.1} parent=87 // pred_region
          %780 = dma.done [#allocation27], 16
        $region136: #{tpu_custom_call.1} parent=87 // pred_fallthru
          _
        // Predicated region
        $region137: #{tpu_custom_call.1} parent=87 // pred_check
          %p781 = pneg %p369
        $region138: #{tpu_custom_call.1} parent=87 // pred_check_branch
          %783 = sbr.rel (%p781) target = $region140
        $region139: #{tpu_custom_call.1} parent=87 // pred_region
          %784 = dma.done [#allocation27], 256
        $region140: #{tpu_custom_call.1} parent=87 // pred_fallthru
          _
        // Predicated region
        $region141: #{tpu_custom_call.1} parent=87 // pred_check
          %p785 = pneg %p390
        $region142: #{tpu_custom_call.1} parent=87 // pred_check_branch
          %787 = sbr.rel (%p785) target = $region144
        $region143: #{tpu_custom_call.1} parent=87 // pred_region
          %788 = dma.done [#allocation30], 16
        $region144: #{tpu_custom_call.1} parent=87 // pred_fallthru
          _
        // Predicated region
        $region145: #{tpu_custom_call.1} parent=87 // pred_check
          %p789 = pneg %p411
        $region146: #{tpu_custom_call.1} parent=87 // pred_check_branch
          %791 = sbr.rel (%p789) target = $region148
        $region147: #{tpu_custom_call.1} parent=87 // pred_region
          %792 = dma.done [#allocation30], 768
        $region148: #{tpu_custom_call.1} parent=87 // pred_fallthru
          _
        // Predicated region
        $region149: #{tpu_custom_call.1} parent=87 // pred_check
          %p793 = pneg %p432
        $region150: #{tpu_custom_call.1} parent=87 // pred_check_branch
          %795 = sbr.rel (%p793) target = $region152
        $region151: #{tpu_custom_call.1} parent=87 // pred_region
          %796 = dma.done [#allocation33], 16
        $region152: #{tpu_custom_call.1} parent=87 // pred_fallthru
          _
        %p797 = pneg %p84
        %p798 = pneg %p81
        %s799 = sand.u32 %s51, 1
        %s800 = scalar_lea.sflag [#allocation12], %s799
        %s801 = sand.u32 %s99, 1
        %s802 = smul.addr %s801, 8
        %s803 = scalar_lea.vmem [#allocation11], %s802
        %p804 = pneg %p112
        %p805 = pneg %p109
        %p806 = pneg %p138
        %p807 = pneg %p135
        %p808 = pneg %p159
        %p809 = pneg %p156
        %p810 = pneg %p180
        %p811 = pneg %p177
        %p812 = pneg %p201
        %p813 = pneg %p198
        %p814 = pneg %p222
        %p815 = pneg %p219
        %p816 = pneg %p243
        %p817 = pneg %p240
        %p818 = pneg %p264
        %p819 = pneg %p261
        %p820 = pneg %p285
        %p821 = pneg %p282
        %p822 = pneg %p306
        %p823 = pneg %p303
        %p824 = pneg %p327
        %p825 = pneg %p324
        %p826 = pneg %p348
        %p827 = pneg %p345
        %p828 = pneg %p369
        %p829 = pneg %p366
        %p830 = pneg %p390
        %p831 = pneg %p387
        %p832 = pneg %p411
        %p833 = pneg %p408
        %p834 = pneg %p432
        %p835 = pneg %p429
        %p836 = pneg %p460
        %p837 = pneg %p457
        %s838 = sand.u32 %s447, 1
        %s839 = scalar_lea.sflag [#allocation10], %s838
        %s840 = sand.u32 %s447, 1
        %s841 = smul.addr %s840, 8
        %s842 = scalar_lea.vmem [#allocation34], %s841
        %p843 = pneg %p488
        %p844 = pneg %p485
        %s845 = sand.u32 %s475, 1
        %s846 = scalar_lea.sflag [#allocation36], %s845
        %s847 = sand.u32 %s475, 1
        %s848 = smul.addr %s847, 16
        %s849 = scalar_lea.vmem [#allocation35], %s848
        %s850 = smul.u32 16, %s55
        %s851 = smul.u32 2, %s55
        %s852 = smul.u32 2, %s55
        %s853 = smul.u32 2, %s55
        %s854 = smul.u32 2, %s55
        %v856 = vld [vmem:[#allocation13] sm:$0xff]
        %v857 = vld [vmem:[#allocation13 + $0x8] sm:$0xff]
        %v858 = vstv %s56
        %vm859 = vcmp.gt.s32.totalorder %v856, %v858
        %vm860 = vcmp.gt.s32.totalorder %v857, %v858
        %s861 = sld [smem:[#allocation6 + %s55]]
        %p862 = scmp.gt.s32.totalorder %s861, %s56
        // Predicated region
        $region153: #{tpu_custom_call.1} parent=87 // pred_check
          %p863 = pneg %p862
        $region154: #{tpu_custom_call.1} parent=87 // pred_check_branch
          %865 = sbr.rel (%p863) target = $region156
        $region155: #{tpu_custom_call.1} parent=87 // pred_region
          %v866 = vld [vmem:[#allocation8] sm:$0xf]
          %v867 = vld [vmem:[#allocation8 + $0x4] sm:$0xf]
          %v868 = vld [vmem:[#allocation8 + $0x8] sm:$0xf]
          %v869 = vld [vmem:[#allocation8 + $0xc] sm:$0xf]
          %v870 = vld [vmem:[#allocation8 + $0x10] sm:$0xf]
          %v871 = vld [vmem:[#allocation8 + $0x14] sm:$0xf]
          %v872 = vld [vmem:[#allocation8 + $0x18] sm:$0xf]
          %v873 = vld [vmem:[#allocation8 + $0x1c] sm:$0xf]
          %v874 = vld [vmem:[#allocation8 + $0x20] sm:$0xf]
          %v875 = vld [vmem:[#allocation8 + $0x24] sm:$0xf]
          %v876 = vld [vmem:[#allocation8 + $0x28] sm:$0xf]
          %v877 = vld [vmem:[#allocation8 + $0x2c] sm:$0xf]
          %v878 = vld [vmem:[#allocation8 + $0x30] sm:$0xf]
          %v879 = vld [vmem:[#allocation8 + $0x34] sm:$0xf]
          %v880 = vld [vmem:[#allocation8 + $0x38] sm:$0xf]
          %v881 = vld [vmem:[#allocation8 + $0x3c] sm:$0xf]
          %v882 = vld [vmem:[#allocation8 + $0x40] sm:$0xf]
          %v883 = vld [vmem:[#allocation8 + $0x44] sm:$0xf]
          %v884 = vld [vmem:[#allocation8 + $0x48] sm:$0xf]
          %v885 = vld [vmem:[#allocation8 + $0x4c] sm:$0xf]
          %v886 = vld [vmem:[#allocation8 + $0x50] sm:$0xf]
          %v887 = vld [vmem:[#allocation8 + $0x54] sm:$0xf]
          %v888 = vld [vmem:[#allocation8 + $0x58] sm:$0xf]
          %v889 = vld [vmem:[#allocation8 + $0x5c] sm:$0xf]
          %v890 = vld [vmem:[#allocation8 + $0x60] sm:$0xf]
          %v891 = vld [vmem:[#allocation8 + $0x64] sm:$0xf]
          %v892 = vld [vmem:[#allocation8 + $0x68] sm:$0xf]
          %v893 = vld [vmem:[#allocation8 + $0x6c] sm:$0xf]
          %v894 = vld [vmem:[#allocation8 + $0x70] sm:$0xf]
          %v895 = vld [vmem:[#allocation8 + $0x74] sm:$0xf]
          %v896 = vld [vmem:[#allocation8 + $0x78] sm:$0xf]
          %v897 = vld [vmem:[#allocation8 + $0x7c] sm:$0xf]
          %p898 = scmp.eq.s32.totalorder %s56, 0
          // Predicated region
          $region157: #{tpu_custom_call.1} parent=155 // pred_check
            %p899 = pneg %p898
          $region158: #{tpu_custom_call.1} parent=155 // pred_check_branch
            %901 = sbr.rel (%p899) target = $region160
          $region159: #{tpu_custom_call.1} parent=155 // pred_region
            %v902 = vunpack.c.l.bf16 %v866
            %v903 = vunpack.c.l.bf16 %v867
            %v904 = vunpack.c.l.bf16 %v868
            %v905 = vunpack.c.l.bf16 %v869
            %v906 = vunpack.c.l.bf16 %v870
            %v907 = vunpack.c.l.bf16 %v871
            %v908 = vunpack.c.l.bf16 %v872
            %v909 = vunpack.c.l.bf16 %v873
            %v910 = vunpack.c.l.bf16 %v874
            %v911 = vunpack.c.l.bf16 %v875
            %v912 = vunpack.c.l.bf16 %v876
            %v913 = vunpack.c.l.bf16 %v877
            %v914 = vunpack.c.l.bf16 %v878
            %v915 = vunpack.c.l.bf16 %v879
            %v916 = vunpack.c.l.bf16 %v880
            %v917 = vunpack.c.l.bf16 %v881
            %v918 = vunpack.c.l.bf16 %v882
            %v919 = vunpack.c.l.bf16 %v883
            %v920 = vunpack.c.l.bf16 %v884
            %v921 = vunpack.c.l.bf16 %v885
            %v922 = vunpack.c.l.bf16 %v886
            %v923 = vunpack.c.l.bf16 %v887
            %v924 = vunpack.c.l.bf16 %v888
            %v925 = vunpack.c.l.bf16 %v889
            %v926 = vunpack.c.l.bf16 %v890
            %v927 = vunpack.c.l.bf16 %v891
            %v928 = vunpack.c.l.bf16 %v892
            %v929 = vunpack.c.l.bf16 %v893
            %v930 = vunpack.c.l.bf16 %v894
            %v931 = vunpack.c.l.bf16 %v895
            %v932 = vunpack.c.l.bf16 %v896
            %v933 = vunpack.c.l.bf16 %v897
            %vm934 = vcmask 261120
            %v935 = vsel %vm934, %v902, 0.0
            %v936 = vsel %vm934, %v903, 0.0
            %v937 = vadd.f32 %v935, %v936
            %v938 = vrot.slane %v937, 4
            %v939 = vadd.f32 %v937, %v938
            %v940 = vrot.slane %v939, 2
            %v941 = vadd.f32 %v939, %v940
            %v942 = vrot.slane %v941, 1
            %v943 = vadd.f32 %v941, %v942
            %v944 = vsel %vm934, %v904, 0.0
            %v945 = vsel %vm934, %v905, 0.0
            %v946 = vadd.f32 %v944, %v945
            %v947 = vrot.slane %v946, 4
            %v948 = vadd.f32 %v946, %v947
            %v949 = vrot.slane %v948, 2
            %v950 = vadd.f32 %v948, %v949
            %v951 = vrot.slane %v950, 1
            %v952 = vadd.f32 %v950, %v951
            %v953 = vsel %vm934, %v906, 0.0
            %v954 = vsel %vm934, %v907, 0.0
            %v955 = vadd.f32 %v953, %v954
            %v956 = vrot.slane %v955, 4
            %v957 = vadd.f32 %v955, %v956
            %v958 = vrot.slane %v957, 2
            %v959 = vadd.f32 %v957, %v958
            %v960 = vrot.slane %v959, 1
            %v961 = vadd.f32 %v959, %v960
            %v962 = vsel %vm934, %v908, 0.0
            %v963 = vsel %vm934, %v909, 0.0
            %v964 = vadd.f32 %v962, %v963
            %v965 = vrot.slane %v964, 4
            %v966 = vadd.f32 %v964, %v965
            %v967 = vrot.slane %v966, 2
            %v968 = vadd.f32 %v966, %v967
            %v969 = vrot.slane %v968, 1
            %v970 = vadd.f32 %v968, %v969
            %v971 = vsel %vm934, %v910, 0.0
            %v972 = vsel %vm934, %v911, 0.0
            %v973 = vadd.f32 %v971, %v972
            %v974 = vrot.slane %v973, 4
            %v975 = vadd.f32 %v973, %v974
            %v976 = vrot.slane %v975, 2
            %v977 = vadd.f32 %v975, %v976
            %v978 = vrot.slane %v977, 1
            %v979 = vadd.f32 %v977, %v978
            %v980 = vsel %vm934, %v912, 0.0
            %v981 = vsel %vm934, %v913, 0.0
            %v982 = vadd.f32 %v980, %v981
            %v983 = vrot.slane %v982, 4
            %v984 = vadd.f32 %v982, %v983
            %v985 = vrot.slane %v984, 2
            %v986 = vadd.f32 %v984, %v985
            %v987 = vrot.slane %v986, 1
            %v988 = vadd.f32 %v986, %v987
            %v989 = vsel %vm934, %v914, 0.0
            %v990 = vsel %vm934, %v915, 0.0
            %v991 = vadd.f32 %v989, %v990
            %v992 = vrot.slane %v991, 4
            %v993 = vadd.f32 %v991, %v992
            %v994 = vrot.slane %v993, 2
            %v995 = vadd.f32 %v993, %v994
            %v996 = vrot.slane %v995, 1
            %v997 = vadd.f32 %v995, %v996
            %v998 = vsel %vm934, %v916, 0.0
            %v999 = vsel %vm934, %v917, 0.0
            %v1000 = vadd.f32 %v998, %v999
            %v1001 = vrot.slane %v1000, 4
            %v1002 = vadd.f32 %v1000, %v1001
            %v1003 = vrot.slane %v1002, 2
            %v1004 = vadd.f32 %v1002, %v1003
            %v1005 = vrot.slane %v1004, 1
            %v1006 = vadd.f32 %v1004, %v1005
            %v1007 = vsel %vm934, %v918, 0.0
            %v1008 = vsel %vm934, %v919, 0.0
            %v1009 = vadd.f32 %v1007, %v1008
            %v1010 = vrot.slane %v1009, 4
            %v1011 = vadd.f32 %v1009, %v1010
            %v1012 = vrot.slane %v1011, 2
            %v1013 = vadd.f32 %v1011, %v1012
            %v1014 = vrot.slane %v1013, 1
            %v1015 = vadd.f32 %v1013, %v1014
            %v1016 = vsel %vm934, %v920, 0.0
            %v1017 = vsel %vm934, %v921, 0.0
            %v1018 = vadd.f32 %v1016, %v1017
            %v1019 = vrot.slane %v1018, 4
            %v1020 = vadd.f32 %v1018, %v1019
            %v1021 = vrot.slane %v1020, 2
            %v1022 = vadd.f32 %v1020, %v1021
            %v1023 = vrot.slane %v1022, 1
            %v1024 = vadd.f32 %v1022, %v1023
            %v1025 = vsel %vm934, %v922, 0.0
            %v1026 = vsel %vm934, %v923, 0.0
            %v1027 = vadd.f32 %v1025, %v1026
            %v1028 = vrot.slane %v1027, 4
            %v1029 = vadd.f32 %v1027, %v1028
            %v1030 = vrot.slane %v1029, 2
            %v1031 = vadd.f32 %v1029, %v1030
            %v1032 = vrot.slane %v1031, 1
            %v1033 = vadd.f32 %v1031, %v1032
            %v1034 = vsel %vm934, %v924, 0.0
            %v1035 = vsel %vm934, %v925, 0.0
            %v1036 = vadd.f32 %v1034, %v1035
            %v1037 = vrot.slane %v1036, 4
            %v1038 = vadd.f32 %v1036, %v1037
            %v1039 = vrot.slane %v1038, 2
            %v1040 = vadd.f32 %v1038, %v1039
            %v1041 = vrot.slane %v1040, 1
            %v1042 = vadd.f32 %v1040, %v1041
            %v1043 = vsel %vm934, %v926, 0.0
            %v1044 = vsel %vm934, %v927, 0.0
            %v1045 = vadd.f32 %v1043, %v1044
            %v1046 = vrot.slane %v1045, 4
            %v1047 = vadd.f32 %v1045, %v1046
            %v1048 = vrot.slane %v1047, 2
            %v1049 = vadd.f32 %v1047, %v1048
            %v1050 = vrot.slane %v1049, 1
            %v1051 = vadd.f32 %v1049, %v1050
            %v1052 = vsel %vm934, %v928, 0.0
            %v1053 = vsel %vm934, %v929, 0.0
            %v1054 = vadd.f32 %v1052, %v1053
            %v1055 = vrot.slane %v1054, 4
            %v1056 = vadd.f32 %v1054, %v1055
            %v1057 = vrot.slane %v1056, 2
            %v1058 = vadd.f32 %v1056, %v1057
            %v1059 = vrot.slane %v1058, 1
            %v1060 = vadd.f32 %v1058, %v1059
            %v1061 = vsel %vm934, %v930, 0.0
            %v1062 = vsel %vm934, %v931, 0.0
            %v1063 = vadd.f32 %v1061, %v1062
            %v1064 = vrot.slane %v1063, 4
            %v1065 = vadd.f32 %v1063, %v1064
            %v1066 = vrot.slane %v1065, 2
            %v1067 = vadd.f32 %v1065, %v1066
            %v1068 = vrot.slane %v1067, 1
            %v1069 = vadd.f32 %v1067, %v1068
            %v1070 = vsel %vm934, %v932, 0.0
            %v1071 = vsel %vm934, %v933, 0.0
            %v1072 = vadd.f32 %v1070, %v1071
            %v1073 = vrot.slane %v1072, 4
            %v1074 = vadd.f32 %v1072, %v1073
            %v1075 = vrot.slane %v1074, 2
            %v1076 = vadd.f32 %v1074, %v1075
            %v1077 = vrot.slane %v1076, 1
            %v1078 = vadd.f32 %v1076, %v1077
            %v1079 = vmul.f32 %v943, 0.0625
            %v1080 = vmul.f32 %v952, 0.0625
            %v1081 = vmul.f32 %v961, 0.0625
            %v1082 = vmul.f32 %v970, 0.0625
            %v1083 = vmul.f32 %v979, 0.0625
            %v1084 = vmul.f32 %v988, 0.0625
            %v1085 = vmul.f32 %v997, 0.0625
            %v1086 = vmul.f32 %v1006, 0.0625
            %v1087 = vmul.f32 %v1015, 0.0625
            %v1088 = vmul.f32 %v1024, 0.0625
            %v1089 = vmul.f32 %v1033, 0.0625
            %v1090 = vmul.f32 %v1042, 0.0625
            %v1091 = vmul.f32 %v1051, 0.0625
            %v1092 = vmul.f32 %v1060, 0.0625
            %v1093 = vmul.f32 %v1069, 0.0625
            %v1094 = vmul.f32 %v1078, 0.0625
            %v1095 = vpack.c.bf16 %v1079, %v1079
            %v1096 = vpack.c.bf16 %v1080, %v1080
            %v1097 = vpack.c.bf16 %v1081, %v1081
            %v1098 = vpack.c.bf16 %v1082, %v1082
            %v1099 = vpack.c.bf16 %v1083, %v1083
            %v1100 = vpack.c.bf16 %v1084, %v1084
            %v1101 = vpack.c.bf16 %v1085, %v1085
            %v1102 = vpack.c.bf16 %v1086, %v1086
            %v1103 = vpack.c.bf16 %v1087, %v1087
            %v1104 = vpack.c.bf16 %v1088, %v1088
            %v1105 = vpack.c.bf16 %v1089, %v1089
            %v1106 = vpack.c.bf16 %v1090, %v1090
            %v1107 = vpack.c.bf16 %v1091, %v1091
            %v1108 = vpack.c.bf16 %v1092, %v1092
            %v1109 = vpack.c.bf16 %v1093, %v1093
            %v1110 = vpack.c.bf16 %v1094, %v1094
            %v1111 = vld [vmem:[#allocation14] sm:$0xf]
            %v1112 = vld [vmem:[#allocation14 + $0x4] sm:$0xf]
            %v1113 = vld [vmem:[#allocation14 + $0x8] sm:$0xf]
            %v1114 = vld [vmem:[#allocation14 + $0xc] sm:$0xf]
            %v1115 = vld [vmem:[#allocation16] sm:$0x1]
            %v1117 = vlaneseq
            %v1118 = vshrl.u32 %v1117, 7
            %v1119 = vsub.s32 0, %v1118
            %v1120 = vrot.slane %v1115, %v1119
            %v1138 = vunpack.c.l.b16 %v1095
            %v1139 = vunpack.c.l.b16 %v1096
            %v1140 = vunpack.c.l.b16 %v1097
            %v1141 = vunpack.c.l.b16 %v1098
            %v1142 = vunpack.c.l.b16 %v1099
            %v1143 = vunpack.c.l.b16 %v1100
            %v1144 = vunpack.c.l.b16 %v1101
            %v1145 = vunpack.c.l.b16 %v1102
            %v1146 = vunpack.c.l.b16 %v1103
            %v1147 = vunpack.c.l.b16 %v1104
            %v1148 = vunpack.c.l.b16 %v1105
            %v1149 = vunpack.c.l.b16 %v1106
            %v1150 = vunpack.c.l.b16 %v1107
            %v1151 = vunpack.c.l.b16 %v1108
            %v1152 = vunpack.c.l.b16 %v1109
            %v1153 = vunpack.c.l.b16 %v1110
            %vm1154 = vcmask 1041409
            %v1155 = vsel %vm1154, %v1139, %v1138
            %vm1156 = vcmask 1042434
            %v1157 = vsel %vm1156, %v1140, %v1155
            %vm1158 = vcmask 1043459
            %v1159 = vsel %vm1158, %v1141, %v1157
            %vm1160 = vcmask 1044484
            %v1161 = vsel %vm1160, %v1142, %v1159
            %vm1162 = vcmask 1045509
            %v1163 = vsel %vm1162, %v1143, %v1161
            %vm1164 = vcmask 1046534
            %v1165 = vsel %vm1164, %v1144, %v1163
            %vm1166 = vcmask 1047559
            %v1167 = vsel %vm1166, %v1145, %v1165
            %v1168 = vsel %vm1154, %v1147, %v1146
            %v1169 = vsel %vm1156, %v1148, %v1168
            %v1170 = vsel %vm1158, %v1149, %v1169
            %v1171 = vsel %vm1160, %v1150, %v1170
            %v1172 = vsel %vm1162, %v1151, %v1171
            %v1173 = vsel %vm1164, %v1152, %v1172
            %v1174 = vsel %vm1166, %v1153, %v1173
            %v1175 = vpack.c.b16 %v1174, %v1167
            %v1180 = vunpack.c.l.b16 %v1111
            %v1181 = vunpack.c.l.b16 %v1112
            %v1182 = vunpack.c.l.b16 %v1113
            %v1183 = vunpack.c.l.b16 %v1114
            %v1184 = vpack.c.b16 %v1181, %v1180
            %v1185 = vpack.c.b16 %v1183, %v1182
            %v1189 = vsel %vm934, %v1175, 0
            %1191 = vmatprep.subr.bf16.mxu0 0
            %1192 = vmatpush1.bf16.msra.mxu0 %v1184
            %1193 = vmatprep.subr.bf16.mxu0 0
            %1194 = vmatpush1.bf16.msra.mxu0 %v1185
            %1195 = vmatprep.subr.bf16.mxu0 0
            %1196 = vmatpush1.bf16.msra.mxu0 0
            %1197 = vmatprep.subr.bf16.mxu0 0
            %1198 = vmatpush1.bf16.msra.mxu0 0
            %1199 = vmatprep.subr.bf16.mxu0 0
            %1200 = vmatpush1.bf16.msra.mxu0 0
            %1201 = vmatprep.subr.bf16.mxu0 0
            %1202 = vmatpush1.bf16.msra.mxu0 0
            %1203 = vmatprep.subr.bf16.mxu0 0
            %1204 = vmatpush1.bf16.msra.mxu0 0
            %1205 = vmatprep.subr.bf16.mxu0 0
            %1206 = vmatpush1.bf16.msra.mxu0 0
            %1207 = vmatprep.subr.bf16.mxu0 0
            %1208 = vmatpush1.bf16.msra.mxu0 0
            %1209 = vmatprep.subr.bf16.mxu0 0
            %1210 = vmatpush1.bf16.msra.mxu0 0
            %1211 = vmatprep.subr.bf16.mxu0 0
            %1212 = vmatpush1.bf16.msra.mxu0 0
            %1213 = vmatprep.subr.bf16.mxu0 0
            %1214 = vmatpush1.bf16.msra.mxu0 0
            %1215 = vmatprep.subr.bf16.mxu0 0
            %1216 = vmatpush1.bf16.msra.mxu0 0
            %1217 = vmatprep.subr.bf16.mxu0 0
            %1218 = vmatpush1.bf16.msra.mxu0 0
            %1219 = vmatprep.subr.bf16.mxu0 0
            %1220 = vmatpush1.bf16.msra.mxu0 0
            %1221 = vmatprep.subr.bf16.mxu0 0
            %1222 = vmatpush1.bf16.msra.mxu0 0
            %1223 = vmatprep.mubr.bf16.mxu0 0
            %1224 = vmatmul.mubr.bf16.gmra.mrb[0].mxu0 %v1189
            %v1225 = vpop.f32.mrb[0].mxu0
            %v1226 = vadd.f32 %v1120, %v1225
            %v1227 = vpop.f32.mrb[0].mxu0
            %v1228 = vpop.f32.mrb[0].mxu0
            %v1229 = vadd.f32 %v1120, %v1228
            %v1230 = vpop.f32.mrb[0].mxu0
            %1231 = vdwg.mxu0
            %1232 = vst.msk [vmem:[#allocation2] sm:$0xff] %vm934, %v1226
            %1233 = vst.msk [vmem:[#allocation2 + $0x8] sm:$0xff] %vm934, %v1229
            %v1234 = vld [vmem:[#allocation17] sm:$0xf]
            %v1235 = vld [vmem:[#allocation17 + $0x4] sm:$0xf]
            %v1236 = vld [vmem:[#allocation17 + $0x8] sm:$0xf]
            %v1237 = vld [vmem:[#allocation17 + $0xc] sm:$0xf]
            %v1238 = vld [vmem:[#allocation19] sm:$0x1]
            %v1240 = vlaneseq
            %v1241 = vshrl.u32 %v1240, 7
            %v1242 = vsub.s32 0, %v1241
            %v1243 = vrot.slane %v1238, %v1242
            %v1249 = vunpack.c.l.b16 %v1234
            %v1250 = vunpack.c.l.b16 %v1235
            %v1251 = vunpack.c.l.b16 %v1236
            %v1252 = vunpack.c.l.b16 %v1237
            %v1253 = vpack.c.b16 %v1250, %v1249
            %v1254 = vpack.c.b16 %v1252, %v1251
            %1257 = vmatprep.subr.bf16.mxu0 0
            %1258 = vmatpush1.bf16.msra.mxu0 %v1253
            %1259 = vmatprep.subr.bf16.mxu0 0
            %1260 = vmatpush1.bf16.msra.mxu0 %v1254
            %1261 = vmatprep.subr.bf16.mxu0 0
            %1262 = vmatpush1.bf16.msra.mxu0 0
            %1263 = vmatprep.subr.bf16.mxu0 0
            %1264 = vmatpush1.bf16.msra.mxu0 0
            %1265 = vmatprep.subr.bf16.mxu0 0
            %1266 = vmatpush1.bf16.msra.mxu0 0
            %1267 = vmatprep.subr.bf16.mxu0 0
            %1268 = vmatpush1.bf16.msra.mxu0 0
            %1269 = vmatprep.subr.bf16.mxu0 0
            %1270 = vmatpush1.bf16.msra.mxu0 0
            %1271 = vmatprep.subr.bf16.mxu0 0
            %1272 = vmatpush1.bf16.msra.mxu0 0
            %1273 = vmatprep.subr.bf16.mxu0 0
            %1274 = vmatpush1.bf16.msra.mxu0 0
            %1275 = vmatprep.subr.bf16.mxu0 0
            %1276 = vmatpush1.bf16.msra.mxu0 0
            %1277 = vmatprep.subr.bf16.mxu0 0
            %1278 = vmatpush1.bf16.msra.mxu0 0
            %1279 = vmatprep.subr.bf16.mxu0 0
            %1280 = vmatpush1.bf16.msra.mxu0 0
            %1281 = vmatprep.subr.bf16.mxu0 0
            %1282 = vmatpush1.bf16.msra.mxu0 0
            %1283 = vmatprep.subr.bf16.mxu0 0
            %1284 = vmatpush1.bf16.msra.mxu0 0
            %1285 = vmatprep.subr.bf16.mxu0 0
            %1286 = vmatpush1.bf16.msra.mxu0 0
            %1287 = vmatprep.subr.bf16.mxu0 0
            %1288 = vmatpush1.bf16.msra.mxu0 0
            %1289 = vmatprep.mubr.bf16.mxu0 0
            %1290 = vmatmul.mubr.bf16.gmra.mrb[0].mxu0 %v1189
            %v1291 = vpop.f32.mrb[0].mxu0
            %v1292 = vadd.f32 %v1243, %v1291
            %v1293 = vpop.f32.mrb[0].mxu0
            %v1294 = vpop.f32.mrb[0].mxu0
            %v1295 = vadd.f32 %v1243, %v1294
            %v1296 = vpop.f32.mrb[0].mxu0
            %1297 = vdwg.mxu0
            %1298 = vst.msk [vmem:[#allocation3] sm:$0xff] %vm934, %v1292
            %1299 = vst.msk [vmem:[#allocation3 + $0x8] sm:$0xff] %vm934, %v1295
            %v1300 = vld [vmem:[#allocation20] sm:$0xf]
            %v1301 = vld [vmem:[#allocation20 + $0x4] sm:$0xf]
            %v1302 = vld [vmem:[#allocation20 + $0x8] sm:$0xf]
            %v1303 = vld [vmem:[#allocation20 + $0xc] sm:$0xf]
            %v1304 = vld [vmem:[#allocation22] sm:$0x1]
            %v1306 = vlaneseq
            %v1307 = vshrl.u32 %v1306, 7
            %v1308 = vsub.s32 0, %v1307
            %v1309 = vrot.slane %v1304, %v1308
            %v1343 = vunpack.c.l.b16 %v866
            %v1344 = vunpack.c.l.b16 %v867
            %v1345 = vunpack.c.l.b16 %v868
            %v1346 = vunpack.c.l.b16 %v869
            %v1347 = vunpack.c.l.b16 %v870
            %v1348 = vunpack.c.l.b16 %v871
            %v1349 = vunpack.c.l.b16 %v872
            %v1350 = vunpack.c.l.b16 %v873
            %v1351 = vunpack.c.l.b16 %v874
            %v1352 = vunpack.c.l.b16 %v875
            %v1353 = vunpack.c.l.b16 %v876
            %v1354 = vunpack.c.l.b16 %v877
            %v1355 = vunpack.c.l.b16 %v878
            %v1356 = vunpack.c.l.b16 %v879
            %v1357 = vunpack.c.l.b16 %v880
            %v1358 = vunpack.c.l.b16 %v881
            %v1359 = vunpack.c.l.b16 %v882
            %v1360 = vunpack.c.l.b16 %v883
            %v1361 = vunpack.c.l.b16 %v884
            %v1362 = vunpack.c.l.b16 %v885
            %v1363 = vunpack.c.l.b16 %v886
            %v1364 = vunpack.c.l.b16 %v887
            %v1365 = vunpack.c.l.b16 %v888
            %v1366 = vunpack.c.l.b16 %v889
            %v1367 = vunpack.c.l.b16 %v890
            %v1368 = vunpack.c.l.b16 %v891
            %v1369 = vunpack.c.l.b16 %v892
            %v1370 = vunpack.c.l.b16 %v893
            %v1371 = vunpack.c.l.b16 %v894
            %v1372 = vunpack.c.l.b16 %v895
            %v1373 = vunpack.c.l.b16 %v896
            %v1374 = vunpack.c.l.b16 %v897
            %v1375 = vpack.c.b16 %v1344, %v1343
            %v1376 = vpack.c.b16 %v1346, %v1345
            %v1377 = vpack.c.b16 %v1348, %v1347
            %v1378 = vpack.c.b16 %v1350, %v1349
            %v1379 = vpack.c.b16 %v1352, %v1351
            %v1380 = vpack.c.b16 %v1354, %v1353
            %v1381 = vpack.c.b16 %v1356, %v1355
            %v1382 = vpack.c.b16 %v1358, %v1357
            %v1383 = vpack.c.b16 %v1360, %v1359
            %v1384 = vpack.c.b16 %v1362, %v1361
            %v1385 = vpack.c.b16 %v1364, %v1363
            %v1386 = vpack.c.b16 %v1366, %v1365
            %v1387 = vpack.c.b16 %v1368, %v1367
            %v1388 = vpack.c.b16 %v1370, %v1369
            %v1389 = vpack.c.b16 %v1372, %v1371
            %v1390 = vpack.c.b16 %v1374, %v1373
            %v1395 = vunpack.c.l.b16 %v1300
            %v1396 = vunpack.c.l.b16 %v1301
            %v1397 = vunpack.c.l.b16 %v1302
            %v1398 = vunpack.c.l.b16 %v1303
            %v1399 = vpack.c.b16 %v1396, %v1395
            %v1400 = vpack.c.b16 %v1398, %v1397
            %v1404 = vsel %vm934, %v1375, 0
            %v1407 = vsel %vm934, %v1376, 0
            %v1410 = vsel %vm934, %v1377, 0
            %v1413 = vsel %vm934, %v1378, 0
            %v1416 = vsel %vm934, %v1379, 0
            %v1419 = vsel %vm934, %v1380, 0
            %v1422 = vsel %vm934, %v1381, 0
            %v1425 = vsel %vm934, %v1382, 0
            %v1428 = vsel %vm934, %v1383, 0
            %v1431 = vsel %vm934, %v1384, 0
            %v1434 = vsel %vm934, %v1385, 0
            %v1437 = vsel %vm934, %v1386, 0
            %v1440 = vsel %vm934, %v1387, 0
            %v1443 = vsel %vm934, %v1388, 0
            %v1446 = vsel %vm934, %v1389, 0
            %v1449 = vsel %vm934, %v1390, 0
            %1451 = vmatprep.subr.bf16.mxu0 0
            %1452 = vmatpush1.bf16.msra.mxu0 %v1399
            %1453 = vmatprep.subr.bf16.mxu0 0
            %1454 = vmatpush1.bf16.msra.mxu0 %v1400
            %1455 = vmatprep.subr.bf16.mxu0 0
            %1456 = vmatpush1.bf16.msra.mxu0 0
            %1457 = vmatprep.subr.bf16.mxu0 0
            %1458 = vmatpush1.bf16.msra.mxu0 0
            %1459 = vmatprep.subr.bf16.mxu0 0
            %1460 = vmatpush1.bf16.msra.mxu0 0
            %1461 = vmatprep.subr.bf16.mxu0 0
            %1462 = vmatpush1.bf16.msra.mxu0 0
            %1463 = vmatprep.subr.bf16.mxu0 0
            %1464 = vmatpush1.bf16.msra.mxu0 0
            %1465 = vmatprep.subr.bf16.mxu0 0
            %1466 = vmatpush1.bf16.msra.mxu0 0
            %1467 = vmatprep.subr.bf16.mxu0 0
            %1468 = vmatpush1.bf16.msra.mxu0 0
            %1469 = vmatprep.subr.bf16.mxu0 0
            %1470 = vmatpush1.bf16.msra.mxu0 0
            %1471 = vmatprep.subr.bf16.mxu0 0
            %1472 = vmatpush1.bf16.msra.mxu0 0
            %1473 = vmatprep.subr.bf16.mxu0 0
            %1474 = vmatpush1.bf16.msra.mxu0 0
            %1475 = vmatprep.subr.bf16.mxu0 0
            %1476 = vmatpush1.bf16.msra.mxu0 0
            %1477 = vmatprep.subr.bf16.mxu0 0
            %1478 = vmatpush1.bf16.msra.mxu0 0
            %1479 = vmatprep.subr.bf16.mxu0 0
            %1480 = vmatpush1.bf16.msra.mxu0 0
            %1481 = vmatprep.subr.bf16.mxu0 0
            %1482 = vmatpush1.bf16.msra.mxu0 0
            %1483 = vmatprep.mubr.bf16.mxu0 0
            %1484 = vmatmul.mubr.bf16.gmra.mrb[0].mxu0 %v1404
            %v1485 = vpop.f32.mrb[0].mxu0
            %v1486 = vadd.f32 %v1309, %v1485
            %v1487 = vpop.f32.mrb[0].mxu0
            %v1488 = vpop.f32.mrb[0].mxu0
            %v1489 = vadd.f32 %v1309, %v1488
            %v1490 = vpop.f32.mrb[0].mxu0
            %1491 = vmatprep.mubr.bf16.mxu0 0
            %1492 = vmatmul.mubr.bf16.gmra.mrb[0].mxu0 %v1407
            %v1493 = vpop.f32.mrb[0].mxu0
            %v1494 = vadd.f32 %v1309, %v1493
            %v1495 = vpop.f32.mrb[0].mxu0
            %v1496 = vpop.f32.mrb[0].mxu0
            %v1497 = vadd.f32 %v1309, %v1496
            %v1498 = vpop.f32.mrb[0].mxu0
            %1499 = vmatprep.mubr.bf16.mxu0 0
            %1500 = vmatmul.mubr.bf16.gmra.mrb[0].mxu0 %v1410
            %v1501 = vpop.f32.mrb[0].mxu0
            %v1502 = vadd.f32 %v1309, %v1501
            %v1503 = vpop.f32.mrb[0].mxu0
            %v1504 = vpop.f32.mrb[0].mxu0
            %v1505 = vadd.f32 %v1309, %v1504
            %v1506 = vpop.f32.mrb[0].mxu0
            %1507 = vmatprep.mubr.bf16.mxu0 0
            %1508 = vmatmul.mubr.bf16.gmra.mrb[0].mxu0 %v1413
            %v1509 = vpop.f32.mrb[0].mxu0
            %v1510 = vadd.f32 %v1309, %v1509
            %v1511 = vpop.f32.mrb[0].mxu0
            %v1512 = vpop.f32.mrb[0].mxu0
            %v1513 = vadd.f32 %v1309, %v1512
            %v1514 = vpop.f32.mrb[0].mxu0
            %1515 = vmatprep.mubr.bf16.mxu0 0
            %1516 = vmatmul.mubr.bf16.gmra.mrb[0].mxu0 %v1416
            %v1517 = vpop.f32.mrb[0].mxu0
            %v1518 = vadd.f32 %v1309, %v1517
            %v1519 = vpop.f32.mrb[0].mxu0
            %v1520 = vpop.f32.mrb[0].mxu0
            %v1521 = vadd.f32 %v1309, %v1520
            %v1522 = vpop.f32.mrb[0].mxu0
            %1523 = vmatprep.mubr.bf16.mxu0 0
            %1524 = vmatmul.mubr.bf16.gmra.mrb[0].mxu0 %v1419
            %v1525 = vpop.f32.mrb[0].mxu0
            %v1526 = vadd.f32 %v1309, %v1525
            %v1527 = vpop.f32.mrb[0].mxu0
            %v1528 = vpop.f32.mrb[0].mxu0
            %v1529 = vadd.f32 %v1309, %v1528
            %v1530 = vpop.f32.mrb[0].mxu0
            %1531 = vmatprep.mubr.bf16.mxu0 0
            %1532 = vmatmul.mubr.bf16.gmra.mrb[0].mxu0 %v1422
            %v1533 = vpop.f32.mrb[0].mxu0
            %v1534 = vadd.f32 %v1309, %v1533
            %v1535 = vpop.f32.mrb[0].mxu0
            %v1536 = vpop.f32.mrb[0].mxu0
            %v1537 = vadd.f32 %v1309, %v1536
            %v1538 = vpop.f32.mrb[0].mxu0
            %1539 = vmatprep.mubr.bf16.mxu0 0
            %1540 = vmatmul.mubr.bf16.gmra.mrb[0].mxu0 %v1425
            %v1541 = vpop.f32.mrb[0].mxu0
            %v1542 = vadd.f32 %v1309, %v1541
            %v1543 = vpop.f32.mrb[0].mxu0
            %v1544 = vpop.f32.mrb[0].mxu0
            %v1545 = vadd.f32 %v1309, %v1544
            %v1546 = vpop.f32.mrb[0].mxu0
            %1547 = vmatprep.mubr.bf16.mxu0 0
            %1548 = vmatmul.mubr.bf16.gmra.mrb[0].mxu0 %v1428
            %v1549 = vpop.f32.mrb[0].mxu0
            %v1550 = vadd.f32 %v1309, %v1549
            %v1551 = vpop.f32.mrb[0].mxu0
            %v1552 = vpop.f32.mrb[0].mxu0
            %v1553 = vadd.f32 %v1309, %v1552
            %v1554 = vpop.f32.mrb[0].mxu0
            %1555 = vmatprep.mubr.bf16.mxu0 0
            %1556 = vmatmul.mubr.bf16.gmra.mrb[0].mxu0 %v1431
            %v1557 = vpop.f32.mrb[0].mxu0
            %v1558 = vadd.f32 %v1309, %v1557
            %v1559 = vpop.f32.mrb[0].mxu0
            %v1560 = vpop.f32.mrb[0].mxu0
            %v1561 = vadd.f32 %v1309, %v1560
            %v1562 = vpop.f32.mrb[0].mxu0
            %1563 = vmatprep.mubr.bf16.mxu0 0
            %1564 = vmatmul.mubr.bf16.gmra.mrb[0].mxu0 %v1434
            %v1565 = vpop.f32.mrb[0].mxu0
            %v1566 = vadd.f32 %v1309, %v1565
            %v1567 = vpop.f32.mrb[0].mxu0
            %v1568 = vpop.f32.mrb[0].mxu0
            %v1569 = vadd.f32 %v1309, %v1568
            %v1570 = vpop.f32.mrb[0].mxu0
            %1571 = vmatprep.mubr.bf16.mxu0 0
            %1572 = vmatmul.mubr.bf16.gmra.mrb[0].mxu0 %v1437
            %v1573 = vpop.f32.mrb[0].mxu0
            %v1574 = vadd.f32 %v1309, %v1573
            %v1575 = vpop.f32.mrb[0].mxu0
            %v1576 = vpop.f32.mrb[0].mxu0
            %v1577 = vadd.f32 %v1309, %v1576
            %v1578 = vpop.f32.mrb[0].mxu0
            %1579 = vmatprep.mubr.bf16.mxu0 0
            %1580 = vmatmul.mubr.bf16.gmra.mrb[0].mxu0 %v1440
            %v1581 = vpop.f32.mrb[0].mxu0
            %v1582 = vadd.f32 %v1309, %v1581
            %v1583 = vpop.f32.mrb[0].mxu0
            %v1584 = vpop.f32.mrb[0].mxu0
            %v1585 = vadd.f32 %v1309, %v1584
            %v1586 = vpop.f32.mrb[0].mxu0
            %1587 = vmatprep.mubr.bf16.mxu0 0
            %1588 = vmatmul.mubr.bf16.gmra.mrb[0].mxu0 %v1443
            %v1589 = vpop.f32.mrb[0].mxu0
            %v1590 = vadd.f32 %v1309, %v1589
            %v1591 = vpop.f32.mrb[0].mxu0
            %v1592 = vpop.f32.mrb[0].mxu0
            %v1593 = vadd.f32 %v1309, %v1592
            %v1594 = vpop.f32.mrb[0].mxu0
            %1595 = vmatprep.mubr.bf16.mxu0 0
            %1596 = vmatmul.mubr.bf16.gmra.mrb[0].mxu0 %v1446
            %v1597 = vpop.f32.mrb[0].mxu0
            %v1598 = vadd.f32 %v1309, %v1597
            %v1599 = vpop.f32.mrb[0].mxu0
            %v1600 = vpop.f32.mrb[0].mxu0
            %v1601 = vadd.f32 %v1309, %v1600
            %v1602 = vpop.f32.mrb[0].mxu0
            %1603 = vmatprep.mubr.bf16.mxu0 0
            %1604 = vmatmul.mubr.bf16.gmra.mrb[0].mxu0 %v1449
            %v1605 = vpop.f32.mrb[0].mxu0
            %v1606 = vadd.f32 %v1309, %v1605
            %v1607 = vpop.f32.mrb[0].mxu0
            %v1608 = vpop.f32.mrb[0].mxu0
            %v1609 = vadd.f32 %v1309, %v1608
            %v1610 = vpop.f32.mrb[0].mxu0
            %1611 = vdwg.mxu0
            %v1612 = vpack.c.bf16 %v1489, %v1486
            %v1613 = vpack.c.bf16 %v1497, %v1494
            %v1614 = vpack.c.bf16 %v1505, %v1502
            %v1615 = vpack.c.bf16 %v1513, %v1510
            %v1616 = vpack.c.bf16 %v1521, %v1518
            %v1617 = vpack.c.bf16 %v1529, %v1526
            %v1618 = vpack.c.bf16 %v1537, %v1534
            %v1619 = vpack.c.bf16 %v1545, %v1542
            %v1620 = vpack.c.bf16 %v1553, %v1550
            %v1621 = vpack.c.bf16 %v1561, %v1558
            %v1622 = vpack.c.bf16 %v1569, %v1566
            %v1623 = vpack.c.bf16 %v1577, %v1574
            %v1624 = vpack.c.bf16 %v1585, %v1582
            %v1625 = vpack.c.bf16 %v1593, %v1590
            %v1626 = vpack.c.bf16 %v1601, %v1598
            %v1627 = vpack.c.bf16 %v1609, %v1606
            %1628 = vst.msk [vmem:[#allocation4] sm:$0xff] %vm934, %v1612
            %1629 = vst.msk [vmem:[#allocation4 + $0x8] sm:$0xff] %vm934, %v1613
            %1630 = vst.msk [vmem:[#allocation4 + $0x10] sm:$0xff] %vm934, %v1614
            %1631 = vst.msk [vmem:[#allocation4 + $0x18] sm:$0xff] %vm934, %v1615
            %1632 = vst.msk [vmem:[#allocation4 + $0x20] sm:$0xff] %vm934, %v1616
            %1633 = vst.msk [vmem:[#allocation4 + $0x28] sm:$0xff] %vm934, %v1617
            %1634 = vst.msk [vmem:[#allocation4 + $0x30] sm:$0xff] %vm934, %v1618
            %1635 = vst.msk [vmem:[#allocation4 + $0x38] sm:$0xff] %vm934, %v1619
            %1636 = vst.msk [vmem:[#allocation4 + $0x40] sm:$0xff] %vm934, %v1620
            %1637 = vst.msk [vmem:[#allocation4 + $0x48] sm:$0xff] %vm934, %v1621
            %1638 = vst.msk [vmem:[#allocation4 + $0x50] sm:$0xff] %vm934, %v1622
            %1639 = vst.msk [vmem:[#allocation4 + $0x58] sm:$0xff] %vm934, %v1623
            %1640 = vst.msk [vmem:[#allocation4 + $0x60] sm:$0xff] %vm934, %v1624
            %1641 = vst.msk [vmem:[#allocation4 + $0x68] sm:$0xff] %vm934, %v1625
            %1642 = vst.msk [vmem:[#allocation4 + $0x70] sm:$0xff] %vm934, %v1626
            %1643 = vst.msk [vmem:[#allocation4 + $0x78] sm:$0xff] %vm934, %v1627
          $region160: #{tpu_custom_call.1} parent=155 // pred_fallthru
            _
          %v1644 = vld [vmem:[#allocation2] sm:$0xff]
          %v1645 = vld [vmem:[#allocation2 + $0x8] sm:$0xff]
          %v1646 = vld [vmem:[#allocation3] sm:$0xff]
          %v1647 = vld [vmem:[#allocation3 + $0x8] sm:$0xff]
          %v1648 = vpack.c.bf16 %v1645, %v1644
          %v1649 = vld [vmem:[#allocation23] sm:$0xf]
          %v1650 = vld [vmem:[#allocation23 + $0x4] sm:$0xf]
          %v1651 = vld [vmem:[#allocation23 + $0x8] sm:$0xf]
          %v1652 = vld [vmem:[#allocation23 + $0xc] sm:$0xf]
          %v1653 = vld [vmem:[#allocation25] sm:$0x1]
          %v1655 = vlaneseq
          %v1656 = vshrl.u32 %v1655, 7
          %v1657 = vsub.s32 0, %v1656
          %v1658 = vrot.slane %v1653, %v1657
          %v1664 = vunpack.c.l.b16 %v1649
          %v1665 = vunpack.c.l.b16 %v1650
          %v1666 = vunpack.c.l.b16 %v1651
          %v1667 = vunpack.c.l.b16 %v1652
          %v1668 = vpack.c.b16 %v1665, %v1664
          %v1669 = vpack.c.b16 %v1667, %v1666
          %vm1672 = vcmask 261120
          %v1674 = vsel %vm1672, %v1648, 0
          %1676 = vmatprep.subr.bf16.mxu0 0
          %1677 = vmatpush1.bf16.msra.mxu0 %v1668
          %1678 = vmatprep.subr.bf16.mxu0 0
          %1679 = vmatpush1.bf16.msra.mxu0 %v1669
          %1680 = vmatprep.subr.bf16.mxu0 0
          %1681 = vmatpush1.bf16.msra.mxu0 0
          %1682 = vmatprep.subr.bf16.mxu0 0
          %1683 = vmatpush1.bf16.msra.mxu0 0
          %1684 = vmatprep.subr.bf16.mxu0 0
          %1685 = vmatpush1.bf16.msra.mxu0 0
          %1686 = vmatprep.subr.bf16.mxu0 0
          %1687 = vmatpush1.bf16.msra.mxu0 0
          %1688 = vmatprep.subr.bf16.mxu0 0
          %1689 = vmatpush1.bf16.msra.mxu0 0
          %1690 = vmatprep.subr.bf16.mxu0 0
          %1691 = vmatpush1.bf16.msra.mxu0 0
          %1692 = vmatprep.subr.bf16.mxu0 0
          %1693 = vmatpush1.bf16.msra.mxu0 0
          %1694 = vmatprep.subr.bf16.mxu0 0
          %1695 = vmatpush1.bf16.msra.mxu0 0
          %1696 = vmatprep.subr.bf16.mxu0 0
          %1697 = vmatpush1.bf16.msra.mxu0 0
          %1698 = vmatprep.subr.bf16.mxu0 0
          %1699 = vmatpush1.bf16.msra.mxu0 0
          %1700 = vmatprep.subr.bf16.mxu0 0
          %1701 = vmatpush1.bf16.msra.mxu0 0
          %1702 = vmatprep.subr.bf16.mxu0 0
          %1703 = vmatpush1.bf16.msra.mxu0 0
          %1704 = vmatprep.subr.bf16.mxu0 0
          %1705 = vmatpush1.bf16.msra.mxu0 0
          %1706 = vmatprep.subr.bf16.mxu0 0
          %1707 = vmatpush1.bf16.msra.mxu0 0
          %1708 = vmatprep.mubr.bf16.mxu0 0
          %1709 = vmatmul.mubr.bf16.gmra.mrb[0].mxu0 %v1674
          %v1710 = vpop.f32.mrb[0].mxu0
          %v1711 = vadd.f32 %v1658, %v1710
          %v1712 = vpop.f32.mrb[0].mxu0
          %v1713 = vpop.f32.mrb[0].mxu0
          %v1714 = vadd.f32 %v1658, %v1713
          %v1715 = vpop.f32.mrb[0].mxu0
          %1716 = vdwg.mxu0
          %v1717 = vld [vmem:[#allocation4] sm:$0xff]
          %v1718 = vld [vmem:[#allocation4 + $0x8] sm:$0xff]
          %v1719 = vld [vmem:[#allocation4 + $0x10] sm:$0xff]
          %v1720 = vld [vmem:[#allocation4 + $0x18] sm:$0xff]
          %v1721 = vld [vmem:[#allocation4 + $0x20] sm:$0xff]
          %v1722 = vld [vmem:[#allocation4 + $0x28] sm:$0xff]
          %v1723 = vld [vmem:[#allocation4 + $0x30] sm:$0xff]
          %v1724 = vld [vmem:[#allocation4 + $0x38] sm:$0xff]
          %v1725 = vld [vmem:[#allocation4 + $0x40] sm:$0xff]
          %v1726 = vld [vmem:[#allocation4 + $0x48] sm:$0xff]
          %v1727 = vld [vmem:[#allocation4 + $0x50] sm:$0xff]
          %v1728 = vld [vmem:[#allocation4 + $0x58] sm:$0xff]
          %v1729 = vld [vmem:[#allocation4 + $0x60] sm:$0xff]
          %v1730 = vld [vmem:[#allocation4 + $0x68] sm:$0xff]
          %v1731 = vld [vmem:[#allocation4 + $0x70] sm:$0xff]
          %v1732 = vld [vmem:[#allocation4 + $0x78] sm:$0xff]
          %v1733 = vunpack.c.l.bf16 %v1717
          %v1734 = vunpack.c.h.bf16 %v1717
          %v1735 = vunpack.c.l.bf16 %v1718
          %v1736 = vunpack.c.h.bf16 %v1718
          %v1737 = vunpack.c.l.bf16 %v1719
          %v1738 = vunpack.c.h.bf16 %v1719
          %v1739 = vunpack.c.l.bf16 %v1720
          %v1740 = vunpack.c.h.bf16 %v1720
          %v1741 = vunpack.c.l.bf16 %v1721
          %v1742 = vunpack.c.h.bf16 %v1721
          %v1743 = vunpack.c.l.bf16 %v1722
          %v1744 = vunpack.c.h.bf16 %v1722
          %v1745 = vunpack.c.l.bf16 %v1723
          %v1746 = vunpack.c.h.bf16 %v1723
          %v1747 = vunpack.c.l.bf16 %v1724
          %v1748 = vunpack.c.h.bf16 %v1724
          %v1749 = vunpack.c.l.bf16 %v1725
          %v1750 = vunpack.c.h.bf16 %v1725
          %v1751 = vunpack.c.l.bf16 %v1726
          %v1752 = vunpack.c.h.bf16 %v1726
          %v1753 = vunpack.c.l.bf16 %v1727
          %v1754 = vunpack.c.h.bf16 %v1727
          %v1755 = vunpack.c.l.bf16 %v1728
          %v1756 = vunpack.c.h.bf16 %v1728
          %v1757 = vunpack.c.l.bf16 %v1729
          %v1758 = vunpack.c.h.bf16 %v1729
          %v1759 = vunpack.c.l.bf16 %v1730
          %v1760 = vunpack.c.h.bf16 %v1730
          %v1761 = vunpack.c.l.bf16 %v1731
          %v1762 = vunpack.c.h.bf16 %v1731
          %v1763 = vunpack.c.l.bf16 %v1732
          %v1764 = vunpack.c.h.bf16 %v1732
          %v1767 = vcombine.high %v1711, %v1711
          %v1769 = vunpack.c.l.s4 1966171168
          %v1770 = vunpack.c.0.s8 %v1769
          %v1771 = vlaneseq
          %v1772 = vshrl.u32 %v1771, 7
          %v1773 = vsub.s32 %v1770, %v1772
          %v1774 = vrot.slane %v1711, %v1773
          %v1776 = vunpack.c.l.s4 1966171168
          %v1777 = vunpack.c.0.s8 %v1776
          %v1778 = vlaneseq
          %v1779 = vshrl.u32 %v1778, 7
          %v1780 = vsub.s32 %v1777, %v1779
          %v1781 = vrot.slane %v1767, %v1780
          %v1782 = vcombine.high %v1774, %v1774
          %v1783 = vcombine.high %v1781, %v1781
          %v1785 = vunpack.c.l.s4 1966171168
          %v1786 = vunpack.c.0.s8 %v1785
          %v1787 = vlaneseq
          %v1788 = vshrl.u32 %v1787, 7
          %v1789 = vsub.s32 %v1786, %v1788
          %v1790 = vrot.slane %v1774, %v1789
          %v1792 = vunpack.c.l.s4 1966171168
          %v1793 = vunpack.c.0.s8 %v1792
          %v1794 = vlaneseq
          %v1795 = vshrl.u32 %v1794, 7
          %v1796 = vsub.s32 %v1793, %v1795
          %v1797 = vrot.slane %v1781, %v1796
          %v1799 = vunpack.c.l.s4 1966171168
          %v1800 = vunpack.c.0.s8 %v1799
          %v1801 = vlaneseq
          %v1802 = vshrl.u32 %v1801, 7
          %v1803 = vsub.s32 %v1800, %v1802
          %v1804 = vrot.slane %v1782, %v1803
          %v1806 = vunpack.c.l.s4 1966171168
          %v1807 = vunpack.c.0.s8 %v1806
          %v1808 = vlaneseq
          %v1809 = vshrl.u32 %v1808, 7
          %v1810 = vsub.s32 %v1807, %v1809
          %v1811 = vrot.slane %v1783, %v1810
          %v1812 = vcombine.high %v1790, %v1790
          %v1813 = vcombine.high %v1797, %v1797
          %v1814 = vcombine.high %v1804, %v1804
          %v1815 = vcombine.high %v1811, %v1811
          %v1816 = vcombine.high %v1714, %v1714
          %v1818 = vunpack.c.l.s4 1966171168
          %v1819 = vunpack.c.0.s8 %v1818
          %v1820 = vlaneseq
          %v1821 = vshrl.u32 %v1820, 7
          %v1822 = vsub.s32 %v1819, %v1821
          %v1823 = vrot.slane %v1714, %v1822
          %v1825 = vunpack.c.l.s4 1966171168
          %v1826 = vunpack.c.0.s8 %v1825
          %v1827 = vlaneseq
          %v1828 = vshrl.u32 %v1827, 7
          %v1829 = vsub.s32 %v1826, %v1828
          %v1830 = vrot.slane %v1816, %v1829
          %v1831 = vcombine.high %v1823, %v1823
          %v1832 = vcombine.high %v1830, %v1830
          %v1834 = vunpack.c.l.s4 1966171168
          %v1835 = vunpack.c.0.s8 %v1834
          %v1836 = vlaneseq
          %v1837 = vshrl.u32 %v1836, 7
          %v1838 = vsub.s32 %v1835, %v1837
          %v1839 = vrot.slane %v1823, %v1838
          %v1841 = vunpack.c.l.s4 1966171168
          %v1842 = vunpack.c.0.s8 %v1841
          %v1843 = vlaneseq
          %v1844 = vshrl.u32 %v1843, 7
          %v1845 = vsub.s32 %v1842, %v1844
          %v1846 = vrot.slane %v1830, %v1845
          %v1848 = vunpack.c.l.s4 1966171168
          %v1849 = vunpack.c.0.s8 %v1848
          %v1850 = vlaneseq
          %v1851 = vshrl.u32 %v1850, 7
          %v1852 = vsub.s32 %v1849, %v1851
          %v1853 = vrot.slane %v1831, %v1852
          %v1855 = vunpack.c.l.s4 1966171168
          %v1856 = vunpack.c.0.s8 %v1855
          %v1857 = vlaneseq
          %v1858 = vshrl.u32 %v1857, 7
          %v1859 = vsub.s32 %v1856, %v1858
          %v1860 = vrot.slane %v1832, %v1859
          %v1861 = vcombine.high %v1839, %v1839
          %v1862 = vcombine.high %v1846, %v1846
          %v1863 = vcombine.high %v1853, %v1853
          %v1864 = vcombine.high %v1860, %v1860
          %v1865 = vlaneseq
          %v1866 = vshrl.u32 %v1865, 7
          %v1867 = vsub.s32 0, %v1866
          %v1868 = vrot.slane %v1790, %v1867
          %v1869 = vlaneseq
          %v1870 = vshrl.u32 %v1869, 7
          %v1871 = vsub.s32 0, %v1870
          %v1872 = vrot.slane %v1804, %v1871
          %v1873 = vlaneseq
          %v1874 = vshrl.u32 %v1873, 7
          %v1875 = vsub.s32 0, %v1874
          %v1876 = vrot.slane %v1812, %v1875
          %v1877 = vlaneseq
          %v1878 = vshrl.u32 %v1877, 7
          %v1879 = vsub.s32 0, %v1878
          %v1880 = vrot.slane %v1814, %v1879
          %v1881 = vlaneseq
          %v1882 = vshrl.u32 %v1881, 7
          %v1883 = vsub.s32 0, %v1882
          %v1884 = vrot.slane %v1797, %v1883
          %v1885 = vlaneseq
          %v1886 = vshrl.u32 %v1885, 7
          %v1887 = vsub.s32 0, %v1886
          %v1888 = vrot.slane %v1811, %v1887
          %v1889 = vlaneseq
          %v1890 = vshrl.u32 %v1889, 7
          %v1891 = vsub.s32 0, %v1890
          %v1892 = vrot.slane %v1813, %v1891
          %v1893 = vlaneseq
          %v1894 = vshrl.u32 %v1893, 7
          %v1895 = vsub.s32 0, %v1894
          %v1896 = vrot.slane %v1815, %v1895
          %v1897 = vlaneseq
          %v1898 = vshrl.u32 %v1897, 7
          %v1899 = vsub.s32 0, %v1898
          %v1900 = vrot.slane %v1839, %v1899
          %v1901 = vlaneseq
          %v1902 = vshrl.u32 %v1901, 7
          %v1903 = vsub.s32 0, %v1902
          %v1904 = vrot.slane %v1853, %v1903
          %v1905 = vlaneseq
          %v1906 = vshrl.u32 %v1905, 7
          %v1907 = vsub.s32 0, %v1906
          %v1908 = vrot.slane %v1861, %v1907
          %v1909 = vlaneseq
          %v1910 = vshrl.u32 %v1909, 7
          %v1911 = vsub.s32 0, %v1910
          %v1912 = vrot.slane %v1863, %v1911
          %v1913 = vlaneseq
          %v1914 = vshrl.u32 %v1913, 7
          %v1915 = vsub.s32 0, %v1914
          %v1916 = vrot.slane %v1846, %v1915
          %v1917 = vlaneseq
          %v1918 = vshrl.u32 %v1917, 7
          %v1919 = vsub.s32 0, %v1918
          %v1920 = vrot.slane %v1860, %v1919
          %v1921 = vlaneseq
          %v1922 = vshrl.u32 %v1921, 7
          %v1923 = vsub.s32 0, %v1922
          %v1924 = vrot.slane %v1862, %v1923
          %v1925 = vlaneseq
          %v1926 = vshrl.u32 %v1925, 7
          %v1927 = vsub.s32 0, %v1926
          %v1928 = vrot.slane %v1864, %v1927
          %v1945 = vadd.f32 %v1733, %v1868
          %v1946 = vadd.f32 %v1734, %v1868
          %v1947 = vadd.f32 %v1735, %v1872
          %v1948 = vadd.f32 %v1736, %v1872
          %v1949 = vadd.f32 %v1737, %v1876
          %v1950 = vadd.f32 %v1738, %v1876
          %v1951 = vadd.f32 %v1739, %v1880
          %v1952 = vadd.f32 %v1740, %v1880
          %v1953 = vadd.f32 %v1741, %v1884
          %v1954 = vadd.f32 %v1742, %v1884
          %v1955 = vadd.f32 %v1743, %v1888
          %v1956 = vadd.f32 %v1744, %v1888
          %v1957 = vadd.f32 %v1745, %v1892
          %v1958 = vadd.f32 %v1746, %v1892
          %v1959 = vadd.f32 %v1747, %v1896
          %v1960 = vadd.f32 %v1748, %v1896
          %v1961 = vadd.f32 %v1749, %v1900
          %v1962 = vadd.f32 %v1750, %v1900
          %v1963 = vadd.f32 %v1751, %v1904
          %v1964 = vadd.f32 %v1752, %v1904
          %v1965 = vadd.f32 %v1753, %v1908
          %v1966 = vadd.f32 %v1754, %v1908
          %v1967 = vadd.f32 %v1755, %v1912
          %v1968 = vadd.f32 %v1756, %v1912
          %v1969 = vadd.f32 %v1757, %v1916
          %v1970 = vadd.f32 %v1758, %v1916
          %v1971 = vadd.f32 %v1759, %v1920
          %v1972 = vadd.f32 %v1760, %v1920
          %v1973 = vadd.f32 %v1761, %v1924
          %v1974 = vadd.f32 %v1762, %v1924
          %v1975 = vadd.f32 %v1763, %v1928
          %v1976 = vadd.f32 %v1764, %v1928
          %v1977 = vmax.f32 %v1945, 0.0
          %v1978 = vmax.f32 %v1946, 0.0
          %v1979 = vmax.f32 %v1947, 0.0
          %v1980 = vmax.f32 %v1948, 0.0
          %v1981 = vmax.f32 %v1949, 0.0
          %v1982 = vmax.f32 %v1950, 0.0
          %v1983 = vmax.f32 %v1951, 0.0
          %v1984 = vmax.f32 %v1952, 0.0
          %v1985 = vmax.f32 %v1953, 0.0
          %v1986 = vmax.f32 %v1954, 0.0
          %v1987 = vmax.f32 %v1955, 0.0
          %v1988 = vmax.f32 %v1956, 0.0
          %v1989 = vmax.f32 %v1957, 0.0
          %v1990 = vmax.f32 %v1958, 0.0
          %v1991 = vmax.f32 %v1959, 0.0
          %v1992 = vmax.f32 %v1960, 0.0
          %v1993 = vmax.f32 %v1961, 0.0
          %v1994 = vmax.f32 %v1962, 0.0
          %v1995 = vmax.f32 %v1963, 0.0
          %v1996 = vmax.f32 %v1964, 0.0
          %v1997 = vmax.f32 %v1965, 0.0
          %v1998 = vmax.f32 %v1966, 0.0
          %v1999 = vmax.f32 %v1967, 0.0
          %v2000 = vmax.f32 %v1968, 0.0
          %v2001 = vmax.f32 %v1969, 0.0
          %v2002 = vmax.f32 %v1970, 0.0
          %v2003 = vmax.f32 %v1971, 0.0
          %v2004 = vmax.f32 %v1972, 0.0
          %v2005 = vmax.f32 %v1973, 0.0
          %v2006 = vmax.f32 %v1974, 0.0
          %v2007 = vmax.f32 %v1975, 0.0
          %v2008 = vmax.f32 %v1976, 0.0
          %v2009 = vld [vmem:[#allocation26] sm:$0x1]
          %v2011 = vlaneseq
          %v2012 = vshrl.u32 %v2011, 7
          %v2013 = vsub.s32 0, %v2012
          %v2014 = vrot.slane %v2009, %v2013
          %v2016 = vmul.f32 %v1977, %v2014
          %v2017 = vmul.f32 %v1978, %v2014
          %v2018 = vmul.f32 %v1979, %v2014
          %v2019 = vmul.f32 %v1980, %v2014
          %v2020 = vmul.f32 %v1981, %v2014
          %v2021 = vmul.f32 %v1982, %v2014
          %v2022 = vmul.f32 %v1983, %v2014
          %v2023 = vmul.f32 %v1984, %v2014
          %v2024 = vmul.f32 %v1985, %v2014
          %v2025 = vmul.f32 %v1986, %v2014
          %v2026 = vmul.f32 %v1987, %v2014
          %v2027 = vmul.f32 %v1988, %v2014
          %v2028 = vmul.f32 %v1989, %v2014
          %v2029 = vmul.f32 %v1990, %v2014
          %v2030 = vmul.f32 %v1991, %v2014
          %v2031 = vmul.f32 %v1992, %v2014
          %v2032 = vmul.f32 %v1993, %v2014
          %v2033 = vmul.f32 %v1994, %v2014
          %v2034 = vmul.f32 %v1995, %v2014
          %v2035 = vmul.f32 %v1996, %v2014
          %v2036 = vmul.f32 %v1997, %v2014
          %v2037 = vmul.f32 %v1998, %v2014
          %v2038 = vmul.f32 %v1999, %v2014
          %v2039 = vmul.f32 %v2000, %v2014
          %v2040 = vmul.f32 %v2001, %v2014
          %v2041 = vmul.f32 %v2002, %v2014
          %v2042 = vmul.f32 %v2003, %v2014
          %v2043 = vmul.f32 %v2004, %v2014
          %v2044 = vmul.f32 %v2005, %v2014
          %v2045 = vmul.f32 %v2006, %v2014
          %v2046 = vmul.f32 %v2007, %v2014
          %v2047 = vmul.f32 %v2008, %v2014
          %v2048 = vsel %vm1672, %v2016, 0.0
          %2049 = vadd.xlane.f32.xlu0 %v2048
          %v2050 = vpop.xlane.xlu0 %2049
          %v2051 = vsel %vm1672, %v2017, 0.0
          %2052 = vadd.xlane.f32.xlu0 %v2051
          %v2053 = vpop.xlane.xlu0 %2052
          %v2054 = vsel %vm1672, %v2018, 0.0
          %2055 = vadd.xlane.f32.xlu0 %v2054
          %v2056 = vpop.xlane.xlu0 %2055
          %v2057 = vsel %vm1672, %v2019, 0.0
          %2058 = vadd.xlane.f32.xlu0 %v2057
          %v2059 = vpop.xlane.xlu0 %2058
          %v2060 = vsel %vm1672, %v2020, 0.0
          %2061 = vadd.xlane.f32.xlu0 %v2060
          %v2062 = vpop.xlane.xlu0 %2061
          %v2063 = vsel %vm1672, %v2021, 0.0
          %2064 = vadd.xlane.f32.xlu0 %v2063
          %v2065 = vpop.xlane.xlu0 %2064
          %v2066 = vsel %vm1672, %v2022, 0.0
          %2067 = vadd.xlane.f32.xlu0 %v2066
          %v2068 = vpop.xlane.xlu0 %2067
          %v2069 = vsel %vm1672, %v2023, 0.0
          %2070 = vadd.xlane.f32.xlu0 %v2069
          %v2071 = vpop.xlane.xlu0 %2070
          %v2072 = vsel %vm1672, %v2024, 0.0
          %2073 = vadd.xlane.f32.xlu0 %v2072
          %v2074 = vpop.xlane.xlu0 %2073
          %v2075 = vsel %vm1672, %v2025, 0.0
          %2076 = vadd.xlane.f32.xlu0 %v2075
          %v2077 = vpop.xlane.xlu0 %2076
          %v2078 = vsel %vm1672, %v2026, 0.0
          %2079 = vadd.xlane.f32.xlu0 %v2078
          %v2080 = vpop.xlane.xlu0 %2079
          %v2081 = vsel %vm1672, %v2027, 0.0
          %2082 = vadd.xlane.f32.xlu0 %v2081
          %v2083 = vpop.xlane.xlu0 %2082
          %v2084 = vsel %vm1672, %v2028, 0.0
          %2085 = vadd.xlane.f32.xlu0 %v2084
          %v2086 = vpop.xlane.xlu0 %2085
          %v2087 = vsel %vm1672, %v2029, 0.0
          %2088 = vadd.xlane.f32.xlu0 %v2087
          %v2089 = vpop.xlane.xlu0 %2088
          %v2090 = vsel %vm1672, %v2030, 0.0
          %2091 = vadd.xlane.f32.xlu0 %v2090
          %v2092 = vpop.xlane.xlu0 %2091
          %v2093 = vsel %vm1672, %v2031, 0.0
          %2094 = vadd.xlane.f32.xlu0 %v2093
          %v2095 = vpop.xlane.xlu0 %2094
          %v2096 = vsel %vm1672, %v2032, 0.0
          %2097 = vadd.xlane.f32.xlu0 %v2096
          %v2098 = vpop.xlane.xlu0 %2097
          %v2099 = vsel %vm1672, %v2033, 0.0
          %2100 = vadd.xlane.f32.xlu0 %v2099
          %v2101 = vpop.xlane.xlu0 %2100
          %v2102 = vsel %vm1672, %v2034, 0.0
          %2103 = vadd.xlane.f32.xlu0 %v2102
          %v2104 = vpop.xlane.xlu0 %2103
          %v2105 = vsel %vm1672, %v2035, 0.0
          %2106 = vadd.xlane.f32.xlu0 %v2105
          %v2107 = vpop.xlane.xlu0 %2106
          %v2108 = vsel %vm1672, %v2036, 0.0
          %2109 = vadd.xlane.f32.xlu0 %v2108
          %v2110 = vpop.xlane.xlu0 %2109
          %v2111 = vsel %vm1672, %v2037, 0.0
          %2112 = vadd.xlane.f32.xlu0 %v2111
          %v2113 = vpop.xlane.xlu0 %2112
          %v2114 = vsel %vm1672, %v2038, 0.0
          %2115 = vadd.xlane.f32.xlu0 %v2114
          %v2116 = vpop.xlane.xlu0 %2115
          %v2117 = vsel %vm1672, %v2039, 0.0
          %2118 = vadd.xlane.f32.xlu0 %v2117
          %v2119 = vpop.xlane.xlu0 %2118
          %v2120 = vsel %vm1672, %v2040, 0.0
          %2121 = vadd.xlane.f32.xlu0 %v2120
          %v2122 = vpop.xlane.xlu0 %2121
          %v2123 = vsel %vm1672, %v2041, 0.0
          %2124 = vadd.xlane.f32.xlu0 %v2123
          %v2125 = vpop.xlane.xlu0 %2124
          %v2126 = vsel %vm1672, %v2042, 0.0
          %2127 = vadd.xlane.f32.xlu0 %v2126
          %v2128 = vpop.xlane.xlu0 %2127
          %v2129 = vsel %vm1672, %v2043, 0.0
          %2130 = vadd.xlane.f32.xlu0 %v2129
          %v2131 = vpop.xlane.xlu0 %2130
          %v2132 = vsel %vm1672, %v2044, 0.0
          %2133 = vadd.xlane.f32.xlu0 %v2132
          %v2134 = vpop.xlane.xlu0 %2133
          %v2135 = vsel %vm1672, %v2045, 0.0
          %2136 = vadd.xlane.f32.xlu0 %v2135
          %v2137 = vpop.xlane.xlu0 %2136
          %v2138 = vsel %vm1672, %v2046, 0.0
          %2139 = vadd.xlane.f32.xlu0 %v2138
          %v2140 = vpop.xlane.xlu0 %2139
          %v2141 = vsel %vm1672, %v2047, 0.0
          %2142 = vadd.xlane.f32.xlu0 %v2141
          %v2143 = vpop.xlane.xlu0 %2142
          %v2144 = vld [vmem:[#allocation7] sm:$0x1]
          %v2146 = vlaneseq
          %v2147 = vshrl.u32 %v2146, 7
          %v2148 = vsub.s32 0, %v2147
          %v2149 = vrot.slane %v2144, %v2148
          %2150 = vset.pattern.permute.xlu0 0
          %2151 = vperm.xlu0 %2150, %v2149
          %v2152 = vpop.permute.xlu0 %2151
          %v2154 = vadd.f32 %v2050, %v2152
          %v2155 = vadd.f32 %v2053, %v2152
          %v2156 = vadd.f32 %v2056, %v2152
          %v2157 = vadd.f32 %v2059, %v2152
          %v2158 = vadd.f32 %v2062, %v2152
          %v2159 = vadd.f32 %v2065, %v2152
          %v2160 = vadd.f32 %v2068, %v2152
          %v2161 = vadd.f32 %v2071, %v2152
          %v2162 = vadd.f32 %v2074, %v2152
          %v2163 = vadd.f32 %v2077, %v2152
          %v2164 = vadd.f32 %v2080, %v2152
          %v2165 = vadd.f32 %v2083, %v2152
          %v2166 = vadd.f32 %v2086, %v2152
          %v2167 = vadd.f32 %v2089, %v2152
          %v2168 = vadd.f32 %v2092, %v2152
          %v2169 = vadd.f32 %v2095, %v2152
          %v2170 = vadd.f32 %v2098, %v2152
          %v2171 = vadd.f32 %v2101, %v2152
          %v2172 = vadd.f32 %v2104, %v2152
          %v2173 = vadd.f32 %v2107, %v2152
          %v2174 = vadd.f32 %v2110, %v2152
          %v2175 = vadd.f32 %v2113, %v2152
          %v2176 = vadd.f32 %v2116, %v2152
          %v2177 = vadd.f32 %v2119, %v2152
          %v2178 = vadd.f32 %v2122, %v2152
          %v2179 = vadd.f32 %v2125, %v2152
          %v2180 = vadd.f32 %v2128, %v2152
          %v2181 = vadd.f32 %v2131, %v2152
          %v2182 = vadd.f32 %v2134, %v2152
          %v2183 = vadd.f32 %v2137, %v2152
          %v2184 = vadd.f32 %v2140, %v2152
          %v2185 = vadd.f32 %v2143, %v2152
          %v2218 = vlaneseq
          %v2219 = vand.u32 %v2218, 127
          %v2220 = vlaneseq
          %v2221 = vshrl.u32 %v2220, 7
          %v2222 = vsub.s32 %v2219, %v2221
          %v2223 = vrot.slane %v2154, %v2222
          %v2224 = vadd.s32 %v2219, 4294967288
          %v2225 = vlaneseq
          %v2226 = vshrl.u32 %v2225, 7
          %v2227 = vsub.s32 %v2224, %v2226
          %v2228 = vrot.slane %v2155, %v2227
          %vm2229 = vcmask 130112
          %v2230 = vsel %vm2229, %v2228, %v2223
          %v2231 = vlaneseq
          %v2232 = vshrl.u32 %v2231, 7
          %v2233 = vsub.s32 %v2219, %v2232
          %v2234 = vrot.slane %v2156, %v2233
          %v2235 = vlaneseq
          %v2236 = vshrl.u32 %v2235, 7
          %v2237 = vsub.s32 %v2224, %v2236
          %v2238 = vrot.slane %v2157, %v2237
          %v2239 = vsel %vm2229, %v2238, %v2234
          %v2240 = vlaneseq
          %v2241 = vshrl.u32 %v2240, 7
          %v2242 = vsub.s32 %v2219, %v2241
          %v2243 = vrot.slane %v2158, %v2242
          %v2244 = vlaneseq
          %v2245 = vshrl.u32 %v2244, 7
          %v2246 = vsub.s32 %v2224, %v2245
          %v2247 = vrot.slane %v2159, %v2246
          %v2248 = vsel %vm2229, %v2247, %v2243
          %v2249 = vlaneseq
          %v2250 = vshrl.u32 %v2249, 7
          %v2251 = vsub.s32 %v2219, %v2250
          %v2252 = vrot.slane %v2160, %v2251
          %v2253 = vlaneseq
          %v2254 = vshrl.u32 %v2253, 7
          %v2255 = vsub.s32 %v2224, %v2254
          %v2256 = vrot.slane %v2161, %v2255
          %v2257 = vsel %vm2229, %v2256, %v2252
          %v2258 = vlaneseq
          %v2259 = vshrl.u32 %v2258, 7
          %v2260 = vsub.s32 %v2219, %v2259
          %v2261 = vrot.slane %v2162, %v2260
          %v2262 = vlaneseq
          %v2263 = vshrl.u32 %v2262, 7
          %v2264 = vsub.s32 %v2224, %v2263
          %v2265 = vrot.slane %v2163, %v2264
          %v2266 = vsel %vm2229, %v2265, %v2261
          %v2267 = vlaneseq
          %v2268 = vshrl.u32 %v2267, 7
          %v2269 = vsub.s32 %v2219, %v2268
          %v2270 = vrot.slane %v2164, %v2269
          %v2271 = vlaneseq
          %v2272 = vshrl.u32 %v2271, 7
          %v2273 = vsub.s32 %v2224, %v2272
          %v2274 = vrot.slane %v2165, %v2273
          %v2275 = vsel %vm2229, %v2274, %v2270
          %v2276 = vlaneseq
          %v2277 = vshrl.u32 %v2276, 7
          %v2278 = vsub.s32 %v2219, %v2277
          %v2279 = vrot.slane %v2166, %v2278
          %v2280 = vlaneseq
          %v2281 = vshrl.u32 %v2280, 7
          %v2282 = vsub.s32 %v2224, %v2281
          %v2283 = vrot.slane %v2167, %v2282
          %v2284 = vsel %vm2229, %v2283, %v2279
          %v2285 = vlaneseq
          %v2286 = vshrl.u32 %v2285, 7
          %v2287 = vsub.s32 %v2219, %v2286
          %v2288 = vrot.slane %v2168, %v2287
          %v2289 = vlaneseq
          %v2290 = vshrl.u32 %v2289, 7
          %v2291 = vsub.s32 %v2224, %v2290
          %v2292 = vrot.slane %v2169, %v2291
          %v2293 = vsel %vm2229, %v2292, %v2288
          %v2294 = vlaneseq
          %v2295 = vshrl.u32 %v2294, 7
          %v2296 = vsub.s32 %v2219, %v2295
          %v2297 = vrot.slane %v2170, %v2296
          %v2298 = vlaneseq
          %v2299 = vshrl.u32 %v2298, 7
          %v2300 = vsub.s32 %v2224, %v2299
          %v2301 = vrot.slane %v2171, %v2300
          %v2302 = vsel %vm2229, %v2301, %v2297
          %v2303 = vlaneseq
          %v2304 = vshrl.u32 %v2303, 7
          %v2305 = vsub.s32 %v2219, %v2304
          %v2306 = vrot.slane %v2172, %v2305
          %v2307 = vlaneseq
          %v2308 = vshrl.u32 %v2307, 7
          %v2309 = vsub.s32 %v2224, %v2308
          %v2310 = vrot.slane %v2173, %v2309
          %v2311 = vsel %vm2229, %v2310, %v2306
          %v2312 = vlaneseq
          %v2313 = vshrl.u32 %v2312, 7
          %v2314 = vsub.s32 %v2219, %v2313
          %v2315 = vrot.slane %v2174, %v2314
          %v2316 = vlaneseq
          %v2317 = vshrl.u32 %v2316, 7
          %v2318 = vsub.s32 %v2224, %v2317
          %v2319 = vrot.slane %v2175, %v2318
          %v2320 = vsel %vm2229, %v2319, %v2315
          %v2321 = vlaneseq
          %v2322 = vshrl.u32 %v2321, 7
          %v2323 = vsub.s32 %v2219, %v2322
          %v2324 = vrot.slane %v2176, %v2323
          %v2325 = vlaneseq
          %v2326 = vshrl.u32 %v2325, 7
          %v2327 = vsub.s32 %v2224, %v2326
          %v2328 = vrot.slane %v2177, %v2327
          %v2329 = vsel %vm2229, %v2328, %v2324
          %v2330 = vlaneseq
          %v2331 = vshrl.u32 %v2330, 7
          %v2332 = vsub.s32 %v2219, %v2331
          %v2333 = vrot.slane %v2178, %v2332
          %v2334 = vlaneseq
          %v2335 = vshrl.u32 %v2334, 7
          %v2336 = vsub.s32 %v2224, %v2335
          %v2337 = vrot.slane %v2179, %v2336
          %v2338 = vsel %vm2229, %v2337, %v2333
          %v2339 = vlaneseq
          %v2340 = vshrl.u32 %v2339, 7
          %v2341 = vsub.s32 %v2219, %v2340
          %v2342 = vrot.slane %v2180, %v2341
          %v2343 = vlaneseq
          %v2344 = vshrl.u32 %v2343, 7
          %v2345 = vsub.s32 %v2224, %v2344
          %v2346 = vrot.slane %v2181, %v2345
          %v2347 = vsel %vm2229, %v2346, %v2342
          %v2348 = vlaneseq
          %v2349 = vshrl.u32 %v2348, 7
          %v2350 = vsub.s32 %v2219, %v2349
          %v2351 = vrot.slane %v2182, %v2350
          %v2352 = vlaneseq
          %v2353 = vshrl.u32 %v2352, 7
          %v2354 = vsub.s32 %v2224, %v2353
          %v2355 = vrot.slane %v2183, %v2354
          %v2356 = vsel %vm2229, %v2355, %v2351
          %v2357 = vlaneseq
          %v2358 = vshrl.u32 %v2357, 7
          %v2359 = vsub.s32 %v2219, %v2358
          %v2360 = vrot.slane %v2184, %v2359
          %v2361 = vlaneseq
          %v2362 = vshrl.u32 %v2361, 7
          %v2363 = vsub.s32 %v2224, %v2362
          %v2364 = vrot.slane %v2185, %v2363
          %v2365 = vsel %vm2229, %v2364, %v2360
          %vm2366 = vcmask 1041409
          %v2367 = vsel %vm2366, %v2239, %v2230
          %vm2368 = vcmask 1042434
          %v2369 = vsel %vm2368, %v2248, %v2367
          %vm2370 = vcmask 1043459
          %v2371 = vsel %vm2370, %v2257, %v2369
          %vm2372 = vcmask 1044484
          %v2373 = vsel %vm2372, %v2266, %v2371
          %vm2374 = vcmask 1045509
          %v2375 = vsel %vm2374, %v2275, %v2373
          %vm2376 = vcmask 1046534
          %v2377 = vsel %vm2376, %v2284, %v2375
          %vm2378 = vcmask 1047559
          %v2379 = vsel %vm2378, %v2293, %v2377
          %v2380 = vsel %vm2366, %v2311, %v2302
          %v2381 = vsel %vm2368, %v2320, %v2380
          %v2382 = vsel %vm2370, %v2329, %v2381
          %v2383 = vsel %vm2372, %v2338, %v2382
          %v2384 = vsel %vm2374, %v2347, %v2383
          %v2385 = vsel %vm2376, %v2356, %v2384
          %v2386 = vsel %vm2378, %v2365, %v2385
          %vm2389 = vcmask 130048
          %v2390 = vsel %vm2389, %v2379, -inf
          %2391 = vmax.xlane.f32.xlu0 %v2390
          %v2392 = vpop.xlane.xlu0 %2391
          %v2393 = vsel %vm2389, %v2386, -inf
          %2394 = vmax.xlane.f32.xlu0 %v2393
          %v2395 = vpop.xlane.xlu0 %2394
          %v2398 = vlaneseq
          %v2399 = vshrl.u32 %v2398, 7
          %v2400 = vsub.s32 0, %v2399
          %v2401 = vrot.slane %v2392, %v2400
          %v2402 = vlaneseq
          %v2403 = vshrl.u32 %v2402, 7
          %v2404 = vsub.s32 1, %v2403
          %v2405 = vrot.slane %v2392, %v2404
          %v2406 = vlaneseq
          %v2407 = vshrl.u32 %v2406, 7
          %v2408 = vsub.s32 2, %v2407
          %v2409 = vrot.slane %v2392, %v2408
          %v2410 = vlaneseq
          %v2411 = vshrl.u32 %v2410, 7
          %v2412 = vsub.s32 3, %v2411
          %v2413 = vrot.slane %v2392, %v2412
          %v2414 = vlaneseq
          %v2415 = vshrl.u32 %v2414, 7
          %v2416 = vsub.s32 4, %v2415
          %v2417 = vrot.slane %v2392, %v2416
          %v2418 = vlaneseq
          %v2419 = vshrl.u32 %v2418, 7
          %v2420 = vsub.s32 5, %v2419
          %v2421 = vrot.slane %v2392, %v2420
          %v2422 = vlaneseq
          %v2423 = vshrl.u32 %v2422, 7
          %v2424 = vsub.s32 6, %v2423
          %v2425 = vrot.slane %v2392, %v2424
          %v2426 = vlaneseq
          %v2427 = vshrl.u32 %v2426, 7
          %v2428 = vsub.s32 7, %v2427
          %v2429 = vrot.slane %v2392, %v2428
          %v2430 = vlaneseq
          %v2431 = vshrl.u32 %v2430, 7
          %v2432 = vsub.s32 0, %v2431
          %v2433 = vrot.slane %v2395, %v2432
          %v2434 = vlaneseq
          %v2435 = vshrl.u32 %v2434, 7
          %v2436 = vsub.s32 1, %v2435
          %v2437 = vrot.slane %v2395, %v2436
          %v2438 = vlaneseq
          %v2439 = vshrl.u32 %v2438, 7
          %v2440 = vsub.s32 2, %v2439
          %v2441 = vrot.slane %v2395, %v2440
          %v2442 = vlaneseq
          %v2443 = vshrl.u32 %v2442, 7
          %v2444 = vsub.s32 3, %v2443
          %v2445 = vrot.slane %v2395, %v2444
          %v2446 = vlaneseq
          %v2447 = vshrl.u32 %v2446, 7
          %v2448 = vsub.s32 4, %v2447
          %v2449 = vrot.slane %v2395, %v2448
          %v2450 = vlaneseq
          %v2451 = vshrl.u32 %v2450, 7
          %v2452 = vsub.s32 5, %v2451
          %v2453 = vrot.slane %v2395, %v2452
          %v2454 = vlaneseq
          %v2455 = vshrl.u32 %v2454, 7
          %v2456 = vsub.s32 6, %v2455
          %v2457 = vrot.slane %v2395, %v2456
          %v2458 = vlaneseq
          %v2459 = vshrl.u32 %v2458, 7
          %v2460 = vsub.s32 7, %v2459
          %v2461 = vrot.slane %v2395, %v2460
          %v2478 = vsub.f32 %v2154, %v2401
          %v2479 = vsub.f32 %v2155, %v2401
          %v2480 = vsub.f32 %v2156, %v2405
          %v2481 = vsub.f32 %v2157, %v2405
          %v2482 = vsub.f32 %v2158, %v2409
          %v2483 = vsub.f32 %v2159, %v2409
          %v2484 = vsub.f32 %v2160, %v2413
          %v2485 = vsub.f32 %v2161, %v2413
          %v2486 = vsub.f32 %v2162, %v2417
          %v2487 = vsub.f32 %v2163, %v2417
          %v2488 = vsub.f32 %v2164, %v2421
          %v2489 = vsub.f32 %v2165, %v2421
          %v2490 = vsub.f32 %v2166, %v2425
          %v2491 = vsub.f32 %v2167, %v2425
          %v2492 = vsub.f32 %v2168, %v2429
          %v2493 = vsub.f32 %v2169, %v2429
          %v2494 = vsub.f32 %v2170, %v2433
          %v2495 = vsub.f32 %v2171, %v2433
          %v2496 = vsub.f32 %v2172, %v2437
          %v2497 = vsub.f32 %v2173, %v2437
          %v2498 = vsub.f32 %v2174, %v2441
          %v2499 = vsub.f32 %v2175, %v2441
          %v2500 = vsub.f32 %v2176, %v2445
          %v2501 = vsub.f32 %v2177, %v2445
          %v2502 = vsub.f32 %v2178, %v2449
          %v2503 = vsub.f32 %v2179, %v2449
          %v2504 = vsub.f32 %v2180, %v2453
          %v2505 = vsub.f32 %v2181, %v2453
          %v2506 = vsub.f32 %v2182, %v2457
          %v2507 = vsub.f32 %v2183, %v2457
          %v2508 = vsub.f32 %v2184, %v2461
          %v2509 = vsub.f32 %v2185, %v2461
          %v2510 = vmul.f32 %v2478, 1.442695
          %v2511 = vpow.pop %v2510
          %v2512 = vmul.f32 %v2479, 1.442695
          %v2513 = vpow.pop %v2512
          %v2514 = vmul.f32 %v2480, 1.442695
          %v2515 = vpow.pop %v2514
          %v2516 = vmul.f32 %v2481, 1.442695
          %v2517 = vpow.pop %v2516
          %v2518 = vmul.f32 %v2482, 1.442695
          %v2519 = vpow.pop %v2518
          %v2520 = vmul.f32 %v2483, 1.442695
          %v2521 = vpow.pop %v2520
          %v2522 = vmul.f32 %v2484, 1.442695
          %v2523 = vpow.pop %v2522
          %v2524 = vmul.f32 %v2485, 1.442695
          %v2525 = vpow.pop %v2524
          %v2526 = vmul.f32 %v2486, 1.442695
          %v2527 = vpow.pop %v2526
          %v2528 = vmul.f32 %v2487, 1.442695
          %v2529 = vpow.pop %v2528
          %v2530 = vmul.f32 %v2488, 1.442695
          %v2531 = vpow.pop %v2530
          %v2532 = vmul.f32 %v2489, 1.442695
          %v2533 = vpow.pop %v2532
          %v2534 = vmul.f32 %v2490, 1.442695
          %v2535 = vpow.pop %v2534
          %v2536 = vmul.f32 %v2491, 1.442695
          %v2537 = vpow.pop %v2536
          %v2538 = vmul.f32 %v2492, 1.442695
          %v2539 = vpow.pop %v2538
          %v2540 = vmul.f32 %v2493, 1.442695
          %v2541 = vpow.pop %v2540
          %v2542 = vmul.f32 %v2494, 1.442695
          %v2543 = vpow.pop %v2542
          %v2544 = vmul.f32 %v2495, 1.442695
          %v2545 = vpow.pop %v2544
          %v2546 = vmul.f32 %v2496, 1.442695
          %v2547 = vpow.pop %v2546
          %v2548 = vmul.f32 %v2497, 1.442695
          %v2549 = vpow.pop %v2548
          %v2550 = vmul.f32 %v2498, 1.442695
          %v2551 = vpow.pop %v2550
          %v2552 = vmul.f32 %v2499, 1.442695
          %v2553 = vpow.pop %v2552
          %v2554 = vmul.f32 %v2500, 1.442695
          %v2555 = vpow.pop %v2554
          %v2556 = vmul.f32 %v2501, 1.442695
          %v2557 = vpow.pop %v2556
          %v2558 = vmul.f32 %v2502, 1.442695
          %v2559 = vpow.pop %v2558
          %v2560 = vmul.f32 %v2503, 1.442695
          %v2561 = vpow.pop %v2560
          %v2562 = vmul.f32 %v2504, 1.442695
          %v2563 = vpow.pop %v2562
          %v2564 = vmul.f32 %v2505, 1.442695
          %v2565 = vpow.pop %v2564
          %v2566 = vmul.f32 %v2506, 1.442695
          %v2567 = vpow.pop %v2566
          %v2568 = vmul.f32 %v2507, 1.442695
          %v2569 = vpow.pop %v2568
          %v2570 = vmul.f32 %v2508, 1.442695
          %v2571 = vpow.pop %v2570
          %v2572 = vmul.f32 %v2509, 1.442695
          %v2573 = vpow.pop %v2572
          %2606 = vset.pattern.permute.xlu0 0
          %2607 = vperm.xlu0 %2606, %v2511
          %v2608 = vpop.permute.xlu0 %2607
          %2609 = vset.pattern.permute.xlu0 0
          %2610 = vperm.xlu0 %2609, %v2513
          %v2611 = vpop.permute.xlu0 %2610
          %2612 = vset.pattern.permute.xlu0 0
          %2613 = vperm.xlu0 %2612, %v2515
          %v2614 = vpop.permute.xlu0 %2613
          %2615 = vset.pattern.permute.xlu0 0
          %2616 = vperm.xlu0 %2615, %v2517
          %v2617 = vpop.permute.xlu0 %2616
          %2618 = vset.pattern.permute.xlu0 0
          %2619 = vperm.xlu0 %2618, %v2519
          %v2620 = vpop.permute.xlu0 %2619
          %2621 = vset.pattern.permute.xlu0 0
          %2622 = vperm.xlu0 %2621, %v2521
          %v2623 = vpop.permute.xlu0 %2622
          %2624 = vset.pattern.permute.xlu0 0
          %2625 = vperm.xlu0 %2624, %v2523
          %v2626 = vpop.permute.xlu0 %2625
          %2627 = vset.pattern.permute.xlu0 0
          %2628 = vperm.xlu0 %2627, %v2525
          %v2629 = vpop.permute.xlu0 %2628
          %2630 = vset.pattern.permute.xlu0 0
          %2631 = vperm.xlu0 %2630, %v2527
          %v2632 = vpop.permute.xlu0 %2631
          %2633 = vset.pattern.permute.xlu0 0
          %2634 = vperm.xlu0 %2633, %v2529
          %v2635 = vpop.permute.xlu0 %2634
          %2636 = vset.pattern.permute.xlu0 0
          %2637 = vperm.xlu0 %2636, %v2531
          %v2638 = vpop.permute.xlu0 %2637
          %2639 = vset.pattern.permute.xlu0 0
          %2640 = vperm.xlu0 %2639, %v2533
          %v2641 = vpop.permute.xlu0 %2640
          %2642 = vset.pattern.permute.xlu0 0
          %2643 = vperm.xlu0 %2642, %v2535
          %v2644 = vpop.permute.xlu0 %2643
          %2645 = vset.pattern.permute.xlu0 0
          %2646 = vperm.xlu0 %2645, %v2537
          %v2647 = vpop.permute.xlu0 %2646
          %2648 = vset.pattern.permute.xlu0 0
          %2649 = vperm.xlu0 %2648, %v2539
          %v2650 = vpop.permute.xlu0 %2649
          %2651 = vset.pattern.permute.xlu0 0
          %2652 = vperm.xlu0 %2651, %v2541
          %v2653 = vpop.permute.xlu0 %2652
          %2654 = vset.pattern.permute.xlu0 0
          %2655 = vperm.xlu0 %2654, %v2543
          %v2656 = vpop.permute.xlu0 %2655
          %2657 = vset.pattern.permute.xlu0 0
          %2658 = vperm.xlu0 %2657, %v2545
          %v2659 = vpop.permute.xlu0 %2658
          %2660 = vset.pattern.permute.xlu0 0
          %2661 = vperm.xlu0 %2660, %v2547
          %v2662 = vpop.permute.xlu0 %2661
          %2663 = vset.pattern.permute.xlu0 0
          %2664 = vperm.xlu0 %2663, %v2549
          %v2665 = vpop.permute.xlu0 %2664
          %2666 = vset.pattern.permute.xlu0 0
          %2667 = vperm.xlu0 %2666, %v2551
          %v2668 = vpop.permute.xlu0 %2667
          %2669 = vset.pattern.permute.xlu0 0
          %2670 = vperm.xlu0 %2669, %v2553
          %v2671 = vpop.permute.xlu0 %2670
          %2672 = vset.pattern.permute.xlu0 0
          %2673 = vperm.xlu0 %2672, %v2555
          %v2674 = vpop.permute.xlu0 %2673
          %2675 = vset.pattern.permute.xlu0 0
          %2676 = vperm.xlu0 %2675, %v2557
          %v2677 = vpop.permute.xlu0 %2676
          %2678 = vset.pattern.permute.xlu0 0
          %2679 = vperm.xlu0 %2678, %v2559
          %v2680 = vpop.permute.xlu0 %2679
          %2681 = vset.pattern.permute.xlu0 0
          %2682 = vperm.xlu0 %2681, %v2561
          %v2683 = vpop.permute.xlu0 %2682
          %2684 = vset.pattern.permute.xlu0 0
          %2685 = vperm.xlu0 %2684, %v2563
          %v2686 = vpop.permute.xlu0 %2685
          %2687 = vset.pattern.permute.xlu0 0
          %2688 = vperm.xlu0 %2687, %v2565
          %v2689 = vpop.permute.xlu0 %2688
          %2690 = vset.pattern.permute.xlu0 0
          %2691 = vperm.xlu0 %2690, %v2567
          %v2692 = vpop.permute.xlu0 %2691
          %2693 = vset.pattern.permute.xlu0 0
          %2694 = vperm.xlu0 %2693, %v2569
          %v2695 = vpop.permute.xlu0 %2694
          %2696 = vset.pattern.permute.xlu0 0
          %2697 = vperm.xlu0 %2696, %v2571
          %v2698 = vpop.permute.xlu0 %2697
          %2699 = vset.pattern.permute.xlu0 0
          %2700 = vperm.xlu0 %2699, %v2573
          %v2701 = vpop.permute.xlu0 %2700
          %v2702 = vlaneseq
          %v2703 = vshrl.u32 %v2702, 7
          %v2704 = vsub.s32 %v2219, %v2703
          %v2705 = vrot.slane %v2608, %v2704
          %v2706 = vlaneseq
          %v2707 = vshrl.u32 %v2706, 7
          %v2708 = vsub.s32 %v2224, %v2707
          %v2709 = vrot.slane %v2611, %v2708
          %v2710 = vsel %vm2229, %v2709, %v2705
          %v2711 = vlaneseq
          %v2712 = vshrl.u32 %v2711, 7
          %v2713 = vsub.s32 %v2219, %v2712
          %v2714 = vrot.slane %v2614, %v2713
          %v2715 = vlaneseq
          %v2716 = vshrl.u32 %v2715, 7
          %v2717 = vsub.s32 %v2224, %v2716
          %v2718 = vrot.slane %v2617, %v2717
          %v2719 = vsel %vm2229, %v2718, %v2714
          %v2720 = vlaneseq
          %v2721 = vshrl.u32 %v2720, 7
          %v2722 = vsub.s32 %v2219, %v2721
          %v2723 = vrot.slane %v2620, %v2722
          %v2724 = vlaneseq
          %v2725 = vshrl.u32 %v2724, 7
          %v2726 = vsub.s32 %v2224, %v2725
          %v2727 = vrot.slane %v2623, %v2726
          %v2728 = vsel %vm2229, %v2727, %v2723
          %v2729 = vlaneseq
          %v2730 = vshrl.u32 %v2729, 7
          %v2731 = vsub.s32 %v2219, %v2730
          %v2732 = vrot.slane %v2626, %v2731
          %v2733 = vlaneseq
          %v2734 = vshrl.u32 %v2733, 7
          %v2735 = vsub.s32 %v2224, %v2734
          %v2736 = vrot.slane %v2629, %v2735
          %v2737 = vsel %vm2229, %v2736, %v2732
          %v2738 = vlaneseq
          %v2739 = vshrl.u32 %v2738, 7
          %v2740 = vsub.s32 %v2219, %v2739
          %v2741 = vrot.slane %v2632, %v2740
          %v2742 = vlaneseq
          %v2743 = vshrl.u32 %v2742, 7
          %v2744 = vsub.s32 %v2224, %v2743
          %v2745 = vrot.slane %v2635, %v2744
          %v2746 = vsel %vm2229, %v2745, %v2741
          %v2747 = vlaneseq
          %v2748 = vshrl.u32 %v2747, 7
          %v2749 = vsub.s32 %v2219, %v2748
          %v2750 = vrot.slane %v2638, %v2749
          %v2751 = vlaneseq
          %v2752 = vshrl.u32 %v2751, 7
          %v2753 = vsub.s32 %v2224, %v2752
          %v2754 = vrot.slane %v2641, %v2753
          %v2755 = vsel %vm2229, %v2754, %v2750
          %v2756 = vlaneseq
          %v2757 = vshrl.u32 %v2756, 7
          %v2758 = vsub.s32 %v2219, %v2757
          %v2759 = vrot.slane %v2644, %v2758
          %v2760 = vlaneseq
          %v2761 = vshrl.u32 %v2760, 7
          %v2762 = vsub.s32 %v2224, %v2761
          %v2763 = vrot.slane %v2647, %v2762
          %v2764 = vsel %vm2229, %v2763, %v2759
          %v2765 = vlaneseq
          %v2766 = vshrl.u32 %v2765, 7
          %v2767 = vsub.s32 %v2219, %v2766
          %v2768 = vrot.slane %v2650, %v2767
          %v2769 = vlaneseq
          %v2770 = vshrl.u32 %v2769, 7
          %v2771 = vsub.s32 %v2224, %v2770
          %v2772 = vrot.slane %v2653, %v2771
          %v2773 = vsel %vm2229, %v2772, %v2768
          %v2774 = vlaneseq
          %v2775 = vshrl.u32 %v2774, 7
          %v2776 = vsub.s32 %v2219, %v2775
          %v2777 = vrot.slane %v2656, %v2776
          %v2778 = vlaneseq
          %v2779 = vshrl.u32 %v2778, 7
          %v2780 = vsub.s32 %v2224, %v2779
          %v2781 = vrot.slane %v2659, %v2780
          %v2782 = vsel %vm2229, %v2781, %v2777
          %v2783 = vlaneseq
          %v2784 = vshrl.u32 %v2783, 7
          %v2785 = vsub.s32 %v2219, %v2784
          %v2786 = vrot.slane %v2662, %v2785
          %v2787 = vlaneseq
          %v2788 = vshrl.u32 %v2787, 7
          %v2789 = vsub.s32 %v2224, %v2788
          %v2790 = vrot.slane %v2665, %v2789
          %v2791 = vsel %vm2229, %v2790, %v2786
          %v2792 = vlaneseq
          %v2793 = vshrl.u32 %v2792, 7
          %v2794 = vsub.s32 %v2219, %v2793
          %v2795 = vrot.slane %v2668, %v2794
          %v2796 = vlaneseq
          %v2797 = vshrl.u32 %v2796, 7
          %v2798 = vsub.s32 %v2224, %v2797
          %v2799 = vrot.slane %v2671, %v2798
          %v2800 = vsel %vm2229, %v2799, %v2795
          %v2801 = vlaneseq
          %v2802 = vshrl.u32 %v2801, 7
          %v2803 = vsub.s32 %v2219, %v2802
          %v2804 = vrot.slane %v2674, %v2803
          %v2805 = vlaneseq
          %v2806 = vshrl.u32 %v2805, 7
          %v2807 = vsub.s32 %v2224, %v2806
          %v2808 = vrot.slane %v2677, %v2807
          %v2809 = vsel %vm2229, %v2808, %v2804
          %v2810 = vlaneseq
          %v2811 = vshrl.u32 %v2810, 7
          %v2812 = vsub.s32 %v2219, %v2811
          %v2813 = vrot.slane %v2680, %v2812
          %v2814 = vlaneseq
          %v2815 = vshrl.u32 %v2814, 7
          %v2816 = vsub.s32 %v2224, %v2815
          %v2817 = vrot.slane %v2683, %v2816
          %v2818 = vsel %vm2229, %v2817, %v2813
          %v2819 = vlaneseq
          %v2820 = vshrl.u32 %v2819, 7
          %v2821 = vsub.s32 %v2219, %v2820
          %v2822 = vrot.slane %v2686, %v2821
          %v2823 = vlaneseq
          %v2824 = vshrl.u32 %v2823, 7
          %v2825 = vsub.s32 %v2224, %v2824
          %v2826 = vrot.slane %v2689, %v2825
          %v2827 = vsel %vm2229, %v2826, %v2822
          %v2828 = vlaneseq
          %v2829 = vshrl.u32 %v2828, 7
          %v2830 = vsub.s32 %v2219, %v2829
          %v2831 = vrot.slane %v2692, %v2830
          %v2832 = vlaneseq
          %v2833 = vshrl.u32 %v2832, 7
          %v2834 = vsub.s32 %v2224, %v2833
          %v2835 = vrot.slane %v2695, %v2834
          %v2836 = vsel %vm2229, %v2835, %v2831
          %v2837 = vlaneseq
          %v2838 = vshrl.u32 %v2837, 7
          %v2839 = vsub.s32 %v2219, %v2838
          %v2840 = vrot.slane %v2698, %v2839
          %v2841 = vlaneseq
          %v2842 = vshrl.u32 %v2841, 7
          %v2843 = vsub.s32 %v2224, %v2842
          %v2844 = vrot.slane %v2701, %v2843
          %v2845 = vsel %vm2229, %v2844, %v2840
          %v2846 = vsel %vm2366, %v2719, %v2710
          %v2847 = vsel %vm2368, %v2728, %v2846
          %v2848 = vsel %vm2370, %v2737, %v2847
          %v2849 = vsel %vm2372, %v2746, %v2848
          %v2850 = vsel %vm2374, %v2755, %v2849
          %v2851 = vsel %vm2376, %v2764, %v2850
          %v2852 = vsel %vm2378, %v2773, %v2851
          %v2853 = vsel %vm2366, %v2791, %v2782
          %v2854 = vsel %vm2368, %v2800, %v2853
          %v2855 = vsel %vm2370, %v2809, %v2854
          %v2856 = vsel %vm2372, %v2818, %v2855
          %v2857 = vsel %vm2374, %v2827, %v2856
          %v2858 = vsel %vm2376, %v2836, %v2857
          %v2859 = vsel %vm2378, %v2845, %v2858
          %v2862 = vsel %vm2389, %v2852, 0.0
          %2863 = vadd.xlane.f32.xlu0 %v2862
          %v2864 = vpop.xlane.xlu0 %2863
          %v2865 = vsel %vm2389, %v2859, 0.0
          %2866 = vadd.xlane.f32.xlu0 %v2865
          %v2867 = vpop.xlane.xlu0 %2866
          %v2870 = vlaneseq
          %v2871 = vshrl.u32 %v2870, 7
          %v2872 = vsub.s32 0, %v2871
          %v2873 = vrot.slane %v2864, %v2872
          %v2874 = vlaneseq
          %v2875 = vshrl.u32 %v2874, 7
          %v2876 = vsub.s32 1, %v2875
          %v2877 = vrot.slane %v2864, %v2876
          %v2878 = vlaneseq
          %v2879 = vshrl.u32 %v2878, 7
          %v2880 = vsub.s32 2, %v2879
          %v2881 = vrot.slane %v2864, %v2880
          %v2882 = vlaneseq
          %v2883 = vshrl.u32 %v2882, 7
          %v2884 = vsub.s32 3, %v2883
          %v2885 = vrot.slane %v2864, %v2884
          %v2886 = vlaneseq
          %v2887 = vshrl.u32 %v2886, 7
          %v2888 = vsub.s32 4, %v2887
          %v2889 = vrot.slane %v2864, %v2888
          %v2890 = vlaneseq
          %v2891 = vshrl.u32 %v2890, 7
          %v2892 = vsub.s32 5, %v2891
          %v2893 = vrot.slane %v2864, %v2892
          %v2894 = vlaneseq
          %v2895 = vshrl.u32 %v2894, 7
          %v2896 = vsub.s32 6, %v2895
          %v2897 = vrot.slane %v2864, %v2896
          %v2898 = vlaneseq
          %v2899 = vshrl.u32 %v2898, 7
          %v2900 = vsub.s32 7, %v2899
          %v2901 = vrot.slane %v2864, %v2900
          %v2902 = vlaneseq
          %v2903 = vshrl.u32 %v2902, 7
          %v2904 = vsub.s32 0, %v2903
          %v2905 = vrot.slane %v2867, %v2904
          %v2906 = vlaneseq
          %v2907 = vshrl.u32 %v2906, 7
          %v2908 = vsub.s32 1, %v2907
          %v2909 = vrot.slane %v2867, %v2908
          %v2910 = vlaneseq
          %v2911 = vshrl.u32 %v2910, 7
          %v2912 = vsub.s32 2, %v2911
          %v2913 = vrot.slane %v2867, %v2912
          %v2914 = vlaneseq
          %v2915 = vshrl.u32 %v2914, 7
          %v2916 = vsub.s32 3, %v2915
          %v2917 = vrot.slane %v2867, %v2916
          %v2918 = vlaneseq
          %v2919 = vshrl.u32 %v2918, 7
          %v2920 = vsub.s32 4, %v2919
          %v2921 = vrot.slane %v2867, %v2920
          %v2922 = vlaneseq
          %v2923 = vshrl.u32 %v2922, 7
          %v2924 = vsub.s32 5, %v2923
          %v2925 = vrot.slane %v2867, %v2924
          %v2926 = vlaneseq
          %v2927 = vshrl.u32 %v2926, 7
          %v2928 = vsub.s32 6, %v2927
          %v2929 = vrot.slane %v2867, %v2928
          %v2930 = vlaneseq
          %v2931 = vshrl.u32 %v2930, 7
          %v2932 = vsub.s32 7, %v2931
          %v2933 = vrot.slane %v2867, %v2932
          %v2950 = vrcp.pop %v2873
          %v2951 = vmul.f32 %v2511, %v2950
          %v2952 = vmul.f32 %v2513, %v2950
          %v2953 = vrcp.pop %v2877
          %v2954 = vmul.f32 %v2515, %v2953
          %v2955 = vmul.f32 %v2517, %v2953
          %v2956 = vrcp.pop %v2881
          %v2957 = vmul.f32 %v2519, %v2956
          %v2958 = vmul.f32 %v2521, %v2956
          %v2959 = vrcp.pop %v2885
          %v2960 = vmul.f32 %v2523, %v2959
          %v2961 = vmul.f32 %v2525, %v2959
          %v2962 = vrcp.pop %v2889
          %v2963 = vmul.f32 %v2527, %v2962
          %v2964 = vmul.f32 %v2529, %v2962
          %v2965 = vrcp.pop %v2893
          %v2966 = vmul.f32 %v2531, %v2965
          %v2967 = vmul.f32 %v2533, %v2965
          %v2968 = vrcp.pop %v2897
          %v2969 = vmul.f32 %v2535, %v2968
          %v2970 = vmul.f32 %v2537, %v2968
          %v2971 = vrcp.pop %v2901
          %v2972 = vmul.f32 %v2539, %v2971
          %v2973 = vmul.f32 %v2541, %v2971
          %v2974 = vrcp.pop %v2905
          %v2975 = vmul.f32 %v2543, %v2974
          %v2976 = vmul.f32 %v2545, %v2974
          %v2977 = vrcp.pop %v2909
          %v2978 = vmul.f32 %v2547, %v2977
          %v2979 = vmul.f32 %v2549, %v2977
          %v2980 = vrcp.pop %v2913
          %v2981 = vmul.f32 %v2551, %v2980
          %v2982 = vmul.f32 %v2553, %v2980
          %v2983 = vrcp.pop %v2917
          %v2984 = vmul.f32 %v2555, %v2983
          %v2985 = vmul.f32 %v2557, %v2983
          %v2986 = vrcp.pop %v2921
          %v2987 = vmul.f32 %v2559, %v2986
          %v2988 = vmul.f32 %v2561, %v2986
          %v2989 = vrcp.pop %v2925
          %v2990 = vmul.f32 %v2563, %v2989
          %v2991 = vmul.f32 %v2565, %v2989
          %v2992 = vrcp.pop %v2929
          %v2993 = vmul.f32 %v2567, %v2992
          %v2994 = vmul.f32 %v2569, %v2992
          %v2995 = vrcp.pop %v2933
          %v2996 = vmul.f32 %v2571, %v2995
          %v2997 = vmul.f32 %v2573, %v2995
          %v2998 = vunpack.c.l.bf16 %v866
          %v2999 = vunpack.c.l.bf16 %v867
          %v3000 = vunpack.c.l.bf16 %v868
          %v3001 = vunpack.c.l.bf16 %v869
          %v3002 = vunpack.c.l.bf16 %v870
          %v3003 = vunpack.c.l.bf16 %v871
          %v3004 = vunpack.c.l.bf16 %v872
          %v3005 = vunpack.c.l.bf16 %v873
          %v3006 = vunpack.c.l.bf16 %v874
          %v3007 = vunpack.c.l.bf16 %v875
          %v3008 = vunpack.c.l.bf16 %v876
          %v3009 = vunpack.c.l.bf16 %v877
          %v3010 = vunpack.c.l.bf16 %v878
          %v3011 = vunpack.c.l.bf16 %v879
          %v3012 = vunpack.c.l.bf16 %v880
          %v3013 = vunpack.c.l.bf16 %v881
          %v3014 = vunpack.c.l.bf16 %v882
          %v3015 = vunpack.c.l.bf16 %v883
          %v3016 = vunpack.c.l.bf16 %v884
          %v3017 = vunpack.c.l.bf16 %v885
          %v3018 = vunpack.c.l.bf16 %v886
          %v3019 = vunpack.c.l.bf16 %v887
          %v3020 = vunpack.c.l.bf16 %v888
          %v3021 = vunpack.c.l.bf16 %v889
          %v3022 = vunpack.c.l.bf16 %v890
          %v3023 = vunpack.c.l.bf16 %v891
          %v3024 = vunpack.c.l.bf16 %v892
          %v3025 = vunpack.c.l.bf16 %v893
          %v3026 = vunpack.c.l.bf16 %v894
          %v3027 = vunpack.c.l.bf16 %v895
          %v3028 = vunpack.c.l.bf16 %v896
          %v3029 = vunpack.c.l.bf16 %v897
          %3031 = vset.pattern.permute.xlu0 0
          %3032 = vperm.xlu0 %3031, %v2951
          %v3033 = vpop.permute.xlu0 %3032
          %3036 = vset.pattern.permute.xlu0 0
          %3037 = vperm.xlu0 %3036, %v2952
          %v3038 = vpop.permute.xlu0 %3037
          %3041 = vset.pattern.permute.xlu0 0
          %3042 = vperm.xlu0 %3041, %v2954
          %v3043 = vpop.permute.xlu0 %3042
          %3046 = vset.pattern.permute.xlu0 0
          %3047 = vperm.xlu0 %3046, %v2955
          %v3048 = vpop.permute.xlu0 %3047
          %3051 = vset.pattern.permute.xlu0 0
          %3052 = vperm.xlu0 %3051, %v2957
          %v3053 = vpop.permute.xlu0 %3052
          %3056 = vset.pattern.permute.xlu0 0
          %3057 = vperm.xlu0 %3056, %v2958
          %v3058 = vpop.permute.xlu0 %3057
          %3061 = vset.pattern.permute.xlu0 0
          %3062 = vperm.xlu0 %3061, %v2960
          %v3063 = vpop.permute.xlu0 %3062
          %3066 = vset.pattern.permute.xlu0 0
          %3067 = vperm.xlu0 %3066, %v2961
          %v3068 = vpop.permute.xlu0 %3067
          %3071 = vset.pattern.permute.xlu0 0
          %3072 = vperm.xlu0 %3071, %v2963
          %v3073 = vpop.permute.xlu0 %3072
          %3076 = vset.pattern.permute.xlu0 0
          %3077 = vperm.xlu0 %3076, %v2964
          %v3078 = vpop.permute.xlu0 %3077
          %3081 = vset.pattern.permute.xlu0 0
          %3082 = vperm.xlu0 %3081, %v2966
          %v3083 = vpop.permute.xlu0 %3082
          %3086 = vset.pattern.permute.xlu0 0
          %3087 = vperm.xlu0 %3086, %v2967
          %v3088 = vpop.permute.xlu0 %3087
          %3091 = vset.pattern.permute.xlu0 0
          %3092 = vperm.xlu0 %3091, %v2969
          %v3093 = vpop.permute.xlu0 %3092
          %3096 = vset.pattern.permute.xlu0 0
          %3097 = vperm.xlu0 %3096, %v2970
          %v3098 = vpop.permute.xlu0 %3097
          %3101 = vset.pattern.permute.xlu0 0
          %3102 = vperm.xlu0 %3101, %v2972
          %v3103 = vpop.permute.xlu0 %3102
          %3106 = vset.pattern.permute.xlu0 0
          %3107 = vperm.xlu0 %3106, %v2973
          %v3108 = vpop.permute.xlu0 %3107
          %3111 = vset.pattern.permute.xlu0 0
          %3112 = vperm.xlu0 %3111, %v2975
          %v3113 = vpop.permute.xlu0 %3112
          %3116 = vset.pattern.permute.xlu0 0
          %3117 = vperm.xlu0 %3116, %v2976
          %v3118 = vpop.permute.xlu0 %3117
          %3121 = vset.pattern.permute.xlu0 0
          %3122 = vperm.xlu0 %3121, %v2978
          %v3123 = vpop.permute.xlu0 %3122
          %3126 = vset.pattern.permute.xlu0 0
          %3127 = vperm.xlu0 %3126, %v2979
          %v3128 = vpop.permute.xlu0 %3127
          %3131 = vset.pattern.permute.xlu0 0
          %3132 = vperm.xlu0 %3131, %v2981
          %v3133 = vpop.permute.xlu0 %3132
          %3136 = vset.pattern.permute.xlu0 0
          %3137 = vperm.xlu0 %3136, %v2982
          %v3138 = vpop.permute.xlu0 %3137
          %3141 = vset.pattern.permute.xlu0 0
          %3142 = vperm.xlu0 %3141, %v2984
          %v3143 = vpop.permute.xlu0 %3142
          %3146 = vset.pattern.permute.xlu0 0
          %3147 = vperm.xlu0 %3146, %v2985
          %v3148 = vpop.permute.xlu0 %3147
          %3151 = vset.pattern.permute.xlu0 0
          %3152 = vperm.xlu0 %3151, %v2987
          %v3153 = vpop.permute.xlu0 %3152
          %3156 = vset.pattern.permute.xlu0 0
          %3157 = vperm.xlu0 %3156, %v2988
          %v3158 = vpop.permute.xlu0 %3157
          %3161 = vset.pattern.permute.xlu0 0
          %3162 = vperm.xlu0 %3161, %v2990
          %v3163 = vpop.permute.xlu0 %3162
          %3166 = vset.pattern.permute.xlu0 0
          %3167 = vperm.xlu0 %3166, %v2991
          %v3168 = vpop.permute.xlu0 %3167
          %3171 = vset.pattern.permute.xlu0 0
          %3172 = vperm.xlu0 %3171, %v2993
          %v3173 = vpop.permute.xlu0 %3172
          %3176 = vset.pattern.permute.xlu0 0
          %3177 = vperm.xlu0 %3176, %v2994
          %v3178 = vpop.permute.xlu0 %3177
          %3181 = vset.pattern.permute.xlu0 0
          %3182 = vperm.xlu0 %3181, %v2996
          %v3183 = vpop.permute.xlu0 %3182
          %3186 = vset.pattern.permute.xlu0 0
          %3187 = vperm.xlu0 %3186, %v2997
          %v3188 = vpop.permute.xlu0 %3187
          %v3190 = vmul.f32 %v2998, %v3033
          %v3191 = vmul.f32 %v2999, %v3038
          %v3192 = vmul.f32 %v3000, %v3043
          %v3193 = vmul.f32 %v3001, %v3048
          %v3194 = vmul.f32 %v3002, %v3053
          %v3195 = vmul.f32 %v3003, %v3058
          %v3196 = vmul.f32 %v3004, %v3063
          %v3197 = vmul.f32 %v3005, %v3068
          %v3198 = vmul.f32 %v3006, %v3073
          %v3199 = vmul.f32 %v3007, %v3078
          %v3200 = vmul.f32 %v3008, %v3083
          %v3201 = vmul.f32 %v3009, %v3088
          %v3202 = vmul.f32 %v3010, %v3093
          %v3203 = vmul.f32 %v3011, %v3098
          %v3204 = vmul.f32 %v3012, %v3103
          %v3205 = vmul.f32 %v3013, %v3108
          %v3206 = vmul.f32 %v3014, %v3113
          %v3207 = vmul.f32 %v3015, %v3118
          %v3208 = vmul.f32 %v3016, %v3123
          %v3209 = vmul.f32 %v3017, %v3128
          %v3210 = vmul.f32 %v3018, %v3133
          %v3211 = vmul.f32 %v3019, %v3138
          %v3212 = vmul.f32 %v3020, %v3143
          %v3213 = vmul.f32 %v3021, %v3148
          %v3214 = vmul.f32 %v3022, %v3153
          %v3215 = vmul.f32 %v3023, %v3158
          %v3216 = vmul.f32 %v3024, %v3163
          %v3217 = vmul.f32 %v3025, %v3168
          %v3218 = vmul.f32 %v3026, %v3173
          %v3219 = vmul.f32 %v3027, %v3178
          %v3220 = vmul.f32 %v3028, %v3183
          %v3221 = vmul.f32 %v3029, %v3188
          %v3222 = vsel %vm1672, %v3190, 0.0
          %v3223 = vsel %vm1672, %v3191, 0.0
          %v3224 = vadd.f32 %v3222, %v3223
          %v3225 = vrot.slane %v3224, 4
          %v3226 = vadd.f32 %v3224, %v3225
          %v3227 = vrot.slane %v3226, 2
          %v3228 = vadd.f32 %v3226, %v3227
          %v3229 = vrot.slane %v3228, 1
          %v3230 = vadd.f32 %v3228, %v3229
          %v3231 = vsel %vm1672, %v3192, 0.0
          %v3232 = vsel %vm1672, %v3193, 0.0
          %v3233 = vadd.f32 %v3231, %v3232
          %v3234 = vrot.slane %v3233, 4
          %v3235 = vadd.f32 %v3233, %v3234
          %v3236 = vrot.slane %v3235, 2
          %v3237 = vadd.f32 %v3235, %v3236
          %v3238 = vrot.slane %v3237, 1
          %v3239 = vadd.f32 %v3237, %v3238
          %v3240 = vsel %vm1672, %v3194, 0.0
          %v3241 = vsel %vm1672, %v3195, 0.0
          %v3242 = vadd.f32 %v3240, %v3241
          %v3243 = vrot.slane %v3242, 4
          %v3244 = vadd.f32 %v3242, %v3243
          %v3245 = vrot.slane %v3244, 2
          %v3246 = vadd.f32 %v3244, %v3245
          %v3247 = vrot.slane %v3246, 1
          %v3248 = vadd.f32 %v3246, %v3247
          %v3249 = vsel %vm1672, %v3196, 0.0
          %v3250 = vsel %vm1672, %v3197, 0.0
          %v3251 = vadd.f32 %v3249, %v3250
          %v3252 = vrot.slane %v3251, 4
          %v3253 = vadd.f32 %v3251, %v3252
          %v3254 = vrot.slane %v3253, 2
          %v3255 = vadd.f32 %v3253, %v3254
          %v3256 = vrot.slane %v3255, 1
          %v3257 = vadd.f32 %v3255, %v3256
          %v3258 = vsel %vm1672, %v3198, 0.0
          %v3259 = vsel %vm1672, %v3199, 0.0
          %v3260 = vadd.f32 %v3258, %v3259
          %v3261 = vrot.slane %v3260, 4
          %v3262 = vadd.f32 %v3260, %v3261
          %v3263 = vrot.slane %v3262, 2
          %v3264 = vadd.f32 %v3262, %v3263
          %v3265 = vrot.slane %v3264, 1
          %v3266 = vadd.f32 %v3264, %v3265
          %v3267 = vsel %vm1672, %v3200, 0.0
          %v3268 = vsel %vm1672, %v3201, 0.0
          %v3269 = vadd.f32 %v3267, %v3268
          %v3270 = vrot.slane %v3269, 4
          %v3271 = vadd.f32 %v3269, %v3270
          %v3272 = vrot.slane %v3271, 2
          %v3273 = vadd.f32 %v3271, %v3272
          %v3274 = vrot.slane %v3273, 1
          %v3275 = vadd.f32 %v3273, %v3274
          %v3276 = vsel %vm1672, %v3202, 0.0
          %v3277 = vsel %vm1672, %v3203, 0.0
          %v3278 = vadd.f32 %v3276, %v3277
          %v3279 = vrot.slane %v3278, 4
          %v3280 = vadd.f32 %v3278, %v3279
          %v3281 = vrot.slane %v3280, 2
          %v3282 = vadd.f32 %v3280, %v3281
          %v3283 = vrot.slane %v3282, 1
          %v3284 = vadd.f32 %v3282, %v3283
          %v3285 = vsel %vm1672, %v3204, 0.0
          %v3286 = vsel %vm1672, %v3205, 0.0
          %v3287 = vadd.f32 %v3285, %v3286
          %v3288 = vrot.slane %v3287, 4
          %v3289 = vadd.f32 %v3287, %v3288
          %v3290 = vrot.slane %v3289, 2
          %v3291 = vadd.f32 %v3289, %v3290
          %v3292 = vrot.slane %v3291, 1
          %v3293 = vadd.f32 %v3291, %v3292
          %v3294 = vsel %vm1672, %v3206, 0.0
          %v3295 = vsel %vm1672, %v3207, 0.0
          %v3296 = vadd.f32 %v3294, %v3295
          %v3297 = vrot.slane %v3296, 4
          %v3298 = vadd.f32 %v3296, %v3297
          %v3299 = vrot.slane %v3298, 2
          %v3300 = vadd.f32 %v3298, %v3299
          %v3301 = vrot.slane %v3300, 1
          %v3302 = vadd.f32 %v3300, %v3301
          %v3303 = vsel %vm1672, %v3208, 0.0
          %v3304 = vsel %vm1672, %v3209, 0.0
          %v3305 = vadd.f32 %v3303, %v3304
          %v3306 = vrot.slane %v3305, 4
          %v3307 = vadd.f32 %v3305, %v3306
          %v3308 = vrot.slane %v3307, 2
          %v3309 = vadd.f32 %v3307, %v3308
          %v3310 = vrot.slane %v3309, 1
          %v3311 = vadd.f32 %v3309, %v3310
          %v3312 = vsel %vm1672, %v3210, 0.0
          %v3313 = vsel %vm1672, %v3211, 0.0
          %v3314 = vadd.f32 %v3312, %v3313
          %v3315 = vrot.slane %v3314, 4
          %v3316 = vadd.f32 %v3314, %v3315
          %v3317 = vrot.slane %v3316, 2
          %v3318 = vadd.f32 %v3316, %v3317
          %v3319 = vrot.slane %v3318, 1
          %v3320 = vadd.f32 %v3318, %v3319
          %v3321 = vsel %vm1672, %v3212, 0.0
          %v3322 = vsel %vm1672, %v3213, 0.0
          %v3323 = vadd.f32 %v3321, %v3322
          %v3324 = vrot.slane %v3323, 4
          %v3325 = vadd.f32 %v3323, %v3324
          %v3326 = vrot.slane %v3325, 2
          %v3327 = vadd.f32 %v3325, %v3326
          %v3328 = vrot.slane %v3327, 1
          %v3329 = vadd.f32 %v3327, %v3328
          %v3330 = vsel %vm1672, %v3214, 0.0
          %v3331 = vsel %vm1672, %v3215, 0.0
          %v3332 = vadd.f32 %v3330, %v3331
          %v3333 = vrot.slane %v3332, 4
          %v3334 = vadd.f32 %v3332, %v3333
          %v3335 = vrot.slane %v3334, 2
          %v3336 = vadd.f32 %v3334, %v3335
          %v3337 = vrot.slane %v3336, 1
          %v3338 = vadd.f32 %v3336, %v3337
          %v3339 = vsel %vm1672, %v3216, 0.0
          %v3340 = vsel %vm1672, %v3217, 0.0
          %v3341 = vadd.f32 %v3339, %v3340
          %v3342 = vrot.slane %v3341, 4
          %v3343 = vadd.f32 %v3341, %v3342
          %v3344 = vrot.slane %v3343, 2
          %v3345 = vadd.f32 %v3343, %v3344
          %v3346 = vrot.slane %v3345, 1
          %v3347 = vadd.f32 %v3345, %v3346
          %v3348 = vsel %vm1672, %v3218, 0.0
          %v3349 = vsel %vm1672, %v3219, 0.0
          %v3350 = vadd.f32 %v3348, %v3349
          %v3351 = vrot.slane %v3350, 4
          %v3352 = vadd.f32 %v3350, %v3351
          %v3353 = vrot.slane %v3352, 2
          %v3354 = vadd.f32 %v3352, %v3353
          %v3355 = vrot.slane %v3354, 1
          %v3356 = vadd.f32 %v3354, %v3355
          %v3357 = vsel %vm1672, %v3220, 0.0
          %v3358 = vsel %vm1672, %v3221, 0.0
          %v3359 = vadd.f32 %v3357, %v3358
          %v3360 = vrot.slane %v3359, 4
          %v3361 = vadd.f32 %v3359, %v3360
          %v3362 = vrot.slane %v3361, 2
          %v3363 = vadd.f32 %v3361, %v3362
          %v3364 = vrot.slane %v3363, 1
          %v3365 = vadd.f32 %v3363, %v3364
          %v3366 = vld [vmem:[#allocation28] sm:$0xf]
          %v3367 = vld [vmem:[#allocation28 + $0x4] sm:$0xf]
          %v3368 = vld [vmem:[#allocation28 + $0x8] sm:$0xf]
          %v3369 = vld [vmem:[#allocation28 + $0xc] sm:$0xf]
          %v3370 = vld [vmem:[#allocation29] sm:$0x1]
          %v3372 = vlaneseq
          %v3373 = vshrl.u32 %v3372, 7
          %v3374 = vsub.s32 0, %v3373
          %v3375 = vrot.slane %v3370, %v3374
          %v3381 = vunpack.c.l.b16 %v3366
          %v3382 = vunpack.c.l.b16 %v3367
          %v3383 = vunpack.c.l.b16 %v3368
          %v3384 = vunpack.c.l.b16 %v3369
          %v3385 = vpack.c.b16 %v3382, %v3381
          %v3386 = vpack.c.b16 %v3384, %v3383
          %3389 = vmatprep.subr.bf16.mxu0 0
          %3390 = vmatpush1.bf16.msra.mxu0 %v3385
          %3391 = vmatprep.subr.bf16.mxu0 0
          %3392 = vmatpush1.bf16.msra.mxu0 %v3386
          %3393 = vmatprep.subr.bf16.mxu0 0
          %3394 = vmatpush1.bf16.msra.mxu0 0
          %3395 = vmatprep.subr.bf16.mxu0 0
          %3396 = vmatpush1.bf16.msra.mxu0 0
          %3397 = vmatprep.subr.bf16.mxu0 0
          %3398 = vmatpush1.bf16.msra.mxu0 0
          %3399 = vmatprep.subr.bf16.mxu0 0
          %3400 = vmatpush1.bf16.msra.mxu0 0
          %3401 = vmatprep.subr.bf16.mxu0 0
          %3402 = vmatpush1.bf16.msra.mxu0 0
          %3403 = vmatprep.subr.bf16.mxu0 0
          %3404 = vmatpush1.bf16.msra.mxu0 0
          %3405 = vmatprep.subr.bf16.mxu0 0
          %3406 = vmatpush1.bf16.msra.mxu0 0
          %3407 = vmatprep.subr.bf16.mxu0 0
          %3408 = vmatpush1.bf16.msra.mxu0 0
          %3409 = vmatprep.subr.bf16.mxu0 0
          %3410 = vmatpush1.bf16.msra.mxu0 0
          %3411 = vmatprep.subr.bf16.mxu0 0
          %3412 = vmatpush1.bf16.msra.mxu0 0
          %3413 = vmatprep.subr.bf16.mxu0 0
          %3414 = vmatpush1.bf16.msra.mxu0 0
          %3415 = vmatprep.subr.bf16.mxu0 0
          %3416 = vmatpush1.bf16.msra.mxu0 0
          %3417 = vmatprep.subr.bf16.mxu0 0
          %3418 = vmatpush1.bf16.msra.mxu0 0
          %3419 = vmatprep.subr.bf16.mxu0 0
          %3420 = vmatpush1.bf16.msra.mxu0 0
          %3421 = vmatprep.mubr.bf16.mxu0 0
          %3422 = vmatmul.mubr.bf16.gmra.mrb[0].mxu0 %v1674
          %v3423 = vpop.f32.mrb[0].mxu0
          %v3424 = vadd.f32 %v3375, %v3423
          %v3425 = vpop.f32.mrb[0].mxu0
          %v3426 = vpop.f32.mrb[0].mxu0
          %v3427 = vadd.f32 %v3375, %v3426
          %v3428 = vpop.f32.mrb[0].mxu0
          %3429 = vdwg.mxu0
          %v3430 = vxor.u32 %v3424, 2147483648
          %v3431 = vxor.u32 %v3427, 2147483648
          %v3432 = vmul.f32 %v3430, 1.442695
          %v3433 = vpow.pop %v3432
          %v3434 = vmul.f32 %v3431, 1.442695
          %v3435 = vpow.pop %v3434
          %v3436 = vadd.f32 %v3433, 1.0
          %v3437 = vadd.f32 %v3435, 1.0
          %v3438 = vrcp.pop %v3436
          %v3439 = vmul.f32 1.0, %v3438
          %v3440 = vrcp.pop %v3437
          %v3441 = vmul.f32 1.0, %v3440
          %v3458 = vsel %vm2366, %v3239, %v3230
          %v3459 = vsel %vm2368, %v3248, %v3458
          %v3460 = vsel %vm2370, %v3257, %v3459
          %v3461 = vsel %vm2372, %v3266, %v3460
          %v3462 = vsel %vm2374, %v3275, %v3461
          %v3463 = vsel %vm2376, %v3284, %v3462
          %v3464 = vsel %vm2378, %v3293, %v3463
          %v3465 = vsel %vm2366, %v3311, %v3302
          %v3466 = vsel %vm2368, %v3320, %v3465
          %v3467 = vsel %vm2370, %v3329, %v3466
          %v3468 = vsel %vm2372, %v3338, %v3467
          %v3469 = vsel %vm2374, %v3347, %v3468
          %v3470 = vsel %vm2376, %v3356, %v3469
          %v3471 = vsel %vm2378, %v3365, %v3470
          %v3474 = vmul.f32 %v3439, %v3464
          %v3475 = vmul.f32 %v3441, %v3471
          %v3476 = vld [vmem:[%s736] sm:$0xf]
          %v3477 = vld [vmem:[%s736 + $0x4] sm:$0xf]
          %v3478 = vpack.c.bf16 %v3475, %v3474
          %v3481 = vunpack.c.l.b16 %v3476
          %v3482 = vunpack.c.l.b16 %v3477
          %v3483 = vpack.c.b16 %v3482, %v3481
          %3485 = vrot.lane.b32.xlu0 %v3478, 32
          %v3486 = vpop.permute.xlu0 %3485
          %3488 = vrot.lane.b32.xlu0 %v1648, 64
          %v3489 = vpop.permute.xlu0 %3488
          %v3492 = vsel %vm1672, %v3483, %v3486
          %vm3493 = vcmask 523264
          %v3495 = vsel %vm3493, %v3492, %v3489
          %v3496 = vld [vmem:[#allocation31] sm:$0xf]
          %v3497 = vld [vmem:[#allocation31 + $0x4] sm:$0xf]
          %v3498 = vld [vmem:[#allocation31 + $0x8] sm:$0xf]
          %v3499 = vld [vmem:[#allocation31 + $0xc] sm:$0xf]
          %v3500 = vld [vmem:[#allocation31 + $0x10] sm:$0xf]
          %v3501 = vld [vmem:[#allocation31 + $0x14] sm:$0xf]
          %v3502 = vld [vmem:[#allocation31 + $0x18] sm:$0xf]
          %v3503 = vld [vmem:[#allocation31 + $0x1c] sm:$0xf]
          %v3504 = vld [vmem:[#allocation31 + $0x20] sm:$0xf]
          %v3505 = vld [vmem:[#allocation31 + $0x24] sm:$0xf]
          %v3506 = vld [vmem:[#allocation31 + $0x28] sm:$0xf]
          %v3507 = vld [vmem:[#allocation31 + $0x2c] sm:$0xf]
          %v3508 = vld [vmem:[#allocation32] sm:$0x1]
          %v3510 = vlaneseq
          %v3511 = vshrl.u32 %v3510, 7
          %v3512 = vsub.s32 0, %v3511
          %v3513 = vrot.slane %v3508, %v3512
          %v3527 = vunpack.c.l.b16 %v3496
          %v3528 = vunpack.c.l.b16 %v3497
          %v3529 = vunpack.c.l.b16 %v3498
          %v3530 = vunpack.c.l.b16 %v3499
          %v3531 = vunpack.c.l.b16 %v3500
          %v3532 = vunpack.c.l.b16 %v3501
          %v3533 = vunpack.c.l.b16 %v3502
          %v3534 = vunpack.c.l.b16 %v3503
          %v3535 = vunpack.c.l.b16 %v3504
          %v3536 = vunpack.c.l.b16 %v3505
          %v3537 = vunpack.c.l.b16 %v3506
          %v3538 = vunpack.c.l.b16 %v3507
          %v3539 = vpack.c.b16 %v3528, %v3527
          %v3540 = vpack.c.b16 %v3530, %v3529
          %v3541 = vpack.c.b16 %v3532, %v3531
          %v3542 = vpack.c.b16 %v3534, %v3533
          %v3543 = vpack.c.b16 %v3536, %v3535
          %v3544 = vpack.c.b16 %v3538, %v3537
          %vm3551 = vcmask 785408
          %v3552 = vsel %vm3551, %v3495, 0
          %3554 = vmatprep.subr.bf16.mxu0 0
          %3555 = vmatpush1.bf16.msra.mxu0 %v3539
          %3556 = vmatprep.subr.bf16.mxu0 0
          %3557 = vmatpush1.bf16.msra.mxu0 %v3540
          %3558 = vmatprep.subr.bf16.mxu0 0
          %3559 = vmatpush1.bf16.msra.mxu0 %v3541
          %3560 = vmatprep.subr.bf16.mxu0 0
          %3561 = vmatpush1.bf16.msra.mxu0 %v3542
          %3562 = vmatprep.subr.bf16.mxu0 0
          %3563 = vmatpush1.bf16.msra.mxu0 %v3543
          %3564 = vmatprep.subr.bf16.mxu0 0
          %3565 = vmatpush1.bf16.msra.mxu0 %v3544
          %3566 = vmatprep.subr.bf16.mxu0 0
          %3567 = vmatpush1.bf16.msra.mxu0 0
          %3568 = vmatprep.subr.bf16.mxu0 0
          %3569 = vmatpush1.bf16.msra.mxu0 0
          %3570 = vmatprep.subr.bf16.mxu0 0
          %3571 = vmatpush1.bf16.msra.mxu0 0
          %3572 = vmatprep.subr.bf16.mxu0 0
          %3573 = vmatpush1.bf16.msra.mxu0 0
          %3574 = vmatprep.subr.bf16.mxu0 0
          %3575 = vmatpush1.bf16.msra.mxu0 0
          %3576 = vmatprep.subr.bf16.mxu0 0
          %3577 = vmatpush1.bf16.msra.mxu0 0
          %3578 = vmatprep.subr.bf16.mxu0 0
          %3579 = vmatpush1.bf16.msra.mxu0 0
          %3580 = vmatprep.subr.bf16.mxu0 0
          %3581 = vmatpush1.bf16.msra.mxu0 0
          %3582 = vmatprep.subr.bf16.mxu0 0
          %3583 = vmatpush1.bf16.msra.mxu0 0
          %3584 = vmatprep.subr.bf16.mxu0 0
          %3585 = vmatpush1.bf16.msra.mxu0 0
          %3586 = vmatprep.mubr.bf16.mxu0 0
          %3587 = vmatmul.mubr.bf16.gmra.mrb[0].mxu0 %v3552
          %v3588 = vpop.f32.mrb[0].mxu0
          %v3589 = vadd.f32 %v3513, %v3588
          %v3590 = vpop.f32.mrb[0].mxu0
          %v3591 = vpop.f32.mrb[0].mxu0
          %v3592 = vadd.f32 %v3513, %v3591
          %v3593 = vpop.f32.mrb[0].mxu0
          %3594 = vdwg.mxu0
          %v3595 = vxor.u32 %v3589, 2147483648
          %v3596 = vxor.u32 %v3592, 2147483648
          %v3597 = vmul.f32 %v3595, 1.442695
          %v3598 = vpow.pop %v3597
          %v3599 = vmul.f32 %v3596, 1.442695
          %v3600 = vpow.pop %v3599
          %v3601 = vadd.f32 %v3598, 1.0
          %v3602 = vadd.f32 %v3600, 1.0
          %v3603 = vrcp.pop %v3601
          %v3604 = vmul.f32 1.0, %v3603
          %v3605 = vrcp.pop %v3602
          %v3606 = vmul.f32 1.0, %v3605
          %v3607 = vtanh.pop %v3589
          %v3608 = vtanh.pop %v3592
          %3611 = vrot.lane.b32.xlu0 %v1646, 32
          %v3612 = vpop.permute.xlu0 %3611
          %3613 = vrot.lane.b32.xlu0 %v1647, 32
          %v3614 = vpop.permute.xlu0 %3613
          %v3617 = vmul.f32 %v3604, %v3612
          %v3618 = vmul.f32 %v3606, %v3614
          %3621 = vrot.lane.b32.xlu0 %v3607, 64
          %v3622 = vpop.permute.xlu0 %3621
          %3623 = vrot.lane.b32.xlu0 %v3608, 64
          %v3624 = vpop.permute.xlu0 %3623
          %v3627 = vmul.f32 %v3604, %v3622
          %v3628 = vmul.f32 %v3606, %v3624
          %3631 = vrot.lane.b32.xlu0 %v3627, 32
          %v3632 = vpop.permute.xlu0 %3631
          %3633 = vrot.lane.b32.xlu0 %v3628, 32
          %v3634 = vpop.permute.xlu0 %3633
          %v3637 = vadd.f32 %v3617, %v3632
          %v3638 = vadd.f32 %v3618, %v3634
          %v3639 = vtanh.pop %v3637
          %v3640 = vtanh.pop %v3638
          %3643 = vrot.lane.b32.xlu0 %v3639, 64
          %v3644 = vpop.permute.xlu0 %3643
          %3645 = vrot.lane.b32.xlu0 %v3640, 64
          %v3646 = vpop.permute.xlu0 %3645
          %v3649 = vmul.f32 %v3604, %v3644
          %v3650 = vmul.f32 %v3606, %v3646
          %v3651 = vsel %vm859, 1, 0
          %v3652 = vsel %vm860, 1, 0
          %3653 = vset.pattern.permute.xlu0 0
          %3654 = vperm.xlu0 %3653, %v3651
          %v3655 = vpop.permute.xlu0 %3654
          %3656 = vset.pattern.permute.xlu0 0
          %3657 = vperm.xlu0 %3656, %v3652
          %v3658 = vpop.permute.xlu0 %3657
          %vm3659 = vcmp.eq.s32.totalorder %v3655, 1
          %vm3660 = vcmp.eq.s32.totalorder %v3658, 1
          %3663 = vrot.lane.b32.xlu0 %v1644, 96
          %v3664 = vpop.permute.xlu0 %3663
          %3665 = vrot.lane.b32.xlu0 %v1645, 96
          %v3666 = vpop.permute.xlu0 %3665
          %v3669 = vsel %vm3659, %v3649, %v3664
          %v3670 = vsel %vm3660, %v3650, %v3666
          %3673 = vrot.lane.b32.xlu0 %v3669, 32
          %v3674 = vpop.permute.xlu0 %3673
          %3675 = vrot.lane.b32.xlu0 %v3670, 32
          %v3676 = vpop.permute.xlu0 %3675
          %3679 = vst.msk [vmem:[#allocation2] sm:$0xff] %vm1672, %v3674
          %3680 = vst.msk [vmem:[#allocation2 + $0x8] sm:$0xff] %vm1672, %v3676
          %v3681 = vsel %vm3659, %v3637, %v3612
          %v3682 = vsel %vm3660, %v3638, %v3614
          %3685 = vrot.lane.b32.xlu0 %v3681, 96
          %v3686 = vpop.permute.xlu0 %3685
          %3687 = vrot.lane.b32.xlu0 %v3682, 96
          %v3688 = vpop.permute.xlu0 %3687
          %3691 = vst.msk [vmem:[#allocation3] sm:$0xff] %vm1672, %v3686
          %3692 = vst.msk [vmem:[#allocation3 + $0x8] sm:$0xff] %vm1672, %v3688
          %v3693 = vsel %vm3659, %v3649, 0.0
          %v3694 = vsel %vm3660, %v3650, 0.0
          %v3695 = vpack.c.bf16 %v3694, %v3693
          %v3697 = vunpack.c.l.b16 %v3695
          %v3698 = vunpack.c.h.b16 %v3695
          %v3699 = vpack.c.b16 %v3697, %v3697
          %v3700 = vpack.c.b16 %v3698, %v3698
          %3701 = vrot.lane.b32.xlu0 %v3699, 32
          %v3702 = vpop.permute.xlu0 %3701
          %3703 = vrot.lane.b32.xlu0 %v3700, 32
          %v3704 = vpop.permute.xlu0 %3703
          %vm3707 = vcmask 257024
          %3708 = vst.msk [vmem:[%s842] sm:$0xf] %vm3707, %v3702
          %3709 = vst.msk [vmem:[%s842 + $0x4] sm:$0xf] %vm3707, %v3704
          %v3710 = vlaneseq
          %v3711 = vshrl.u32 %v3710, 7
          %v3712 = vsub.s32 %v2219, %v3711
          %v3713 = vrot.slane %v3033, %v3712
          %v3714 = vlaneseq
          %v3715 = vshrl.u32 %v3714, 7
          %v3716 = vsub.s32 %v2224, %v3715
          %v3717 = vrot.slane %v3038, %v3716
          %v3718 = vsel %vm2229, %v3717, %v3713
          %v3719 = vlaneseq
          %v3720 = vshrl.u32 %v3719, 7
          %v3721 = vsub.s32 %v2219, %v3720
          %v3722 = vrot.slane %v3043, %v3721
          %v3723 = vlaneseq
          %v3724 = vshrl.u32 %v3723, 7
          %v3725 = vsub.s32 %v2224, %v3724
          %v3726 = vrot.slane %v3048, %v3725
          %v3727 = vsel %vm2229, %v3726, %v3722
          %v3728 = vlaneseq
          %v3729 = vshrl.u32 %v3728, 7
          %v3730 = vsub.s32 %v2219, %v3729
          %v3731 = vrot.slane %v3053, %v3730
          %v3732 = vlaneseq
          %v3733 = vshrl.u32 %v3732, 7
          %v3734 = vsub.s32 %v2224, %v3733
          %v3735 = vrot.slane %v3058, %v3734
          %v3736 = vsel %vm2229, %v3735, %v3731
          %v3737 = vlaneseq
          %v3738 = vshrl.u32 %v3737, 7
          %v3739 = vsub.s32 %v2219, %v3738
          %v3740 = vrot.slane %v3063, %v3739
          %v3741 = vlaneseq
          %v3742 = vshrl.u32 %v3741, 7
          %v3743 = vsub.s32 %v2224, %v3742
          %v3744 = vrot.slane %v3068, %v3743
          %v3745 = vsel %vm2229, %v3744, %v3740
          %v3746 = vlaneseq
          %v3747 = vshrl.u32 %v3746, 7
          %v3748 = vsub.s32 %v2219, %v3747
          %v3749 = vrot.slane %v3073, %v3748
          %v3750 = vlaneseq
          %v3751 = vshrl.u32 %v3750, 7
          %v3752 = vsub.s32 %v2224, %v3751
          %v3753 = vrot.slane %v3078, %v3752
          %v3754 = vsel %vm2229, %v3753, %v3749
          %v3755 = vlaneseq
          %v3756 = vshrl.u32 %v3755, 7
          %v3757 = vsub.s32 %v2219, %v3756
          %v3758 = vrot.slane %v3083, %v3757
          %v3759 = vlaneseq
          %v3760 = vshrl.u32 %v3759, 7
          %v3761 = vsub.s32 %v2224, %v3760
          %v3762 = vrot.slane %v3088, %v3761
          %v3763 = vsel %vm2229, %v3762, %v3758
          %v3764 = vlaneseq
          %v3765 = vshrl.u32 %v3764, 7
          %v3766 = vsub.s32 %v2219, %v3765
          %v3767 = vrot.slane %v3093, %v3766
          %v3768 = vlaneseq
          %v3769 = vshrl.u32 %v3768, 7
          %v3770 = vsub.s32 %v2224, %v3769
          %v3771 = vrot.slane %v3098, %v3770
          %v3772 = vsel %vm2229, %v3771, %v3767
          %v3773 = vlaneseq
          %v3774 = vshrl.u32 %v3773, 7
          %v3775 = vsub.s32 %v2219, %v3774
          %v3776 = vrot.slane %v3103, %v3775
          %v3777 = vlaneseq
          %v3778 = vshrl.u32 %v3777, 7
          %v3779 = vsub.s32 %v2224, %v3778
          %v3780 = vrot.slane %v3108, %v3779
          %v3781 = vsel %vm2229, %v3780, %v3776
          %v3782 = vlaneseq
          %v3783 = vshrl.u32 %v3782, 7
          %v3784 = vsub.s32 %v2219, %v3783
          %v3785 = vrot.slane %v3113, %v3784
          %v3786 = vlaneseq
          %v3787 = vshrl.u32 %v3786, 7
          %v3788 = vsub.s32 %v2224, %v3787
          %v3789 = vrot.slane %v3118, %v3788
          %v3790 = vsel %vm2229, %v3789, %v3785
          %v3791 = vlaneseq
          %v3792 = vshrl.u32 %v3791, 7
          %v3793 = vsub.s32 %v2219, %v3792
          %v3794 = vrot.slane %v3123, %v3793
          %v3795 = vlaneseq
          %v3796 = vshrl.u32 %v3795, 7
          %v3797 = vsub.s32 %v2224, %v3796
          %v3798 = vrot.slane %v3128, %v3797
          %v3799 = vsel %vm2229, %v3798, %v3794
          %v3800 = vlaneseq
          %v3801 = vshrl.u32 %v3800, 7
          %v3802 = vsub.s32 %v2219, %v3801
          %v3803 = vrot.slane %v3133, %v3802
          %v3804 = vlaneseq
          %v3805 = vshrl.u32 %v3804, 7
          %v3806 = vsub.s32 %v2224, %v3805
          %v3807 = vrot.slane %v3138, %v3806
          %v3808 = vsel %vm2229, %v3807, %v3803
          %v3809 = vlaneseq
          %v3810 = vshrl.u32 %v3809, 7
          %v3811 = vsub.s32 %v2219, %v3810
          %v3812 = vrot.slane %v3143, %v3811
          %v3813 = vlaneseq
          %v3814 = vshrl.u32 %v3813, 7
          %v3815 = vsub.s32 %v2224, %v3814
          %v3816 = vrot.slane %v3148, %v3815
          %v3817 = vsel %vm2229, %v3816, %v3812
          %v3818 = vlaneseq
          %v3819 = vshrl.u32 %v3818, 7
          %v3820 = vsub.s32 %v2219, %v3819
          %v3821 = vrot.slane %v3153, %v3820
          %v3822 = vlaneseq
          %v3823 = vshrl.u32 %v3822, 7
          %v3824 = vsub.s32 %v2224, %v3823
          %v3825 = vrot.slane %v3158, %v3824
          %v3826 = vsel %vm2229, %v3825, %v3821
          %v3827 = vlaneseq
          %v3828 = vshrl.u32 %v3827, 7
          %v3829 = vsub.s32 %v2219, %v3828
          %v3830 = vrot.slane %v3163, %v3829
          %v3831 = vlaneseq
          %v3832 = vshrl.u32 %v3831, 7
          %v3833 = vsub.s32 %v2224, %v3832
          %v3834 = vrot.slane %v3168, %v3833
          %v3835 = vsel %vm2229, %v3834, %v3830
          %v3836 = vlaneseq
          %v3837 = vshrl.u32 %v3836, 7
          %v3838 = vsub.s32 %v2219, %v3837
          %v3839 = vrot.slane %v3173, %v3838
          %v3840 = vlaneseq
          %v3841 = vshrl.u32 %v3840, 7
          %v3842 = vsub.s32 %v2224, %v3841
          %v3843 = vrot.slane %v3178, %v3842
          %v3844 = vsel %vm2229, %v3843, %v3839
          %v3845 = vlaneseq
          %v3846 = vshrl.u32 %v3845, 7
          %v3847 = vsub.s32 %v2219, %v3846
          %v3848 = vrot.slane %v3183, %v3847
          %v3849 = vlaneseq
          %v3850 = vshrl.u32 %v3849, 7
          %v3851 = vsub.s32 %v2224, %v3850
          %v3852 = vrot.slane %v3188, %v3851
          %v3853 = vsel %vm2229, %v3852, %v3848
          %v3854 = vsel %vm2366, %v3727, %v3718
          %v3855 = vsel %vm2368, %v3736, %v3854
          %v3856 = vsel %vm2370, %v3745, %v3855
          %v3857 = vsel %vm2372, %v3754, %v3856
          %v3858 = vsel %vm2374, %v3763, %v3857
          %v3859 = vsel %vm2376, %v3772, %v3858
          %v3860 = vsel %vm2378, %v3781, %v3859
          %v3861 = vsel %vm2366, %v3799, %v3790
          %v3862 = vsel %vm2368, %v3808, %v3861
          %v3863 = vsel %vm2370, %v3817, %v3862
          %v3864 = vsel %vm2372, %v3826, %v3863
          %v3865 = vsel %vm2374, %v3835, %v3864
          %v3866 = vsel %vm2376, %v3844, %v3865
          %v3867 = vsel %vm2378, %v3853, %v3866
          %v3870 = vsel %vm3659, %v3860, 0.0
          %v3871 = vsel %vm3660, %v3867, 0.0
          %3872 = vst.msk [vmem:[%s849] sm:$0xff] %vm2389, %v3870
          %3873 = vst.msk [vmem:[%s849 + $0x8] sm:$0xff] %vm2389, %v3871
        $region156: #{tpu_custom_call.1} parent=87 // pred_fallthru
          _
        %p3874 = scmp.le.s32.totalorder %s861, %s56
        // Predicated region
        $region161: #{tpu_custom_call.1} parent=87 // pred_check
          %p3875 = pneg %p3874
        $region162: #{tpu_custom_call.1} parent=87 // pred_check_branch
          %3877 = sbr.rel (%p3875) target = $region164
        $region163: #{tpu_custom_call.1} parent=87 // pred_region
          %vm3878 = vcmask 257024
          %3879 = vst.msk [vmem:[%s842] sm:$0xf] %vm3878, 0
          %3880 = vst.msk [vmem:[%s842 + $0x4] sm:$0xf] %vm3878, 0
          %vm3881 = vcmask 130048
          %3882 = vst.msk [vmem:[%s849] sm:$0xff] %vm3881, 0.0
          %3883 = vst.msk [vmem:[%s849 + $0x8] sm:$0xff] %vm3881, 0.0
        $region164: #{tpu_custom_call.1} parent=87 // pred_fallthru
          _
        %s3884 = sand.u32 %s447, 1
        %s3885 = scalar_lea.sflag [#allocation10], %s3884
        %s3886 = sand.u32 %s447, 1
        %s3887 = smul.addr %s3886, 8
        %s3888 = scalar_lea.vmem [#allocation34], %s3887
        %s3889 = sand.u32 %s475, 1
        %s3890 = scalar_lea.sflag [#allocation36], %s3889
        %s3891 = sand.u32 %s475, 1
        %s3892 = smul.addr %s3891, 16
        %s3893 = scalar_lea.vmem [#allocation35], %s3892
        // Predicated region
        $region165: #{tpu_custom_call.1} parent=87 // pred_check
          %p3894 = pneg %p457
        $region166: #{tpu_custom_call.1} parent=87 // pred_check_branch
          %3896 = sbr.rel (%p3894) target = $region168
        $region167: #{tpu_custom_call.1} parent=87 // pred_region
          %s3897 = smul.u32 2, %s55
          %s3899 = ssub.s32 128, 128
          %3900 = vsyncadd %s3885, %s3899
          %s3901 = smul.addr %s56, 2
          %s3902 = sadd.s32 %s3897, %s3901
          %s3903 = smul.addr %s3902, 64
          %s3904 = scalar_lea.hbm %s18, %s3903
          %s3905 = sshll.u32 %s3888, 4
          %s3906 = int_to_ptr.vmem [resolvable:$true] %s3905
          %3911 = dma.vmem_to_hbm [thread:$0]  %s3906, 128, %s3904, %s3885, 64, 64, 4
        $region168: #{tpu_custom_call.1} parent=87 // pred_fallthru
          _
        // Predicated region
        $region169: #{tpu_custom_call.1} parent=87 // pred_check
          %p3912 = pneg %p485
        $region170: #{tpu_custom_call.1} parent=87 // pred_check_branch
          %3914 = sbr.rel (%p3912) target = $region172
        $region171: #{tpu_custom_call.1} parent=87 // pred_region
          %s3915 = smul.u32 2, %s55
          %s3917 = ssub.s32 256, 256
          %3918 = vsyncadd %s3890, %s3917
          %s3919 = smul.addr %s56, 2
          %s3920 = sadd.s32 %s3915, %s3919
          %s3921 = smul.addr %s3920, 128
          %s3922 = scalar_lea.hbm %s19, %s3921
          %s3923 = sshll.u32 %s3893, 4
          %s3924 = int_to_ptr.vmem [resolvable:$true] %s3923
          %3929 = dma.vmem_to_hbm [thread:$0]  %s3924, 256, %s3922, %s3890, 128, 128, 8
        $region172: #{tpu_custom_call.1} parent=87 // pred_fallthru
          _
      $region88: #{tpu_custom_call.1} parent=5 // pred_fallthru
        _
      %p3930 = scmp.le.s32.totalorder 2, %s46
      // Predicated region
      $region173: #{tpu_custom_call.1} parent=5 // pred_check
        %p3931 = pneg %p3930
      $region174: #{tpu_custom_call.1} parent=5 // pred_check_branch
        %3933 = sbr.rel (%p3931) target = $region176
      $region175: #{tpu_custom_call.1} parent=5 // pred_region
        %s3934 = ssub.s32 %s46, 2
        // Predicated region
        $region177: #{tpu_custom_call.1} parent=175 // pred_check
          %p3935 = pneg %p463
        $region178: #{tpu_custom_call.1} parent=175 // pred_check_branch
          %3937 = sbr.rel (%p3935) target = $region180
        $region179: #{tpu_custom_call.1} parent=175 // pred_region
          %s3938 = sand.u32 %s448, 1
          %s3939 = scalar_lea.sflag [#allocation10], %s3938
          %s3940 = sand.u32 %s448, 1
          %s3941 = smul.addr %s3940, 8
          %s3942 = scalar_lea.vmem [#allocation34], %s3941
          %3943 = dma.done %s3939, 128
        $region180: #{tpu_custom_call.1} parent=175 // pred_fallthru
          _
        // Predicated region
        $region181: #{tpu_custom_call.1} parent=175 // pred_check
          %p3944 = pneg %p491
        $region182: #{tpu_custom_call.1} parent=175 // pred_check_branch
          %3946 = sbr.rel (%p3944) target = $region184
        $region183: #{tpu_custom_call.1} parent=175 // pred_region
          %s3947 = sand.u32 %s476, 1
          %s3948 = scalar_lea.sflag [#allocation36], %s3947
          %s3949 = sand.u32 %s476, 1
          %s3950 = smul.addr %s3949, 16
          %s3951 = scalar_lea.vmem [#allocation35], %s3950
          %3952 = dma.done %s3948, 256
        $region184: #{tpu_custom_call.1} parent=175 // pred_fallthru
          _
      $region176: #{tpu_custom_call.1} parent=5 // pred_fallthru
        _
    $region6: #{tpu_custom_call.1} parent=1 // loop_footer
      %s50 = sadd.s32 1, %s46
    $region7: #{tpu_custom_call.1} parent=1 // loop_footer_branch
      %45 = sbr.rel target = $region3
    $region8: #{tpu_custom_call.1} parent=1 // loop_exit
      _
    %3953 = vsyncpa [#allocation9], 1
    %s3954 = scalar_lea.sflag [#allocation9], 1
    %3955 = vsyncpa %s3954, 1
    %3956 = vsyncpa [#allocation12], 1
    %s3957 = scalar_lea.sflag [#allocation12], 1
    %3958 = vsyncpa %s3957, 1
    %3959 = vsyncpa [#allocation15], 1
    %3960 = vsyncpa [#allocation18], 1
    %3961 = vsyncpa [#allocation21], 1
    %3962 = vsyncpa [#allocation24], 1
    %3963 = vsyncpa [#allocation27], 1
    %3964 = vsyncpa [#allocation30], 1
    %3965 = vsyncpa [#allocation33], 1
    %3966 = vsyncpa [#allocation10], 1
    %s3967 = scalar_lea.sflag [#allocation10], 1
    %3968 = vsyncpa %s3967, 1
    %3969 = vsyncpa [#allocation36], 1
    %s3970 = scalar_lea.sflag [#allocation36], 1
    %3971 = vsyncpa %s3970, 1

</llo_original>
